<compile_context>
chip_gen: v7x
topology: tpu7x:2x2x1
jax: 0.10.0
libtpu: 0.0.40
codegen_flags: <defaults>
</compile_context>

<pallas_src>
import functools
from collections import namedtuple

import jax
import jax.numpy as jnp
from jax.experimental import pallas as pl
from jax.experimental.pallas import tpu as pltpu

LANES = 128  # TPU lane width; conv2's output channels are padded to this (lane-dense out).

SeqMeta = namedtuple("SeqMeta", "cin kh1 kw1 kh2 kw2 co2 k1 k1p c1p")


def _images_per_block(n):
    """Whole batch in one grid step on single-TC chips (v5e/v6e); split the batch
    across the two TensorCores on v7x via a parallel grid axis."""
    try:
        kind = jax.devices()[0].device_kind.lower()
    except Exception:  # pragma: no cover - defensive
        kind = ""
    if "v7" in kind and n % 2 == 0:
        return n // 2
    return n


def _fused_conv_relu_x2_kernel(nb, ho1, wo1p, ho2, wo2, kh2, kw2, c1p,
                               p1_ref, w1_ref, b1_ref, w2_ref, b2_ref, o_ref, h_ref):
    """Fused conv1+relu1+conv2+relu2 for a block of `nb` images.

    p1_ref: (nb, ho1*wo1p, k1p)   conv1 im2col patches (rows width-padded to wo1p)
    w1_ref: (k1p, c1p)            conv1 weight, matmul-ready, Cout padded 20->32
    b1_ref: (1, c1p)              conv1 bias, zero-padded
    w2_ref: (kh2*kw2*c1p, 128)    conv2 weight, tap-major (r, c, ci), Cout padded 64->128
    b2_ref: (1, 128)              conv2 bias, zero-padded
    o_ref : (nb, ho2*wo2, 128)    lane-dense output slab
    h_ref : VMEM (nb, ho1, wo1p, c1p)  conv1+relu1 intermediate
    """
    m1p = ho1 * wo1p
    m2 = ho2 * wo2

    # ---- Stage 1: conv1 + relu1 for the whole block as ONE MXU matmul ----------
    p1 = p1_ref[...].reshape(nb * m1p, p1_ref.shape[-1])
    h = jnp.dot(p1, w1_ref[...], preferred_element_type=jnp.float32)   # (nb*m1p, c1p)
    h = jnp.maximum(h + b1_ref[...], 0.0)
    # wo1p is a multiple of 8, so this reshape + store is a single aligned block write.
    h_ref[...] = h.reshape(nb, ho1, wo1p, c1p)

    # ---- Stage 2: conv2 + relu2 as a 25-tap MXU accumulate (no im2col scratch) --
    bias2 = jnp.broadcast_to(b2_ref[...], (m2, o_ref.shape[-1]))        # hoisted
    for b in range(nb):
        acc = bias2
        for r in range(kh2):
            for c in range(kw2):
                t = r * kw2 + c
                win = h_ref[b, r:r + ho2, c:c + wo2, :].reshape(m2, c1p)   # (64, 32)
                acc = acc + jnp.dot(win, w2_ref[t * c1p:(t + 1) * c1p, :],
                                    preferred_element_type=jnp.float32)
        o_ref[b] = jnp.maximum(acc, 0.0).astype(o_ref.dtype)


def prepare_params(params):
    """One-time weight prep (hoisted out of the per-call path): transpose + pad the
    PyTorch-shaped weights into matmul-ready (K, lanes) slabs."""
    (w1_oihw, b1), (w2_oihw, b2) = params
    co1, cin, kh1, kw1 = w1_oihw.shape            # (20, 1, 5, 5)
    co2, ci2, kh2, kw2 = w2_oihw.shape            # (64, 20, 5, 5)
    assert ci2 == co1, "conv2 input channels must match conv1 output channels"

    k1 = kh1 * kw1 * cin                          # 25
    k1p = 8 * pl.cdiv(k1, 8)                      # 32 (sublane-aligned stage-1 K)
    c1p = 32 * pl.cdiv(co1, 32)                   # 32 (conv1 Cout padding: 20 -> 32, NOT 128)
    k2 = kh2 * kw2 * c1p                          # 800

    # conv1 weight -> (k1p, c1p), rows ordered (r, c, ci) to match the im2col columns.
    w1 = jnp.transpose(w1_oihw, (2, 3, 1, 0)).reshape(k1, co1)
    w1 = jnp.pad(w1, ((0, k1p - k1), (0, c1p - co1)))
    b1p = jnp.pad(b1, (0, c1p - co1)).reshape(1, c1p)

    # conv2 weight -> (k2, 128), tap-major rows ((r*kw2 + c)*c1p + ci); padded rows are 0.
    w2 = jnp.transpose(w2_oihw, (2, 3, 1, 0))                        # HWIO (5,5,20,64)
    w2 = jnp.pad(w2, ((0, 0), (0, 0), (0, c1p - ci2), (0, LANES - co2)))
    w2 = w2.reshape(k2, LANES)
    b2p = jnp.pad(b2, (0, LANES - co2)).reshape(1, LANES)

    arrays = (w1, b1p, w2, b2p)
    meta = SeqMeta(cin=cin, kh1=kh1, kw1=kw1, kh2=kh2, kw2=kw2,
                   co2=co2, k1=k1, k1p=k1p, c1p=c1p)
    return arrays, meta


def sequential_forward(x_nchw, prepared, meta):
    """Mirror of Sequential.forward for the conv1-relu1-conv2-relu2 stack.

    Takes NCHW input (PyTorch convention) and prepared weights; returns NCHW output.
    `meta` is a static namedtuple of Python ints (use static_argnums under jit).
    """
    w1p, b1p, w2p, b2p = prepared
    cin, kh1, kw1, kh2, kw2, co2, k1, k1p, c1p = meta

    n, _, h, w = x_nchw.shape
    ho1, wo1 = h - kh1 + 1, w - kw1 + 1           # 12, 12
    ho2, wo2 = ho1 - kh2 + 1, wo1 - kw2 + 1       # 8, 8
    wo1p = 8 * pl.cdiv(wo1, 8)                    # 16: aligned intermediate row width
    m1p = ho1 * wo1p                              # 192
    m2 = ho2 * wo2                                # 64
    k2 = kh2 * kw2 * c1p                          # 800

    # ---- conv1 im2col (layout plumbing, tiny), width-padded to wo1p ------------
    if cin == 1:
        x_nhwc = x_nchw.reshape(n, h, w, 1)       # NCHW == NHWC when C == 1
    else:
        x_nhwc = jnp.transpose(x_nchw, (0, 2, 3, 1))
    cols = [x_nhwc[:, r:r + ho1, c:c + wo1, :]
            for r in range(kh1) for c in range(kw1)]
    p1 = jnp.concatenate(cols, axis=-1)                               # (n, 12, 12, 25)
    p1 = jnp.pad(p1, ((0, 0), (0, 0), (0, wo1p - wo1), (0, k1p - k1)))  # (n, 12, 16, 32)
    p1 = p1.reshape(n, m1p, k1p)                                      # (n, 192, 32)

    nb = _images_per_block(n)                     # images per grid step
    grid = (n // nb,)

    kernel = functools.partial(_fused_conv_relu_x2_kernel,
                               nb, ho1, wo1p, ho2, wo2, kh2, kw2, c1p)

    out = pl.pallas_call(
        kernel,
        out_shape=jax.ShapeDtypeStruct((n, m2, LANES), x_nchw.dtype),
        grid_spec=pltpu.PrefetchScalarGridSpec(
            num_scalar_prefetch=0,
            grid=grid,
            in_specs=[
                pl.BlockSpec((nb, m1p, k1p), lambda i: (i, 0, 0)),   # per-block patches
                pl.BlockSpec((k1p, c1p), lambda i: (0, 0)),          # w1 (resident)
                pl.BlockSpec((1, c1p), lambda i: (0, 0)),            # b1
                pl.BlockSpec((k2, LANES), lambda i: (0, 0)),         # w2 (resident, 400 KiB)
                pl.BlockSpec((1, LANES), lambda i: (0, 0)),          # b2
            ],
            out_specs=pl.BlockSpec((nb, m2, LANES), lambda i: (i, 0, 0)),
            scratch_shapes=[
                pltpu.VMEM((nb, ho1, wo1p, c1p), jnp.float32),       # fused intermediate
            ],
        ),
        compiler_params=pltpu.CompilerParams(
            dimension_semantics=("parallel",)),
    )(p1, w1p, b1p, w2p, b2p)

    # Un-pad channels and restore PyTorch's NCHW layout (tiny post-ops).
    out = out[:, :, :co2].reshape(n, ho2, wo2, co2)
    return jnp.transpose(out, (0, 3, 1, 2))


def init_params(key):
    """Deterministic params in PyTorch shapes: conv1 (20,1,5,5), conv2 (64,20,5,5)."""
    k1, k2, k3, k4 = jax.random.split(key, 4)
    w1 = jax.random.normal(k1, (20, 1, 5, 5), jnp.float32) * 0.1
    b1 = jax.random.normal(k2, (20,), jnp.float32) * 0.1
    w2 = jax.random.normal(k3, (64, 20, 5, 5), jnp.float32) * 0.05
    b2 = jax.random.normal(k4, (64,), jnp.float32) * 0.05
    return ((w1, b1), (w2, b2))


def _reference_forward(x_nchw, params):
    """Pure-JAX reference (lax conv, NCHW/OIHW) for correctness checking."""
    (w1, b1), (w2, b2) = params
    dn = ("NCHW", "OIHW", "NCHW")
    x = jax.lax.conv_general_dilated(x_nchw, w1, (1, 1), "VALID", dimension_numbers=dn)
    x = jnp.maximum(x + b1[None, :, None, None], 0.0)
    x = jax.lax.conv_general_dilated(x, w2, (1, 1), "VALID", dimension_numbers=dn)
    x = jnp.maximum(x + b2[None, :, None, None], 0.0)
    return x


if __name__ == "__main__":
    key = jax.random.PRNGKey(0)
    kx, kp = jax.random.split(key)

    # Input matching nn.Conv2d(1, 20, 5): NCHW = [batch=2, C=1, H=16, W=16]
    x = jax.random.normal(kx, (2, 1, 16, 16), jnp.float32)
    params = init_params(kp)

    # One-time weight preparation, hoisted out of the per-call jitted path.
    prepared, meta = prepare_params(params)
    prepared = jax.block_until_ready(prepared)

    fwd = jax.jit(sequential_forward, static_argnums=2)
    out = jax.block_until_ready(fwd(x, prepared, meta))

    ref = _reference_forward(x, params)
    assert out.shape == (2, 64, 8, 8), out.shape
    assert jnp.allclose(out, ref, atol=1e-4, rtol=1e-4), "mismatch vs reference"

    print("KERNEL_OK")
</pallas_src>

<mosaic_0001>
module attributes {stable_mosaic.version = 11 : i64} {
  func.func @_fused_conv_relu_x2_kernel(%arg0: i32, %arg1: memref<2x192x32xf32, #tpu.memory_space<vmem>>, %arg2: memref<32x32xf32, #tpu.memory_space<vmem>>, %arg3: memref<1x32xf32, #tpu.memory_space<vmem>>, %arg4: memref<800x128xf32, #tpu.memory_space<vmem>>, %arg5: memref<1x128xf32, #tpu.memory_space<vmem>>, %arg6: memref<2x64x128xf32, #tpu.memory_space<vmem>>, %arg7: memref<2x12x16x32xf32, #tpu.memory_space<vmem>>) attributes {dimension_semantics = [#tpu.dimension_semantics<parallel>], iteration_bounds = array<i64: 1>, scalar_prefetch = 0 : i64, scratch_operands = 1 : i64, tpu.core_type = #tpu.core_type<tc>, window_params = [{transform_indices = @transform_0, window_bounds = array<i64: 2, 192, 32>}, {pipeline_mode = #tpu.pipeline_mode<synchronous>, transform_indices = @transform_1, window_bounds = array<i64: 32, 32>}, {pipeline_mode = #tpu.pipeline_mode<synchronous>, transform_indices = @transform_2, window_bounds = array<i64: 1, 32>}, {pipeline_mode = #tpu.pipeline_mode<synchronous>, transform_indices = @transform_3, window_bounds = array<i64: 800, 128>}, {pipeline_mode = #tpu.pipeline_mode<synchronous>, transform_indices = @transform_4, window_bounds = array<i64: 1, 128>}, {transform_indices = @transform_5, window_bounds = array<i64: 2, 64, 128>}]} {
    %c0 = arith.constant 0 : index
    %c0_0 = arith.constant 0 : index
    %c0_1 = arith.constant 0 : index
    %0 = vector.load %arg1[%c0, %c0_0, %c0_1] : memref<2x192x32xf32, #tpu.memory_space<vmem>>, vector<2x192x32xf32>
    %1 = vector.shape_cast %0 : vector<2x192x32xf32> to vector<384x32xf32>
    %c0_2 = arith.constant 0 : index
    %c0_3 = arith.constant 0 : index
    %2 = vector.load %arg2[%c0_2, %c0_3] : memref<32x32xf32, #tpu.memory_space<vmem>>, vector<32x32xf32>
    %cst = arith.constant dense<0.000000e+00> : vector<384x32xf32>
    %3 = tpu.matmul %1, %2, %cst {dimension_numbers = #tpu.dot_dimension_numbers<[1], [0], [0], [1], [0, 0, 1, 1], [], []>} : vector<384x32xf32>, vector<32x32xf32>, vector<384x32xf32> -> vector<384x32xf32>
    %c0_4 = arith.constant 0 : index
    %c0_5 = arith.constant 0 : index
    %4 = vector.load %arg3[%c0_4, %c0_5] : memref<1x32xf32, #tpu.memory_space<vmem>>, vector<1x32xf32>
    %5 = vector.broadcast %4 : vector<1x32xf32> to vector<384x32xf32>
    %6 = arith.addf %3, %5 : vector<384x32xf32>
    %cst_6 = arith.constant 0.000000e+00 : f32
    %7 = vector.broadcast %cst_6 : f32 to vector<384x32xf32>
    %8 = arith.maximumf %6, %7 : vector<384x32xf32>
    %9 = vector.shape_cast %8 : vector<384x32xf32> to vector<2x12x16x32xf32>
    %c0_7 = arith.constant 0 : index
    %c0_8 = arith.constant 0 : index
    %c0_9 = arith.constant 0 : index
    %c0_10 = arith.constant 0 : index
    %10 = vector.load %arg7[%c0_7, %c0_8, %c0_9, %c0_10] : memref<2x12x16x32xf32, #tpu.memory_space<vmem>>, vector<2x12x16x32xf32>
    tpu.vector_store %arg7[%c0_7, %c0_8, %c0_9, %c0_10], %9 {strides = array<i32>} : memref<2x12x16x32xf32, #tpu.memory_space<vmem>>, vector<2x12x16x32xf32>,
    %c0_11 = arith.constant 0 : index
    %c0_12 = arith.constant 0 : index
    %11 = vector.load %arg5[%c0_11, %c0_12] : memref<1x128xf32, #tpu.memory_space<vmem>>, vector<1x128xf32>
    %12 = vector.shape_cast %11 : vector<1x128xf32> to vector<1x128xf32>
    %13 = vector.broadcast %12 : vector<1x128xf32> to vector<64x128xf32>
    %c0_13 = arith.constant 0 : index
    %c0_14 = arith.constant 0 : index
    %c0_15 = arith.constant 0 : index
    %c0_16 = arith.constant 0 : index
    %14 = vector.load %arg7[%c0_13, %c0_14, %c0_15, %c0_16] : memref<2x12x16x32xf32, #tpu.memory_space<vmem>>, vector<1x8x8x32xf32>
    %15 = vector.shape_cast %14 : vector<1x8x8x32xf32> to vector<8x8x32xf32>
    %16 = vector.shape_cast %15 : vector<8x8x32xf32> to vector<64x32xf32>
    %c0_17 = arith.constant 0 : index
    %c0_18 = arith.constant 0 : index
    %17 = vector.load %arg4[%c0_17, %c0_18] : memref<800x128xf32, #tpu.memory_space<vmem>>, vector<32x128xf32>
    %cst_19 = arith.constant dense<0.000000e+00> : vector<64x128xf32>
    %18 = tpu.matmul %16, %17, %cst_19 {dimension_numbers = #tpu.dot_dimension_numbers<[1], [0], [0], [1], [0, 0, 1, 1], [], []>} : vector<64x32xf32>, vector<32x128xf32>, vector<64x128xf32> -> vector<64x128xf32>
    %19 = arith.addf %13, %18 : vector<64x128xf32>
    %c0_20 = arith.constant 0 : index
    %c0_21 = arith.constant 0 : index
    %c1 = arith.constant 1 : index
    %c0_22 = arith.constant 0 : index
    %20 = vector.load %arg7[%c0_20, %c0_21, %c1, %c0_22] : memref<2x12x16x32xf32, #tpu.memory_space<vmem>>, vector<1x8x8x32xf32>
    %21 = vector.shape_cast %20 : vector<1x8x8x32xf32> to vector<8x8x32xf32>
    %22 = vector.shape_cast %21 : vector<8x8x32xf32> to vector<64x32xf32>
    %c32 = arith.constant 32 : index
    %c0_23 = arith.constant 0 : index
    %23 = vector.load %arg4[%c32, %c0_23] : memref<800x128xf32, #tpu.memory_space<vmem>>, vector<32x128xf32>
    %cst_24 = arith.constant dense<0.000000e+00> : vector<64x128xf32>
    %24 = tpu.matmul %22, %23, %cst_24 {dimension_numbers = #tpu.dot_dimension_numbers<[1], [0], [0], [1], [0, 0, 1, 1], [], []>} : vector<64x32xf32>, vector<32x128xf32>, vector<64x128xf32> -> vector<64x128xf32>
    %25 = arith.addf %19, %24 : vector<64x128xf32>
    %c0_25 = arith.constant 0 : index
    %c0_26 = arith.constant 0 : index
    %c2 = arith.constant 2 : index
    %c0_27 = arith.constant 0 : index
    %26 = vector.load %arg7[%c0_25, %c0_26, %c2, %c0_27] : memref<2x12x16x32xf32, #tpu.memory_space<vmem>>, vector<1x8x8x32xf32>
    %27 = vector.shape_cast %26 : vector<1x8x8x32xf32> to vector<8x8x32xf32>
    %28 = vector.shape_cast %27 : vector<8x8x32xf32> to vector<64x32xf32>
    %c64 = arith.constant 64 : index
    %c0_28 = arith.constant 0 : index
    %29 = vector.load %arg4[%c64, %c0_28] : memref<800x128xf32, #tpu.memory_space<vmem>>, vector<32x128xf32>
    %cst_29 = arith.constant dense<0.000000e+00> : vector<64x128xf32>
    %30 = tpu.matmul %28, %29, %cst_29 {dimension_numbers = #tpu.dot_dimension_numbers<[1], [0], [0], [1], [0, 0, 1, 1], [], []>} : vector<64x32xf32>, vector<32x128xf32>, vector<64x128xf32> -> vector<64x128xf32>
    %31 = arith.addf %25, %30 : vector<64x128xf32>
    %c0_30 = arith.constant 0 : index
    %c0_31 = arith.constant 0 : index
    %c3 = arith.constant 3 : index
    %c0_32 = arith.constant 0 : index
    %32 = vector.load %arg7[%c0_30, %c0_31, %c3, %c0_32] : memref<2x12x16x32xf32, #tpu.memory_space<vmem>>, vector<1x8x8x32xf32>
    %33 = vector.shape_cast %32 : vector<1x8x8x32xf32> to vector<8x8x32xf32>
    %34 = vector.shape_cast %33 : vector<8x8x32xf32> to vector<64x32xf32>
    %c96 = arith.constant 96 : index
    %c0_33 = arith.constant 0 : index
    %35 = vector.load %arg4[%c96, %c0_33] : memref<800x128xf32, #tpu.memory_space<vmem>>, vector<32x128xf32>
    %cst_34 = arith.constant dense<0.000000e+00> : vector<64x128xf32>
    %36 = tpu.matmul %34, %35, %cst_34 {dimension_numbers = #tpu.dot_dimension_numbers<[1], [0], [0], [1], [0, 0, 1, 1], [], []>} : vector<64x32xf32>, vector<32x128xf32>, vector<64x128xf32> -> vector<64x128xf32>
    %37 = arith.addf %31, %36 : vector<64x128xf32>
    %c0_35 = arith.constant 0 : index
    %c0_36 = arith.constant 0 : index
    %c4 = arith.constant 4 : index
    %c0_37 = arith.constant 0 : index
    %38 = vector.load %arg7[%c0_35, %c0_36, %c4, %c0_37] : memref<2x12x16x32xf32, #tpu.memory_space<vmem>>, vector<1x8x8x32xf32>
    %39 = vector.shape_cast %38 : vector<1x8x8x32xf32> to vector<8x8x32xf32>
    %40 = vector.shape_cast %39 : vector<8x8x32xf32> to vector<64x32xf32>
    %c128 = arith.constant 128 : index
    %c0_38 = arith.constant 0 : index
    %41 = vector.load %arg4[%c128, %c0_38] : memref<800x128xf32, #tpu.memory_space<vmem>>, vector<32x128xf32>
    %cst_39 = arith.constant dense<0.000000e+00> : vector<64x128xf32>
    %42 = tpu.matmul %40, %41, %cst_39 {dimension_numbers = #tpu.dot_dimension_numbers<[1], [0], [0], [1], [0, 0, 1, 1], [], []>} : vector<64x32xf32>, vector<32x128xf32>, vector<64x128xf32> -> vector<64x128xf32>
    %43 = arith.addf %37, %42 : vector<64x128xf32>
    %c0_40 = arith.constant 0 : index
    %c1_41 = arith.constant 1 : index
    %c0_42 = arith.constant 0 : index
    %c0_43 = arith.constant 0 : index
    %44 = vector.load %arg7[%c0_40, %c1_41, %c0_42, %c0_43] : memref<2x12x16x32xf32, #tpu.memory_space<vmem>>, vector<1x8x8x32xf32>
    %45 = vector.shape_cast %44 : vector<1x8x8x32xf32> to vector<8x8x32xf32>
    %46 = vector.shape_cast %45 : vector<8x8x32xf32> to vector<64x32xf32>
    %c160 = arith.constant 160 : index
    %c0_44 = arith.constant 0 : index
    %47 = vector.load %arg4[%c160, %c0_44] : memref<800x128xf32, #tpu.memory_space<vmem>>, vector<32x128xf32>
    %cst_45 = arith.constant dense<0.000000e+00> : vector<64x128xf32>
    %48 = tpu.matmul %46, %47, %cst_45 {dimension_numbers = #tpu.dot_dimension_numbers<[1], [0], [0], [1], [0, 0, 1, 1], [], []>} : vector<64x32xf32>, vector<32x128xf32>, vector<64x128xf32> -> vector<64x128xf32>
    %49 = arith.addf %43, %48 : vector<64x128xf32>
    %c0_46 = arith.constant 0 : index
    %c1_47 = arith.constant 1 : index
    %c1_48 = arith.constant 1 : index
    %c0_49 = arith.constant 0 : index
    %50 = vector.load %arg7[%c0_46, %c1_47, %c1_48, %c0_49] : memref<2x12x16x32xf32, #tpu.memory_space<vmem>>, vector<1x8x8x32xf32>
    %51 = vector.shape_cast %50 : vector<1x8x8x32xf32> to vector<8x8x32xf32>
    %52 = vector.shape_cast %51 : vector<8x8x32xf32> to vector<64x32xf32>
    %c192 = arith.constant 192 : index
    %c0_50 = arith.constant 0 : index
    %53 = vector.load %arg4[%c192, %c0_50] : memref<800x128xf32, #tpu.memory_space<vmem>>, vector<32x128xf32>
    %cst_51 = arith.constant dense<0.000000e+00> : vector<64x128xf32>
    %54 = tpu.matmul %52, %53, %cst_51 {dimension_numbers = #tpu.dot_dimension_numbers<[1], [0], [0], [1], [0, 0, 1, 1], [], []>} : vector<64x32xf32>, vector<32x128xf32>, vector<64x128xf32> -> vector<64x128xf32>
    %55 = arith.addf %49, %54 : vector<64x128xf32>
    %c0_52 = arith.constant 0 : index
    %c1_53 = arith.constant 1 : index
    %c2_54 = arith.constant 2 : index
    %c0_55 = arith.constant 0 : index
    %56 = vector.load %arg7[%c0_52, %c1_53, %c2_54, %c0_55] : memref<2x12x16x32xf32, #tpu.memory_space<vmem>>, vector<1x8x8x32xf32>
    %57 = vector.shape_cast %56 : vector<1x8x8x32xf32> to vector<8x8x32xf32>
    %58 = vector.shape_cast %57 : vector<8x8x32xf32> to vector<64x32xf32>
    %c224 = arith.constant 224 : index
    %c0_56 = arith.constant 0 : index
    %59 = vector.load %arg4[%c224, %c0_56] : memref<800x128xf32, #tpu.memory_space<vmem>>, vector<32x128xf32>
    %cst_57 = arith.constant dense<0.000000e+00> : vector<64x128xf32>
    %60 = tpu.matmul %58, %59, %cst_57 {dimension_numbers = #tpu.dot_dimension_numbers<[1], [0], [0], [1], [0, 0, 1, 1], [], []>} : vector<64x32xf32>, vector<32x128xf32>, vector<64x128xf32> -> vector<64x128xf32>
    %61 = arith.addf %55, %60 : vector<64x128xf32>
    %c0_58 = arith.constant 0 : index
    %c1_59 = arith.constant 1 : index
    %c3_60 = arith.constant 3 : index
    %c0_61 = arith.constant 0 : index
    %62 = vector.load %arg7[%c0_58, %c1_59, %c3_60, %c0_61] : memref<2x12x16x32xf32, #tpu.memory_space<vmem>>, vector<1x8x8x32xf32>
    %63 = vector.shape_cast %62 : vector<1x8x8x32xf32> to vector<8x8x32xf32>
    %64 = vector.shape_cast %63 : vector<8x8x32xf32> to vector<64x32xf32>
    %c256 = arith.constant 256 : index
    %c0_62 = arith.constant 0 : index
    %65 = vector.load %arg4[%c256, %c0_62] : memref<800x128xf32, #tpu.memory_space<vmem>>, vector<32x128xf32>
    %cst_63 = arith.constant dense<0.000000e+00> : vector<64x128xf32>
    %66 = tpu.matmul %64, %65, %cst_63 {dimension_numbers = #tpu.dot_dimension_numbers<[1], [0], [0], [1], [0, 0, 1, 1], [], []>} : vector<64x32xf32>, vector<32x128xf32>, vector<64x128xf32> -> vector<64x128xf32>
    %67 = arith.addf %61, %66 : vector<64x128xf32>
    %c0_64 = arith.constant 0 : index
    %c1_65 = arith.constant 1 : index
    %c4_66 = arith.constant 4 : index
    %c0_67 = arith.constant 0 : index
    %68 = vector.load %arg7[%c0_64, %c1_65, %c4_66, %c0_67] : memref<2x12x16x32xf32, #tpu.memory_space<vmem>>, vector<1x8x8x32xf32>
    %69 = vector.shape_cast %68 : vector<1x8x8x32xf32> to vector<8x8x32xf32>
    %70 = vector.shape_cast %69 : vector<8x8x32xf32> to vector<64x32xf32>
    %c288 = arith.constant 288 : index
    %c0_68 = arith.constant 0 : index
    %71 = vector.load %arg4[%c288, %c0_68] : memref<800x128xf32, #tpu.memory_space<vmem>>, vector<32x128xf32>
    %cst_69 = arith.constant dense<0.000000e+00> : vector<64x128xf32>
    %72 = tpu.matmul %70, %71, %cst_69 {dimension_numbers = #tpu.dot_dimension_numbers<[1], [0], [0], [1], [0, 0, 1, 1], [], []>} : vector<64x32xf32>, vector<32x128xf32>, vector<64x128xf32> -> vector<64x128xf32>
    %73 = arith.addf %67, %72 : vector<64x128xf32>
    %c0_70 = arith.constant 0 : index
    %c2_71 = arith.constant 2 : index
    %c0_72 = arith.constant 0 : index
    %c0_73 = arith.constant 0 : index
    %74 = vector.load %arg7[%c0_70, %c2_71, %c0_72, %c0_73] : memref<2x12x16x32xf32, #tpu.memory_space<vmem>>, vector<1x8x8x32xf32>
    %75 = vector.shape_cast %74 : vector<1x8x8x32xf32> to vector<8x8x32xf32>
    %76 = vector.shape_cast %75 : vector<8x8x32xf32> to vector<64x32xf32>
    %c320 = arith.constant 320 : index
    %c0_74 = arith.constant 0 : index
    %77 = vector.load %arg4[%c320, %c0_74] : memref<800x128xf32, #tpu.memory_space<vmem>>, vector<32x128xf32>
    %cst_75 = arith.constant dense<0.000000e+00> : vector<64x128xf32>
    %78 = tpu.matmul %76, %77, %cst_75 {dimension_numbers = #tpu.dot_dimension_numbers<[1], [0], [0], [1], [0, 0, 1, 1], [], []>} : vector<64x32xf32>, vector<32x128xf32>, vector<64x128xf32> -> vector<64x128xf32>
    %79 = arith.addf %73, %78 : vector<64x128xf32>
    %c0_76 = arith.constant 0 : index
    %c2_77 = arith.constant 2 : index
    %c1_78 = arith.constant 1 : index
    %c0_79 = arith.constant 0 : index
    %80 = vector.load %arg7[%c0_76, %c2_77, %c1_78, %c0_79] : memref<2x12x16x32xf32, #tpu.memory_space<vmem>>, vector<1x8x8x32xf32>
    %81 = vector.shape_cast %80 : vector<1x8x8x32xf32> to vector<8x8x32xf32>
    %82 = vector.shape_cast %81 : vector<8x8x32xf32> to vector<64x32xf32>
    %c352 = arith.constant 352 : index
    %c0_80 = arith.constant 0 : index
    %83 = vector.load %arg4[%c352, %c0_80] : memref<800x128xf32, #tpu.memory_space<vmem>>, vector<32x128xf32>
    %cst_81 = arith.constant dense<0.000000e+00> : vector<64x128xf32>
    %84 = tpu.matmul %82, %83, %cst_81 {dimension_numbers = #tpu.dot_dimension_numbers<[1], [0], [0], [1], [0, 0, 1, 1], [], []>} : vector<64x32xf32>, vector<32x128xf32>, vector<64x128xf32> -> vector<64x128xf32>
    %85 = arith.addf %79, %84 : vector<64x128xf32>
    %c0_82 = arith.constant 0 : index
    %c2_83 = arith.constant 2 : index
    %c2_84 = arith.constant 2 : index
    %c0_85 = arith.constant 0 : index
    %86 = vector.load %arg7[%c0_82, %c2_83, %c2_84, %c0_85] : memref<2x12x16x32xf32, #tpu.memory_space<vmem>>, vector<1x8x8x32xf32>
    %87 = vector.shape_cast %86 : vector<1x8x8x32xf32> to vector<8x8x32xf32>
    %88 = vector.shape_cast %87 : vector<8x8x32xf32> to vector<64x32xf32>
    %c384 = arith.constant 384 : index
    %c0_86 = arith.constant 0 : index
    %89 = vector.load %arg4[%c384, %c0_86] : memref<800x128xf32, #tpu.memory_space<vmem>>, vector<32x128xf32>
    %cst_87 = arith.constant dense<0.000000e+00> : vector<64x128xf32>
    %90 = tpu.matmul %88, %89, %cst_87 {dimension_numbers = #tpu.dot_dimension_numbers<[1], [0], [0], [1], [0, 0, 1, 1], [], []>} : vector<64x32xf32>, vector<32x128xf32>, vector<64x128xf32> -> vector<64x128xf32>
    %91 = arith.addf %85, %90 : vector<64x128xf32>
    %c0_88 = arith.constant 0 : index
    %c2_89 = arith.constant 2 : index
    %c3_90 = arith.constant 3 : index
    %c0_91 = arith.constant 0 : index
    %92 = vector.load %arg7[%c0_88, %c2_89, %c3_90, %c0_91] : memref<2x12x16x32xf32, #tpu.memory_space<vmem>>, vector<1x8x8x32xf32>
    %93 = vector.shape_cast %92 : vector<1x8x8x32xf32> to vector<8x8x32xf32>
    %94 = vector.shape_cast %93 : vector<8x8x32xf32> to vector<64x32xf32>
    %c416 = arith.constant 416 : index
    %c0_92 = arith.constant 0 : index
    %95 = vector.load %arg4[%c416, %c0_92] : memref<800x128xf32, #tpu.memory_space<vmem>>, vector<32x128xf32>
    %cst_93 = arith.constant dense<0.000000e+00> : vector<64x128xf32>
    %96 = tpu.matmul %94, %95, %cst_93 {dimension_numbers = #tpu.dot_dimension_numbers<[1], [0], [0], [1], [0, 0, 1, 1], [], []>} : vector<64x32xf32>, vector<32x128xf32>, vector<64x128xf32> -> vector<64x128xf32>
    %97 = arith.addf %91, %96 : vector<64x128xf32>
    %c0_94 = arith.constant 0 : index
    %c2_95 = arith.constant 2 : index
    %c4_96 = arith.constant 4 : index
    %c0_97 = arith.constant 0 : index
    %98 = vector.load %arg7[%c0_94, %c2_95, %c4_96, %c0_97] : memref<2x12x16x32xf32, #tpu.memory_space<vmem>>, vector<1x8x8x32xf32>
    %99 = vector.shape_cast %98 : vector<1x8x8x32xf32> to vector<8x8x32xf32>
    %100 = vector.shape_cast %99 : vector<8x8x32xf32> to vector<64x32xf32>
    %c448 = arith.constant 448 : index
    %c0_98 = arith.constant 0 : index
    %101 = vector.load %arg4[%c448, %c0_98] : memref<800x128xf32, #tpu.memory_space<vmem>>, vector<32x128xf32>
    %cst_99 = arith.constant dense<0.000000e+00> : vector<64x128xf32>
    %102 = tpu.matmul %100, %101, %cst_99 {dimension_numbers = #tpu.dot_dimension_numbers<[1], [0], [0], [1], [0, 0, 1, 1], [], []>} : vector<64x32xf32>, vector<32x128xf32>, vector<64x128xf32> -> vector<64x128xf32>
    %103 = arith.addf %97, %102 : vector<64x128xf32>
    %c0_100 = arith.constant 0 : index
    %c3_101 = arith.constant 3 : index
    %c0_102 = arith.constant 0 : index
    %c0_103 = arith.constant 0 : index
    %104 = vector.load %arg7[%c0_100, %c3_101, %c0_102, %c0_103] : memref<2x12x16x32xf32, #tpu.memory_space<vmem>>, vector<1x8x8x32xf32>
    %105 = vector.shape_cast %104 : vector<1x8x8x32xf32> to vector<8x8x32xf32>
    %106 = vector.shape_cast %105 : vector<8x8x32xf32> to vector<64x32xf32>
    %c480 = arith.constant 480 : index
    %c0_104 = arith.constant 0 : index
    %107 = vector.load %arg4[%c480, %c0_104] : memref<800x128xf32, #tpu.memory_space<vmem>>, vector<32x128xf32>
    %cst_105 = arith.constant dense<0.000000e+00> : vector<64x128xf32>
    %108 = tpu.matmul %106, %107, %cst_105 {dimension_numbers = #tpu.dot_dimension_numbers<[1], [0], [0], [1], [0, 0, 1, 1], [], []>} : vector<64x32xf32>, vector<32x128xf32>, vector<64x128xf32> -> vector<64x128xf32>
    %109 = arith.addf %103, %108 : vector<64x128xf32>
    %c0_106 = arith.constant 0 : index
    %c3_107 = arith.constant 3 : index
    %c1_108 = arith.constant 1 : index
    %c0_109 = arith.constant 0 : index
    %110 = vector.load %arg7[%c0_106, %c3_107, %c1_108, %c0_109] : memref<2x12x16x32xf32, #tpu.memory_space<vmem>>, vector<1x8x8x32xf32>
    %111 = vector.shape_cast %110 : vector<1x8x8x32xf32> to vector<8x8x32xf32>
    %112 = vector.shape_cast %111 : vector<8x8x32xf32> to vector<64x32xf32>
    %c512 = arith.constant 512 : index
    %c0_110 = arith.constant 0 : index
    %113 = vector.load %arg4[%c512, %c0_110] : memref<800x128xf32, #tpu.memory_space<vmem>>, vector<32x128xf32>
    %cst_111 = arith.constant dense<0.000000e+00> : vector<64x128xf32>
    %114 = tpu.matmul %112, %113, %cst_111 {dimension_numbers = #tpu.dot_dimension_numbers<[1], [0], [0], [1], [0, 0, 1, 1], [], []>} : vector<64x32xf32>, vector<32x128xf32>, vector<64x128xf32> -> vector<64x128xf32>
    %115 = arith.addf %109, %114 : vector<64x128xf32>
    %c0_112 = arith.constant 0 : index
    %c3_113 = arith.constant 3 : index
    %c2_114 = arith.constant 2 : index
    %c0_115 = arith.constant 0 : index
    %116 = vector.load %arg7[%c0_112, %c3_113, %c2_114, %c0_115] : memref<2x12x16x32xf32, #tpu.memory_space<vmem>>, vector<1x8x8x32xf32>
    %117 = vector.shape_cast %116 : vector<1x8x8x32xf32> to vector<8x8x32xf32>
    %118 = vector.shape_cast %117 : vector<8x8x32xf32> to vector<64x32xf32>
    %c544 = arith.constant 544 : index
    %c0_116 = arith.constant 0 : index
    %119 = vector.load %arg4[%c544, %c0_116] : memref<800x128xf32, #tpu.memory_space<vmem>>, vector<32x128xf32>
    %cst_117 = arith.constant dense<0.000000e+00> : vector<64x128xf32>
    %120 = tpu.matmul %118, %119, %cst_117 {dimension_numbers = #tpu.dot_dimension_numbers<[1], [0], [0], [1], [0, 0, 1, 1], [], []>} : vector<64x32xf32>, vector<32x128xf32>, vector<64x128xf32> -> vector<64x128xf32>
    %121 = arith.addf %115, %120 : vector<64x128xf32>
    %c0_118 = arith.constant 0 : index
    %c3_119 = arith.constant 3 : index
    %c3_120 = arith.constant 3 : index
    %c0_121 = arith.constant 0 : index
    %122 = vector.load %arg7[%c0_118, %c3_119, %c3_120, %c0_121] : memref<2x12x16x32xf32, #tpu.memory_space<vmem>>, vector<1x8x8x32xf32>
    %123 = vector.shape_cast %122 : vector<1x8x8x32xf32> to vector<8x8x32xf32>
    %124 = vector.shape_cast %123 : vector<8x8x32xf32> to vector<64x32xf32>
    %c576 = arith.constant 576 : index
    %c0_122 = arith.constant 0 : index
    %125 = vector.load %arg4[%c576, %c0_122] : memref<800x128xf32, #tpu.memory_space<vmem>>, vector<32x128xf32>
    %cst_123 = arith.constant dense<0.000000e+00> : vector<64x128xf32>
    %126 = tpu.matmul %124, %125, %cst_123 {dimension_numbers = #tpu.dot_dimension_numbers<[1], [0], [0], [1], [0, 0, 1, 1], [], []>} : vector<64x32xf32>, vector<32x128xf32>, vector<64x128xf32> -> vector<64x128xf32>
    %127 = arith.addf %121, %126 : vector<64x128xf32>
    %c0_124 = arith.constant 0 : index
    %c3_125 = arith.constant 3 : index
    %c4_126 = arith.constant 4 : index
    %c0_127 = arith.constant 0 : index
    %128 = vector.load %arg7[%c0_124, %c3_125, %c4_126, %c0_127] : memref<2x12x16x32xf32, #tpu.memory_space<vmem>>, vector<1x8x8x32xf32>
    %129 = vector.shape_cast %128 : vector<1x8x8x32xf32> to vector<8x8x32xf32>
    %130 = vector.shape_cast %129 : vector<8x8x32xf32> to vector<64x32xf32>
    %c608 = arith.constant 608 : index
    %c0_128 = arith.constant 0 : index
    %131 = vector.load %arg4[%c608, %c0_128] : memref<800x128xf32, #tpu.memory_space<vmem>>, vector<32x128xf32>
    %cst_129 = arith.constant dense<0.000000e+00> : vector<64x128xf32>
    %132 = tpu.matmul %130, %131, %cst_129 {dimension_numbers = #tpu.dot_dimension_numbers<[1], [0], [0], [1], [0, 0, 1, 1], [], []>} : vector<64x32xf32>, vector<32x128xf32>, vector<64x128xf32> -> vector<64x128xf32>
    %133 = arith.addf %127, %132 : vector<64x128xf32>
    %c0_130 = arith.constant 0 : index
    %c4_131 = arith.constant 4 : index
    %c0_132 = arith.constant 0 : index
    %c0_133 = arith.constant 0 : index
    %134 = vector.load %arg7[%c0_130, %c4_131, %c0_132, %c0_133] : memref<2x12x16x32xf32, #tpu.memory_space<vmem>>, vector<1x8x8x32xf32>
    %135 = vector.shape_cast %134 : vector<1x8x8x32xf32> to vector<8x8x32xf32>
    %136 = vector.shape_cast %135 : vector<8x8x32xf32> to vector<64x32xf32>
    %c640 = arith.constant 640 : index
    %c0_134 = arith.constant 0 : index
    %137 = vector.load %arg4[%c640, %c0_134] : memref<800x128xf32, #tpu.memory_space<vmem>>, vector<32x128xf32>
    %cst_135 = arith.constant dense<0.000000e+00> : vector<64x128xf32>
    %138 = tpu.matmul %136, %137, %cst_135 {dimension_numbers = #tpu.dot_dimension_numbers<[1], [0], [0], [1], [0, 0, 1, 1], [], []>} : vector<64x32xf32>, vector<32x128xf32>, vector<64x128xf32> -> vector<64x128xf32>
    %139 = arith.addf %133, %138 : vector<64x128xf32>
    %c0_136 = arith.constant 0 : index
    %c4_137 = arith.constant 4 : index
    %c1_138 = arith.constant 1 : index
    %c0_139 = arith.constant 0 : index
    %140 = vector.load %arg7[%c0_136, %c4_137, %c1_138, %c0_139] : memref<2x12x16x32xf32, #tpu.memory_space<vmem>>, vector<1x8x8x32xf32>
    %141 = vector.shape_cast %140 : vector<1x8x8x32xf32> to vector<8x8x32xf32>
    %142 = vector.shape_cast %141 : vector<8x8x32xf32> to vector<64x32xf32>
    %c672 = arith.constant 672 : index
    %c0_140 = arith.constant 0 : index
    %143 = vector.load %arg4[%c672, %c0_140] : memref<800x128xf32, #tpu.memory_space<vmem>>, vector<32x128xf32>
    %cst_141 = arith.constant dense<0.000000e+00> : vector<64x128xf32>
    %144 = tpu.matmul %142, %143, %cst_141 {dimension_numbers = #tpu.dot_dimension_numbers<[1], [0], [0], [1], [0, 0, 1, 1], [], []>} : vector<64x32xf32>, vector<32x128xf32>, vector<64x128xf32> -> vector<64x128xf32>
    %145 = arith.addf %139, %144 : vector<64x128xf32>
    %c0_142 = arith.constant 0 : index
    %c4_143 = arith.constant 4 : index
    %c2_144 = arith.constant 2 : index
    %c0_145 = arith.constant 0 : index
    %146 = vector.load %arg7[%c0_142, %c4_143, %c2_144, %c0_145] : memref<2x12x16x32xf32, #tpu.memory_space<vmem>>, vector<1x8x8x32xf32>
    %147 = vector.shape_cast %146 : vector<1x8x8x32xf32> to vector<8x8x32xf32>
    %148 = vector.shape_cast %147 : vector<8x8x32xf32> to vector<64x32xf32>
    %c704 = arith.constant 704 : index
    %c0_146 = arith.constant 0 : index
    %149 = vector.load %arg4[%c704, %c0_146] : memref<800x128xf32, #tpu.memory_space<vmem>>, vector<32x128xf32>
    %cst_147 = arith.constant dense<0.000000e+00> : vector<64x128xf32>
    %150 = tpu.matmul %148, %149, %cst_147 {dimension_numbers = #tpu.dot_dimension_numbers<[1], [0], [0], [1], [0, 0, 1, 1], [], []>} : vector<64x32xf32>, vector<32x128xf32>, vector<64x128xf32> -> vector<64x128xf32>
    %151 = arith.addf %145, %150 : vector<64x128xf32>
    %c0_148 = arith.constant 0 : index
    %c4_149 = arith.constant 4 : index
    %c3_150 = arith.constant 3 : index
    %c0_151 = arith.constant 0 : index
    %152 = vector.load %arg7[%c0_148, %c4_149, %c3_150, %c0_151] : memref<2x12x16x32xf32, #tpu.memory_space<vmem>>, vector<1x8x8x32xf32>
    %153 = vector.shape_cast %152 : vector<1x8x8x32xf32> to vector<8x8x32xf32>
    %154 = vector.shape_cast %153 : vector<8x8x32xf32> to vector<64x32xf32>
    %c736 = arith.constant 736 : index
    %c0_152 = arith.constant 0 : index
    %155 = vector.load %arg4[%c736, %c0_152] : memref<800x128xf32, #tpu.memory_space<vmem>>, vector<32x128xf32>
    %cst_153 = arith.constant dense<0.000000e+00> : vector<64x128xf32>
    %156 = tpu.matmul %154, %155, %cst_153 {dimension_numbers = #tpu.dot_dimension_numbers<[1], [0], [0], [1], [0, 0, 1, 1], [], []>} : vector<64x32xf32>, vector<32x128xf32>, vector<64x128xf32> -> vector<64x128xf32>
    %157 = arith.addf %151, %156 : vector<64x128xf32>
    %c0_154 = arith.constant 0 : index
    %c4_155 = arith.constant 4 : index
    %c4_156 = arith.constant 4 : index
    %c0_157 = arith.constant 0 : index
    %158 = vector.load %arg7[%c0_154, %c4_155, %c4_156, %c0_157] : memref<2x12x16x32xf32, #tpu.memory_space<vmem>>, vector<1x8x8x32xf32>
    %159 = vector.shape_cast %158 : vector<1x8x8x32xf32> to vector<8x8x32xf32>
    %160 = vector.shape_cast %159 : vector<8x8x32xf32> to vector<64x32xf32>
    %c768 = arith.constant 768 : index
    %c0_158 = arith.constant 0 : index
    %161 = vector.load %arg4[%c768, %c0_158] : memref<800x128xf32, #tpu.memory_space<vmem>>, vector<32x128xf32>
    %cst_159 = arith.constant dense<0.000000e+00> : vector<64x128xf32>
    %162 = tpu.matmul %160, %161, %cst_159 {dimension_numbers = #tpu.dot_dimension_numbers<[1], [0], [0], [1], [0, 0, 1, 1], [], []>} : vector<64x32xf32>, vector<32x128xf32>, vector<64x128xf32> -> vector<64x128xf32>
    %163 = arith.addf %157, %162 : vector<64x128xf32>
    %cst_160 = arith.constant 0.000000e+00 : f32
    %164 = vector.broadcast %cst_160 : f32 to vector<64x128xf32>
    %165 = arith.maximumf %163, %164 : vector<64x128xf32>
    %c0_161 = arith.constant 0 : index
    %c0_162 = arith.constant 0 : index
    %c0_163 = arith.constant 0 : index
    %166 = vector.load %arg6[%c0_161, %c0_162, %c0_163] : memref<2x64x128xf32, #tpu.memory_space<vmem>>, vector<1x64x128xf32>
    %167 = vector.shape_cast %166 : vector<1x64x128xf32> to vector<64x128xf32>
    %168 = vector.shape_cast %165 : vector<64x128xf32> to vector<1x64x128xf32>
    tpu.vector_store %arg6[%c0_161, %c0_162, %c0_163], %168 {strides = array<i32>} : memref<2x64x128xf32, #tpu.memory_space<vmem>>, vector<1x64x128xf32>,
    %c1_164 = arith.constant 1 : index
    %c0_165 = arith.constant 0 : index
    %c0_166 = arith.constant 0 : index
    %c0_167 = arith.constant 0 : index
    %169 = vector.load %arg7[%c1_164, %c0_165, %c0_166, %c0_167] : memref<2x12x16x32xf32, #tpu.memory_space<vmem>>, vector<1x8x8x32xf32>
    %170 = vector.shape_cast %169 : vector<1x8x8x32xf32> to vector<8x8x32xf32>
    %171 = vector.shape_cast %170 : vector<8x8x32xf32> to vector<64x32xf32>
    %c0_168 = arith.constant 0 : index
    %c0_169 = arith.constant 0 : index
    %172 = vector.load %arg4[%c0_168, %c0_169] : memref<800x128xf32, #tpu.memory_space<vmem>>, vector<32x128xf32>
    %cst_170 = arith.constant dense<0.000000e+00> : vector<64x128xf32>
    %173 = tpu.matmul %171, %172, %cst_170 {dimension_numbers = #tpu.dot_dimension_numbers<[1], [0], [0], [1], [0, 0, 1, 1], [], []>} : vector<64x32xf32>, vector<32x128xf32>, vector<64x128xf32> -> vector<64x128xf32>
    %174 = arith.addf %13, %173 : vector<64x128xf32>
    %c1_171 = arith.constant 1 : index
    %c0_172 = arith.constant 0 : index
    %c1_173 = arith.constant 1 : index
    %c0_174 = arith.constant 0 : index
    %175 = vector.load %arg7[%c1_171, %c0_172, %c1_173, %c0_174] : memref<2x12x16x32xf32, #tpu.memory_space<vmem>>, vector<1x8x8x32xf32>
    %176 = vector.shape_cast %175 : vector<1x8x8x32xf32> to vector<8x8x32xf32>
    %177 = vector.shape_cast %176 : vector<8x8x32xf32> to vector<64x32xf32>
    %c32_175 = arith.constant 32 : index
    %c0_176 = arith.constant 0 : index
    %178 = vector.load %arg4[%c32_175, %c0_176] : memref<800x128xf32, #tpu.memory_space<vmem>>, vector<32x128xf32>
    %cst_177 = arith.constant dense<0.000000e+00> : vector<64x128xf32>
    %179 = tpu.matmul %177, %178, %cst_177 {dimension_numbers = #tpu.dot_dimension_numbers<[1], [0], [0], [1], [0, 0, 1, 1], [], []>} : vector<64x32xf32>, vector<32x128xf32>, vector<64x128xf32> -> vector<64x128xf32>
    %180 = arith.addf %174, %179 : vector<64x128xf32>
    %c1_178 = arith.constant 1 : index
    %c0_179 = arith.constant 0 : index
    %c2_180 = arith.constant 2 : index
    %c0_181 = arith.constant 0 : index
    %181 = vector.load %arg7[%c1_178, %c0_179, %c2_180, %c0_181] : memref<2x12x16x32xf32, #tpu.memory_space<vmem>>, vector<1x8x8x32xf32>
    %182 = vector.shape_cast %181 : vector<1x8x8x32xf32> to vector<8x8x32xf32>
    %183 = vector.shape_cast %182 : vector<8x8x32xf32> to vector<64x32xf32>
    %c64_182 = arith.constant 64 : index
    %c0_183 = arith.constant 0 : index
    %184 = vector.load %arg4[%c64_182, %c0_183] : memref<800x128xf32, #tpu.memory_space<vmem>>, vector<32x128xf32>
    %cst_184 = arith.constant dense<0.000000e+00> : vector<64x128xf32>
    %185 = tpu.matmul %183, %184, %cst_184 {dimension_numbers = #tpu.dot_dimension_numbers<[1], [0], [0], [1], [0, 0, 1, 1], [], []>} : vector<64x32xf32>, vector<32x128xf32>, vector<64x128xf32> -> vector<64x128xf32>
    %186 = arith.addf %180, %185 : vector<64x128xf32>
    %c1_185 = arith.constant 1 : index
    %c0_186 = arith.constant 0 : index
    %c3_187 = arith.constant 3 : index
    %c0_188 = arith.constant 0 : index
    %187 = vector.load %arg7[%c1_185, %c0_186, %c3_187, %c0_188] : memref<2x12x16x32xf32, #tpu.memory_space<vmem>>, vector<1x8x8x32xf32>
    %188 = vector.shape_cast %187 : vector<1x8x8x32xf32> to vector<8x8x32xf32>
    %189 = vector.shape_cast %188 : vector<8x8x32xf32> to vector<64x32xf32>
    %c96_189 = arith.constant 96 : index
    %c0_190 = arith.constant 0 : index
    %190 = vector.load %arg4[%c96_189, %c0_190] : memref<800x128xf32, #tpu.memory_space<vmem>>, vector<32x128xf32>
    %cst_191 = arith.constant dense<0.000000e+00> : vector<64x128xf32>
    %191 = tpu.matmul %189, %190, %cst_191 {dimension_numbers = #tpu.dot_dimension_numbers<[1], [0], [0], [1], [0, 0, 1, 1], [], []>} : vector<64x32xf32>, vector<32x128xf32>, vector<64x128xf32> -> vector<64x128xf32>
    %192 = arith.addf %186, %191 : vector<64x128xf32>
    %c1_192 = arith.constant 1 : index
    %c0_193 = arith.constant 0 : index
    %c4_194 = arith.constant 4 : index
    %c0_195 = arith.constant 0 : index
    %193 = vector.load %arg7[%c1_192, %c0_193, %c4_194, %c0_195] : memref<2x12x16x32xf32, #tpu.memory_space<vmem>>, vector<1x8x8x32xf32>
    %194 = vector.shape_cast %193 : vector<1x8x8x32xf32> to vector<8x8x32xf32>
    %195 = vector.shape_cast %194 : vector<8x8x32xf32> to vector<64x32xf32>
    %c128_196 = arith.constant 128 : index
    %c0_197 = arith.constant 0 : index
    %196 = vector.load %arg4[%c128_196, %c0_197] : memref<800x128xf32, #tpu.memory_space<vmem>>, vector<32x128xf32>
    %cst_198 = arith.constant dense<0.000000e+00> : vector<64x128xf32>
    %197 = tpu.matmul %195, %196, %cst_198 {dimension_numbers = #tpu.dot_dimension_numbers<[1], [0], [0], [1], [0, 0, 1, 1], [], []>} : vector<64x32xf32>, vector<32x128xf32>, vector<64x128xf32> -> vector<64x128xf32>
    %198 = arith.addf %192, %197 : vector<64x128xf32>
    %c1_199 = arith.constant 1 : index
    %c1_200 = arith.constant 1 : index
    %c0_201 = arith.constant 0 : index
    %c0_202 = arith.constant 0 : index
    %199 = vector.load %arg7[%c1_199, %c1_200, %c0_201, %c0_202] : memref<2x12x16x32xf32, #tpu.memory_space<vmem>>, vector<1x8x8x32xf32>
    %200 = vector.shape_cast %199 : vector<1x8x8x32xf32> to vector<8x8x32xf32>
    %201 = vector.shape_cast %200 : vector<8x8x32xf32> to vector<64x32xf32>
    %c160_203 = arith.constant 160 : index
    %c0_204 = arith.constant 0 : index
    %202 = vector.load %arg4[%c160_203, %c0_204] : memref<800x128xf32, #tpu.memory_space<vmem>>, vector<32x128xf32>
    %cst_205 = arith.constant dense<0.000000e+00> : vector<64x128xf32>
    %203 = tpu.matmul %201, %202, %cst_205 {dimension_numbers = #tpu.dot_dimension_numbers<[1], [0], [0], [1], [0, 0, 1, 1], [], []>} : vector<64x32xf32>, vector<32x128xf32>, vector<64x128xf32> -> vector<64x128xf32>
    %204 = arith.addf %198, %203 : vector<64x128xf32>
    %c1_206 = arith.constant 1 : index
    %c1_207 = arith.constant 1 : index
    %c1_208 = arith.constant 1 : index
    %c0_209 = arith.constant 0 : index
    %205 = vector.load %arg7[%c1_206, %c1_207, %c1_208, %c0_209] : memref<2x12x16x32xf32, #tpu.memory_space<vmem>>, vector<1x8x8x32xf32>
    %206 = vector.shape_cast %205 : vector<1x8x8x32xf32> to vector<8x8x32xf32>
    %207 = vector.shape_cast %206 : vector<8x8x32xf32> to vector<64x32xf32>
    %c192_210 = arith.constant 192 : index
    %c0_211 = arith.constant 0 : index
    %208 = vector.load %arg4[%c192_210, %c0_211] : memref<800x128xf32, #tpu.memory_space<vmem>>, vector<32x128xf32>
    %cst_212 = arith.constant dense<0.000000e+00> : vector<64x128xf32>
    %209 = tpu.matmul %207, %208, %cst_212 {dimension_numbers = #tpu.dot_dimension_numbers<[1], [0], [0], [1], [0, 0, 1, 1], [], []>} : vector<64x32xf32>, vector<32x128xf32>, vector<64x128xf32> -> vector<64x128xf32>
    %210 = arith.addf %204, %209 : vector<64x128xf32>
    %c1_213 = arith.constant 1 : index
    %c1_214 = arith.constant 1 : index
    %c2_215 = arith.constant 2 : index
    %c0_216 = arith.constant 0 : index
    %211 = vector.load %arg7[%c1_213, %c1_214, %c2_215, %c0_216] : memref<2x12x16x32xf32, #tpu.memory_space<vmem>>, vector<1x8x8x32xf32>
    %212 = vector.shape_cast %211 : vector<1x8x8x32xf32> to vector<8x8x32xf32>
    %213 = vector.shape_cast %212 : vector<8x8x32xf32> to vector<64x32xf32>
    %c224_217 = arith.constant 224 : index
    %c0_218 = arith.constant 0 : index
    %214 = vector.load %arg4[%c224_217, %c0_218] : memref<800x128xf32, #tpu.memory_space<vmem>>, vector<32x128xf32>
    %cst_219 = arith.constant dense<0.000000e+00> : vector<64x128xf32>
    %215 = tpu.matmul %213, %214, %cst_219 {dimension_numbers = #tpu.dot_dimension_numbers<[1], [0], [0], [1], [0, 0, 1, 1], [], []>} : vector<64x32xf32>, vector<32x128xf32>, vector<64x128xf32> -> vector<64x128xf32>
    %216 = arith.addf %210, %215 : vector<64x128xf32>
    %c1_220 = arith.constant 1 : index
    %c1_221 = arith.constant 1 : index
    %c3_222 = arith.constant 3 : index
    %c0_223 = arith.constant 0 : index
    %217 = vector.load %arg7[%c1_220, %c1_221, %c3_222, %c0_223] : memref<2x12x16x32xf32, #tpu.memory_space<vmem>>, vector<1x8x8x32xf32>
    %218 = vector.shape_cast %217 : vector<1x8x8x32xf32> to vector<8x8x32xf32>
    %219 = vector.shape_cast %218 : vector<8x8x32xf32> to vector<64x32xf32>
    %c256_224 = arith.constant 256 : index
    %c0_225 = arith.constant 0 : index
    %220 = vector.load %arg4[%c256_224, %c0_225] : memref<800x128xf32, #tpu.memory_space<vmem>>, vector<32x128xf32>
    %cst_226 = arith.constant dense<0.000000e+00> : vector<64x128xf32>
    %221 = tpu.matmul %219, %220, %cst_226 {dimension_numbers = #tpu.dot_dimension_numbers<[1], [0], [0], [1], [0, 0, 1, 1], [], []>} : vector<64x32xf32>, vector<32x128xf32>, vector<64x128xf32> -> vector<64x128xf32>
    %222 = arith.addf %216, %221 : vector<64x128xf32>
    %c1_227 = arith.constant 1 : index
    %c1_228 = arith.constant 1 : index
    %c4_229 = arith.constant 4 : index
    %c0_230 = arith.constant 0 : index
    %223 = vector.load %arg7[%c1_227, %c1_228, %c4_229, %c0_230] : memref<2x12x16x32xf32, #tpu.memory_space<vmem>>, vector<1x8x8x32xf32>
    %224 = vector.shape_cast %223 : vector<1x8x8x32xf32> to vector<8x8x32xf32>
    %225 = vector.shape_cast %224 : vector<8x8x32xf32> to vector<64x32xf32>
    %c288_231 = arith.constant 288 : index
    %c0_232 = arith.constant 0 : index
    %226 = vector.load %arg4[%c288_231, %c0_232] : memref<800x128xf32, #tpu.memory_space<vmem>>, vector<32x128xf32>
    %cst_233 = arith.constant dense<0.000000e+00> : vector<64x128xf32>
    %227 = tpu.matmul %225, %226, %cst_233 {dimension_numbers = #tpu.dot_dimension_numbers<[1], [0], [0], [1], [0, 0, 1, 1], [], []>} : vector<64x32xf32>, vector<32x128xf32>, vector<64x128xf32> -> vector<64x128xf32>
    %228 = arith.addf %222, %227 : vector<64x128xf32>
    %c1_234 = arith.constant 1 : index
    %c2_235 = arith.constant 2 : index
    %c0_236 = arith.constant 0 : index
    %c0_237 = arith.constant 0 : index
    %229 = vector.load %arg7[%c1_234, %c2_235, %c0_236, %c0_237] : memref<2x12x16x32xf32, #tpu.memory_space<vmem>>, vector<1x8x8x32xf32>
    %230 = vector.shape_cast %229 : vector<1x8x8x32xf32> to vector<8x8x32xf32>
    %231 = vector.shape_cast %230 : vector<8x8x32xf32> to vector<64x32xf32>
    %c320_238 = arith.constant 320 : index
    %c0_239 = arith.constant 0 : index
    %232 = vector.load %arg4[%c320_238, %c0_239] : memref<800x128xf32, #tpu.memory_space<vmem>>, vector<32x128xf32>
    %cst_240 = arith.constant dense<0.000000e+00> : vector<64x128xf32>
    %233 = tpu.matmul %231, %232, %cst_240 {dimension_numbers = #tpu.dot_dimension_numbers<[1], [0], [0], [1], [0, 0, 1, 1], [], []>} : vector<64x32xf32>, vector<32x128xf32>, vector<64x128xf32> -> vector<64x128xf32>
    %234 = arith.addf %228, %233 : vector<64x128xf32>
    %c1_241 = arith.constant 1 : index
    %c2_242 = arith.constant 2 : index
    %c1_243 = arith.constant 1 : index
    %c0_244 = arith.constant 0 : index
    %235 = vector.load %arg7[%c1_241, %c2_242, %c1_243, %c0_244] : memref<2x12x16x32xf32, #tpu.memory_space<vmem>>, vector<1x8x8x32xf32>
    %236 = vector.shape_cast %235 : vector<1x8x8x32xf32> to vector<8x8x32xf32>
    %237 = vector.shape_cast %236 : vector<8x8x32xf32> to vector<64x32xf32>
    %c352_245 = arith.constant 352 : index
    %c0_246 = arith.constant 0 : index
    %238 = vector.load %arg4[%c352_245, %c0_246] : memref<800x128xf32, #tpu.memory_space<vmem>>, vector<32x128xf32>
    %cst_247 = arith.constant dense<0.000000e+00> : vector<64x128xf32>
    %239 = tpu.matmul %237, %238, %cst_247 {dimension_numbers = #tpu.dot_dimension_numbers<[1], [0], [0], [1], [0, 0, 1, 1], [], []>} : vector<64x32xf32>, vector<32x128xf32>, vector<64x128xf32> -> vector<64x128xf32>
    %240 = arith.addf %234, %239 : vector<64x128xf32>
    %c1_248 = arith.constant 1 : index
    %c2_249 = arith.constant 2 : index
    %c2_250 = arith.constant 2 : index
    %c0_251 = arith.constant 0 : index
    %241 = vector.load %arg7[%c1_248, %c2_249, %c2_250, %c0_251] : memref<2x12x16x32xf32, #tpu.memory_space<vmem>>, vector<1x8x8x32xf32>
    %242 = vector.shape_cast %241 : vector<1x8x8x32xf32> to vector<8x8x32xf32>
    %243 = vector.shape_cast %242 : vector<8x8x32xf32> to vector<64x32xf32>
    %c384_252 = arith.constant 384 : index
    %c0_253 = arith.constant 0 : index
    %244 = vector.load %arg4[%c384_252, %c0_253] : memref<800x128xf32, #tpu.memory_space<vmem>>, vector<32x128xf32>
    %cst_254 = arith.constant dense<0.000000e+00> : vector<64x128xf32>
    %245 = tpu.matmul %243, %244, %cst_254 {dimension_numbers = #tpu.dot_dimension_numbers<[1], [0], [0], [1], [0, 0, 1, 1], [], []>} : vector<64x32xf32>, vector<32x128xf32>, vector<64x128xf32> -> vector<64x128xf32>
    %246 = arith.addf %240, %245 : vector<64x128xf32>
    %c1_255 = arith.constant 1 : index
    %c2_256 = arith.constant 2 : index
    %c3_257 = arith.constant 3 : index
    %c0_258 = arith.constant 0 : index
    %247 = vector.load %arg7[%c1_255, %c2_256, %c3_257, %c0_258] : memref<2x12x16x32xf32, #tpu.memory_space<vmem>>, vector<1x8x8x32xf32>
    %248 = vector.shape_cast %247 : vector<1x8x8x32xf32> to vector<8x8x32xf32>
    %249 = vector.shape_cast %248 : vector<8x8x32xf32> to vector<64x32xf32>
    %c416_259 = arith.constant 416 : index
    %c0_260 = arith.constant 0 : index
    %250 = vector.load %arg4[%c416_259, %c0_260] : memref<800x128xf32, #tpu.memory_space<vmem>>, vector<32x128xf32>
    %cst_261 = arith.constant dense<0.000000e+00> : vector<64x128xf32>
    %251 = tpu.matmul %249, %250, %cst_261 {dimension_numbers = #tpu.dot_dimension_numbers<[1], [0], [0], [1], [0, 0, 1, 1], [], []>} : vector<64x32xf32>, vector<32x128xf32>, vector<64x128xf32> -> vector<64x128xf32>
    %252 = arith.addf %246, %251 : vector<64x128xf32>
    %c1_262 = arith.constant 1 : index
    %c2_263 = arith.constant 2 : index
    %c4_264 = arith.constant 4 : index
    %c0_265 = arith.constant 0 : index
    %253 = vector.load %arg7[%c1_262, %c2_263, %c4_264, %c0_265] : memref<2x12x16x32xf32, #tpu.memory_space<vmem>>, vector<1x8x8x32xf32>
    %254 = vector.shape_cast %253 : vector<1x8x8x32xf32> to vector<8x8x32xf32>
    %255 = vector.shape_cast %254 : vector<8x8x32xf32> to vector<64x32xf32>
    %c448_266 = arith.constant 448 : index
    %c0_267 = arith.constant 0 : index
    %256 = vector.load %arg4[%c448_266, %c0_267] : memref<800x128xf32, #tpu.memory_space<vmem>>, vector<32x128xf32>
    %cst_268 = arith.constant dense<0.000000e+00> : vector<64x128xf32>
    %257 = tpu.matmul %255, %256, %cst_268 {dimension_numbers = #tpu.dot_dimension_numbers<[1], [0], [0], [1], [0, 0, 1, 1], [], []>} : vector<64x32xf32>, vector<32x128xf32>, vector<64x128xf32> -> vector<64x128xf32>
    %258 = arith.addf %252, %257 : vector<64x128xf32>
    %c1_269 = arith.constant 1 : index
    %c3_270 = arith.constant 3 : index
    %c0_271 = arith.constant 0 : index
    %c0_272 = arith.constant 0 : index
    %259 = vector.load %arg7[%c1_269, %c3_270, %c0_271, %c0_272] : memref<2x12x16x32xf32, #tpu.memory_space<vmem>>, vector<1x8x8x32xf32>
    %260 = vector.shape_cast %259 : vector<1x8x8x32xf32> to vector<8x8x32xf32>
    %261 = vector.shape_cast %260 : vector<8x8x32xf32> to vector<64x32xf32>
    %c480_273 = arith.constant 480 : index
    %c0_274 = arith.constant 0 : index
    %262 = vector.load %arg4[%c480_273, %c0_274] : memref<800x128xf32, #tpu.memory_space<vmem>>, vector<32x128xf32>
    %cst_275 = arith.constant dense<0.000000e+00> : vector<64x128xf32>
    %263 = tpu.matmul %261, %262, %cst_275 {dimension_numbers = #tpu.dot_dimension_numbers<[1], [0], [0], [1], [0, 0, 1, 1], [], []>} : vector<64x32xf32>, vector<32x128xf32>, vector<64x128xf32> -> vector<64x128xf32>
    %264 = arith.addf %258, %263 : vector<64x128xf32>
    %c1_276 = arith.constant 1 : index
    %c3_277 = arith.constant 3 : index
    %c1_278 = arith.constant 1 : index
    %c0_279 = arith.constant 0 : index
    %265 = vector.load %arg7[%c1_276, %c3_277, %c1_278, %c0_279] : memref<2x12x16x32xf32, #tpu.memory_space<vmem>>, vector<1x8x8x32xf32>
    %266 = vector.shape_cast %265 : vector<1x8x8x32xf32> to vector<8x8x32xf32>
    %267 = vector.shape_cast %266 : vector<8x8x32xf32> to vector<64x32xf32>
    %c512_280 = arith.constant 512 : index
    %c0_281 = arith.constant 0 : index
    %268 = vector.load %arg4[%c512_280, %c0_281] : memref<800x128xf32, #tpu.memory_space<vmem>>, vector<32x128xf32>
    %cst_282 = arith.constant dense<0.000000e+00> : vector<64x128xf32>
    %269 = tpu.matmul %267, %268, %cst_282 {dimension_numbers = #tpu.dot_dimension_numbers<[1], [0], [0], [1], [0, 0, 1, 1], [], []>} : vector<64x32xf32>, vector<32x128xf32>, vector<64x128xf32> -> vector<64x128xf32>
    %270 = arith.addf %264, %269 : vector<64x128xf32>
    %c1_283 = arith.constant 1 : index
    %c3_284 = arith.constant 3 : index
    %c2_285 = arith.constant 2 : index
    %c0_286 = arith.constant 0 : index
    %271 = vector.load %arg7[%c1_283, %c3_284, %c2_285, %c0_286] : memref<2x12x16x32xf32, #tpu.memory_space<vmem>>, vector<1x8x8x32xf32>
    %272 = vector.shape_cast %271 : vector<1x8x8x32xf32> to vector<8x8x32xf32>
    %273 = vector.shape_cast %272 : vector<8x8x32xf32> to vector<64x32xf32>
    %c544_287 = arith.constant 544 : index
    %c0_288 = arith.constant 0 : index
    %274 = vector.load %arg4[%c544_287, %c0_288] : memref<800x128xf32, #tpu.memory_space<vmem>>, vector<32x128xf32>
    %cst_289 = arith.constant dense<0.000000e+00> : vector<64x128xf32>
    %275 = tpu.matmul %273, %274, %cst_289 {dimension_numbers = #tpu.dot_dimension_numbers<[1], [0], [0], [1], [0, 0, 1, 1], [], []>} : vector<64x32xf32>, vector<32x128xf32>, vector<64x128xf32> -> vector<64x128xf32>
    %276 = arith.addf %270, %275 : vector<64x128xf32>
    %c1_290 = arith.constant 1 : index
    %c3_291 = arith.constant 3 : index
    %c3_292 = arith.constant 3 : index
    %c0_293 = arith.constant 0 : index
    %277 = vector.load %arg7[%c1_290, %c3_291, %c3_292, %c0_293] : memref<2x12x16x32xf32, #tpu.memory_space<vmem>>, vector<1x8x8x32xf32>
    %278 = vector.shape_cast %277 : vector<1x8x8x32xf32> to vector<8x8x32xf32>
    %279 = vector.shape_cast %278 : vector<8x8x32xf32> to vector<64x32xf32>
    %c576_294 = arith.constant 576 : index
    %c0_295 = arith.constant 0 : index
    %280 = vector.load %arg4[%c576_294, %c0_295] : memref<800x128xf32, #tpu.memory_space<vmem>>, vector<32x128xf32>
    %cst_296 = arith.constant dense<0.000000e+00> : vector<64x128xf32>
    %281 = tpu.matmul %279, %280, %cst_296 {dimension_numbers = #tpu.dot_dimension_numbers<[1], [0], [0], [1], [0, 0, 1, 1], [], []>} : vector<64x32xf32>, vector<32x128xf32>, vector<64x128xf32> -> vector<64x128xf32>
    %282 = arith.addf %276, %281 : vector<64x128xf32>
    %c1_297 = arith.constant 1 : index
    %c3_298 = arith.constant 3 : index
    %c4_299 = arith.constant 4 : index
    %c0_300 = arith.constant 0 : index
    %283 = vector.load %arg7[%c1_297, %c3_298, %c4_299, %c0_300] : memref<2x12x16x32xf32, #tpu.memory_space<vmem>>, vector<1x8x8x32xf32>
    %284 = vector.shape_cast %283 : vector<1x8x8x32xf32> to vector<8x8x32xf32>
    %285 = vector.shape_cast %284 : vector<8x8x32xf32> to vector<64x32xf32>
    %c608_301 = arith.constant 608 : index
    %c0_302 = arith.constant 0 : index
    %286 = vector.load %arg4[%c608_301, %c0_302] : memref<800x128xf32, #tpu.memory_space<vmem>>, vector<32x128xf32>
    %cst_303 = arith.constant dense<0.000000e+00> : vector<64x128xf32>
    %287 = tpu.matmul %285, %286, %cst_303 {dimension_numbers = #tpu.dot_dimension_numbers<[1], [0], [0], [1], [0, 0, 1, 1], [], []>} : vector<64x32xf32>, vector<32x128xf32>, vector<64x128xf32> -> vector<64x128xf32>
    %288 = arith.addf %282, %287 : vector<64x128xf32>
    %c1_304 = arith.constant 1 : index
    %c4_305 = arith.constant 4 : index
    %c0_306 = arith.constant 0 : index
    %c0_307 = arith.constant 0 : index
    %289 = vector.load %arg7[%c1_304, %c4_305, %c0_306, %c0_307] : memref<2x12x16x32xf32, #tpu.memory_space<vmem>>, vector<1x8x8x32xf32>
    %290 = vector.shape_cast %289 : vector<1x8x8x32xf32> to vector<8x8x32xf32>
    %291 = vector.shape_cast %290 : vector<8x8x32xf32> to vector<64x32xf32>
    %c640_308 = arith.constant 640 : index
    %c0_309 = arith.constant 0 : index
    %292 = vector.load %arg4[%c640_308, %c0_309] : memref<800x128xf32, #tpu.memory_space<vmem>>, vector<32x128xf32>
    %cst_310 = arith.constant dense<0.000000e+00> : vector<64x128xf32>
    %293 = tpu.matmul %291, %292, %cst_310 {dimension_numbers = #tpu.dot_dimension_numbers<[1], [0], [0], [1], [0, 0, 1, 1], [], []>} : vector<64x32xf32>, vector<32x128xf32>, vector<64x128xf32> -> vector<64x128xf32>
    %294 = arith.addf %288, %293 : vector<64x128xf32>
    %c1_311 = arith.constant 1 : index
    %c4_312 = arith.constant 4 : index
    %c1_313 = arith.constant 1 : index
    %c0_314 = arith.constant 0 : index
    %295 = vector.load %arg7[%c1_311, %c4_312, %c1_313, %c0_314] : memref<2x12x16x32xf32, #tpu.memory_space<vmem>>, vector<1x8x8x32xf32>
    %296 = vector.shape_cast %295 : vector<1x8x8x32xf32> to vector<8x8x32xf32>
    %297 = vector.shape_cast %296 : vector<8x8x32xf32> to vector<64x32xf32>
    %c672_315 = arith.constant 672 : index
    %c0_316 = arith.constant 0 : index
    %298 = vector.load %arg4[%c672_315, %c0_316] : memref<800x128xf32, #tpu.memory_space<vmem>>, vector<32x128xf32>
    %cst_317 = arith.constant dense<0.000000e+00> : vector<64x128xf32>
    %299 = tpu.matmul %297, %298, %cst_317 {dimension_numbers = #tpu.dot_dimension_numbers<[1], [0], [0], [1], [0, 0, 1, 1], [], []>} : vector<64x32xf32>, vector<32x128xf32>, vector<64x128xf32> -> vector<64x128xf32>
    %300 = arith.addf %294, %299 : vector<64x128xf32>
    %c1_318 = arith.constant 1 : index
    %c4_319 = arith.constant 4 : index
    %c2_320 = arith.constant 2 : index
    %c0_321 = arith.constant 0 : index
    %301 = vector.load %arg7[%c1_318, %c4_319, %c2_320, %c0_321] : memref<2x12x16x32xf32, #tpu.memory_space<vmem>>, vector<1x8x8x32xf32>
    %302 = vector.shape_cast %301 : vector<1x8x8x32xf32> to vector<8x8x32xf32>
    %303 = vector.shape_cast %302 : vector<8x8x32xf32> to vector<64x32xf32>
    %c704_322 = arith.constant 704 : index
    %c0_323 = arith.constant 0 : index
    %304 = vector.load %arg4[%c704_322, %c0_323] : memref<800x128xf32, #tpu.memory_space<vmem>>, vector<32x128xf32>
    %cst_324 = arith.constant dense<0.000000e+00> : vector<64x128xf32>
    %305 = tpu.matmul %303, %304, %cst_324 {dimension_numbers = #tpu.dot_dimension_numbers<[1], [0], [0], [1], [0, 0, 1, 1], [], []>} : vector<64x32xf32>, vector<32x128xf32>, vector<64x128xf32> -> vector<64x128xf32>
    %306 = arith.addf %300, %305 : vector<64x128xf32>
    %c1_325 = arith.constant 1 : index
    %c4_326 = arith.constant 4 : index
    %c3_327 = arith.constant 3 : index
    %c0_328 = arith.constant 0 : index
    %307 = vector.load %arg7[%c1_325, %c4_326, %c3_327, %c0_328] : memref<2x12x16x32xf32, #tpu.memory_space<vmem>>, vector<1x8x8x32xf32>
    %308 = vector.shape_cast %307 : vector<1x8x8x32xf32> to vector<8x8x32xf32>
    %309 = vector.shape_cast %308 : vector<8x8x32xf32> to vector<64x32xf32>
    %c736_329 = arith.constant 736 : index
    %c0_330 = arith.constant 0 : index
    %310 = vector.load %arg4[%c736_329, %c0_330] : memref<800x128xf32, #tpu.memory_space<vmem>>, vector<32x128xf32>
    %cst_331 = arith.constant dense<0.000000e+00> : vector<64x128xf32>
    %311 = tpu.matmul %309, %310, %cst_331 {dimension_numbers = #tpu.dot_dimension_numbers<[1], [0], [0], [1], [0, 0, 1, 1], [], []>} : vector<64x32xf32>, vector<32x128xf32>, vector<64x128xf32> -> vector<64x128xf32>
    %312 = arith.addf %306, %311 : vector<64x128xf32>
    %c1_332 = arith.constant 1 : index
    %c4_333 = arith.constant 4 : index
    %c4_334 = arith.constant 4 : index
    %c0_335 = arith.constant 0 : index
    %313 = vector.load %arg7[%c1_332, %c4_333, %c4_334, %c0_335] : memref<2x12x16x32xf32, #tpu.memory_space<vmem>>, vector<1x8x8x32xf32>
    %314 = vector.shape_cast %313 : vector<1x8x8x32xf32> to vector<8x8x32xf32>
    %315 = vector.shape_cast %314 : vector<8x8x32xf32> to vector<64x32xf32>
    %c768_336 = arith.constant 768 : index
    %c0_337 = arith.constant 0 : index
    %316 = vector.load %arg4[%c768_336, %c0_337] : memref<800x128xf32, #tpu.memory_space<vmem>>, vector<32x128xf32>
    %cst_338 = arith.constant dense<0.000000e+00> : vector<64x128xf32>
    %317 = tpu.matmul %315, %316, %cst_338 {dimension_numbers = #tpu.dot_dimension_numbers<[1], [0], [0], [1], [0, 0, 1, 1], [], []>} : vector<64x32xf32>, vector<32x128xf32>, vector<64x128xf32> -> vector<64x128xf32>
    %318 = arith.addf %312, %317 : vector<64x128xf32>
    %cst_339 = arith.constant 0.000000e+00 : f32
    %319 = vector.broadcast %cst_339 : f32 to vector<64x128xf32>
    %320 = arith.maximumf %318, %319 : vector<64x128xf32>
    %c1_340 = arith.constant 1 : index
    %c0_341 = arith.constant 0 : index
    %c0_342 = arith.constant 0 : index
    %321 = vector.load %arg6[%c1_340, %c0_341, %c0_342] : memref<2x64x128xf32, #tpu.memory_space<vmem>>, vector<1x64x128xf32>
    %322 = vector.shape_cast %321 : vector<1x64x128xf32> to vector<64x128xf32>
    %323 = vector.shape_cast %320 : vector<64x128xf32> to vector<1x64x128xf32>
    tpu.vector_store %arg6[%c1_340, %c0_341, %c0_342], %323 {strides = array<i32>} : memref<2x64x128xf32, #tpu.memory_space<vmem>>, vector<1x64x128xf32>,
    return
  }
  func.func @transform_0(%arg0: i32) -> (i32, i32, i32) {
    %c0_i32 = arith.constant 0 : i32
    %c0_i32_0 = arith.constant 0 : i32
    %c0_i32_1 = arith.constant 0 : i32
    return %arg0, %c0_i32, %c0_i32_0 : i32, i32, i32
  }
  func.func @transform_1(%arg0: i32) -> (i32, i32) {
    %c0_i32 = arith.constant 0 : i32
    %c0_i32_0 = arith.constant 0 : i32
    %c0_i32_1 = arith.constant 0 : i32
    return %c0_i32, %c0_i32_0 : i32, i32
  }
  func.func @transform_2(%arg0: i32) -> (i32, i32) {
    %c0_i32 = arith.constant 0 : i32
    %c0_i32_0 = arith.constant 0 : i32
    %c0_i32_1 = arith.constant 0 : i32
    return %c0_i32, %c0_i32_0 : i32, i32
  }
  func.func @transform_3(%arg0: i32) -> (i32, i32) {
    %c0_i32 = arith.constant 0 : i32
    %c0_i32_0 = arith.constant 0 : i32
    %c0_i32_1 = arith.constant 0 : i32
    return %c0_i32, %c0_i32_0 : i32, i32
  }
  func.func @transform_4(%arg0: i32) -> (i32, i32) {
    %c0_i32 = arith.constant 0 : i32
    %c0_i32_0 = arith.constant 0 : i32
    %c0_i32_1 = arith.constant 0 : i32
    return %c0_i32, %c0_i32_0 : i32, i32
  }
  func.func @transform_5(%arg0: i32) -> (i32, i32, i32) {
    %c0_i32 = arith.constant 0 : i32
    %c0_i32_0 = arith.constant 0 : i32
    %c0_i32_1 = arith.constant 0 : i32
    return %arg0, %c0_i32, %c0_i32_0 : i32, i32, i32
  }
}

</mosaic_0001>

<llo_original>
// kernel: sequential_forward.1
$region0: #{sequential_forward.1}
  #allocation0 [shape = 'u32[]', space=smem, size = 0x4, offset = 0x4, fixed_abs, tag = 'smem constant byte address 0x4 - core index']
  #allocation1 [shape = 'u32[144,128]{1,0:T(1,128)}', space=vmem, size = 0x12000, scoped, tag = 'internal scratch']
  #allocation2 [shape = 'f32[2,12,16,32]{3,2,1,0:T(8,128)}', space=vmem, size = 0x30000, scoped, tag = 'scratch operand']
  %s0 = inlined_call_operand.vmem [shape: f32[2,192,32], index: 0, kind: input, shape index: {}]
  %s1 = inlined_call_operand.vmem [shape: f32[32,32], index: 1, kind: input, shape index: {}]
  %s2 = inlined_call_operand.vmem [shape: f32[1,32], index: 2, kind: input, shape index: {}]
  %s3 = inlined_call_operand.vmem [shape: f32[800,128], index: 3, kind: input, shape index: {}]
  %s4 = inlined_call_operand.vmem [shape: f32[1,128], index: 4, kind: input, shape index: {}]
  %s5 = inlined_call_operand.vmem [shape: f32[2,64,128], index: 5, kind: output, shape index: {}]
  %s6 = sld [smem:[#allocation0]]
  $region30: #{sequential_forward.1} parent=0
    _
  %s8 = ssub.s32 1, %s6
  %s9 = scalar_select 0, %s8, %s6
  // Predicated region
  $region2: #{sequential_forward.1} parent=0 // pred_check
    _
  $region3: #{sequential_forward.1} parent=0 // pred_check_branch
    %11 = sbr.rel (0) target = $region5
  $region4: #{sequential_forward.1} parent=0 // pred_region
    _
  $region5: #{sequential_forward.1} parent=0 // pred_fallthru
    _
  // Predicated region
  $region6: #{sequential_forward.1} parent=0 // pred_check
    _
  $region7: #{sequential_forward.1} parent=0 // pred_check_branch
    %13 = sbr.rel (0) target = $region9
  $region8: #{sequential_forward.1} parent=0 // pred_region
    _
  $region9: #{sequential_forward.1} parent=0 // pred_fallthru
    _
  // Predicated region
  $region10: #{sequential_forward.1} parent=0 // pred_check
    _
  $region11: #{sequential_forward.1} parent=0 // pred_check_branch
    %15 = sbr.rel (0) target = $region13
  $region12: #{sequential_forward.1} parent=0 // pred_region
    _
  $region13: #{sequential_forward.1} parent=0 // pred_fallthru
    _
  // Predicated region
  $region14: #{sequential_forward.1} parent=0 // pred_check
    _
  $region15: #{sequential_forward.1} parent=0 // pred_check_branch
    %17 = sbr.rel (0) target = $region17
  $region16: #{sequential_forward.1} parent=0 // pred_region
    _
  $region17: #{sequential_forward.1} parent=0 // pred_fallthru
    _
  // Predicated region
  $region18: #{sequential_forward.1} parent=0 // pred_check
    _
  $region19: #{sequential_forward.1} parent=0 // pred_check_branch
    %19 = sbr.rel (0) target = $region21
  $region20: #{sequential_forward.1} parent=0 // pred_region
    _
  $region21: #{sequential_forward.1} parent=0 // pred_fallthru
    _
  %v20 = vld [vmem:[%s0] sm:$0xff]
  %v21 = vld [vmem:[%s0 + $0x8] sm:$0xff]
  %v22 = vld [vmem:[%s0 + $0x10] sm:$0xff]
  %v23 = vld [vmem:[%s0 + $0x18] sm:$0xff]
  %v24 = vld [vmem:[%s0 + $0x20] sm:$0xff]
  %v25 = vld [vmem:[%s0 + $0x28] sm:$0xff]
  %v26 = vld [vmem:[%s0 + $0x30] sm:$0xff]
  %v27 = vld [vmem:[%s0 + $0x38] sm:$0xff]
  %v28 = vld [vmem:[%s0 + $0x40] sm:$0xff]
  %v29 = vld [vmem:[%s0 + $0x48] sm:$0xff]
  %v30 = vld [vmem:[%s0 + $0x50] sm:$0xff]
  %v31 = vld [vmem:[%s0 + $0x58] sm:$0xff]
  %v32 = vld [vmem:[%s0 + $0x60] sm:$0xff]
  %v33 = vld [vmem:[%s0 + $0x68] sm:$0xff]
  %v34 = vld [vmem:[%s0 + $0x70] sm:$0xff]
  %v35 = vld [vmem:[%s0 + $0x78] sm:$0xff]
  %v36 = vld [vmem:[%s0 + $0x80] sm:$0xff]
  %v37 = vld [vmem:[%s0 + $0x88] sm:$0xff]
  %v38 = vld [vmem:[%s0 + $0x90] sm:$0xff]
  %v39 = vld [vmem:[%s0 + $0x98] sm:$0xff]
  %v40 = vld [vmem:[%s0 + $0xa0] sm:$0xff]
  %v41 = vld [vmem:[%s0 + $0xa8] sm:$0xff]
  %v42 = vld [vmem:[%s0 + $0xb0] sm:$0xff]
  %v43 = vld [vmem:[%s0 + $0xb8] sm:$0xff]
  %v44 = vld [vmem:[%s0 + $0xc0] sm:$0xff]
  %v45 = vld [vmem:[%s0 + $0xc8] sm:$0xff]
  %v46 = vld [vmem:[%s0 + $0xd0] sm:$0xff]
  %v47 = vld [vmem:[%s0 + $0xd8] sm:$0xff]
  %v48 = vld [vmem:[%s0 + $0xe0] sm:$0xff]
  %v49 = vld [vmem:[%s0 + $0xe8] sm:$0xff]
  %v50 = vld [vmem:[%s0 + $0xf0] sm:$0xff]
  %v51 = vld [vmem:[%s0 + $0xf8] sm:$0xff]
  %v52 = vld [vmem:[%s0 + $0x100] sm:$0xff]
  %v53 = vld [vmem:[%s0 + $0x108] sm:$0xff]
  %v54 = vld [vmem:[%s0 + $0x110] sm:$0xff]
  %v55 = vld [vmem:[%s0 + $0x118] sm:$0xff]
  %v56 = vld [vmem:[%s0 + $0x120] sm:$0xff]
  %v57 = vld [vmem:[%s0 + $0x128] sm:$0xff]
  %v58 = vld [vmem:[%s0 + $0x130] sm:$0xff]
  %v59 = vld [vmem:[%s0 + $0x138] sm:$0xff]
  %v60 = vld [vmem:[%s0 + $0x140] sm:$0xff]
  %v61 = vld [vmem:[%s0 + $0x148] sm:$0xff]
  %v62 = vld [vmem:[%s0 + $0x150] sm:$0xff]
  %v63 = vld [vmem:[%s0 + $0x158] sm:$0xff]
  %v64 = vld [vmem:[%s0 + $0x160] sm:$0xff]
  %v65 = vld [vmem:[%s0 + $0x168] sm:$0xff]
  %v66 = vld [vmem:[%s0 + $0x170] sm:$0xff]
  %v67 = vld [vmem:[%s0 + $0x178] sm:$0xff]
  %v68 = vld [vmem:[%s1] sm:$0xff]
  %v69 = vld [vmem:[%s1 + $0x8] sm:$0xff]
  %v70 = vld [vmem:[%s1 + $0x10] sm:$0xff]
  %v71 = vld [vmem:[%s1 + $0x18] sm:$0xff]
  %v72 = vld [vmem:[%s2] sm:$0x1]
  %v74 = vlaneseq
  %v75 = vshrl.u32 %v74, 7
  %v76 = vsub.s32 0, %v75
  %v77 = vrot.slane %v72, %v76
  %vm79 = vcmask 261120
  %v81 = vsel %vm79, %v20, 0
  %v84 = vsel %vm79, %v21, 0
  %v87 = vsel %vm79, %v22, 0
  %v90 = vsel %vm79, %v23, 0
  %v93 = vsel %vm79, %v24, 0
  %v96 = vsel %vm79, %v25, 0
  %v99 = vsel %vm79, %v26, 0
  %v102 = vsel %vm79, %v27, 0
  %v105 = vsel %vm79, %v28, 0
  %v108 = vsel %vm79, %v29, 0
  %v111 = vsel %vm79, %v30, 0
  %v114 = vsel %vm79, %v31, 0
  %v117 = vsel %vm79, %v32, 0
  %v120 = vsel %vm79, %v33, 0
  %v123 = vsel %vm79, %v34, 0
  %v126 = vsel %vm79, %v35, 0
  %v129 = vsel %vm79, %v36, 0
  %v132 = vsel %vm79, %v37, 0
  %v135 = vsel %vm79, %v38, 0
  %v138 = vsel %vm79, %v39, 0
  %v141 = vsel %vm79, %v40, 0
  %v144 = vsel %vm79, %v41, 0
  %v147 = vsel %vm79, %v42, 0
  %v150 = vsel %vm79, %v43, 0
  %v153 = vsel %vm79, %v44, 0
  %v156 = vsel %vm79, %v45, 0
  %v159 = vsel %vm79, %v46, 0
  %v162 = vsel %vm79, %v47, 0
  %v165 = vsel %vm79, %v48, 0
  %v168 = vsel %vm79, %v49, 0
  %v171 = vsel %vm79, %v50, 0
  %v174 = vsel %vm79, %v51, 0
  %v177 = vsel %vm79, %v52, 0
  %v180 = vsel %vm79, %v53, 0
  %v183 = vsel %vm79, %v54, 0
  %v186 = vsel %vm79, %v55, 0
  %v189 = vsel %vm79, %v56, 0
  %v192 = vsel %vm79, %v57, 0
  %v195 = vsel %vm79, %v58, 0
  %v198 = vsel %vm79, %v59, 0
  %v201 = vsel %vm79, %v60, 0
  %v204 = vsel %vm79, %v61, 0
  %v207 = vsel %vm79, %v62, 0
  %v210 = vsel %vm79, %v63, 0
  %v213 = vsel %vm79, %v64, 0
  %v216 = vsel %vm79, %v65, 0
  %v219 = vsel %vm79, %v66, 0
  %v222 = vsel %vm79, %v67, 0
  %224 = vmatprep.subr.mxu0 0.0
  %225 = vmatpush1.msra.mxu0 %v68
  %226 = vmatprep.subr.mxu0 0.0
  %227 = vmatpush1.msra.mxu0 %v69
  %228 = vmatprep.subr.mxu0 0.0
  %229 = vmatpush1.msra.mxu0 %v70
  %230 = vmatprep.subr.mxu0 0.0
  %231 = vmatpush1.msra.mxu0 %v71
  %232 = vmatprep.subr.mxu0 0.0
  %233 = vmatpush1.msra.mxu0 0.0
  %234 = vmatprep.subr.mxu0 0.0
  %235 = vmatpush1.msra.mxu0 0.0
  %236 = vmatprep.subr.mxu0 0.0
  %237 = vmatpush1.msra.mxu0 0.0
  %238 = vmatprep.subr.mxu0 0.0
  %239 = vmatpush1.msra.mxu0 0.0
  %240 = vmatprep.subr.mxu0 0.0
  %241 = vmatpush1.msra.mxu0 0.0
  %242 = vmatprep.subr.mxu0 0.0
  %243 = vmatpush1.msra.mxu0 0.0
  %244 = vmatprep.subr.mxu0 0.0
  %245 = vmatpush1.msra.mxu0 0.0
  %246 = vmatprep.subr.mxu0 0.0
  %247 = vmatpush1.msra.mxu0 0.0
  %248 = vmatprep.subr.mxu0 0.0
  %249 = vmatpush1.msra.mxu0 0.0
  %250 = vmatprep.subr.mxu0 0.0
  %251 = vmatpush1.msra.mxu0 0.0
  %252 = vmatprep.subr.mxu0 0.0
  %253 = vmatpush1.msra.mxu0 0.0
  %254 = vmatprep.subr.mxu0 0.0
  %255 = vmatpush1.msra.mxu0 0.0
  %256 = vmatprep.subr.mxu0 0.0
  %257 = vmatpush1.msra.mxu0 0.0
  %258 = vmatprep.subr.mxu0 0.0
  %259 = vmatpush1.msra.mxu0 0.0
  %260 = vmatprep.subr.mxu0 0.0
  %261 = vmatpush1.msra.mxu0 0.0
  %262 = vmatprep.subr.mxu0 0.0
  %263 = vmatpush1.msra.mxu0 0.0
  %264 = vmatprep.subr.mxu0 0.0
  %265 = vmatpush1.msra.mxu0 0.0
  %266 = vmatprep.subr.mxu0 0.0
  %267 = vmatpush1.msra.mxu0 0.0
  %268 = vmatprep.subr.mxu0 0.0
  %269 = vmatpush1.msra.mxu0 0.0
  %270 = vmatprep.subr.mxu0 0.0
  %271 = vmatpush1.msra.mxu0 0.0
  %272 = vmatprep.subr.mxu0 0.0
  %273 = vmatpush1.msra.mxu0 0.0
  %274 = vmatprep.subr.mxu0 0.0
  %275 = vmatpush1.msra.mxu0 0.0
  %276 = vmatprep.subr.mxu0 0.0
  %277 = vmatpush1.msra.mxu0 0.0
  %278 = vmatprep.subr.mxu0 0.0
  %279 = vmatpush1.msra.mxu0 0.0
  %280 = vmatprep.subr.mxu0 0.0
  %281 = vmatpush1.msra.mxu0 0.0
  %282 = vmatprep.subr.mxu0 0.0
  %283 = vmatpush1.msra.mxu0 0.0
  %284 = vmatprep.subr.mxu0 0.0
  %285 = vmatpush1.msra.mxu0 0.0
  %286 = vmatprep.subr.mxu0 0.0
  %287 = vmatpush1.msra.mxu0 0.0
  %288 = vmatprep.mubr.f32.mxu0 0.0
  %289 = vmatmul.mubr.f32.gmra.mrb[0].mxu0 %v81
  %v290 = vpop.f32.mrb[0].mxu0
  %v291 = vadd.f32 %v77, %v290
  %v292 = vpop.f32.mrb[0].mxu0
  %293 = vmatprep.mubr.f32.mxu0 0.0
  %294 = vmatmul.mubr.f32.gmra.mrb[0].mxu0 %v84
  %v295 = vpop.f32.mrb[0].mxu0
  %v296 = vadd.f32 %v77, %v295
  %v297 = vpop.f32.mrb[0].mxu0
  %298 = vmatprep.mubr.f32.mxu0 0.0
  %299 = vmatmul.mubr.f32.gmra.mrb[0].mxu0 %v87
  %v300 = vpop.f32.mrb[0].mxu0
  %v301 = vadd.f32 %v77, %v300
  %v302 = vpop.f32.mrb[0].mxu0
  %303 = vmatprep.mubr.f32.mxu0 0.0
  %304 = vmatmul.mubr.f32.gmra.mrb[0].mxu0 %v90
  %v305 = vpop.f32.mrb[0].mxu0
  %v306 = vadd.f32 %v77, %v305
  %v307 = vpop.f32.mrb[0].mxu0
  %308 = vmatprep.mubr.f32.mxu0 0.0
  %309 = vmatmul.mubr.f32.gmra.mrb[0].mxu0 %v93
  %v310 = vpop.f32.mrb[0].mxu0
  %v311 = vadd.f32 %v77, %v310
  %v312 = vpop.f32.mrb[0].mxu0
  %313 = vmatprep.mubr.f32.mxu0 0.0
  %314 = vmatmul.mubr.f32.gmra.mrb[0].mxu0 %v96
  %v315 = vpop.f32.mrb[0].mxu0
  %v316 = vadd.f32 %v77, %v315
  %v317 = vpop.f32.mrb[0].mxu0
  %318 = vmatprep.mubr.f32.mxu0 0.0
  %319 = vmatmul.mubr.f32.gmra.mrb[0].mxu0 %v99
  %v320 = vpop.f32.mrb[0].mxu0
  %v321 = vadd.f32 %v77, %v320
  %v322 = vpop.f32.mrb[0].mxu0
  %323 = vmatprep.mubr.f32.mxu0 0.0
  %324 = vmatmul.mubr.f32.gmra.mrb[0].mxu0 %v102
  %v325 = vpop.f32.mrb[0].mxu0
  %v326 = vadd.f32 %v77, %v325
  %v327 = vpop.f32.mrb[0].mxu0
  %328 = vmatprep.mubr.f32.mxu0 0.0
  %329 = vmatmul.mubr.f32.gmra.mrb[0].mxu0 %v105
  %v330 = vpop.f32.mrb[0].mxu0
  %v331 = vadd.f32 %v77, %v330
  %v332 = vpop.f32.mrb[0].mxu0
  %333 = vmatprep.mubr.f32.mxu0 0.0
  %334 = vmatmul.mubr.f32.gmra.mrb[0].mxu0 %v108
  %v335 = vpop.f32.mrb[0].mxu0
  %v336 = vadd.f32 %v77, %v335
  %v337 = vpop.f32.mrb[0].mxu0
  %338 = vmatprep.mubr.f32.mxu0 0.0
  %339 = vmatmul.mubr.f32.gmra.mrb[0].mxu0 %v111
  %v340 = vpop.f32.mrb[0].mxu0
  %v341 = vadd.f32 %v77, %v340
  %v342 = vpop.f32.mrb[0].mxu0
  %343 = vmatprep.mubr.f32.mxu0 0.0
  %344 = vmatmul.mubr.f32.gmra.mrb[0].mxu0 %v114
  %v345 = vpop.f32.mrb[0].mxu0
  %v346 = vadd.f32 %v77, %v345
  %v347 = vpop.f32.mrb[0].mxu0
  %348 = vmatprep.mubr.f32.mxu0 0.0
  %349 = vmatmul.mubr.f32.gmra.mrb[0].mxu0 %v117
  %v350 = vpop.f32.mrb[0].mxu0
  %v351 = vadd.f32 %v77, %v350
  %v352 = vpop.f32.mrb[0].mxu0
  %353 = vmatprep.mubr.f32.mxu0 0.0
  %354 = vmatmul.mubr.f32.gmra.mrb[0].mxu0 %v120
  %v355 = vpop.f32.mrb[0].mxu0
  %v356 = vadd.f32 %v77, %v355
  %v357 = vpop.f32.mrb[0].mxu0
  %358 = vmatprep.mubr.f32.mxu0 0.0
  %359 = vmatmul.mubr.f32.gmra.mrb[0].mxu0 %v123
  %v360 = vpop.f32.mrb[0].mxu0
  %v361 = vadd.f32 %v77, %v360
  %v362 = vpop.f32.mrb[0].mxu0
  %363 = vmatprep.mubr.f32.mxu0 0.0
  %364 = vmatmul.mubr.f32.gmra.mrb[0].mxu0 %v126
  %v365 = vpop.f32.mrb[0].mxu0
  %v366 = vadd.f32 %v77, %v365
  %v367 = vpop.f32.mrb[0].mxu0
  %368 = vmatprep.mubr.f32.mxu0 0.0
  %369 = vmatmul.mubr.f32.gmra.mrb[0].mxu0 %v129
  %v370 = vpop.f32.mrb[0].mxu0
  %v371 = vadd.f32 %v77, %v370
  %v372 = vpop.f32.mrb[0].mxu0
  %373 = vmatprep.mubr.f32.mxu0 0.0
  %374 = vmatmul.mubr.f32.gmra.mrb[0].mxu0 %v132
  %v375 = vpop.f32.mrb[0].mxu0
  %v376 = vadd.f32 %v77, %v375
  %v377 = vpop.f32.mrb[0].mxu0
  %378 = vmatprep.mubr.f32.mxu0 0.0
  %379 = vmatmul.mubr.f32.gmra.mrb[0].mxu0 %v135
  %v380 = vpop.f32.mrb[0].mxu0
  %v381 = vadd.f32 %v77, %v380
  %v382 = vpop.f32.mrb[0].mxu0
  %383 = vmatprep.mubr.f32.mxu0 0.0
  %384 = vmatmul.mubr.f32.gmra.mrb[0].mxu0 %v138
  %v385 = vpop.f32.mrb[0].mxu0
  %v386 = vadd.f32 %v77, %v385
  %v387 = vpop.f32.mrb[0].mxu0
  %388 = vmatprep.mubr.f32.mxu0 0.0
  %389 = vmatmul.mubr.f32.gmra.mrb[0].mxu0 %v141
  %v390 = vpop.f32.mrb[0].mxu0
  %v391 = vadd.f32 %v77, %v390
  %v392 = vpop.f32.mrb[0].mxu0
  %393 = vmatprep.mubr.f32.mxu0 0.0
  %394 = vmatmul.mubr.f32.gmra.mrb[0].mxu0 %v144
  %v395 = vpop.f32.mrb[0].mxu0
  %v396 = vadd.f32 %v77, %v395
  %v397 = vpop.f32.mrb[0].mxu0
  %398 = vmatprep.mubr.f32.mxu0 0.0
  %399 = vmatmul.mubr.f32.gmra.mrb[0].mxu0 %v147
  %v400 = vpop.f32.mrb[0].mxu0
  %v401 = vadd.f32 %v77, %v400
  %v402 = vpop.f32.mrb[0].mxu0
  %403 = vmatprep.mubr.f32.mxu0 0.0
  %404 = vmatmul.mubr.f32.gmra.mrb[0].mxu0 %v150
  %v405 = vpop.f32.mrb[0].mxu0
  %v406 = vadd.f32 %v77, %v405
  %v407 = vpop.f32.mrb[0].mxu0
  %408 = vmatprep.mubr.f32.mxu0 0.0
  %409 = vmatmul.mubr.f32.gmra.mrb[0].mxu0 %v153
  %v410 = vpop.f32.mrb[0].mxu0
  %v411 = vadd.f32 %v77, %v410
  %v412 = vpop.f32.mrb[0].mxu0
  %413 = vmatprep.mubr.f32.mxu0 0.0
  %414 = vmatmul.mubr.f32.gmra.mrb[0].mxu0 %v156
  %v415 = vpop.f32.mrb[0].mxu0
  %v416 = vadd.f32 %v77, %v415
  %v417 = vpop.f32.mrb[0].mxu0
  %418 = vmatprep.mubr.f32.mxu0 0.0
  %419 = vmatmul.mubr.f32.gmra.mrb[0].mxu0 %v159
  %v420 = vpop.f32.mrb[0].mxu0
  %v421 = vadd.f32 %v77, %v420
  %v422 = vpop.f32.mrb[0].mxu0
  %423 = vmatprep.mubr.f32.mxu0 0.0
  %424 = vmatmul.mubr.f32.gmra.mrb[0].mxu0 %v162
  %v425 = vpop.f32.mrb[0].mxu0
  %v426 = vadd.f32 %v77, %v425
  %v427 = vpop.f32.mrb[0].mxu0
  %428 = vmatprep.mubr.f32.mxu0 0.0
  %429 = vmatmul.mubr.f32.gmra.mrb[0].mxu0 %v165
  %v430 = vpop.f32.mrb[0].mxu0
  %v431 = vadd.f32 %v77, %v430
  %v432 = vpop.f32.mrb[0].mxu0
  %433 = vmatprep.mubr.f32.mxu0 0.0
  %434 = vmatmul.mubr.f32.gmra.mrb[0].mxu0 %v168
  %v435 = vpop.f32.mrb[0].mxu0
  %v436 = vadd.f32 %v77, %v435
  %v437 = vpop.f32.mrb[0].mxu0
  %438 = vmatprep.mubr.f32.mxu0 0.0
  %439 = vmatmul.mubr.f32.gmra.mrb[0].mxu0 %v171
  %v440 = vpop.f32.mrb[0].mxu0
  %v441 = vadd.f32 %v77, %v440
  %v442 = vpop.f32.mrb[0].mxu0
  %443 = vmatprep.mubr.f32.mxu0 0.0
  %444 = vmatmul.mubr.f32.gmra.mrb[0].mxu0 %v174
  %v445 = vpop.f32.mrb[0].mxu0
  %v446 = vadd.f32 %v77, %v445
  %v447 = vpop.f32.mrb[0].mxu0
  %448 = vmatprep.mubr.f32.mxu0 0.0
  %449 = vmatmul.mubr.f32.gmra.mrb[0].mxu0 %v177
  %v450 = vpop.f32.mrb[0].mxu0
  %v451 = vadd.f32 %v77, %v450
  %v452 = vpop.f32.mrb[0].mxu0
  %453 = vmatprep.mubr.f32.mxu0 0.0
  %454 = vmatmul.mubr.f32.gmra.mrb[0].mxu0 %v180
  %v455 = vpop.f32.mrb[0].mxu0
  %v456 = vadd.f32 %v77, %v455
  %v457 = vpop.f32.mrb[0].mxu0
  %458 = vmatprep.mubr.f32.mxu0 0.0
  %459 = vmatmul.mubr.f32.gmra.mrb[0].mxu0 %v183
  %v460 = vpop.f32.mrb[0].mxu0
  %v461 = vadd.f32 %v77, %v460
  %v462 = vpop.f32.mrb[0].mxu0
  %463 = vmatprep.mubr.f32.mxu0 0.0
  %464 = vmatmul.mubr.f32.gmra.mrb[0].mxu0 %v186
  %v465 = vpop.f32.mrb[0].mxu0
  %v466 = vadd.f32 %v77, %v465
  %v467 = vpop.f32.mrb[0].mxu0
  %468 = vmatprep.mubr.f32.mxu0 0.0
  %469 = vmatmul.mubr.f32.gmra.mrb[0].mxu0 %v189
  %v470 = vpop.f32.mrb[0].mxu0
  %v471 = vadd.f32 %v77, %v470
  %v472 = vpop.f32.mrb[0].mxu0
  %473 = vmatprep.mubr.f32.mxu0 0.0
  %474 = vmatmul.mubr.f32.gmra.mrb[0].mxu0 %v192
  %v475 = vpop.f32.mrb[0].mxu0
  %v476 = vadd.f32 %v77, %v475
  %v477 = vpop.f32.mrb[0].mxu0
  %478 = vmatprep.mubr.f32.mxu0 0.0
  %479 = vmatmul.mubr.f32.gmra.mrb[0].mxu0 %v195
  %v480 = vpop.f32.mrb[0].mxu0
  %v481 = vadd.f32 %v77, %v480
  %v482 = vpop.f32.mrb[0].mxu0
  %483 = vmatprep.mubr.f32.mxu0 0.0
  %484 = vmatmul.mubr.f32.gmra.mrb[0].mxu0 %v198
  %v485 = vpop.f32.mrb[0].mxu0
  %v486 = vadd.f32 %v77, %v485
  %v487 = vpop.f32.mrb[0].mxu0
  %488 = vmatprep.mubr.f32.mxu0 0.0
  %489 = vmatmul.mubr.f32.gmra.mrb[0].mxu0 %v201
  %v490 = vpop.f32.mrb[0].mxu0
  %v491 = vadd.f32 %v77, %v490
  %v492 = vpop.f32.mrb[0].mxu0
  %493 = vmatprep.mubr.f32.mxu0 0.0
  %494 = vmatmul.mubr.f32.gmra.mrb[0].mxu0 %v204
  %v495 = vpop.f32.mrb[0].mxu0
  %v496 = vadd.f32 %v77, %v495
  %v497 = vpop.f32.mrb[0].mxu0
  %498 = vmatprep.mubr.f32.mxu0 0.0
  %499 = vmatmul.mubr.f32.gmra.mrb[0].mxu0 %v207
  %v500 = vpop.f32.mrb[0].mxu0
  %v501 = vadd.f32 %v77, %v500
  %v502 = vpop.f32.mrb[0].mxu0
  %503 = vmatprep.mubr.f32.mxu0 0.0
  %504 = vmatmul.mubr.f32.gmra.mrb[0].mxu0 %v210
  %v505 = vpop.f32.mrb[0].mxu0
  %v506 = vadd.f32 %v77, %v505
  %v507 = vpop.f32.mrb[0].mxu0
  %508 = vmatprep.mubr.f32.mxu0 0.0
  %509 = vmatmul.mubr.f32.gmra.mrb[0].mxu0 %v213
  %v510 = vpop.f32.mrb[0].mxu0
  %v511 = vadd.f32 %v77, %v510
  %v512 = vpop.f32.mrb[0].mxu0
  %513 = vmatprep.mubr.f32.mxu0 0.0
  %514 = vmatmul.mubr.f32.gmra.mrb[0].mxu0 %v216
  %v515 = vpop.f32.mrb[0].mxu0
  %v516 = vadd.f32 %v77, %v515
  %v517 = vpop.f32.mrb[0].mxu0
  %518 = vmatprep.mubr.f32.mxu0 0.0
  %519 = vmatmul.mubr.f32.gmra.mrb[0].mxu0 %v219
  %v520 = vpop.f32.mrb[0].mxu0
  %v521 = vadd.f32 %v77, %v520
  %v522 = vpop.f32.mrb[0].mxu0
  %523 = vmatprep.mubr.f32.mxu0 0.0
  %524 = vmatmul.mubr.f32.gmra.mrb[0].mxu0 %v222
  %v525 = vpop.f32.mrb[0].mxu0
  %v526 = vadd.f32 %v77, %v525
  %v527 = vpop.f32.mrb[0].mxu0
  %528 = vdwg.mxu0
  %v529 = vmax.f32 %v291, 0.0
  %v530 = vmax.f32 %v296, 0.0
  %v531 = vmax.f32 %v301, 0.0
  %v532 = vmax.f32 %v306, 0.0
  %v533 = vmax.f32 %v311, 0.0
  %v534 = vmax.f32 %v316, 0.0
  %v535 = vmax.f32 %v321, 0.0
  %v536 = vmax.f32 %v326, 0.0
  %v537 = vmax.f32 %v331, 0.0
  %v538 = vmax.f32 %v336, 0.0
  %v539 = vmax.f32 %v341, 0.0
  %v540 = vmax.f32 %v346, 0.0
  %v541 = vmax.f32 %v351, 0.0
  %v542 = vmax.f32 %v356, 0.0
  %v543 = vmax.f32 %v361, 0.0
  %v544 = vmax.f32 %v366, 0.0
  %v545 = vmax.f32 %v371, 0.0
  %v546 = vmax.f32 %v376, 0.0
  %v547 = vmax.f32 %v381, 0.0
  %v548 = vmax.f32 %v386, 0.0
  %v549 = vmax.f32 %v391, 0.0
  %v550 = vmax.f32 %v396, 0.0
  %v551 = vmax.f32 %v401, 0.0
  %v552 = vmax.f32 %v406, 0.0
  %v553 = vmax.f32 %v411, 0.0
  %v554 = vmax.f32 %v416, 0.0
  %v555 = vmax.f32 %v421, 0.0
  %v556 = vmax.f32 %v426, 0.0
  %v557 = vmax.f32 %v431, 0.0
  %v558 = vmax.f32 %v436, 0.0
  %v559 = vmax.f32 %v441, 0.0
  %v560 = vmax.f32 %v446, 0.0
  %v561 = vmax.f32 %v451, 0.0
  %v562 = vmax.f32 %v456, 0.0
  %v563 = vmax.f32 %v461, 0.0
  %v564 = vmax.f32 %v466, 0.0
  %v565 = vmax.f32 %v471, 0.0
  %v566 = vmax.f32 %v476, 0.0
  %v567 = vmax.f32 %v481, 0.0
  %v568 = vmax.f32 %v486, 0.0
  %v569 = vmax.f32 %v491, 0.0
  %v570 = vmax.f32 %v496, 0.0
  %v571 = vmax.f32 %v501, 0.0
  %v572 = vmax.f32 %v506, 0.0
  %v573 = vmax.f32 %v511, 0.0
  %v574 = vmax.f32 %v516, 0.0
  %v575 = vmax.f32 %v521, 0.0
  %v576 = vmax.f32 %v526, 0.0
  %577 = vst.msk [vmem:[#allocation2] sm:$0xff] %vm79, %v529
  %578 = vst.msk [vmem:[#allocation2 + $0x8] sm:$0xff] %vm79, %v530
  %579 = vst.msk [vmem:[#allocation2 + $0x10] sm:$0xff] %vm79, %v531
  %580 = vst.msk [vmem:[#allocation2 + $0x18] sm:$0xff] %vm79, %v532
  %581 = vst.msk [vmem:[#allocation2 + $0x20] sm:$0xff] %vm79, %v533
  %582 = vst.msk [vmem:[#allocation2 + $0x28] sm:$0xff] %vm79, %v534
  %583 = vst.msk [vmem:[#allocation2 + $0x30] sm:$0xff] %vm79, %v535
  %584 = vst.msk [vmem:[#allocation2 + $0x38] sm:$0xff] %vm79, %v536
  %585 = vst.msk [vmem:[#allocation2 + $0x40] sm:$0xff] %vm79, %v537
  %586 = vst.msk [vmem:[#allocation2 + $0x48] sm:$0xff] %vm79, %v538
  %587 = vst.msk [vmem:[#allocation2 + $0x50] sm:$0xff] %vm79, %v539
  %588 = vst.msk [vmem:[#allocation2 + $0x58] sm:$0xff] %vm79, %v540
  %589 = vst.msk [vmem:[#allocation2 + $0x60] sm:$0xff] %vm79, %v541
  %590 = vst.msk [vmem:[#allocation2 + $0x68] sm:$0xff] %vm79, %v542
  %591 = vst.msk [vmem:[#allocation2 + $0x70] sm:$0xff] %vm79, %v543
  %592 = vst.msk [vmem:[#allocation2 + $0x78] sm:$0xff] %vm79, %v544
  %593 = vst.msk [vmem:[#allocation2 + $0x80] sm:$0xff] %vm79, %v545
  %594 = vst.msk [vmem:[#allocation2 + $0x88] sm:$0xff] %vm79, %v546
  %595 = vst.msk [vmem:[#allocation2 + $0x90] sm:$0xff] %vm79, %v547
  %596 = vst.msk [vmem:[#allocation2 + $0x98] sm:$0xff] %vm79, %v548
  %597 = vst.msk [vmem:[#allocation2 + $0xa0] sm:$0xff] %vm79, %v549
  %598 = vst.msk [vmem:[#allocation2 + $0xa8] sm:$0xff] %vm79, %v550
  %599 = vst.msk [vmem:[#allocation2 + $0xb0] sm:$0xff] %vm79, %v551
  %600 = vst.msk [vmem:[#allocation2 + $0xb8] sm:$0xff] %vm79, %v552
  %601 = vst.msk [vmem:[#allocation2 + $0xc0] sm:$0xff] %vm79, %v553
  %602 = vst.msk [vmem:[#allocation2 + $0xc8] sm:$0xff] %vm79, %v554
  %603 = vst.msk [vmem:[#allocation2 + $0xd0] sm:$0xff] %vm79, %v555
  %604 = vst.msk [vmem:[#allocation2 + $0xd8] sm:$0xff] %vm79, %v556
  %605 = vst.msk [vmem:[#allocation2 + $0xe0] sm:$0xff] %vm79, %v557
  %606 = vst.msk [vmem:[#allocation2 + $0xe8] sm:$0xff] %vm79, %v558
  %607 = vst.msk [vmem:[#allocation2 + $0xf0] sm:$0xff] %vm79, %v559
  %608 = vst.msk [vmem:[#allocation2 + $0xf8] sm:$0xff] %vm79, %v560
  %609 = vst.msk [vmem:[#allocation2 + $0x100] sm:$0xff] %vm79, %v561
  %610 = vst.msk [vmem:[#allocation2 + $0x108] sm:$0xff] %vm79, %v562
  %611 = vst.msk [vmem:[#allocation2 + $0x110] sm:$0xff] %vm79, %v563
  %612 = vst.msk [vmem:[#allocation2 + $0x118] sm:$0xff] %vm79, %v564
  %613 = vst.msk [vmem:[#allocation2 + $0x120] sm:$0xff] %vm79, %v565
  %614 = vst.msk [vmem:[#allocation2 + $0x128] sm:$0xff] %vm79, %v566
  %615 = vst.msk [vmem:[#allocation2 + $0x130] sm:$0xff] %vm79, %v567
  %616 = vst.msk [vmem:[#allocation2 + $0x138] sm:$0xff] %vm79, %v568
  %617 = vst.msk [vmem:[#allocation2 + $0x140] sm:$0xff] %vm79, %v569
  %618 = vst.msk [vmem:[#allocation2 + $0x148] sm:$0xff] %vm79, %v570
  %619 = vst.msk [vmem:[#allocation2 + $0x150] sm:$0xff] %vm79, %v571
  %620 = vst.msk [vmem:[#allocation2 + $0x158] sm:$0xff] %vm79, %v572
  %621 = vst.msk [vmem:[#allocation2 + $0x160] sm:$0xff] %vm79, %v573
  %622 = vst.msk [vmem:[#allocation2 + $0x168] sm:$0xff] %vm79, %v574
  %623 = vst.msk [vmem:[#allocation2 + $0x170] sm:$0xff] %vm79, %v575
  %624 = vst.msk [vmem:[#allocation2 + $0x178] sm:$0xff] %vm79, %v576
  %v625 = vld [vmem:[%s4] sm:$0x1]
  %v627 = vlaneseq
  %v628 = vshrl.u32 %v627, 7
  %v629 = vsub.s32 0, %v628
  %v630 = vrot.slane %v625, %v629
  %v632 = vld [vmem:[#allocation2] sm:$0xff]
  %v633 = vld [vmem:[#allocation2 + $0x10] sm:$0xff]
  %v634 = vld [vmem:[#allocation2 + $0x20] sm:$0xff]
  %v635 = vld [vmem:[#allocation2 + $0x30] sm:$0xff]
  %v636 = vld [vmem:[#allocation2 + $0x40] sm:$0xff]
  %v637 = vld [vmem:[#allocation2 + $0x50] sm:$0xff]
  %v638 = vld [vmem:[#allocation2 + $0x60] sm:$0xff]
  %v639 = vld [vmem:[#allocation2 + $0x70] sm:$0xff]
  %v640 = vld [vmem:[%s3] sm:$0xff]
  %v641 = vld [vmem:[%s3 + $0x8] sm:$0xff]
  %v642 = vld [vmem:[%s3 + $0x10] sm:$0xff]
  %v643 = vld [vmem:[%s3 + $0x18] sm:$0xff]
  %v645 = vsel %vm79, %v632, 0
  %v648 = vsel %vm79, %v633, 0
  %v651 = vsel %vm79, %v634, 0
  %v654 = vsel %vm79, %v635, 0
  %v657 = vsel %vm79, %v636, 0
  %v660 = vsel %vm79, %v637, 0
  %v663 = vsel %vm79, %v638, 0
  %v666 = vsel %vm79, %v639, 0
  %668 = vmatprep.subr.mxu0 0.0
  %669 = vmatpush1.msra.mxu0 %v640
  %670 = vmatprep.subr.mxu0 0.0
  %671 = vmatpush1.msra.mxu0 %v641
  %672 = vmatprep.subr.mxu0 0.0
  %673 = vmatpush1.msra.mxu0 %v642
  %674 = vmatprep.subr.mxu0 0.0
  %675 = vmatpush1.msra.mxu0 %v643
  %676 = vmatprep.subr.mxu0 0.0
  %677 = vmatpush1.msra.mxu0 0.0
  %678 = vmatprep.subr.mxu0 0.0
  %679 = vmatpush1.msra.mxu0 0.0
  %680 = vmatprep.subr.mxu0 0.0
  %681 = vmatpush1.msra.mxu0 0.0
  %682 = vmatprep.subr.mxu0 0.0
  %683 = vmatpush1.msra.mxu0 0.0
  %684 = vmatprep.subr.mxu0 0.0
  %685 = vmatpush1.msra.mxu0 0.0
  %686 = vmatprep.subr.mxu0 0.0
  %687 = vmatpush1.msra.mxu0 0.0
  %688 = vmatprep.subr.mxu0 0.0
  %689 = vmatpush1.msra.mxu0 0.0
  %690 = vmatprep.subr.mxu0 0.0
  %691 = vmatpush1.msra.mxu0 0.0
  %692 = vmatprep.subr.mxu0 0.0
  %693 = vmatpush1.msra.mxu0 0.0
  %694 = vmatprep.subr.mxu0 0.0
  %695 = vmatpush1.msra.mxu0 0.0
  %696 = vmatprep.subr.mxu0 0.0
  %697 = vmatpush1.msra.mxu0 0.0
  %698 = vmatprep.subr.mxu0 0.0
  %699 = vmatpush1.msra.mxu0 0.0
  %700 = vmatprep.subr.mxu0 0.0
  %701 = vmatpush1.msra.mxu0 0.0
  %702 = vmatprep.subr.mxu0 0.0
  %703 = vmatpush1.msra.mxu0 0.0
  %704 = vmatprep.subr.mxu0 0.0
  %705 = vmatpush1.msra.mxu0 0.0
  %706 = vmatprep.subr.mxu0 0.0
  %707 = vmatpush1.msra.mxu0 0.0
  %708 = vmatprep.subr.mxu0 0.0
  %709 = vmatpush1.msra.mxu0 0.0
  %710 = vmatprep.subr.mxu0 0.0
  %711 = vmatpush1.msra.mxu0 0.0
  %712 = vmatprep.subr.mxu0 0.0
  %713 = vmatpush1.msra.mxu0 0.0
  %714 = vmatprep.subr.mxu0 0.0
  %715 = vmatpush1.msra.mxu0 0.0
  %716 = vmatprep.subr.mxu0 0.0
  %717 = vmatpush1.msra.mxu0 0.0
  %718 = vmatprep.subr.mxu0 0.0
  %719 = vmatpush1.msra.mxu0 0.0
  %720 = vmatprep.subr.mxu0 0.0
  %721 = vmatpush1.msra.mxu0 0.0
  %722 = vmatprep.subr.mxu0 0.0
  %723 = vmatpush1.msra.mxu0 0.0
  %724 = vmatprep.subr.mxu0 0.0
  %725 = vmatpush1.msra.mxu0 0.0
  %726 = vmatprep.subr.mxu0 0.0
  %727 = vmatpush1.msra.mxu0 0.0
  %728 = vmatprep.subr.mxu0 0.0
  %729 = vmatpush1.msra.mxu0 0.0
  %730 = vmatprep.subr.mxu0 0.0
  %731 = vmatpush1.msra.mxu0 0.0
  %732 = vmatprep.mubr.f32.mxu0 0.0
  %733 = vmatmul.mubr.f32.gmra.mrb[0].mxu0 %v645
  %v734 = vpop.f32.mrb[0].mxu0
  %v735 = vadd.f32 0.0, %v734
  %v736 = vpop.f32.mrb[0].mxu0
  %737 = vmatprep.mubr.f32.mxu0 0.0
  %738 = vmatmul.mubr.f32.gmra.mrb[0].mxu0 %v648
  %v739 = vpop.f32.mrb[0].mxu0
  %v740 = vadd.f32 0.0, %v739
  %v741 = vpop.f32.mrb[0].mxu0
  %742 = vmatprep.mubr.f32.mxu0 0.0
  %743 = vmatmul.mubr.f32.gmra.mrb[0].mxu0 %v651
  %v744 = vpop.f32.mrb[0].mxu0
  %v745 = vadd.f32 0.0, %v744
  %v746 = vpop.f32.mrb[0].mxu0
  %747 = vmatprep.mubr.f32.mxu0 0.0
  %748 = vmatmul.mubr.f32.gmra.mrb[0].mxu0 %v654
  %v749 = vpop.f32.mrb[0].mxu0
  %v750 = vadd.f32 0.0, %v749
  %v751 = vpop.f32.mrb[0].mxu0
  %752 = vmatprep.mubr.f32.mxu0 0.0
  %753 = vmatmul.mubr.f32.gmra.mrb[0].mxu0 %v657
  %v754 = vpop.f32.mrb[0].mxu0
  %v755 = vadd.f32 0.0, %v754
  %v756 = vpop.f32.mrb[0].mxu0
  %757 = vmatprep.mubr.f32.mxu0 0.0
  %758 = vmatmul.mubr.f32.gmra.mrb[0].mxu0 %v660
  %v759 = vpop.f32.mrb[0].mxu0
  %v760 = vadd.f32 0.0, %v759
  %v761 = vpop.f32.mrb[0].mxu0
  %762 = vmatprep.mubr.f32.mxu0 0.0
  %763 = vmatmul.mubr.f32.gmra.mrb[0].mxu0 %v663
  %v764 = vpop.f32.mrb[0].mxu0
  %v765 = vadd.f32 0.0, %v764
  %v766 = vpop.f32.mrb[0].mxu0
  %767 = vmatprep.mubr.f32.mxu0 0.0
  %768 = vmatmul.mubr.f32.gmra.mrb[0].mxu0 %v666
  %v769 = vpop.f32.mrb[0].mxu0
  %v770 = vadd.f32 0.0, %v769
  %v771 = vpop.f32.mrb[0].mxu0
  %772 = vdwg.mxu0
  %v773 = vadd.f32 %v630, %v735
  %v774 = vadd.f32 %v630, %v740
  %v775 = vadd.f32 %v630, %v745
  %v776 = vadd.f32 %v630, %v750
  %v777 = vadd.f32 %v630, %v755
  %v778 = vadd.f32 %v630, %v760
  %v779 = vadd.f32 %v630, %v765
  %v780 = vadd.f32 %v630, %v770
  %v781 = vld [vmem:[#allocation2 + $0x1] sm:$0xff]
  %v782 = vld [vmem:[#allocation2 + $0x11] sm:$0xff]
  %v783 = vld [vmem:[#allocation2 + $0x21] sm:$0xff]
  %v784 = vld [vmem:[#allocation2 + $0x31] sm:$0xff]
  %v785 = vld [vmem:[#allocation2 + $0x41] sm:$0xff]
  %v786 = vld [vmem:[#allocation2 + $0x51] sm:$0xff]
  %v787 = vld [vmem:[#allocation2 + $0x61] sm:$0xff]
  %v788 = vld [vmem:[#allocation2 + $0x71] sm:$0xff]
  %v789 = vld [vmem:[%s3 + $0x20] sm:$0xff]
  %v790 = vld [vmem:[%s3 + $0x28] sm:$0xff]
  %v791 = vld [vmem:[%s3 + $0x30] sm:$0xff]
  %v792 = vld [vmem:[%s3 + $0x38] sm:$0xff]
  %v794 = vsel %vm79, %v781, 0
  %v797 = vsel %vm79, %v782, 0
  %v800 = vsel %vm79, %v783, 0
  %v803 = vsel %vm79, %v784, 0
  %v806 = vsel %vm79, %v785, 0
  %v809 = vsel %vm79, %v786, 0
  %v812 = vsel %vm79, %v787, 0
  %v815 = vsel %vm79, %v788, 0
  %817 = vmatprep.subr.mxu0 0.0
  %818 = vmatpush1.msra.mxu0 %v789
  %819 = vmatprep.subr.mxu0 0.0
  %820 = vmatpush1.msra.mxu0 %v790
  %821 = vmatprep.subr.mxu0 0.0
  %822 = vmatpush1.msra.mxu0 %v791
  %823 = vmatprep.subr.mxu0 0.0
  %824 = vmatpush1.msra.mxu0 %v792
  %825 = vmatprep.subr.mxu0 0.0
  %826 = vmatpush1.msra.mxu0 0.0
  %827 = vmatprep.subr.mxu0 0.0
  %828 = vmatpush1.msra.mxu0 0.0
  %829 = vmatprep.subr.mxu0 0.0
  %830 = vmatpush1.msra.mxu0 0.0
  %831 = vmatprep.subr.mxu0 0.0
  %832 = vmatpush1.msra.mxu0 0.0
  %833 = vmatprep.subr.mxu0 0.0
  %834 = vmatpush1.msra.mxu0 0.0
  %835 = vmatprep.subr.mxu0 0.0
  %836 = vmatpush1.msra.mxu0 0.0
  %837 = vmatprep.subr.mxu0 0.0
  %838 = vmatpush1.msra.mxu0 0.0
  %839 = vmatprep.subr.mxu0 0.0
  %840 = vmatpush1.msra.mxu0 0.0
  %841 = vmatprep.subr.mxu0 0.0
  %842 = vmatpush1.msra.mxu0 0.0
  %843 = vmatprep.subr.mxu0 0.0
  %844 = vmatpush1.msra.mxu0 0.0
  %845 = vmatprep.subr.mxu0 0.0
  %846 = vmatpush1.msra.mxu0 0.0
  %847 = vmatprep.subr.mxu0 0.0
  %848 = vmatpush1.msra.mxu0 0.0
  %849 = vmatprep.subr.mxu0 0.0
  %850 = vmatpush1.msra.mxu0 0.0
  %851 = vmatprep.subr.mxu0 0.0
  %852 = vmatpush1.msra.mxu0 0.0
  %853 = vmatprep.subr.mxu0 0.0
  %854 = vmatpush1.msra.mxu0 0.0
  %855 = vmatprep.subr.mxu0 0.0
  %856 = vmatpush1.msra.mxu0 0.0
  %857 = vmatprep.subr.mxu0 0.0
  %858 = vmatpush1.msra.mxu0 0.0
  %859 = vmatprep.subr.mxu0 0.0
  %860 = vmatpush1.msra.mxu0 0.0
  %861 = vmatprep.subr.mxu0 0.0
  %862 = vmatpush1.msra.mxu0 0.0
  %863 = vmatprep.subr.mxu0 0.0
  %864 = vmatpush1.msra.mxu0 0.0
  %865 = vmatprep.subr.mxu0 0.0
  %866 = vmatpush1.msra.mxu0 0.0
  %867 = vmatprep.subr.mxu0 0.0
  %868 = vmatpush1.msra.mxu0 0.0
  %869 = vmatprep.subr.mxu0 0.0
  %870 = vmatpush1.msra.mxu0 0.0
  %871 = vmatprep.subr.mxu0 0.0
  %872 = vmatpush1.msra.mxu0 0.0
  %873 = vmatprep.subr.mxu0 0.0
  %874 = vmatpush1.msra.mxu0 0.0
  %875 = vmatprep.subr.mxu0 0.0
  %876 = vmatpush1.msra.mxu0 0.0
  %877 = vmatprep.subr.mxu0 0.0
  %878 = vmatpush1.msra.mxu0 0.0
  %879 = vmatprep.subr.mxu0 0.0
  %880 = vmatpush1.msra.mxu0 0.0
  %881 = vmatprep.mubr.f32.mxu0 0.0
  %882 = vmatmul.mubr.f32.gmra.mrb[0].mxu0 %v794
  %v883 = vpop.f32.mrb[0].mxu0
  %v884 = vadd.f32 0.0, %v883
  %v885 = vpop.f32.mrb[0].mxu0
  %886 = vmatprep.mubr.f32.mxu0 0.0
  %887 = vmatmul.mubr.f32.gmra.mrb[0].mxu0 %v797
  %v888 = vpop.f32.mrb[0].mxu0
  %v889 = vadd.f32 0.0, %v888
  %v890 = vpop.f32.mrb[0].mxu0
  %891 = vmatprep.mubr.f32.mxu0 0.0
  %892 = vmatmul.mubr.f32.gmra.mrb[0].mxu0 %v800
  %v893 = vpop.f32.mrb[0].mxu0
  %v894 = vadd.f32 0.0, %v893
  %v895 = vpop.f32.mrb[0].mxu0
  %896 = vmatprep.mubr.f32.mxu0 0.0
  %897 = vmatmul.mubr.f32.gmra.mrb[0].mxu0 %v803
  %v898 = vpop.f32.mrb[0].mxu0
  %v899 = vadd.f32 0.0, %v898
  %v900 = vpop.f32.mrb[0].mxu0
  %901 = vmatprep.mubr.f32.mxu0 0.0
  %902 = vmatmul.mubr.f32.gmra.mrb[0].mxu0 %v806
  %v903 = vpop.f32.mrb[0].mxu0
  %v904 = vadd.f32 0.0, %v903
  %v905 = vpop.f32.mrb[0].mxu0
  %906 = vmatprep.mubr.f32.mxu0 0.0
  %907 = vmatmul.mubr.f32.gmra.mrb[0].mxu0 %v809
  %v908 = vpop.f32.mrb[0].mxu0
  %v909 = vadd.f32 0.0, %v908
  %v910 = vpop.f32.mrb[0].mxu0
  %911 = vmatprep.mubr.f32.mxu0 0.0
  %912 = vmatmul.mubr.f32.gmra.mrb[0].mxu0 %v812
  %v913 = vpop.f32.mrb[0].mxu0
  %v914 = vadd.f32 0.0, %v913
  %v915 = vpop.f32.mrb[0].mxu0
  %916 = vmatprep.mubr.f32.mxu0 0.0
  %917 = vmatmul.mubr.f32.gmra.mrb[0].mxu0 %v815
  %v918 = vpop.f32.mrb[0].mxu0
  %v919 = vadd.f32 0.0, %v918
  %v920 = vpop.f32.mrb[0].mxu0
  %921 = vdwg.mxu0
  %v922 = vadd.f32 %v773, %v884
  %v923 = vadd.f32 %v774, %v889
  %v924 = vadd.f32 %v775, %v894
  %v925 = vadd.f32 %v776, %v899
  %v926 = vadd.f32 %v777, %v904
  %v927 = vadd.f32 %v778, %v909
  %v928 = vadd.f32 %v779, %v914
  %v929 = vadd.f32 %v780, %v919
  %v930 = vld [vmem:[#allocation2 + $0x2] sm:$0xff]
  %v931 = vld [vmem:[#allocation2 + $0x12] sm:$0xff]
  %v932 = vld [vmem:[#allocation2 + $0x22] sm:$0xff]
  %v933 = vld [vmem:[#allocation2 + $0x32] sm:$0xff]
  %v934 = vld [vmem:[#allocation2 + $0x42] sm:$0xff]
  %v935 = vld [vmem:[#allocation2 + $0x52] sm:$0xff]
  %v936 = vld [vmem:[#allocation2 + $0x62] sm:$0xff]
  %v937 = vld [vmem:[#allocation2 + $0x72] sm:$0xff]
  %v938 = vld [vmem:[%s3 + $0x40] sm:$0xff]
  %v939 = vld [vmem:[%s3 + $0x48] sm:$0xff]
  %v940 = vld [vmem:[%s3 + $0x50] sm:$0xff]
  %v941 = vld [vmem:[%s3 + $0x58] sm:$0xff]
  %v943 = vsel %vm79, %v930, 0
  %v946 = vsel %vm79, %v931, 0
  %v949 = vsel %vm79, %v932, 0
  %v952 = vsel %vm79, %v933, 0
  %v955 = vsel %vm79, %v934, 0
  %v958 = vsel %vm79, %v935, 0
  %v961 = vsel %vm79, %v936, 0
  %v964 = vsel %vm79, %v937, 0
  %966 = vmatprep.subr.mxu0 0.0
  %967 = vmatpush1.msra.mxu0 %v938
  %968 = vmatprep.subr.mxu0 0.0
  %969 = vmatpush1.msra.mxu0 %v939
  %970 = vmatprep.subr.mxu0 0.0
  %971 = vmatpush1.msra.mxu0 %v940
  %972 = vmatprep.subr.mxu0 0.0
  %973 = vmatpush1.msra.mxu0 %v941
  %974 = vmatprep.subr.mxu0 0.0
  %975 = vmatpush1.msra.mxu0 0.0
  %976 = vmatprep.subr.mxu0 0.0
  %977 = vmatpush1.msra.mxu0 0.0
  %978 = vmatprep.subr.mxu0 0.0
  %979 = vmatpush1.msra.mxu0 0.0
  %980 = vmatprep.subr.mxu0 0.0
  %981 = vmatpush1.msra.mxu0 0.0
  %982 = vmatprep.subr.mxu0 0.0
  %983 = vmatpush1.msra.mxu0 0.0
  %984 = vmatprep.subr.mxu0 0.0
  %985 = vmatpush1.msra.mxu0 0.0
  %986 = vmatprep.subr.mxu0 0.0
  %987 = vmatpush1.msra.mxu0 0.0
  %988 = vmatprep.subr.mxu0 0.0
  %989 = vmatpush1.msra.mxu0 0.0
  %990 = vmatprep.subr.mxu0 0.0
  %991 = vmatpush1.msra.mxu0 0.0
  %992 = vmatprep.subr.mxu0 0.0
  %993 = vmatpush1.msra.mxu0 0.0
  %994 = vmatprep.subr.mxu0 0.0
  %995 = vmatpush1.msra.mxu0 0.0
  %996 = vmatprep.subr.mxu0 0.0
  %997 = vmatpush1.msra.mxu0 0.0
  %998 = vmatprep.subr.mxu0 0.0
  %999 = vmatpush1.msra.mxu0 0.0
  %1000 = vmatprep.subr.mxu0 0.0
  %1001 = vmatpush1.msra.mxu0 0.0
  %1002 = vmatprep.subr.mxu0 0.0
  %1003 = vmatpush1.msra.mxu0 0.0
  %1004 = vmatprep.subr.mxu0 0.0
  %1005 = vmatpush1.msra.mxu0 0.0
  %1006 = vmatprep.subr.mxu0 0.0
  %1007 = vmatpush1.msra.mxu0 0.0
  %1008 = vmatprep.subr.mxu0 0.0
  %1009 = vmatpush1.msra.mxu0 0.0
  %1010 = vmatprep.subr.mxu0 0.0
  %1011 = vmatpush1.msra.mxu0 0.0
  %1012 = vmatprep.subr.mxu0 0.0
  %1013 = vmatpush1.msra.mxu0 0.0
  %1014 = vmatprep.subr.mxu0 0.0
  %1015 = vmatpush1.msra.mxu0 0.0
  %1016 = vmatprep.subr.mxu0 0.0
  %1017 = vmatpush1.msra.mxu0 0.0
  %1018 = vmatprep.subr.mxu0 0.0
  %1019 = vmatpush1.msra.mxu0 0.0
  %1020 = vmatprep.subr.mxu0 0.0
  %1021 = vmatpush1.msra.mxu0 0.0
  %1022 = vmatprep.subr.mxu0 0.0
  %1023 = vmatpush1.msra.mxu0 0.0
  %1024 = vmatprep.subr.mxu0 0.0
  %1025 = vmatpush1.msra.mxu0 0.0
  %1026 = vmatprep.subr.mxu0 0.0
  %1027 = vmatpush1.msra.mxu0 0.0
  %1028 = vmatprep.subr.mxu0 0.0
  %1029 = vmatpush1.msra.mxu0 0.0
  %1030 = vmatprep.mubr.f32.mxu0 0.0
  %1031 = vmatmul.mubr.f32.gmra.mrb[0].mxu0 %v943
  %v1032 = vpop.f32.mrb[0].mxu0
  %v1033 = vadd.f32 0.0, %v1032
  %v1034 = vpop.f32.mrb[0].mxu0
  %1035 = vmatprep.mubr.f32.mxu0 0.0
  %1036 = vmatmul.mubr.f32.gmra.mrb[0].mxu0 %v946
  %v1037 = vpop.f32.mrb[0].mxu0
  %v1038 = vadd.f32 0.0, %v1037
  %v1039 = vpop.f32.mrb[0].mxu0
  %1040 = vmatprep.mubr.f32.mxu0 0.0
  %1041 = vmatmul.mubr.f32.gmra.mrb[0].mxu0 %v949
  %v1042 = vpop.f32.mrb[0].mxu0
  %v1043 = vadd.f32 0.0, %v1042
  %v1044 = vpop.f32.mrb[0].mxu0
  %1045 = vmatprep.mubr.f32.mxu0 0.0
  %1046 = vmatmul.mubr.f32.gmra.mrb[0].mxu0 %v952
  %v1047 = vpop.f32.mrb[0].mxu0
  %v1048 = vadd.f32 0.0, %v1047
  %v1049 = vpop.f32.mrb[0].mxu0
  %1050 = vmatprep.mubr.f32.mxu0 0.0
  %1051 = vmatmul.mubr.f32.gmra.mrb[0].mxu0 %v955
  %v1052 = vpop.f32.mrb[0].mxu0
  %v1053 = vadd.f32 0.0, %v1052
  %v1054 = vpop.f32.mrb[0].mxu0
  %1055 = vmatprep.mubr.f32.mxu0 0.0
  %1056 = vmatmul.mubr.f32.gmra.mrb[0].mxu0 %v958
  %v1057 = vpop.f32.mrb[0].mxu0
  %v1058 = vadd.f32 0.0, %v1057
  %v1059 = vpop.f32.mrb[0].mxu0
  %1060 = vmatprep.mubr.f32.mxu0 0.0
  %1061 = vmatmul.mubr.f32.gmra.mrb[0].mxu0 %v961
  %v1062 = vpop.f32.mrb[0].mxu0
  %v1063 = vadd.f32 0.0, %v1062
  %v1064 = vpop.f32.mrb[0].mxu0
  %1065 = vmatprep.mubr.f32.mxu0 0.0
  %1066 = vmatmul.mubr.f32.gmra.mrb[0].mxu0 %v964
  %v1067 = vpop.f32.mrb[0].mxu0
  %v1068 = vadd.f32 0.0, %v1067
  %v1069 = vpop.f32.mrb[0].mxu0
  %1070 = vdwg.mxu0
  %v1071 = vadd.f32 %v922, %v1033
  %v1072 = vadd.f32 %v923, %v1038
  %v1073 = vadd.f32 %v924, %v1043
  %v1074 = vadd.f32 %v925, %v1048
  %v1075 = vadd.f32 %v926, %v1053
  %v1076 = vadd.f32 %v927, %v1058
  %v1077 = vadd.f32 %v928, %v1063
  %v1078 = vadd.f32 %v929, %v1068
  %v1079 = vld [vmem:[#allocation2 + $0x3] sm:$0xff]
  %v1080 = vld [vmem:[#allocation2 + $0x13] sm:$0xff]
  %v1081 = vld [vmem:[#allocation2 + $0x23] sm:$0xff]
  %v1082 = vld [vmem:[#allocation2 + $0x33] sm:$0xff]
  %v1083 = vld [vmem:[#allocation2 + $0x43] sm:$0xff]
  %v1084 = vld [vmem:[#allocation2 + $0x53] sm:$0xff]
  %v1085 = vld [vmem:[#allocation2 + $0x63] sm:$0xff]
  %v1086 = vld [vmem:[#allocation2 + $0x73] sm:$0xff]
  %v1087 = vld [vmem:[%s3 + $0x60] sm:$0xff]
  %v1088 = vld [vmem:[%s3 + $0x68] sm:$0xff]
  %v1089 = vld [vmem:[%s3 + $0x70] sm:$0xff]
  %v1090 = vld [vmem:[%s3 + $0x78] sm:$0xff]
  %v1092 = vsel %vm79, %v1079, 0
  %v1095 = vsel %vm79, %v1080, 0
  %v1098 = vsel %vm79, %v1081, 0
  %v1101 = vsel %vm79, %v1082, 0
  %v1104 = vsel %vm79, %v1083, 0
  %v1107 = vsel %vm79, %v1084, 0
  %v1110 = vsel %vm79, %v1085, 0
  %v1113 = vsel %vm79, %v1086, 0
  %1115 = vmatprep.subr.mxu0 0.0
  %1116 = vmatpush1.msra.mxu0 %v1087
  %1117 = vmatprep.subr.mxu0 0.0
  %1118 = vmatpush1.msra.mxu0 %v1088
  %1119 = vmatprep.subr.mxu0 0.0
  %1120 = vmatpush1.msra.mxu0 %v1089
  %1121 = vmatprep.subr.mxu0 0.0
  %1122 = vmatpush1.msra.mxu0 %v1090
  %1123 = vmatprep.subr.mxu0 0.0
  %1124 = vmatpush1.msra.mxu0 0.0
  %1125 = vmatprep.subr.mxu0 0.0
  %1126 = vmatpush1.msra.mxu0 0.0
  %1127 = vmatprep.subr.mxu0 0.0
  %1128 = vmatpush1.msra.mxu0 0.0
  %1129 = vmatprep.subr.mxu0 0.0
  %1130 = vmatpush1.msra.mxu0 0.0
  %1131 = vmatprep.subr.mxu0 0.0
  %1132 = vmatpush1.msra.mxu0 0.0
  %1133 = vmatprep.subr.mxu0 0.0
  %1134 = vmatpush1.msra.mxu0 0.0
  %1135 = vmatprep.subr.mxu0 0.0
  %1136 = vmatpush1.msra.mxu0 0.0
  %1137 = vmatprep.subr.mxu0 0.0
  %1138 = vmatpush1.msra.mxu0 0.0
  %1139 = vmatprep.subr.mxu0 0.0
  %1140 = vmatpush1.msra.mxu0 0.0
  %1141 = vmatprep.subr.mxu0 0.0
  %1142 = vmatpush1.msra.mxu0 0.0
  %1143 = vmatprep.subr.mxu0 0.0
  %1144 = vmatpush1.msra.mxu0 0.0
  %1145 = vmatprep.subr.mxu0 0.0
  %1146 = vmatpush1.msra.mxu0 0.0
  %1147 = vmatprep.subr.mxu0 0.0
  %1148 = vmatpush1.msra.mxu0 0.0
  %1149 = vmatprep.subr.mxu0 0.0
  %1150 = vmatpush1.msra.mxu0 0.0
  %1151 = vmatprep.subr.mxu0 0.0
  %1152 = vmatpush1.msra.mxu0 0.0
  %1153 = vmatprep.subr.mxu0 0.0
  %1154 = vmatpush1.msra.mxu0 0.0
  %1155 = vmatprep.subr.mxu0 0.0
  %1156 = vmatpush1.msra.mxu0 0.0
  %1157 = vmatprep.subr.mxu0 0.0
  %1158 = vmatpush1.msra.mxu0 0.0
  %1159 = vmatprep.subr.mxu0 0.0
  %1160 = vmatpush1.msra.mxu0 0.0
  %1161 = vmatprep.subr.mxu0 0.0
  %1162 = vmatpush1.msra.mxu0 0.0
  %1163 = vmatprep.subr.mxu0 0.0
  %1164 = vmatpush1.msra.mxu0 0.0
  %1165 = vmatprep.subr.mxu0 0.0
  %1166 = vmatpush1.msra.mxu0 0.0
  %1167 = vmatprep.subr.mxu0 0.0
  %1168 = vmatpush1.msra.mxu0 0.0
  %1169 = vmatprep.subr.mxu0 0.0
  %1170 = vmatpush1.msra.mxu0 0.0
  %1171 = vmatprep.subr.mxu0 0.0
  %1172 = vmatpush1.msra.mxu0 0.0
  %1173 = vmatprep.subr.mxu0 0.0
  %1174 = vmatpush1.msra.mxu0 0.0
  %1175 = vmatprep.subr.mxu0 0.0
  %1176 = vmatpush1.msra.mxu0 0.0
  %1177 = vmatprep.subr.mxu0 0.0
  %1178 = vmatpush1.msra.mxu0 0.0
  %1179 = vmatprep.mubr.f32.mxu0 0.0
  %1180 = vmatmul.mubr.f32.gmra.mrb[0].mxu0 %v1092
  %v1181 = vpop.f32.mrb[0].mxu0
  %v1182 = vadd.f32 0.0, %v1181
  %v1183 = vpop.f32.mrb[0].mxu0
  %1184 = vmatprep.mubr.f32.mxu0 0.0
  %1185 = vmatmul.mubr.f32.gmra.mrb[0].mxu0 %v1095
  %v1186 = vpop.f32.mrb[0].mxu0
  %v1187 = vadd.f32 0.0, %v1186
  %v1188 = vpop.f32.mrb[0].mxu0
  %1189 = vmatprep.mubr.f32.mxu0 0.0
  %1190 = vmatmul.mubr.f32.gmra.mrb[0].mxu0 %v1098
  %v1191 = vpop.f32.mrb[0].mxu0
  %v1192 = vadd.f32 0.0, %v1191
  %v1193 = vpop.f32.mrb[0].mxu0
  %1194 = vmatprep.mubr.f32.mxu0 0.0
  %1195 = vmatmul.mubr.f32.gmra.mrb[0].mxu0 %v1101
  %v1196 = vpop.f32.mrb[0].mxu0
  %v1197 = vadd.f32 0.0, %v1196
  %v1198 = vpop.f32.mrb[0].mxu0
  %1199 = vmatprep.mubr.f32.mxu0 0.0
  %1200 = vmatmul.mubr.f32.gmra.mrb[0].mxu0 %v1104
  %v1201 = vpop.f32.mrb[0].mxu0
  %v1202 = vadd.f32 0.0, %v1201
  %v1203 = vpop.f32.mrb[0].mxu0
  %1204 = vmatprep.mubr.f32.mxu0 0.0
  %1205 = vmatmul.mubr.f32.gmra.mrb[0].mxu0 %v1107
  %v1206 = vpop.f32.mrb[0].mxu0
  %v1207 = vadd.f32 0.0, %v1206
  %v1208 = vpop.f32.mrb[0].mxu0
  %1209 = vmatprep.mubr.f32.mxu0 0.0
  %1210 = vmatmul.mubr.f32.gmra.mrb[0].mxu0 %v1110
  %v1211 = vpop.f32.mrb[0].mxu0
  %v1212 = vadd.f32 0.0, %v1211
  %v1213 = vpop.f32.mrb[0].mxu0
  %1214 = vmatprep.mubr.f32.mxu0 0.0
  %1215 = vmatmul.mubr.f32.gmra.mrb[0].mxu0 %v1113
  %v1216 = vpop.f32.mrb[0].mxu0
  %v1217 = vadd.f32 0.0, %v1216
  %v1218 = vpop.f32.mrb[0].mxu0
  %1219 = vdwg.mxu0
  %v1220 = vadd.f32 %v1071, %v1182
  %v1221 = vadd.f32 %v1072, %v1187
  %v1222 = vadd.f32 %v1073, %v1192
  %v1223 = vadd.f32 %v1074, %v1197
  %v1224 = vadd.f32 %v1075, %v1202
  %v1225 = vadd.f32 %v1076, %v1207
  %v1226 = vadd.f32 %v1077, %v1212
  %v1227 = vadd.f32 %v1078, %v1217
  %v1228 = vld [vmem:[#allocation2 + $0x4] sm:$0xff]
  %v1229 = vld [vmem:[#allocation2 + $0x14] sm:$0xff]
  %v1230 = vld [vmem:[#allocation2 + $0x24] sm:$0xff]
  %v1231 = vld [vmem:[#allocation2 + $0x34] sm:$0xff]
  %v1232 = vld [vmem:[#allocation2 + $0x44] sm:$0xff]
  %v1233 = vld [vmem:[#allocation2 + $0x54] sm:$0xff]
  %v1234 = vld [vmem:[#allocation2 + $0x64] sm:$0xff]
  %v1235 = vld [vmem:[#allocation2 + $0x74] sm:$0xff]
  %v1236 = vld [vmem:[%s3 + $0x80] sm:$0xff]
  %v1237 = vld [vmem:[%s3 + $0x88] sm:$0xff]
  %v1238 = vld [vmem:[%s3 + $0x90] sm:$0xff]
  %v1239 = vld [vmem:[%s3 + $0x98] sm:$0xff]
  %v1241 = vsel %vm79, %v1228, 0
  %v1244 = vsel %vm79, %v1229, 0
  %v1247 = vsel %vm79, %v1230, 0
  %v1250 = vsel %vm79, %v1231, 0
  %v1253 = vsel %vm79, %v1232, 0
  %v1256 = vsel %vm79, %v1233, 0
  %v1259 = vsel %vm79, %v1234, 0
  %v1262 = vsel %vm79, %v1235, 0
  %1264 = vmatprep.subr.mxu0 0.0
  %1265 = vmatpush1.msra.mxu0 %v1236
  %1266 = vmatprep.subr.mxu0 0.0
  %1267 = vmatpush1.msra.mxu0 %v1237
  %1268 = vmatprep.subr.mxu0 0.0
  %1269 = vmatpush1.msra.mxu0 %v1238
  %1270 = vmatprep.subr.mxu0 0.0
  %1271 = vmatpush1.msra.mxu0 %v1239
  %1272 = vmatprep.subr.mxu0 0.0
  %1273 = vmatpush1.msra.mxu0 0.0
  %1274 = vmatprep.subr.mxu0 0.0
  %1275 = vmatpush1.msra.mxu0 0.0
  %1276 = vmatprep.subr.mxu0 0.0
  %1277 = vmatpush1.msra.mxu0 0.0
  %1278 = vmatprep.subr.mxu0 0.0
  %1279 = vmatpush1.msra.mxu0 0.0
  %1280 = vmatprep.subr.mxu0 0.0
  %1281 = vmatpush1.msra.mxu0 0.0
  %1282 = vmatprep.subr.mxu0 0.0
  %1283 = vmatpush1.msra.mxu0 0.0
  %1284 = vmatprep.subr.mxu0 0.0
  %1285 = vmatpush1.msra.mxu0 0.0
  %1286 = vmatprep.subr.mxu0 0.0
  %1287 = vmatpush1.msra.mxu0 0.0
  %1288 = vmatprep.subr.mxu0 0.0
  %1289 = vmatpush1.msra.mxu0 0.0
  %1290 = vmatprep.subr.mxu0 0.0
  %1291 = vmatpush1.msra.mxu0 0.0
  %1292 = vmatprep.subr.mxu0 0.0
  %1293 = vmatpush1.msra.mxu0 0.0
  %1294 = vmatprep.subr.mxu0 0.0
  %1295 = vmatpush1.msra.mxu0 0.0
  %1296 = vmatprep.subr.mxu0 0.0
  %1297 = vmatpush1.msra.mxu0 0.0
  %1298 = vmatprep.subr.mxu0 0.0
  %1299 = vmatpush1.msra.mxu0 0.0
  %1300 = vmatprep.subr.mxu0 0.0
  %1301 = vmatpush1.msra.mxu0 0.0
  %1302 = vmatprep.subr.mxu0 0.0
  %1303 = vmatpush1.msra.mxu0 0.0
  %1304 = vmatprep.subr.mxu0 0.0
  %1305 = vmatpush1.msra.mxu0 0.0
  %1306 = vmatprep.subr.mxu0 0.0
  %1307 = vmatpush1.msra.mxu0 0.0
  %1308 = vmatprep.subr.mxu0 0.0
  %1309 = vmatpush1.msra.mxu0 0.0
  %1310 = vmatprep.subr.mxu0 0.0
  %1311 = vmatpush1.msra.mxu0 0.0
  %1312 = vmatprep.subr.mxu0 0.0
  %1313 = vmatpush1.msra.mxu0 0.0
  %1314 = vmatprep.subr.mxu0 0.0
  %1315 = vmatpush1.msra.mxu0 0.0
  %1316 = vmatprep.subr.mxu0 0.0
  %1317 = vmatpush1.msra.mxu0 0.0
  %1318 = vmatprep.subr.mxu0 0.0
  %1319 = vmatpush1.msra.mxu0 0.0
  %1320 = vmatprep.subr.mxu0 0.0
  %1321 = vmatpush1.msra.mxu0 0.0
  %1322 = vmatprep.subr.mxu0 0.0
  %1323 = vmatpush1.msra.mxu0 0.0
  %1324 = vmatprep.subr.mxu0 0.0
  %1325 = vmatpush1.msra.mxu0 0.0
  %1326 = vmatprep.subr.mxu0 0.0
  %1327 = vmatpush1.msra.mxu0 0.0
  %1328 = vmatprep.mubr.f32.mxu0 0.0
  %1329 = vmatmul.mubr.f32.gmra.mrb[0].mxu0 %v1241
  %v1330 = vpop.f32.mrb[0].mxu0
  %v1331 = vadd.f32 0.0, %v1330
  %v1332 = vpop.f32.mrb[0].mxu0
  %1333 = vmatprep.mubr.f32.mxu0 0.0
  %1334 = vmatmul.mubr.f32.gmra.mrb[0].mxu0 %v1244
  %v1335 = vpop.f32.mrb[0].mxu0
  %v1336 = vadd.f32 0.0, %v1335
  %v1337 = vpop.f32.mrb[0].mxu0
  %1338 = vmatprep.mubr.f32.mxu0 0.0
  %1339 = vmatmul.mubr.f32.gmra.mrb[0].mxu0 %v1247
  %v1340 = vpop.f32.mrb[0].mxu0
  %v1341 = vadd.f32 0.0, %v1340
  %v1342 = vpop.f32.mrb[0].mxu0
  %1343 = vmatprep.mubr.f32.mxu0 0.0
  %1344 = vmatmul.mubr.f32.gmra.mrb[0].mxu0 %v1250
  %v1345 = vpop.f32.mrb[0].mxu0
  %v1346 = vadd.f32 0.0, %v1345
  %v1347 = vpop.f32.mrb[0].mxu0
  %1348 = vmatprep.mubr.f32.mxu0 0.0
  %1349 = vmatmul.mubr.f32.gmra.mrb[0].mxu0 %v1253
  %v1350 = vpop.f32.mrb[0].mxu0
  %v1351 = vadd.f32 0.0, %v1350
  %v1352 = vpop.f32.mrb[0].mxu0
  %1353 = vmatprep.mubr.f32.mxu0 0.0
  %1354 = vmatmul.mubr.f32.gmra.mrb[0].mxu0 %v1256
  %v1355 = vpop.f32.mrb[0].mxu0
  %v1356 = vadd.f32 0.0, %v1355
  %v1357 = vpop.f32.mrb[0].mxu0
  %1358 = vmatprep.mubr.f32.mxu0 0.0
  %1359 = vmatmul.mubr.f32.gmra.mrb[0].mxu0 %v1259
  %v1360 = vpop.f32.mrb[0].mxu0
  %v1361 = vadd.f32 0.0, %v1360
  %v1362 = vpop.f32.mrb[0].mxu0
  %1363 = vmatprep.mubr.f32.mxu0 0.0
  %1364 = vmatmul.mubr.f32.gmra.mrb[0].mxu0 %v1262
  %v1365 = vpop.f32.mrb[0].mxu0
  %v1366 = vadd.f32 0.0, %v1365
  %v1367 = vpop.f32.mrb[0].mxu0
  %1368 = vdwg.mxu0
  %v1369 = vadd.f32 %v1220, %v1331
  %v1370 = vadd.f32 %v1221, %v1336
  %v1371 = vadd.f32 %v1222, %v1341
  %v1372 = vadd.f32 %v1223, %v1346
  %v1373 = vadd.f32 %v1224, %v1351
  %v1374 = vadd.f32 %v1225, %v1356
  %v1375 = vadd.f32 %v1226, %v1361
  %v1376 = vadd.f32 %v1227, %v1366
  %s1377 = scalar_lea.vmem [#allocation2], 16
  %v1378 = vld [vmem:[%s1377] sm:$0xff]
  %v1379 = vld [vmem:[%s1377 + $0x10] sm:$0xff]
  %v1380 = vld [vmem:[%s1377 + $0x20] sm:$0xff]
  %v1381 = vld [vmem:[%s1377 + $0x30] sm:$0xff]
  %v1382 = vld [vmem:[%s1377 + $0x40] sm:$0xff]
  %v1383 = vld [vmem:[%s1377 + $0x50] sm:$0xff]
  %v1384 = vld [vmem:[%s1377 + $0x60] sm:$0xff]
  %v1385 = vld [vmem:[%s1377 + $0x70] sm:$0xff]
  %v1386 = vld [vmem:[%s3 + $0xa0] sm:$0xff]
  %v1387 = vld [vmem:[%s3 + $0xa8] sm:$0xff]
  %v1388 = vld [vmem:[%s3 + $0xb0] sm:$0xff]
  %v1389 = vld [vmem:[%s3 + $0xb8] sm:$0xff]
  %v1391 = vsel %vm79, %v1378, 0
  %v1394 = vsel %vm79, %v1379, 0
  %v1397 = vsel %vm79, %v1380, 0
  %v1400 = vsel %vm79, %v1381, 0
  %v1403 = vsel %vm79, %v1382, 0
  %v1406 = vsel %vm79, %v1383, 0
  %v1409 = vsel %vm79, %v1384, 0
  %v1412 = vsel %vm79, %v1385, 0
  %1414 = vmatprep.subr.mxu0 0.0
  %1415 = vmatpush1.msra.mxu0 %v1386
  %1416 = vmatprep.subr.mxu0 0.0
  %1417 = vmatpush1.msra.mxu0 %v1387
  %1418 = vmatprep.subr.mxu0 0.0
  %1419 = vmatpush1.msra.mxu0 %v1388
  %1420 = vmatprep.subr.mxu0 0.0
  %1421 = vmatpush1.msra.mxu0 %v1389
  %1422 = vmatprep.subr.mxu0 0.0
  %1423 = vmatpush1.msra.mxu0 0.0
  %1424 = vmatprep.subr.mxu0 0.0
  %1425 = vmatpush1.msra.mxu0 0.0
  %1426 = vmatprep.subr.mxu0 0.0
  %1427 = vmatpush1.msra.mxu0 0.0
  %1428 = vmatprep.subr.mxu0 0.0
  %1429 = vmatpush1.msra.mxu0 0.0
  %1430 = vmatprep.subr.mxu0 0.0
  %1431 = vmatpush1.msra.mxu0 0.0
  %1432 = vmatprep.subr.mxu0 0.0
  %1433 = vmatpush1.msra.mxu0 0.0
  %1434 = vmatprep.subr.mxu0 0.0
  %1435 = vmatpush1.msra.mxu0 0.0
  %1436 = vmatprep.subr.mxu0 0.0
  %1437 = vmatpush1.msra.mxu0 0.0
  %1438 = vmatprep.subr.mxu0 0.0
  %1439 = vmatpush1.msra.mxu0 0.0
  %1440 = vmatprep.subr.mxu0 0.0
  %1441 = vmatpush1.msra.mxu0 0.0
  %1442 = vmatprep.subr.mxu0 0.0
  %1443 = vmatpush1.msra.mxu0 0.0
  %1444 = vmatprep.subr.mxu0 0.0
  %1445 = vmatpush1.msra.mxu0 0.0
  %1446 = vmatprep.subr.mxu0 0.0
  %1447 = vmatpush1.msra.mxu0 0.0
  %1448 = vmatprep.subr.mxu0 0.0
  %1449 = vmatpush1.msra.mxu0 0.0
  %1450 = vmatprep.subr.mxu0 0.0
  %1451 = vmatpush1.msra.mxu0 0.0
  %1452 = vmatprep.subr.mxu0 0.0
  %1453 = vmatpush1.msra.mxu0 0.0
  %1454 = vmatprep.subr.mxu0 0.0
  %1455 = vmatpush1.msra.mxu0 0.0
  %1456 = vmatprep.subr.mxu0 0.0
  %1457 = vmatpush1.msra.mxu0 0.0
  %1458 = vmatprep.subr.mxu0 0.0
  %1459 = vmatpush1.msra.mxu0 0.0
  %1460 = vmatprep.subr.mxu0 0.0
  %1461 = vmatpush1.msra.mxu0 0.0
  %1462 = vmatprep.subr.mxu0 0.0
  %1463 = vmatpush1.msra.mxu0 0.0
  %1464 = vmatprep.subr.mxu0 0.0
  %1465 = vmatpush1.msra.mxu0 0.0
  %1466 = vmatprep.subr.mxu0 0.0
  %1467 = vmatpush1.msra.mxu0 0.0
  %1468 = vmatprep.subr.mxu0 0.0
  %1469 = vmatpush1.msra.mxu0 0.0
  %1470 = vmatprep.subr.mxu0 0.0
  %1471 = vmatpush1.msra.mxu0 0.0
  %1472 = vmatprep.subr.mxu0 0.0
  %1473 = vmatpush1.msra.mxu0 0.0
  %1474 = vmatprep.subr.mxu0 0.0
  %1475 = vmatpush1.msra.mxu0 0.0
  %1476 = vmatprep.subr.mxu0 0.0
  %1477 = vmatpush1.msra.mxu0 0.0
  %1478 = vmatprep.mubr.f32.mxu0 0.0
  %1479 = vmatmul.mubr.f32.gmra.mrb[0].mxu0 %v1391
  %v1480 = vpop.f32.mrb[0].mxu0
  %v1481 = vadd.f32 0.0, %v1480
  %v1482 = vpop.f32.mrb[0].mxu0
  %1483 = vmatprep.mubr.f32.mxu0 0.0
  %1484 = vmatmul.mubr.f32.gmra.mrb[0].mxu0 %v1394
  %v1485 = vpop.f32.mrb[0].mxu0
  %v1486 = vadd.f32 0.0, %v1485
  %v1487 = vpop.f32.mrb[0].mxu0
  %1488 = vmatprep.mubr.f32.mxu0 0.0
  %1489 = vmatmul.mubr.f32.gmra.mrb[0].mxu0 %v1397
  %v1490 = vpop.f32.mrb[0].mxu0
  %v1491 = vadd.f32 0.0, %v1490
  %v1492 = vpop.f32.mrb[0].mxu0
  %1493 = vmatprep.mubr.f32.mxu0 0.0
  %1494 = vmatmul.mubr.f32.gmra.mrb[0].mxu0 %v1400
  %v1495 = vpop.f32.mrb[0].mxu0
  %v1496 = vadd.f32 0.0, %v1495
  %v1497 = vpop.f32.mrb[0].mxu0
  %1498 = vmatprep.mubr.f32.mxu0 0.0
  %1499 = vmatmul.mubr.f32.gmra.mrb[0].mxu0 %v1403
  %v1500 = vpop.f32.mrb[0].mxu0
  %v1501 = vadd.f32 0.0, %v1500
  %v1502 = vpop.f32.mrb[0].mxu0
  %1503 = vmatprep.mubr.f32.mxu0 0.0
  %1504 = vmatmul.mubr.f32.gmra.mrb[0].mxu0 %v1406
  %v1505 = vpop.f32.mrb[0].mxu0
  %v1506 = vadd.f32 0.0, %v1505
  %v1507 = vpop.f32.mrb[0].mxu0
  %1508 = vmatprep.mubr.f32.mxu0 0.0
  %1509 = vmatmul.mubr.f32.gmra.mrb[0].mxu0 %v1409
  %v1510 = vpop.f32.mrb[0].mxu0
  %v1511 = vadd.f32 0.0, %v1510
  %v1512 = vpop.f32.mrb[0].mxu0
  %1513 = vmatprep.mubr.f32.mxu0 0.0
  %1514 = vmatmul.mubr.f32.gmra.mrb[0].mxu0 %v1412
  %v1515 = vpop.f32.mrb[0].mxu0
  %v1516 = vadd.f32 0.0, %v1515
  %v1517 = vpop.f32.mrb[0].mxu0
  %1518 = vdwg.mxu0
  %v1519 = vadd.f32 %v1369, %v1481
  %v1520 = vadd.f32 %v1370, %v1486
  %v1521 = vadd.f32 %v1371, %v1491
  %v1522 = vadd.f32 %v1372, %v1496
  %v1523 = vadd.f32 %v1373, %v1501
  %v1524 = vadd.f32 %v1374, %v1506
  %v1525 = vadd.f32 %v1375, %v1511
  %v1526 = vadd.f32 %v1376, %v1516
  %v1527 = vld [vmem:[%s1377 + $0x1] sm:$0xff]
  %v1528 = vld [vmem:[%s1377 + $0x11] sm:$0xff]
  %v1529 = vld [vmem:[%s1377 + $0x21] sm:$0xff]
  %v1530 = vld [vmem:[%s1377 + $0x31] sm:$0xff]
  %v1531 = vld [vmem:[%s1377 + $0x41] sm:$0xff]
  %v1532 = vld [vmem:[%s1377 + $0x51] sm:$0xff]
  %v1533 = vld [vmem:[%s1377 + $0x61] sm:$0xff]
  %v1534 = vld [vmem:[%s1377 + $0x71] sm:$0xff]
  %v1535 = vld [vmem:[%s3 + $0xc0] sm:$0xff]
  %v1536 = vld [vmem:[%s3 + $0xc8] sm:$0xff]
  %v1537 = vld [vmem:[%s3 + $0xd0] sm:$0xff]
  %v1538 = vld [vmem:[%s3 + $0xd8] sm:$0xff]
  %v1540 = vsel %vm79, %v1527, 0
  %v1543 = vsel %vm79, %v1528, 0
  %v1546 = vsel %vm79, %v1529, 0
  %v1549 = vsel %vm79, %v1530, 0
  %v1552 = vsel %vm79, %v1531, 0
  %v1555 = vsel %vm79, %v1532, 0
  %v1558 = vsel %vm79, %v1533, 0
  %v1561 = vsel %vm79, %v1534, 0
  %1563 = vmatprep.subr.mxu0 0.0
  %1564 = vmatpush1.msra.mxu0 %v1535
  %1565 = vmatprep.subr.mxu0 0.0
  %1566 = vmatpush1.msra.mxu0 %v1536
  %1567 = vmatprep.subr.mxu0 0.0
  %1568 = vmatpush1.msra.mxu0 %v1537
  %1569 = vmatprep.subr.mxu0 0.0
  %1570 = vmatpush1.msra.mxu0 %v1538
  %1571 = vmatprep.subr.mxu0 0.0
  %1572 = vmatpush1.msra.mxu0 0.0
  %1573 = vmatprep.subr.mxu0 0.0
  %1574 = vmatpush1.msra.mxu0 0.0
  %1575 = vmatprep.subr.mxu0 0.0
  %1576 = vmatpush1.msra.mxu0 0.0
  %1577 = vmatprep.subr.mxu0 0.0
  %1578 = vmatpush1.msra.mxu0 0.0
  %1579 = vmatprep.subr.mxu0 0.0
  %1580 = vmatpush1.msra.mxu0 0.0
  %1581 = vmatprep.subr.mxu0 0.0
  %1582 = vmatpush1.msra.mxu0 0.0
  %1583 = vmatprep.subr.mxu0 0.0
  %1584 = vmatpush1.msra.mxu0 0.0
  %1585 = vmatprep.subr.mxu0 0.0
  %1586 = vmatpush1.msra.mxu0 0.0
  %1587 = vmatprep.subr.mxu0 0.0
  %1588 = vmatpush1.msra.mxu0 0.0
  %1589 = vmatprep.subr.mxu0 0.0
  %1590 = vmatpush1.msra.mxu0 0.0
  %1591 = vmatprep.subr.mxu0 0.0
  %1592 = vmatpush1.msra.mxu0 0.0
  %1593 = vmatprep.subr.mxu0 0.0
  %1594 = vmatpush1.msra.mxu0 0.0
  %1595 = vmatprep.subr.mxu0 0.0
  %1596 = vmatpush1.msra.mxu0 0.0
  %1597 = vmatprep.subr.mxu0 0.0
  %1598 = vmatpush1.msra.mxu0 0.0
  %1599 = vmatprep.subr.mxu0 0.0
  %1600 = vmatpush1.msra.mxu0 0.0
  %1601 = vmatprep.subr.mxu0 0.0
  %1602 = vmatpush1.msra.mxu0 0.0
  %1603 = vmatprep.subr.mxu0 0.0
  %1604 = vmatpush1.msra.mxu0 0.0
  %1605 = vmatprep.subr.mxu0 0.0
  %1606 = vmatpush1.msra.mxu0 0.0
  %1607 = vmatprep.subr.mxu0 0.0
  %1608 = vmatpush1.msra.mxu0 0.0
  %1609 = vmatprep.subr.mxu0 0.0
  %1610 = vmatpush1.msra.mxu0 0.0
  %1611 = vmatprep.subr.mxu0 0.0
  %1612 = vmatpush1.msra.mxu0 0.0
  %1613 = vmatprep.subr.mxu0 0.0
  %1614 = vmatpush1.msra.mxu0 0.0
  %1615 = vmatprep.subr.mxu0 0.0
  %1616 = vmatpush1.msra.mxu0 0.0
  %1617 = vmatprep.subr.mxu0 0.0
  %1618 = vmatpush1.msra.mxu0 0.0
  %1619 = vmatprep.subr.mxu0 0.0
  %1620 = vmatpush1.msra.mxu0 0.0
  %1621 = vmatprep.subr.mxu0 0.0
  %1622 = vmatpush1.msra.mxu0 0.0
  %1623 = vmatprep.subr.mxu0 0.0
  %1624 = vmatpush1.msra.mxu0 0.0
  %1625 = vmatprep.subr.mxu0 0.0
  %1626 = vmatpush1.msra.mxu0 0.0
  %1627 = vmatprep.mubr.f32.mxu0 0.0
  %1628 = vmatmul.mubr.f32.gmra.mrb[0].mxu0 %v1540
  %v1629 = vpop.f32.mrb[0].mxu0
  %v1630 = vadd.f32 0.0, %v1629
  %v1631 = vpop.f32.mrb[0].mxu0
  %1632 = vmatprep.mubr.f32.mxu0 0.0
  %1633 = vmatmul.mubr.f32.gmra.mrb[0].mxu0 %v1543
  %v1634 = vpop.f32.mrb[0].mxu0
  %v1635 = vadd.f32 0.0, %v1634
  %v1636 = vpop.f32.mrb[0].mxu0
  %1637 = vmatprep.mubr.f32.mxu0 0.0
  %1638 = vmatmul.mubr.f32.gmra.mrb[0].mxu0 %v1546
  %v1639 = vpop.f32.mrb[0].mxu0
  %v1640 = vadd.f32 0.0, %v1639
  %v1641 = vpop.f32.mrb[0].mxu0
  %1642 = vmatprep.mubr.f32.mxu0 0.0
  %1643 = vmatmul.mubr.f32.gmra.mrb[0].mxu0 %v1549
  %v1644 = vpop.f32.mrb[0].mxu0
  %v1645 = vadd.f32 0.0, %v1644
  %v1646 = vpop.f32.mrb[0].mxu0
  %1647 = vmatprep.mubr.f32.mxu0 0.0
  %1648 = vmatmul.mubr.f32.gmra.mrb[0].mxu0 %v1552
  %v1649 = vpop.f32.mrb[0].mxu0
  %v1650 = vadd.f32 0.0, %v1649
  %v1651 = vpop.f32.mrb[0].mxu0
  %1652 = vmatprep.mubr.f32.mxu0 0.0
  %1653 = vmatmul.mubr.f32.gmra.mrb[0].mxu0 %v1555
  %v1654 = vpop.f32.mrb[0].mxu0
  %v1655 = vadd.f32 0.0, %v1654
  %v1656 = vpop.f32.mrb[0].mxu0
  %1657 = vmatprep.mubr.f32.mxu0 0.0
  %1658 = vmatmul.mubr.f32.gmra.mrb[0].mxu0 %v1558
  %v1659 = vpop.f32.mrb[0].mxu0
  %v1660 = vadd.f32 0.0, %v1659
  %v1661 = vpop.f32.mrb[0].mxu0
  %1662 = vmatprep.mubr.f32.mxu0 0.0
  %1663 = vmatmul.mubr.f32.gmra.mrb[0].mxu0 %v1561
  %v1664 = vpop.f32.mrb[0].mxu0
  %v1665 = vadd.f32 0.0, %v1664
  %v1666 = vpop.f32.mrb[0].mxu0
  %1667 = vdwg.mxu0
  %v1668 = vadd.f32 %v1519, %v1630
  %v1669 = vadd.f32 %v1520, %v1635
  %v1670 = vadd.f32 %v1521, %v1640
  %v1671 = vadd.f32 %v1522, %v1645
  %v1672 = vadd.f32 %v1523, %v1650
  %v1673 = vadd.f32 %v1524, %v1655
  %v1674 = vadd.f32 %v1525, %v1660
  %v1675 = vadd.f32 %v1526, %v1665
  %v1676 = vld [vmem:[%s1377 + $0x2] sm:$0xff]
  %v1677 = vld [vmem:[%s1377 + $0x12] sm:$0xff]
  %v1678 = vld [vmem:[%s1377 + $0x22] sm:$0xff]
  %v1679 = vld [vmem:[%s1377 + $0x32] sm:$0xff]
  %v1680 = vld [vmem:[%s1377 + $0x42] sm:$0xff]
  %v1681 = vld [vmem:[%s1377 + $0x52] sm:$0xff]
  %v1682 = vld [vmem:[%s1377 + $0x62] sm:$0xff]
  %v1683 = vld [vmem:[%s1377 + $0x72] sm:$0xff]
  %v1684 = vld [vmem:[%s3 + $0xe0] sm:$0xff]
  %v1685 = vld [vmem:[%s3 + $0xe8] sm:$0xff]
  %v1686 = vld [vmem:[%s3 + $0xf0] sm:$0xff]
  %v1687 = vld [vmem:[%s3 + $0xf8] sm:$0xff]
  %v1689 = vsel %vm79, %v1676, 0
  %v1692 = vsel %vm79, %v1677, 0
  %v1695 = vsel %vm79, %v1678, 0
  %v1698 = vsel %vm79, %v1679, 0
  %v1701 = vsel %vm79, %v1680, 0
  %v1704 = vsel %vm79, %v1681, 0
  %v1707 = vsel %vm79, %v1682, 0
  %v1710 = vsel %vm79, %v1683, 0
  %1712 = vmatprep.subr.mxu0 0.0
  %1713 = vmatpush1.msra.mxu0 %v1684
  %1714 = vmatprep.subr.mxu0 0.0
  %1715 = vmatpush1.msra.mxu0 %v1685
  %1716 = vmatprep.subr.mxu0 0.0
  %1717 = vmatpush1.msra.mxu0 %v1686
  %1718 = vmatprep.subr.mxu0 0.0
  %1719 = vmatpush1.msra.mxu0 %v1687
  %1720 = vmatprep.subr.mxu0 0.0
  %1721 = vmatpush1.msra.mxu0 0.0
  %1722 = vmatprep.subr.mxu0 0.0
  %1723 = vmatpush1.msra.mxu0 0.0
  %1724 = vmatprep.subr.mxu0 0.0
  %1725 = vmatpush1.msra.mxu0 0.0
  %1726 = vmatprep.subr.mxu0 0.0
  %1727 = vmatpush1.msra.mxu0 0.0
  %1728 = vmatprep.subr.mxu0 0.0
  %1729 = vmatpush1.msra.mxu0 0.0
  %1730 = vmatprep.subr.mxu0 0.0
  %1731 = vmatpush1.msra.mxu0 0.0
  %1732 = vmatprep.subr.mxu0 0.0
  %1733 = vmatpush1.msra.mxu0 0.0
  %1734 = vmatprep.subr.mxu0 0.0
  %1735 = vmatpush1.msra.mxu0 0.0
  %1736 = vmatprep.subr.mxu0 0.0
  %1737 = vmatpush1.msra.mxu0 0.0
  %1738 = vmatprep.subr.mxu0 0.0
  %1739 = vmatpush1.msra.mxu0 0.0
  %1740 = vmatprep.subr.mxu0 0.0
  %1741 = vmatpush1.msra.mxu0 0.0
  %1742 = vmatprep.subr.mxu0 0.0
  %1743 = vmatpush1.msra.mxu0 0.0
  %1744 = vmatprep.subr.mxu0 0.0
  %1745 = vmatpush1.msra.mxu0 0.0
  %1746 = vmatprep.subr.mxu0 0.0
  %1747 = vmatpush1.msra.mxu0 0.0
  %1748 = vmatprep.subr.mxu0 0.0
  %1749 = vmatpush1.msra.mxu0 0.0
  %1750 = vmatprep.subr.mxu0 0.0
  %1751 = vmatpush1.msra.mxu0 0.0
  %1752 = vmatprep.subr.mxu0 0.0
  %1753 = vmatpush1.msra.mxu0 0.0
  %1754 = vmatprep.subr.mxu0 0.0
  %1755 = vmatpush1.msra.mxu0 0.0
  %1756 = vmatprep.subr.mxu0 0.0
  %1757 = vmatpush1.msra.mxu0 0.0
  %1758 = vmatprep.subr.mxu0 0.0
  %1759 = vmatpush1.msra.mxu0 0.0
  %1760 = vmatprep.subr.mxu0 0.0
  %1761 = vmatpush1.msra.mxu0 0.0
  %1762 = vmatprep.subr.mxu0 0.0
  %1763 = vmatpush1.msra.mxu0 0.0
  %1764 = vmatprep.subr.mxu0 0.0
  %1765 = vmatpush1.msra.mxu0 0.0
  %1766 = vmatprep.subr.mxu0 0.0
  %1767 = vmatpush1.msra.mxu0 0.0
  %1768 = vmatprep.subr.mxu0 0.0
  %1769 = vmatpush1.msra.mxu0 0.0
  %1770 = vmatprep.subr.mxu0 0.0
  %1771 = vmatpush1.msra.mxu0 0.0
  %1772 = vmatprep.subr.mxu0 0.0
  %1773 = vmatpush1.msra.mxu0 0.0
  %1774 = vmatprep.subr.mxu0 0.0
  %1775 = vmatpush1.msra.mxu0 0.0
  %1776 = vmatprep.mubr.f32.mxu0 0.0
  %1777 = vmatmul.mubr.f32.gmra.mrb[0].mxu0 %v1689
  %v1778 = vpop.f32.mrb[0].mxu0
  %v1779 = vadd.f32 0.0, %v1778
  %v1780 = vpop.f32.mrb[0].mxu0
  %1781 = vmatprep.mubr.f32.mxu0 0.0
  %1782 = vmatmul.mubr.f32.gmra.mrb[0].mxu0 %v1692
  %v1783 = vpop.f32.mrb[0].mxu0
  %v1784 = vadd.f32 0.0, %v1783
  %v1785 = vpop.f32.mrb[0].mxu0
  %1786 = vmatprep.mubr.f32.mxu0 0.0
  %1787 = vmatmul.mubr.f32.gmra.mrb[0].mxu0 %v1695
  %v1788 = vpop.f32.mrb[0].mxu0
  %v1789 = vadd.f32 0.0, %v1788
  %v1790 = vpop.f32.mrb[0].mxu0
  %1791 = vmatprep.mubr.f32.mxu0 0.0
  %1792 = vmatmul.mubr.f32.gmra.mrb[0].mxu0 %v1698
  %v1793 = vpop.f32.mrb[0].mxu0
  %v1794 = vadd.f32 0.0, %v1793
  %v1795 = vpop.f32.mrb[0].mxu0
  %1796 = vmatprep.mubr.f32.mxu0 0.0
  %1797 = vmatmul.mubr.f32.gmra.mrb[0].mxu0 %v1701
  %v1798 = vpop.f32.mrb[0].mxu0
  %v1799 = vadd.f32 0.0, %v1798
  %v1800 = vpop.f32.mrb[0].mxu0
  %1801 = vmatprep.mubr.f32.mxu0 0.0
  %1802 = vmatmul.mubr.f32.gmra.mrb[0].mxu0 %v1704
  %v1803 = vpop.f32.mrb[0].mxu0
  %v1804 = vadd.f32 0.0, %v1803
  %v1805 = vpop.f32.mrb[0].mxu0
  %1806 = vmatprep.mubr.f32.mxu0 0.0
  %1807 = vmatmul.mubr.f32.gmra.mrb[0].mxu0 %v1707
  %v1808 = vpop.f32.mrb[0].mxu0
  %v1809 = vadd.f32 0.0, %v1808
  %v1810 = vpop.f32.mrb[0].mxu0
  %1811 = vmatprep.mubr.f32.mxu0 0.0
  %1812 = vmatmul.mubr.f32.gmra.mrb[0].mxu0 %v1710
  %v1813 = vpop.f32.mrb[0].mxu0
  %v1814 = vadd.f32 0.0, %v1813
  %v1815 = vpop.f32.mrb[0].mxu0
  %1816 = vdwg.mxu0
  %v1817 = vadd.f32 %v1668, %v1779
  %v1818 = vadd.f32 %v1669, %v1784
  %v1819 = vadd.f32 %v1670, %v1789
  %v1820 = vadd.f32 %v1671, %v1794
  %v1821 = vadd.f32 %v1672, %v1799
  %v1822 = vadd.f32 %v1673, %v1804
  %v1823 = vadd.f32 %v1674, %v1809
  %v1824 = vadd.f32 %v1675, %v1814
  %v1825 = vld [vmem:[%s1377 + $0x3] sm:$0xff]
  %v1826 = vld [vmem:[%s1377 + $0x13] sm:$0xff]
  %v1827 = vld [vmem:[%s1377 + $0x23] sm:$0xff]
  %v1828 = vld [vmem:[%s1377 + $0x33] sm:$0xff]
  %v1829 = vld [vmem:[%s1377 + $0x43] sm:$0xff]
  %v1830 = vld [vmem:[%s1377 + $0x53] sm:$0xff]
  %v1831 = vld [vmem:[%s1377 + $0x63] sm:$0xff]
  %v1832 = vld [vmem:[%s1377 + $0x73] sm:$0xff]
  %v1833 = vld [vmem:[%s3 + $0x100] sm:$0xff]
  %v1834 = vld [vmem:[%s3 + $0x108] sm:$0xff]
  %v1835 = vld [vmem:[%s3 + $0x110] sm:$0xff]
  %v1836 = vld [vmem:[%s3 + $0x118] sm:$0xff]
  %v1838 = vsel %vm79, %v1825, 0
  %v1841 = vsel %vm79, %v1826, 0
  %v1844 = vsel %vm79, %v1827, 0
  %v1847 = vsel %vm79, %v1828, 0
  %v1850 = vsel %vm79, %v1829, 0
  %v1853 = vsel %vm79, %v1830, 0
  %v1856 = vsel %vm79, %v1831, 0
  %v1859 = vsel %vm79, %v1832, 0
  %1861 = vmatprep.subr.mxu0 0.0
  %1862 = vmatpush1.msra.mxu0 %v1833
  %1863 = vmatprep.subr.mxu0 0.0
  %1864 = vmatpush1.msra.mxu0 %v1834
  %1865 = vmatprep.subr.mxu0 0.0
  %1866 = vmatpush1.msra.mxu0 %v1835
  %1867 = vmatprep.subr.mxu0 0.0
  %1868 = vmatpush1.msra.mxu0 %v1836
  %1869 = vmatprep.subr.mxu0 0.0
  %1870 = vmatpush1.msra.mxu0 0.0
  %1871 = vmatprep.subr.mxu0 0.0
  %1872 = vmatpush1.msra.mxu0 0.0
  %1873 = vmatprep.subr.mxu0 0.0
  %1874 = vmatpush1.msra.mxu0 0.0
  %1875 = vmatprep.subr.mxu0 0.0
  %1876 = vmatpush1.msra.mxu0 0.0
  %1877 = vmatprep.subr.mxu0 0.0
  %1878 = vmatpush1.msra.mxu0 0.0
  %1879 = vmatprep.subr.mxu0 0.0
  %1880 = vmatpush1.msra.mxu0 0.0
  %1881 = vmatprep.subr.mxu0 0.0
  %1882 = vmatpush1.msra.mxu0 0.0
  %1883 = vmatprep.subr.mxu0 0.0
  %1884 = vmatpush1.msra.mxu0 0.0
  %1885 = vmatprep.subr.mxu0 0.0
  %1886 = vmatpush1.msra.mxu0 0.0
  %1887 = vmatprep.subr.mxu0 0.0
  %1888 = vmatpush1.msra.mxu0 0.0
  %1889 = vmatprep.subr.mxu0 0.0
  %1890 = vmatpush1.msra.mxu0 0.0
  %1891 = vmatprep.subr.mxu0 0.0
  %1892 = vmatpush1.msra.mxu0 0.0
  %1893 = vmatprep.subr.mxu0 0.0
  %1894 = vmatpush1.msra.mxu0 0.0
  %1895 = vmatprep.subr.mxu0 0.0
  %1896 = vmatpush1.msra.mxu0 0.0
  %1897 = vmatprep.subr.mxu0 0.0
  %1898 = vmatpush1.msra.mxu0 0.0
  %1899 = vmatprep.subr.mxu0 0.0
  %1900 = vmatpush1.msra.mxu0 0.0
  %1901 = vmatprep.subr.mxu0 0.0
  %1902 = vmatpush1.msra.mxu0 0.0
  %1903 = vmatprep.subr.mxu0 0.0
  %1904 = vmatpush1.msra.mxu0 0.0
  %1905 = vmatprep.subr.mxu0 0.0
  %1906 = vmatpush1.msra.mxu0 0.0
  %1907 = vmatprep.subr.mxu0 0.0
  %1908 = vmatpush1.msra.mxu0 0.0
  %1909 = vmatprep.subr.mxu0 0.0
  %1910 = vmatpush1.msra.mxu0 0.0
  %1911 = vmatprep.subr.mxu0 0.0
  %1912 = vmatpush1.msra.mxu0 0.0
  %1913 = vmatprep.subr.mxu0 0.0
  %1914 = vmatpush1.msra.mxu0 0.0
  %1915 = vmatprep.subr.mxu0 0.0
  %1916 = vmatpush1.msra.mxu0 0.0
  %1917 = vmatprep.subr.mxu0 0.0
  %1918 = vmatpush1.msra.mxu0 0.0
  %1919 = vmatprep.subr.mxu0 0.0
  %1920 = vmatpush1.msra.mxu0 0.0
  %1921 = vmatprep.subr.mxu0 0.0
  %1922 = vmatpush1.msra.mxu0 0.0
  %1923 = vmatprep.subr.mxu0 0.0
  %1924 = vmatpush1.msra.mxu0 0.0
  %1925 = vmatprep.mubr.f32.mxu0 0.0
  %1926 = vmatmul.mubr.f32.gmra.mrb[0].mxu0 %v1838
  %v1927 = vpop.f32.mrb[0].mxu0
  %v1928 = vadd.f32 0.0, %v1927
  %v1929 = vpop.f32.mrb[0].mxu0
  %1930 = vmatprep.mubr.f32.mxu0 0.0
  %1931 = vmatmul.mubr.f32.gmra.mrb[0].mxu0 %v1841
  %v1932 = vpop.f32.mrb[0].mxu0
  %v1933 = vadd.f32 0.0, %v1932
  %v1934 = vpop.f32.mrb[0].mxu0
  %1935 = vmatprep.mubr.f32.mxu0 0.0
  %1936 = vmatmul.mubr.f32.gmra.mrb[0].mxu0 %v1844
  %v1937 = vpop.f32.mrb[0].mxu0
  %v1938 = vadd.f32 0.0, %v1937
  %v1939 = vpop.f32.mrb[0].mxu0
  %1940 = vmatprep.mubr.f32.mxu0 0.0
  %1941 = vmatmul.mubr.f32.gmra.mrb[0].mxu0 %v1847
  %v1942 = vpop.f32.mrb[0].mxu0
  %v1943 = vadd.f32 0.0, %v1942
  %v1944 = vpop.f32.mrb[0].mxu0
  %1945 = vmatprep.mubr.f32.mxu0 0.0
  %1946 = vmatmul.mubr.f32.gmra.mrb[0].mxu0 %v1850
  %v1947 = vpop.f32.mrb[0].mxu0
  %v1948 = vadd.f32 0.0, %v1947
  %v1949 = vpop.f32.mrb[0].mxu0
  %1950 = vmatprep.mubr.f32.mxu0 0.0
  %1951 = vmatmul.mubr.f32.gmra.mrb[0].mxu0 %v1853
  %v1952 = vpop.f32.mrb[0].mxu0
  %v1953 = vadd.f32 0.0, %v1952
  %v1954 = vpop.f32.mrb[0].mxu0
  %1955 = vmatprep.mubr.f32.mxu0 0.0
  %1956 = vmatmul.mubr.f32.gmra.mrb[0].mxu0 %v1856
  %v1957 = vpop.f32.mrb[0].mxu0
  %v1958 = vadd.f32 0.0, %v1957
  %v1959 = vpop.f32.mrb[0].mxu0
  %1960 = vmatprep.mubr.f32.mxu0 0.0
  %1961 = vmatmul.mubr.f32.gmra.mrb[0].mxu0 %v1859
  %v1962 = vpop.f32.mrb[0].mxu0
  %v1963 = vadd.f32 0.0, %v1962
  %v1964 = vpop.f32.mrb[0].mxu0
  %1965 = vdwg.mxu0
  %v1966 = vadd.f32 %v1817, %v1928
  %v1967 = vadd.f32 %v1818, %v1933
  %v1968 = vadd.f32 %v1819, %v1938
  %v1969 = vadd.f32 %v1820, %v1943
  %v1970 = vadd.f32 %v1821, %v1948
  %v1971 = vadd.f32 %v1822, %v1953
  %v1972 = vadd.f32 %v1823, %v1958
  %v1973 = vadd.f32 %v1824, %v1963
  %v1974 = vld [vmem:[%s1377 + $0x4] sm:$0xff]
  %v1975 = vld [vmem:[%s1377 + $0x14] sm:$0xff]
  %v1976 = vld [vmem:[%s1377 + $0x24] sm:$0xff]
  %v1977 = vld [vmem:[%s1377 + $0x34] sm:$0xff]
  %v1978 = vld [vmem:[%s1377 + $0x44] sm:$0xff]
  %v1979 = vld [vmem:[%s1377 + $0x54] sm:$0xff]
  %v1980 = vld [vmem:[%s1377 + $0x64] sm:$0xff]
  %v1981 = vld [vmem:[%s1377 + $0x74] sm:$0xff]
  %v1982 = vld [vmem:[%s3 + $0x120] sm:$0xff]
  %v1983 = vld [vmem:[%s3 + $0x128] sm:$0xff]
  %v1984 = vld [vmem:[%s3 + $0x130] sm:$0xff]
  %v1985 = vld [vmem:[%s3 + $0x138] sm:$0xff]
  %v1987 = vsel %vm79, %v1974, 0
  %v1990 = vsel %vm79, %v1975, 0
  %v1993 = vsel %vm79, %v1976, 0
  %v1996 = vsel %vm79, %v1977, 0
  %v1999 = vsel %vm79, %v1978, 0
  %v2002 = vsel %vm79, %v1979, 0
  %v2005 = vsel %vm79, %v1980, 0
  %v2008 = vsel %vm79, %v1981, 0
  %2010 = vmatprep.subr.mxu0 0.0
  %2011 = vmatpush1.msra.mxu0 %v1982
  %2012 = vmatprep.subr.mxu0 0.0
  %2013 = vmatpush1.msra.mxu0 %v1983
  %2014 = vmatprep.subr.mxu0 0.0
  %2015 = vmatpush1.msra.mxu0 %v1984
  %2016 = vmatprep.subr.mxu0 0.0
  %2017 = vmatpush1.msra.mxu0 %v1985
  %2018 = vmatprep.subr.mxu0 0.0
  %2019 = vmatpush1.msra.mxu0 0.0
  %2020 = vmatprep.subr.mxu0 0.0
  %2021 = vmatpush1.msra.mxu0 0.0
  %2022 = vmatprep.subr.mxu0 0.0
  %2023 = vmatpush1.msra.mxu0 0.0
  %2024 = vmatprep.subr.mxu0 0.0
  %2025 = vmatpush1.msra.mxu0 0.0
  %2026 = vmatprep.subr.mxu0 0.0
  %2027 = vmatpush1.msra.mxu0 0.0
  %2028 = vmatprep.subr.mxu0 0.0
  %2029 = vmatpush1.msra.mxu0 0.0
  %2030 = vmatprep.subr.mxu0 0.0
  %2031 = vmatpush1.msra.mxu0 0.0
  %2032 = vmatprep.subr.mxu0 0.0
  %2033 = vmatpush1.msra.mxu0 0.0
  %2034 = vmatprep.subr.mxu0 0.0
  %2035 = vmatpush1.msra.mxu0 0.0
  %2036 = vmatprep.subr.mxu0 0.0
  %2037 = vmatpush1.msra.mxu0 0.0
  %2038 = vmatprep.subr.mxu0 0.0
  %2039 = vmatpush1.msra.mxu0 0.0
  %2040 = vmatprep.subr.mxu0 0.0
  %2041 = vmatpush1.msra.mxu0 0.0
  %2042 = vmatprep.subr.mxu0 0.0
  %2043 = vmatpush1.msra.mxu0 0.0
  %2044 = vmatprep.subr.mxu0 0.0
  %2045 = vmatpush1.msra.mxu0 0.0
  %2046 = vmatprep.subr.mxu0 0.0
  %2047 = vmatpush1.msra.mxu0 0.0
  %2048 = vmatprep.subr.mxu0 0.0
  %2049 = vmatpush1.msra.mxu0 0.0
  %2050 = vmatprep.subr.mxu0 0.0
  %2051 = vmatpush1.msra.mxu0 0.0
  %2052 = vmatprep.subr.mxu0 0.0
  %2053 = vmatpush1.msra.mxu0 0.0
  %2054 = vmatprep.subr.mxu0 0.0
  %2055 = vmatpush1.msra.mxu0 0.0
  %2056 = vmatprep.subr.mxu0 0.0
  %2057 = vmatpush1.msra.mxu0 0.0
  %2058 = vmatprep.subr.mxu0 0.0
  %2059 = vmatpush1.msra.mxu0 0.0
  %2060 = vmatprep.subr.mxu0 0.0
  %2061 = vmatpush1.msra.mxu0 0.0
  %2062 = vmatprep.subr.mxu0 0.0
  %2063 = vmatpush1.msra.mxu0 0.0
  %2064 = vmatprep.subr.mxu0 0.0
  %2065 = vmatpush1.msra.mxu0 0.0
  %2066 = vmatprep.subr.mxu0 0.0
  %2067 = vmatpush1.msra.mxu0 0.0
  %2068 = vmatprep.subr.mxu0 0.0
  %2069 = vmatpush1.msra.mxu0 0.0
  %2070 = vmatprep.subr.mxu0 0.0
  %2071 = vmatpush1.msra.mxu0 0.0
  %2072 = vmatprep.subr.mxu0 0.0
  %2073 = vmatpush1.msra.mxu0 0.0
  %2074 = vmatprep.mubr.f32.mxu0 0.0
  %2075 = vmatmul.mubr.f32.gmra.mrb[0].mxu0 %v1987
  %v2076 = vpop.f32.mrb[0].mxu0
  %v2077 = vadd.f32 0.0, %v2076
  %v2078 = vpop.f32.mrb[0].mxu0
  %2079 = vmatprep.mubr.f32.mxu0 0.0
  %2080 = vmatmul.mubr.f32.gmra.mrb[0].mxu0 %v1990
  %v2081 = vpop.f32.mrb[0].mxu0
  %v2082 = vadd.f32 0.0, %v2081
  %v2083 = vpop.f32.mrb[0].mxu0
  %2084 = vmatprep.mubr.f32.mxu0 0.0
  %2085 = vmatmul.mubr.f32.gmra.mrb[0].mxu0 %v1993
  %v2086 = vpop.f32.mrb[0].mxu0
  %v2087 = vadd.f32 0.0, %v2086
  %v2088 = vpop.f32.mrb[0].mxu0
  %2089 = vmatprep.mubr.f32.mxu0 0.0
  %2090 = vmatmul.mubr.f32.gmra.mrb[0].mxu0 %v1996
  %v2091 = vpop.f32.mrb[0].mxu0
  %v2092 = vadd.f32 0.0, %v2091
  %v2093 = vpop.f32.mrb[0].mxu0
  %2094 = vmatprep.mubr.f32.mxu0 0.0
  %2095 = vmatmul.mubr.f32.gmra.mrb[0].mxu0 %v1999
  %v2096 = vpop.f32.mrb[0].mxu0
  %v2097 = vadd.f32 0.0, %v2096
  %v2098 = vpop.f32.mrb[0].mxu0
  %2099 = vmatprep.mubr.f32.mxu0 0.0
  %2100 = vmatmul.mubr.f32.gmra.mrb[0].mxu0 %v2002
  %v2101 = vpop.f32.mrb[0].mxu0
  %v2102 = vadd.f32 0.0, %v2101
  %v2103 = vpop.f32.mrb[0].mxu0
  %2104 = vmatprep.mubr.f32.mxu0 0.0
  %2105 = vmatmul.mubr.f32.gmra.mrb[0].mxu0 %v2005
  %v2106 = vpop.f32.mrb[0].mxu0
  %v2107 = vadd.f32 0.0, %v2106
  %v2108 = vpop.f32.mrb[0].mxu0
  %2109 = vmatprep.mubr.f32.mxu0 0.0
  %2110 = vmatmul.mubr.f32.gmra.mrb[0].mxu0 %v2008
  %v2111 = vpop.f32.mrb[0].mxu0
  %v2112 = vadd.f32 0.0, %v2111
  %v2113 = vpop.f32.mrb[0].mxu0
  %2114 = vdwg.mxu0
  %v2115 = vadd.f32 %v1966, %v2077
  %v2116 = vadd.f32 %v1967, %v2082
  %v2117 = vadd.f32 %v1968, %v2087
  %v2118 = vadd.f32 %v1969, %v2092
  %v2119 = vadd.f32 %v1970, %v2097
  %v2120 = vadd.f32 %v1971, %v2102
  %v2121 = vadd.f32 %v1972, %v2107
  %v2122 = vadd.f32 %v1973, %v2112
  %s2123 = scalar_lea.vmem [#allocation2], 32
  %v2124 = vld [vmem:[%s2123] sm:$0xff]
  %v2125 = vld [vmem:[%s2123 + $0x10] sm:$0xff]
  %v2126 = vld [vmem:[%s2123 + $0x20] sm:$0xff]
  %v2127 = vld [vmem:[%s2123 + $0x30] sm:$0xff]
  %v2128 = vld [vmem:[%s2123 + $0x40] sm:$0xff]
  %v2129 = vld [vmem:[%s2123 + $0x50] sm:$0xff]
  %v2130 = vld [vmem:[%s2123 + $0x60] sm:$0xff]
  %v2131 = vld [vmem:[%s2123 + $0x70] sm:$0xff]
  %v2132 = vld [vmem:[%s3 + $0x140] sm:$0xff]
  %v2133 = vld [vmem:[%s3 + $0x148] sm:$0xff]
  %v2134 = vld [vmem:[%s3 + $0x150] sm:$0xff]
  %v2135 = vld [vmem:[%s3 + $0x158] sm:$0xff]
  %v2137 = vsel %vm79, %v2124, 0
  %v2140 = vsel %vm79, %v2125, 0
  %v2143 = vsel %vm79, %v2126, 0
  %v2146 = vsel %vm79, %v2127, 0
  %v2149 = vsel %vm79, %v2128, 0
  %v2152 = vsel %vm79, %v2129, 0
  %v2155 = vsel %vm79, %v2130, 0
  %v2158 = vsel %vm79, %v2131, 0
  %2160 = vmatprep.subr.mxu0 0.0
  %2161 = vmatpush1.msra.mxu0 %v2132
  %2162 = vmatprep.subr.mxu0 0.0
  %2163 = vmatpush1.msra.mxu0 %v2133
  %2164 = vmatprep.subr.mxu0 0.0
  %2165 = vmatpush1.msra.mxu0 %v2134
  %2166 = vmatprep.subr.mxu0 0.0
  %2167 = vmatpush1.msra.mxu0 %v2135
  %2168 = vmatprep.subr.mxu0 0.0
  %2169 = vmatpush1.msra.mxu0 0.0
  %2170 = vmatprep.subr.mxu0 0.0
  %2171 = vmatpush1.msra.mxu0 0.0
  %2172 = vmatprep.subr.mxu0 0.0
  %2173 = vmatpush1.msra.mxu0 0.0
  %2174 = vmatprep.subr.mxu0 0.0
  %2175 = vmatpush1.msra.mxu0 0.0
  %2176 = vmatprep.subr.mxu0 0.0
  %2177 = vmatpush1.msra.mxu0 0.0
  %2178 = vmatprep.subr.mxu0 0.0
  %2179 = vmatpush1.msra.mxu0 0.0
  %2180 = vmatprep.subr.mxu0 0.0
  %2181 = vmatpush1.msra.mxu0 0.0
  %2182 = vmatprep.subr.mxu0 0.0
  %2183 = vmatpush1.msra.mxu0 0.0
  %2184 = vmatprep.subr.mxu0 0.0
  %2185 = vmatpush1.msra.mxu0 0.0
  %2186 = vmatprep.subr.mxu0 0.0
  %2187 = vmatpush1.msra.mxu0 0.0
  %2188 = vmatprep.subr.mxu0 0.0
  %2189 = vmatpush1.msra.mxu0 0.0
  %2190 = vmatprep.subr.mxu0 0.0
  %2191 = vmatpush1.msra.mxu0 0.0
  %2192 = vmatprep.subr.mxu0 0.0
  %2193 = vmatpush1.msra.mxu0 0.0
  %2194 = vmatprep.subr.mxu0 0.0
  %2195 = vmatpush1.msra.mxu0 0.0
  %2196 = vmatprep.subr.mxu0 0.0
  %2197 = vmatpush1.msra.mxu0 0.0
  %2198 = vmatprep.subr.mxu0 0.0
  %2199 = vmatpush1.msra.mxu0 0.0
  %2200 = vmatprep.subr.mxu0 0.0
  %2201 = vmatpush1.msra.mxu0 0.0
  %2202 = vmatprep.subr.mxu0 0.0
  %2203 = vmatpush1.msra.mxu0 0.0
  %2204 = vmatprep.subr.mxu0 0.0
  %2205 = vmatpush1.msra.mxu0 0.0
  %2206 = vmatprep.subr.mxu0 0.0
  %2207 = vmatpush1.msra.mxu0 0.0
  %2208 = vmatprep.subr.mxu0 0.0
  %2209 = vmatpush1.msra.mxu0 0.0
  %2210 = vmatprep.subr.mxu0 0.0
  %2211 = vmatpush1.msra.mxu0 0.0
  %2212 = vmatprep.subr.mxu0 0.0
  %2213 = vmatpush1.msra.mxu0 0.0
  %2214 = vmatprep.subr.mxu0 0.0
  %2215 = vmatpush1.msra.mxu0 0.0
  %2216 = vmatprep.subr.mxu0 0.0
  %2217 = vmatpush1.msra.mxu0 0.0
  %2218 = vmatprep.subr.mxu0 0.0
  %2219 = vmatpush1.msra.mxu0 0.0
  %2220 = vmatprep.subr.mxu0 0.0
  %2221 = vmatpush1.msra.mxu0 0.0
  %2222 = vmatprep.subr.mxu0 0.0
  %2223 = vmatpush1.msra.mxu0 0.0
  %2224 = vmatprep.mubr.f32.mxu0 0.0
  %2225 = vmatmul.mubr.f32.gmra.mrb[0].mxu0 %v2137
  %v2226 = vpop.f32.mrb[0].mxu0
  %v2227 = vadd.f32 0.0, %v2226
  %v2228 = vpop.f32.mrb[0].mxu0
  %2229 = vmatprep.mubr.f32.mxu0 0.0
  %2230 = vmatmul.mubr.f32.gmra.mrb[0].mxu0 %v2140
  %v2231 = vpop.f32.mrb[0].mxu0
  %v2232 = vadd.f32 0.0, %v2231
  %v2233 = vpop.f32.mrb[0].mxu0
  %2234 = vmatprep.mubr.f32.mxu0 0.0
  %2235 = vmatmul.mubr.f32.gmra.mrb[0].mxu0 %v2143
  %v2236 = vpop.f32.mrb[0].mxu0
  %v2237 = vadd.f32 0.0, %v2236
  %v2238 = vpop.f32.mrb[0].mxu0
  %2239 = vmatprep.mubr.f32.mxu0 0.0
  %2240 = vmatmul.mubr.f32.gmra.mrb[0].mxu0 %v2146
  %v2241 = vpop.f32.mrb[0].mxu0
  %v2242 = vadd.f32 0.0, %v2241
  %v2243 = vpop.f32.mrb[0].mxu0
  %2244 = vmatprep.mubr.f32.mxu0 0.0
  %2245 = vmatmul.mubr.f32.gmra.mrb[0].mxu0 %v2149
  %v2246 = vpop.f32.mrb[0].mxu0
  %v2247 = vadd.f32 0.0, %v2246
  %v2248 = vpop.f32.mrb[0].mxu0
  %2249 = vmatprep.mubr.f32.mxu0 0.0
  %2250 = vmatmul.mubr.f32.gmra.mrb[0].mxu0 %v2152
  %v2251 = vpop.f32.mrb[0].mxu0
  %v2252 = vadd.f32 0.0, %v2251
  %v2253 = vpop.f32.mrb[0].mxu0
  %2254 = vmatprep.mubr.f32.mxu0 0.0
  %2255 = vmatmul.mubr.f32.gmra.mrb[0].mxu0 %v2155
  %v2256 = vpop.f32.mrb[0].mxu0
  %v2257 = vadd.f32 0.0, %v2256
  %v2258 = vpop.f32.mrb[0].mxu0
  %2259 = vmatprep.mubr.f32.mxu0 0.0
  %2260 = vmatmul.mubr.f32.gmra.mrb[0].mxu0 %v2158
  %v2261 = vpop.f32.mrb[0].mxu0
  %v2262 = vadd.f32 0.0, %v2261
  %v2263 = vpop.f32.mrb[0].mxu0
  %2264 = vdwg.mxu0
  %v2265 = vadd.f32 %v2115, %v2227
  %v2266 = vadd.f32 %v2116, %v2232
  %v2267 = vadd.f32 %v2117, %v2237
  %v2268 = vadd.f32 %v2118, %v2242
  %v2269 = vadd.f32 %v2119, %v2247
  %v2270 = vadd.f32 %v2120, %v2252
  %v2271 = vadd.f32 %v2121, %v2257
  %v2272 = vadd.f32 %v2122, %v2262
  %v2273 = vld [vmem:[%s2123 + $0x1] sm:$0xff]
  %v2274 = vld [vmem:[%s2123 + $0x11] sm:$0xff]
  %v2275 = vld [vmem:[%s2123 + $0x21] sm:$0xff]
  %v2276 = vld [vmem:[%s2123 + $0x31] sm:$0xff]
  %v2277 = vld [vmem:[%s2123 + $0x41] sm:$0xff]
  %v2278 = vld [vmem:[%s2123 + $0x51] sm:$0xff]
  %v2279 = vld [vmem:[%s2123 + $0x61] sm:$0xff]
  %v2280 = vld [vmem:[%s2123 + $0x71] sm:$0xff]
  %v2281 = vld [vmem:[%s3 + $0x160] sm:$0xff]
  %v2282 = vld [vmem:[%s3 + $0x168] sm:$0xff]
  %v2283 = vld [vmem:[%s3 + $0x170] sm:$0xff]
  %v2284 = vld [vmem:[%s3 + $0x178] sm:$0xff]
  %v2286 = vsel %vm79, %v2273, 0
  %v2289 = vsel %vm79, %v2274, 0
  %v2292 = vsel %vm79, %v2275, 0
  %v2295 = vsel %vm79, %v2276, 0
  %v2298 = vsel %vm79, %v2277, 0
  %v2301 = vsel %vm79, %v2278, 0
  %v2304 = vsel %vm79, %v2279, 0
  %v2307 = vsel %vm79, %v2280, 0
  %2309 = vmatprep.subr.mxu0 0.0
  %2310 = vmatpush1.msra.mxu0 %v2281
  %2311 = vmatprep.subr.mxu0 0.0
  %2312 = vmatpush1.msra.mxu0 %v2282
  %2313 = vmatprep.subr.mxu0 0.0
  %2314 = vmatpush1.msra.mxu0 %v2283
  %2315 = vmatprep.subr.mxu0 0.0
  %2316 = vmatpush1.msra.mxu0 %v2284
  %2317 = vmatprep.subr.mxu0 0.0
  %2318 = vmatpush1.msra.mxu0 0.0
  %2319 = vmatprep.subr.mxu0 0.0
  %2320 = vmatpush1.msra.mxu0 0.0
  %2321 = vmatprep.subr.mxu0 0.0
  %2322 = vmatpush1.msra.mxu0 0.0
  %2323 = vmatprep.subr.mxu0 0.0
  %2324 = vmatpush1.msra.mxu0 0.0
  %2325 = vmatprep.subr.mxu0 0.0
  %2326 = vmatpush1.msra.mxu0 0.0
  %2327 = vmatprep.subr.mxu0 0.0
  %2328 = vmatpush1.msra.mxu0 0.0
  %2329 = vmatprep.subr.mxu0 0.0
  %2330 = vmatpush1.msra.mxu0 0.0
  %2331 = vmatprep.subr.mxu0 0.0
  %2332 = vmatpush1.msra.mxu0 0.0
  %2333 = vmatprep.subr.mxu0 0.0
  %2334 = vmatpush1.msra.mxu0 0.0
  %2335 = vmatprep.subr.mxu0 0.0
  %2336 = vmatpush1.msra.mxu0 0.0
  %2337 = vmatprep.subr.mxu0 0.0
  %2338 = vmatpush1.msra.mxu0 0.0
  %2339 = vmatprep.subr.mxu0 0.0
  %2340 = vmatpush1.msra.mxu0 0.0
  %2341 = vmatprep.subr.mxu0 0.0
  %2342 = vmatpush1.msra.mxu0 0.0
  %2343 = vmatprep.subr.mxu0 0.0
  %2344 = vmatpush1.msra.mxu0 0.0
  %2345 = vmatprep.subr.mxu0 0.0
  %2346 = vmatpush1.msra.mxu0 0.0
  %2347 = vmatprep.subr.mxu0 0.0
  %2348 = vmatpush1.msra.mxu0 0.0
  %2349 = vmatprep.subr.mxu0 0.0
  %2350 = vmatpush1.msra.mxu0 0.0
  %2351 = vmatprep.subr.mxu0 0.0
  %2352 = vmatpush1.msra.mxu0 0.0
  %2353 = vmatprep.subr.mxu0 0.0
  %2354 = vmatpush1.msra.mxu0 0.0
  %2355 = vmatprep.subr.mxu0 0.0
  %2356 = vmatpush1.msra.mxu0 0.0
  %2357 = vmatprep.subr.mxu0 0.0
  %2358 = vmatpush1.msra.mxu0 0.0
  %2359 = vmatprep.subr.mxu0 0.0
  %2360 = vmatpush1.msra.mxu0 0.0
  %2361 = vmatprep.subr.mxu0 0.0
  %2362 = vmatpush1.msra.mxu0 0.0
  %2363 = vmatprep.subr.mxu0 0.0
  %2364 = vmatpush1.msra.mxu0 0.0
  %2365 = vmatprep.subr.mxu0 0.0
  %2366 = vmatpush1.msra.mxu0 0.0
  %2367 = vmatprep.subr.mxu0 0.0
  %2368 = vmatpush1.msra.mxu0 0.0
  %2369 = vmatprep.subr.mxu0 0.0
  %2370 = vmatpush1.msra.mxu0 0.0
  %2371 = vmatprep.subr.mxu0 0.0
  %2372 = vmatpush1.msra.mxu0 0.0
  %2373 = vmatprep.mubr.f32.mxu0 0.0
  %2374 = vmatmul.mubr.f32.gmra.mrb[0].mxu0 %v2286
  %v2375 = vpop.f32.mrb[0].mxu0
  %v2376 = vadd.f32 0.0, %v2375
  %v2377 = vpop.f32.mrb[0].mxu0
  %2378 = vmatprep.mubr.f32.mxu0 0.0
  %2379 = vmatmul.mubr.f32.gmra.mrb[0].mxu0 %v2289
  %v2380 = vpop.f32.mrb[0].mxu0
  %v2381 = vadd.f32 0.0, %v2380
  %v2382 = vpop.f32.mrb[0].mxu0
  %2383 = vmatprep.mubr.f32.mxu0 0.0
  %2384 = vmatmul.mubr.f32.gmra.mrb[0].mxu0 %v2292
  %v2385 = vpop.f32.mrb[0].mxu0
  %v2386 = vadd.f32 0.0, %v2385
  %v2387 = vpop.f32.mrb[0].mxu0
  %2388 = vmatprep.mubr.f32.mxu0 0.0
  %2389 = vmatmul.mubr.f32.gmra.mrb[0].mxu0 %v2295
  %v2390 = vpop.f32.mrb[0].mxu0
  %v2391 = vadd.f32 0.0, %v2390
  %v2392 = vpop.f32.mrb[0].mxu0
  %2393 = vmatprep.mubr.f32.mxu0 0.0
  %2394 = vmatmul.mubr.f32.gmra.mrb[0].mxu0 %v2298
  %v2395 = vpop.f32.mrb[0].mxu0
  %v2396 = vadd.f32 0.0, %v2395
  %v2397 = vpop.f32.mrb[0].mxu0
  %2398 = vmatprep.mubr.f32.mxu0 0.0
  %2399 = vmatmul.mubr.f32.gmra.mrb[0].mxu0 %v2301
  %v2400 = vpop.f32.mrb[0].mxu0
  %v2401 = vadd.f32 0.0, %v2400
  %v2402 = vpop.f32.mrb[0].mxu0
  %2403 = vmatprep.mubr.f32.mxu0 0.0
  %2404 = vmatmul.mubr.f32.gmra.mrb[0].mxu0 %v2304
  %v2405 = vpop.f32.mrb[0].mxu0
  %v2406 = vadd.f32 0.0, %v2405
  %v2407 = vpop.f32.mrb[0].mxu0
  %2408 = vmatprep.mubr.f32.mxu0 0.0
  %2409 = vmatmul.mubr.f32.gmra.mrb[0].mxu0 %v2307
  %v2410 = vpop.f32.mrb[0].mxu0
  %v2411 = vadd.f32 0.0, %v2410
  %v2412 = vpop.f32.mrb[0].mxu0
  %2413 = vdwg.mxu0
  %v2414 = vadd.f32 %v2265, %v2376
  %v2415 = vadd.f32 %v2266, %v2381
  %v2416 = vadd.f32 %v2267, %v2386
  %v2417 = vadd.f32 %v2268, %v2391
  %v2418 = vadd.f32 %v2269, %v2396
  %v2419 = vadd.f32 %v2270, %v2401
  %v2420 = vadd.f32 %v2271, %v2406
  %v2421 = vadd.f32 %v2272, %v2411
  %v2422 = vld [vmem:[%s2123 + $0x2] sm:$0xff]
  %v2423 = vld [vmem:[%s2123 + $0x12] sm:$0xff]
  %v2424 = vld [vmem:[%s2123 + $0x22] sm:$0xff]
  %v2425 = vld [vmem:[%s2123 + $0x32] sm:$0xff]
  %v2426 = vld [vmem:[%s2123 + $0x42] sm:$0xff]
  %v2427 = vld [vmem:[%s2123 + $0x52] sm:$0xff]
  %v2428 = vld [vmem:[%s2123 + $0x62] sm:$0xff]
  %v2429 = vld [vmem:[%s2123 + $0x72] sm:$0xff]
  %v2430 = vld [vmem:[%s3 + $0x180] sm:$0xff]
  %v2431 = vld [vmem:[%s3 + $0x188] sm:$0xff]
  %v2432 = vld [vmem:[%s3 + $0x190] sm:$0xff]
  %v2433 = vld [vmem:[%s3 + $0x198] sm:$0xff]
  %v2435 = vsel %vm79, %v2422, 0
  %v2438 = vsel %vm79, %v2423, 0
  %v2441 = vsel %vm79, %v2424, 0
  %v2444 = vsel %vm79, %v2425, 0
  %v2447 = vsel %vm79, %v2426, 0
  %v2450 = vsel %vm79, %v2427, 0
  %v2453 = vsel %vm79, %v2428, 0
  %v2456 = vsel %vm79, %v2429, 0
  %2458 = vmatprep.subr.mxu0 0.0
  %2459 = vmatpush1.msra.mxu0 %v2430
  %2460 = vmatprep.subr.mxu0 0.0
  %2461 = vmatpush1.msra.mxu0 %v2431
  %2462 = vmatprep.subr.mxu0 0.0
  %2463 = vmatpush1.msra.mxu0 %v2432
  %2464 = vmatprep.subr.mxu0 0.0
  %2465 = vmatpush1.msra.mxu0 %v2433
  %2466 = vmatprep.subr.mxu0 0.0
  %2467 = vmatpush1.msra.mxu0 0.0
  %2468 = vmatprep.subr.mxu0 0.0
  %2469 = vmatpush1.msra.mxu0 0.0
  %2470 = vmatprep.subr.mxu0 0.0
  %2471 = vmatpush1.msra.mxu0 0.0
  %2472 = vmatprep.subr.mxu0 0.0
  %2473 = vmatpush1.msra.mxu0 0.0
  %2474 = vmatprep.subr.mxu0 0.0
  %2475 = vmatpush1.msra.mxu0 0.0
  %2476 = vmatprep.subr.mxu0 0.0
  %2477 = vmatpush1.msra.mxu0 0.0
  %2478 = vmatprep.subr.mxu0 0.0
  %2479 = vmatpush1.msra.mxu0 0.0
  %2480 = vmatprep.subr.mxu0 0.0
  %2481 = vmatpush1.msra.mxu0 0.0
  %2482 = vmatprep.subr.mxu0 0.0
  %2483 = vmatpush1.msra.mxu0 0.0
  %2484 = vmatprep.subr.mxu0 0.0
  %2485 = vmatpush1.msra.mxu0 0.0
  %2486 = vmatprep.subr.mxu0 0.0
  %2487 = vmatpush1.msra.mxu0 0.0
  %2488 = vmatprep.subr.mxu0 0.0
  %2489 = vmatpush1.msra.mxu0 0.0
  %2490 = vmatprep.subr.mxu0 0.0
  %2491 = vmatpush1.msra.mxu0 0.0
  %2492 = vmatprep.subr.mxu0 0.0
  %2493 = vmatpush1.msra.mxu0 0.0
  %2494 = vmatprep.subr.mxu0 0.0
  %2495 = vmatpush1.msra.mxu0 0.0
  %2496 = vmatprep.subr.mxu0 0.0
  %2497 = vmatpush1.msra.mxu0 0.0
  %2498 = vmatprep.subr.mxu0 0.0
  %2499 = vmatpush1.msra.mxu0 0.0
  %2500 = vmatprep.subr.mxu0 0.0
  %2501 = vmatpush1.msra.mxu0 0.0
  %2502 = vmatprep.subr.mxu0 0.0
  %2503 = vmatpush1.msra.mxu0 0.0
  %2504 = vmatprep.subr.mxu0 0.0
  %2505 = vmatpush1.msra.mxu0 0.0
  %2506 = vmatprep.subr.mxu0 0.0
  %2507 = vmatpush1.msra.mxu0 0.0
  %2508 = vmatprep.subr.mxu0 0.0
  %2509 = vmatpush1.msra.mxu0 0.0
  %2510 = vmatprep.subr.mxu0 0.0
  %2511 = vmatpush1.msra.mxu0 0.0
  %2512 = vmatprep.subr.mxu0 0.0
  %2513 = vmatpush1.msra.mxu0 0.0
  %2514 = vmatprep.subr.mxu0 0.0
  %2515 = vmatpush1.msra.mxu0 0.0
  %2516 = vmatprep.subr.mxu0 0.0
  %2517 = vmatpush1.msra.mxu0 0.0
  %2518 = vmatprep.subr.mxu0 0.0
  %2519 = vmatpush1.msra.mxu0 0.0
  %2520 = vmatprep.subr.mxu0 0.0
  %2521 = vmatpush1.msra.mxu0 0.0
  %2522 = vmatprep.mubr.f32.mxu0 0.0
  %2523 = vmatmul.mubr.f32.gmra.mrb[0].mxu0 %v2435
  %v2524 = vpop.f32.mrb[0].mxu0
  %v2525 = vadd.f32 0.0, %v2524
  %v2526 = vpop.f32.mrb[0].mxu0
  %2527 = vmatprep.mubr.f32.mxu0 0.0
  %2528 = vmatmul.mubr.f32.gmra.mrb[0].mxu0 %v2438
  %v2529 = vpop.f32.mrb[0].mxu0
  %v2530 = vadd.f32 0.0, %v2529
  %v2531 = vpop.f32.mrb[0].mxu0
  %2532 = vmatprep.mubr.f32.mxu0 0.0
  %2533 = vmatmul.mubr.f32.gmra.mrb[0].mxu0 %v2441
  %v2534 = vpop.f32.mrb[0].mxu0
  %v2535 = vadd.f32 0.0, %v2534
  %v2536 = vpop.f32.mrb[0].mxu0
  %2537 = vmatprep.mubr.f32.mxu0 0.0
  %2538 = vmatmul.mubr.f32.gmra.mrb[0].mxu0 %v2444
  %v2539 = vpop.f32.mrb[0].mxu0
  %v2540 = vadd.f32 0.0, %v2539
  %v2541 = vpop.f32.mrb[0].mxu0
  %2542 = vmatprep.mubr.f32.mxu0 0.0
  %2543 = vmatmul.mubr.f32.gmra.mrb[0].mxu0 %v2447
  %v2544 = vpop.f32.mrb[0].mxu0
  %v2545 = vadd.f32 0.0, %v2544
  %v2546 = vpop.f32.mrb[0].mxu0
  %2547 = vmatprep.mubr.f32.mxu0 0.0
  %2548 = vmatmul.mubr.f32.gmra.mrb[0].mxu0 %v2450
  %v2549 = vpop.f32.mrb[0].mxu0
  %v2550 = vadd.f32 0.0, %v2549
  %v2551 = vpop.f32.mrb[0].mxu0
  %2552 = vmatprep.mubr.f32.mxu0 0.0
  %2553 = vmatmul.mubr.f32.gmra.mrb[0].mxu0 %v2453
  %v2554 = vpop.f32.mrb[0].mxu0
  %v2555 = vadd.f32 0.0, %v2554
  %v2556 = vpop.f32.mrb[0].mxu0
  %2557 = vmatprep.mubr.f32.mxu0 0.0
  %2558 = vmatmul.mubr.f32.gmra.mrb[0].mxu0 %v2456
  %v2559 = vpop.f32.mrb[0].mxu0
  %v2560 = vadd.f32 0.0, %v2559
  %v2561 = vpop.f32.mrb[0].mxu0
  %2562 = vdwg.mxu0
  %v2563 = vadd.f32 %v2414, %v2525
  %v2564 = vadd.f32 %v2415, %v2530
  %v2565 = vadd.f32 %v2416, %v2535
  %v2566 = vadd.f32 %v2417, %v2540
  %v2567 = vadd.f32 %v2418, %v2545
  %v2568 = vadd.f32 %v2419, %v2550
  %v2569 = vadd.f32 %v2420, %v2555
  %v2570 = vadd.f32 %v2421, %v2560
  %v2571 = vld [vmem:[%s2123 + $0x3] sm:$0xff]
  %v2572 = vld [vmem:[%s2123 + $0x13] sm:$0xff]
  %v2573 = vld [vmem:[%s2123 + $0x23] sm:$0xff]
  %v2574 = vld [vmem:[%s2123 + $0x33] sm:$0xff]
  %v2575 = vld [vmem:[%s2123 + $0x43] sm:$0xff]
  %v2576 = vld [vmem:[%s2123 + $0x53] sm:$0xff]
  %v2577 = vld [vmem:[%s2123 + $0x63] sm:$0xff]
  %v2578 = vld [vmem:[%s2123 + $0x73] sm:$0xff]
  %v2579 = vld [vmem:[%s3 + $0x1a0] sm:$0xff]
  %v2580 = vld [vmem:[%s3 + $0x1a8] sm:$0xff]
  %v2581 = vld [vmem:[%s3 + $0x1b0] sm:$0xff]
  %v2582 = vld [vmem:[%s3 + $0x1b8] sm:$0xff]
  %v2584 = vsel %vm79, %v2571, 0
  %v2587 = vsel %vm79, %v2572, 0
  %v2590 = vsel %vm79, %v2573, 0
  %v2593 = vsel %vm79, %v2574, 0
  %v2596 = vsel %vm79, %v2575, 0
  %v2599 = vsel %vm79, %v2576, 0
  %v2602 = vsel %vm79, %v2577, 0
  %v2605 = vsel %vm79, %v2578, 0
  %2607 = vmatprep.subr.mxu0 0.0
  %2608 = vmatpush1.msra.mxu0 %v2579
  %2609 = vmatprep.subr.mxu0 0.0
  %2610 = vmatpush1.msra.mxu0 %v2580
  %2611 = vmatprep.subr.mxu0 0.0
  %2612 = vmatpush1.msra.mxu0 %v2581
  %2613 = vmatprep.subr.mxu0 0.0
  %2614 = vmatpush1.msra.mxu0 %v2582
  %2615 = vmatprep.subr.mxu0 0.0
  %2616 = vmatpush1.msra.mxu0 0.0
  %2617 = vmatprep.subr.mxu0 0.0
  %2618 = vmatpush1.msra.mxu0 0.0
  %2619 = vmatprep.subr.mxu0 0.0
  %2620 = vmatpush1.msra.mxu0 0.0
  %2621 = vmatprep.subr.mxu0 0.0
  %2622 = vmatpush1.msra.mxu0 0.0
  %2623 = vmatprep.subr.mxu0 0.0
  %2624 = vmatpush1.msra.mxu0 0.0
  %2625 = vmatprep.subr.mxu0 0.0
  %2626 = vmatpush1.msra.mxu0 0.0
  %2627 = vmatprep.subr.mxu0 0.0
  %2628 = vmatpush1.msra.mxu0 0.0
  %2629 = vmatprep.subr.mxu0 0.0
  %2630 = vmatpush1.msra.mxu0 0.0
  %2631 = vmatprep.subr.mxu0 0.0
  %2632 = vmatpush1.msra.mxu0 0.0
  %2633 = vmatprep.subr.mxu0 0.0
  %2634 = vmatpush1.msra.mxu0 0.0
  %2635 = vmatprep.subr.mxu0 0.0
  %2636 = vmatpush1.msra.mxu0 0.0
  %2637 = vmatprep.subr.mxu0 0.0
  %2638 = vmatpush1.msra.mxu0 0.0
  %2639 = vmatprep.subr.mxu0 0.0
  %2640 = vmatpush1.msra.mxu0 0.0
  %2641 = vmatprep.subr.mxu0 0.0
  %2642 = vmatpush1.msra.mxu0 0.0
  %2643 = vmatprep.subr.mxu0 0.0
  %2644 = vmatpush1.msra.mxu0 0.0
  %2645 = vmatprep.subr.mxu0 0.0
  %2646 = vmatpush1.msra.mxu0 0.0
  %2647 = vmatprep.subr.mxu0 0.0
  %2648 = vmatpush1.msra.mxu0 0.0
  %2649 = vmatprep.subr.mxu0 0.0
  %2650 = vmatpush1.msra.mxu0 0.0
  %2651 = vmatprep.subr.mxu0 0.0
  %2652 = vmatpush1.msra.mxu0 0.0
  %2653 = vmatprep.subr.mxu0 0.0
  %2654 = vmatpush1.msra.mxu0 0.0
  %2655 = vmatprep.subr.mxu0 0.0
  %2656 = vmatpush1.msra.mxu0 0.0
  %2657 = vmatprep.subr.mxu0 0.0
  %2658 = vmatpush1.msra.mxu0 0.0
  %2659 = vmatprep.subr.mxu0 0.0
  %2660 = vmatpush1.msra.mxu0 0.0
  %2661 = vmatprep.subr.mxu0 0.0
  %2662 = vmatpush1.msra.mxu0 0.0
  %2663 = vmatprep.subr.mxu0 0.0
  %2664 = vmatpush1.msra.mxu0 0.0
  %2665 = vmatprep.subr.mxu0 0.0
  %2666 = vmatpush1.msra.mxu0 0.0
  %2667 = vmatprep.subr.mxu0 0.0
  %2668 = vmatpush1.msra.mxu0 0.0
  %2669 = vmatprep.subr.mxu0 0.0
  %2670 = vmatpush1.msra.mxu0 0.0
  %2671 = vmatprep.mubr.f32.mxu0 0.0
  %2672 = vmatmul.mubr.f32.gmra.mrb[0].mxu0 %v2584
  %v2673 = vpop.f32.mrb[0].mxu0
  %v2674 = vadd.f32 0.0, %v2673
  %v2675 = vpop.f32.mrb[0].mxu0
  %2676 = vmatprep.mubr.f32.mxu0 0.0
  %2677 = vmatmul.mubr.f32.gmra.mrb[0].mxu0 %v2587
  %v2678 = vpop.f32.mrb[0].mxu0
  %v2679 = vadd.f32 0.0, %v2678
  %v2680 = vpop.f32.mrb[0].mxu0
  %2681 = vmatprep.mubr.f32.mxu0 0.0
  %2682 = vmatmul.mubr.f32.gmra.mrb[0].mxu0 %v2590
  %v2683 = vpop.f32.mrb[0].mxu0
  %v2684 = vadd.f32 0.0, %v2683
  %v2685 = vpop.f32.mrb[0].mxu0
  %2686 = vmatprep.mubr.f32.mxu0 0.0
  %2687 = vmatmul.mubr.f32.gmra.mrb[0].mxu0 %v2593
  %v2688 = vpop.f32.mrb[0].mxu0
  %v2689 = vadd.f32 0.0, %v2688
  %v2690 = vpop.f32.mrb[0].mxu0
  %2691 = vmatprep.mubr.f32.mxu0 0.0
  %2692 = vmatmul.mubr.f32.gmra.mrb[0].mxu0 %v2596
  %v2693 = vpop.f32.mrb[0].mxu0
  %v2694 = vadd.f32 0.0, %v2693
  %v2695 = vpop.f32.mrb[0].mxu0
  %2696 = vmatprep.mubr.f32.mxu0 0.0
  %2697 = vmatmul.mubr.f32.gmra.mrb[0].mxu0 %v2599
  %v2698 = vpop.f32.mrb[0].mxu0
  %v2699 = vadd.f32 0.0, %v2698
  %v2700 = vpop.f32.mrb[0].mxu0
  %2701 = vmatprep.mubr.f32.mxu0 0.0
  %2702 = vmatmul.mubr.f32.gmra.mrb[0].mxu0 %v2602
  %v2703 = vpop.f32.mrb[0].mxu0
  %v2704 = vadd.f32 0.0, %v2703
  %v2705 = vpop.f32.mrb[0].mxu0
  %2706 = vmatprep.mubr.f32.mxu0 0.0
  %2707 = vmatmul.mubr.f32.gmra.mrb[0].mxu0 %v2605
  %v2708 = vpop.f32.mrb[0].mxu0
  %v2709 = vadd.f32 0.0, %v2708
  %v2710 = vpop.f32.mrb[0].mxu0
  %2711 = vdwg.mxu0
  %v2712 = vadd.f32 %v2563, %v2674
  %v2713 = vadd.f32 %v2564, %v2679
  %v2714 = vadd.f32 %v2565, %v2684
  %v2715 = vadd.f32 %v2566, %v2689
  %v2716 = vadd.f32 %v2567, %v2694
  %v2717 = vadd.f32 %v2568, %v2699
  %v2718 = vadd.f32 %v2569, %v2704
  %v2719 = vadd.f32 %v2570, %v2709
  %v2720 = vld [vmem:[%s2123 + $0x4] sm:$0xff]
  %v2721 = vld [vmem:[%s2123 + $0x14] sm:$0xff]
  %v2722 = vld [vmem:[%s2123 + $0x24] sm:$0xff]
  %v2723 = vld [vmem:[%s2123 + $0x34] sm:$0xff]
  %v2724 = vld [vmem:[%s2123 + $0x44] sm:$0xff]
  %v2725 = vld [vmem:[%s2123 + $0x54] sm:$0xff]
  %v2726 = vld [vmem:[%s2123 + $0x64] sm:$0xff]
  %v2727 = vld [vmem:[%s2123 + $0x74] sm:$0xff]
  %v2728 = vld [vmem:[%s3 + $0x1c0] sm:$0xff]
  %v2729 = vld [vmem:[%s3 + $0x1c8] sm:$0xff]
  %v2730 = vld [vmem:[%s3 + $0x1d0] sm:$0xff]
  %v2731 = vld [vmem:[%s3 + $0x1d8] sm:$0xff]
  %v2733 = vsel %vm79, %v2720, 0
  %v2736 = vsel %vm79, %v2721, 0
  %v2739 = vsel %vm79, %v2722, 0
  %v2742 = vsel %vm79, %v2723, 0
  %v2745 = vsel %vm79, %v2724, 0
  %v2748 = vsel %vm79, %v2725, 0
  %v2751 = vsel %vm79, %v2726, 0
  %v2754 = vsel %vm79, %v2727, 0
  %2756 = vmatprep.subr.mxu0 0.0
  %2757 = vmatpush1.msra.mxu0 %v2728
  %2758 = vmatprep.subr.mxu0 0.0
  %2759 = vmatpush1.msra.mxu0 %v2729
  %2760 = vmatprep.subr.mxu0 0.0
  %2761 = vmatpush1.msra.mxu0 %v2730
  %2762 = vmatprep.subr.mxu0 0.0
  %2763 = vmatpush1.msra.mxu0 %v2731
  %2764 = vmatprep.subr.mxu0 0.0
  %2765 = vmatpush1.msra.mxu0 0.0
  %2766 = vmatprep.subr.mxu0 0.0
  %2767 = vmatpush1.msra.mxu0 0.0
  %2768 = vmatprep.subr.mxu0 0.0
  %2769 = vmatpush1.msra.mxu0 0.0
  %2770 = vmatprep.subr.mxu0 0.0
  %2771 = vmatpush1.msra.mxu0 0.0
  %2772 = vmatprep.subr.mxu0 0.0
  %2773 = vmatpush1.msra.mxu0 0.0
  %2774 = vmatprep.subr.mxu0 0.0
  %2775 = vmatpush1.msra.mxu0 0.0
  %2776 = vmatprep.subr.mxu0 0.0
  %2777 = vmatpush1.msra.mxu0 0.0
  %2778 = vmatprep.subr.mxu0 0.0
  %2779 = vmatpush1.msra.mxu0 0.0
  %2780 = vmatprep.subr.mxu0 0.0
  %2781 = vmatpush1.msra.mxu0 0.0
  %2782 = vmatprep.subr.mxu0 0.0
  %2783 = vmatpush1.msra.mxu0 0.0
  %2784 = vmatprep.subr.mxu0 0.0
  %2785 = vmatpush1.msra.mxu0 0.0
  %2786 = vmatprep.subr.mxu0 0.0
  %2787 = vmatpush1.msra.mxu0 0.0
  %2788 = vmatprep.subr.mxu0 0.0
  %2789 = vmatpush1.msra.mxu0 0.0
  %2790 = vmatprep.subr.mxu0 0.0
  %2791 = vmatpush1.msra.mxu0 0.0
  %2792 = vmatprep.subr.mxu0 0.0
  %2793 = vmatpush1.msra.mxu0 0.0
  %2794 = vmatprep.subr.mxu0 0.0
  %2795 = vmatpush1.msra.mxu0 0.0
  %2796 = vmatprep.subr.mxu0 0.0
  %2797 = vmatpush1.msra.mxu0 0.0
  %2798 = vmatprep.subr.mxu0 0.0
  %2799 = vmatpush1.msra.mxu0 0.0
  %2800 = vmatprep.subr.mxu0 0.0
  %2801 = vmatpush1.msra.mxu0 0.0
  %2802 = vmatprep.subr.mxu0 0.0
  %2803 = vmatpush1.msra.mxu0 0.0
  %2804 = vmatprep.subr.mxu0 0.0
  %2805 = vmatpush1.msra.mxu0 0.0
  %2806 = vmatprep.subr.mxu0 0.0
  %2807 = vmatpush1.msra.mxu0 0.0
  %2808 = vmatprep.subr.mxu0 0.0
  %2809 = vmatpush1.msra.mxu0 0.0
  %2810 = vmatprep.subr.mxu0 0.0
  %2811 = vmatpush1.msra.mxu0 0.0
  %2812 = vmatprep.subr.mxu0 0.0
  %2813 = vmatpush1.msra.mxu0 0.0
  %2814 = vmatprep.subr.mxu0 0.0
  %2815 = vmatpush1.msra.mxu0 0.0
  %2816 = vmatprep.subr.mxu0 0.0
  %2817 = vmatpush1.msra.mxu0 0.0
  %2818 = vmatprep.subr.mxu0 0.0
  %2819 = vmatpush1.msra.mxu0 0.0
  %2820 = vmatprep.mubr.f32.mxu0 0.0
  %2821 = vmatmul.mubr.f32.gmra.mrb[0].mxu0 %v2733
  %v2822 = vpop.f32.mrb[0].mxu0
  %v2823 = vadd.f32 0.0, %v2822
  %v2824 = vpop.f32.mrb[0].mxu0
  %2825 = vmatprep.mubr.f32.mxu0 0.0
  %2826 = vmatmul.mubr.f32.gmra.mrb[0].mxu0 %v2736
  %v2827 = vpop.f32.mrb[0].mxu0
  %v2828 = vadd.f32 0.0, %v2827
  %v2829 = vpop.f32.mrb[0].mxu0
  %2830 = vmatprep.mubr.f32.mxu0 0.0
  %2831 = vmatmul.mubr.f32.gmra.mrb[0].mxu0 %v2739
  %v2832 = vpop.f32.mrb[0].mxu0
  %v2833 = vadd.f32 0.0, %v2832
  %v2834 = vpop.f32.mrb[0].mxu0
  %2835 = vmatprep.mubr.f32.mxu0 0.0
  %2836 = vmatmul.mubr.f32.gmra.mrb[0].mxu0 %v2742
  %v2837 = vpop.f32.mrb[0].mxu0
  %v2838 = vadd.f32 0.0, %v2837
  %v2839 = vpop.f32.mrb[0].mxu0
  %2840 = vmatprep.mubr.f32.mxu0 0.0
  %2841 = vmatmul.mubr.f32.gmra.mrb[0].mxu0 %v2745
  %v2842 = vpop.f32.mrb[0].mxu0
  %v2843 = vadd.f32 0.0, %v2842
  %v2844 = vpop.f32.mrb[0].mxu0
  %2845 = vmatprep.mubr.f32.mxu0 0.0
  %2846 = vmatmul.mubr.f32.gmra.mrb[0].mxu0 %v2748
  %v2847 = vpop.f32.mrb[0].mxu0
  %v2848 = vadd.f32 0.0, %v2847
  %v2849 = vpop.f32.mrb[0].mxu0
  %2850 = vmatprep.mubr.f32.mxu0 0.0
  %2851 = vmatmul.mubr.f32.gmra.mrb[0].mxu0 %v2751
  %v2852 = vpop.f32.mrb[0].mxu0
  %v2853 = vadd.f32 0.0, %v2852
  %v2854 = vpop.f32.mrb[0].mxu0
  %2855 = vmatprep.mubr.f32.mxu0 0.0
  %2856 = vmatmul.mubr.f32.gmra.mrb[0].mxu0 %v2754
  %v2857 = vpop.f32.mrb[0].mxu0
  %v2858 = vadd.f32 0.0, %v2857
  %v2859 = vpop.f32.mrb[0].mxu0
  %2860 = vdwg.mxu0
  %v2861 = vadd.f32 %v2712, %v2823
  %v2862 = vadd.f32 %v2713, %v2828
  %v2863 = vadd.f32 %v2714, %v2833
  %v2864 = vadd.f32 %v2715, %v2838
  %v2865 = vadd.f32 %v2716, %v2843
  %v2866 = vadd.f32 %v2717, %v2848
  %v2867 = vadd.f32 %v2718, %v2853
  %v2868 = vadd.f32 %v2719, %v2858
  %s2869 = scalar_lea.vmem [#allocation2], 48
  %v2870 = vld [vmem:[%s2869] sm:$0xff]
  %v2871 = vld [vmem:[%s2869 + $0x10] sm:$0xff]
  %v2872 = vld [vmem:[%s2869 + $0x20] sm:$0xff]
  %v2873 = vld [vmem:[%s2869 + $0x30] sm:$0xff]
  %v2874 = vld [vmem:[%s2869 + $0x40] sm:$0xff]
  %v2875 = vld [vmem:[%s2869 + $0x50] sm:$0xff]
  %v2876 = vld [vmem:[%s2869 + $0x60] sm:$0xff]
  %v2877 = vld [vmem:[%s2869 + $0x70] sm:$0xff]
  %v2878 = vld [vmem:[%s3 + $0x1e0] sm:$0xff]
  %v2879 = vld [vmem:[%s3 + $0x1e8] sm:$0xff]
  %v2880 = vld [vmem:[%s3 + $0x1f0] sm:$0xff]
  %v2881 = vld [vmem:[%s3 + $0x1f8] sm:$0xff]
  %v2883 = vsel %vm79, %v2870, 0
  %v2886 = vsel %vm79, %v2871, 0
  %v2889 = vsel %vm79, %v2872, 0
  %v2892 = vsel %vm79, %v2873, 0
  %v2895 = vsel %vm79, %v2874, 0
  %v2898 = vsel %vm79, %v2875, 0
  %v2901 = vsel %vm79, %v2876, 0
  %v2904 = vsel %vm79, %v2877, 0
  %2906 = vmatprep.subr.mxu0 0.0
  %2907 = vmatpush1.msra.mxu0 %v2878
  %2908 = vmatprep.subr.mxu0 0.0
  %2909 = vmatpush1.msra.mxu0 %v2879
  %2910 = vmatprep.subr.mxu0 0.0
  %2911 = vmatpush1.msra.mxu0 %v2880
  %2912 = vmatprep.subr.mxu0 0.0
  %2913 = vmatpush1.msra.mxu0 %v2881
  %2914 = vmatprep.subr.mxu0 0.0
  %2915 = vmatpush1.msra.mxu0 0.0
  %2916 = vmatprep.subr.mxu0 0.0
  %2917 = vmatpush1.msra.mxu0 0.0
  %2918 = vmatprep.subr.mxu0 0.0
  %2919 = vmatpush1.msra.mxu0 0.0
  %2920 = vmatprep.subr.mxu0 0.0
  %2921 = vmatpush1.msra.mxu0 0.0
  %2922 = vmatprep.subr.mxu0 0.0
  %2923 = vmatpush1.msra.mxu0 0.0
  %2924 = vmatprep.subr.mxu0 0.0
  %2925 = vmatpush1.msra.mxu0 0.0
  %2926 = vmatprep.subr.mxu0 0.0
  %2927 = vmatpush1.msra.mxu0 0.0
  %2928 = vmatprep.subr.mxu0 0.0
  %2929 = vmatpush1.msra.mxu0 0.0
  %2930 = vmatprep.subr.mxu0 0.0
  %2931 = vmatpush1.msra.mxu0 0.0
  %2932 = vmatprep.subr.mxu0 0.0
  %2933 = vmatpush1.msra.mxu0 0.0
  %2934 = vmatprep.subr.mxu0 0.0
  %2935 = vmatpush1.msra.mxu0 0.0
  %2936 = vmatprep.subr.mxu0 0.0
  %2937 = vmatpush1.msra.mxu0 0.0
  %2938 = vmatprep.subr.mxu0 0.0
  %2939 = vmatpush1.msra.mxu0 0.0
  %2940 = vmatprep.subr.mxu0 0.0
  %2941 = vmatpush1.msra.mxu0 0.0
  %2942 = vmatprep.subr.mxu0 0.0
  %2943 = vmatpush1.msra.mxu0 0.0
  %2944 = vmatprep.subr.mxu0 0.0
  %2945 = vmatpush1.msra.mxu0 0.0
  %2946 = vmatprep.subr.mxu0 0.0
  %2947 = vmatpush1.msra.mxu0 0.0
  %2948 = vmatprep.subr.mxu0 0.0
  %2949 = vmatpush1.msra.mxu0 0.0
  %2950 = vmatprep.subr.mxu0 0.0
  %2951 = vmatpush1.msra.mxu0 0.0
  %2952 = vmatprep.subr.mxu0 0.0
  %2953 = vmatpush1.msra.mxu0 0.0
  %2954 = vmatprep.subr.mxu0 0.0
  %2955 = vmatpush1.msra.mxu0 0.0
  %2956 = vmatprep.subr.mxu0 0.0
  %2957 = vmatpush1.msra.mxu0 0.0
  %2958 = vmatprep.subr.mxu0 0.0
  %2959 = vmatpush1.msra.mxu0 0.0
  %2960 = vmatprep.subr.mxu0 0.0
  %2961 = vmatpush1.msra.mxu0 0.0
  %2962 = vmatprep.subr.mxu0 0.0
  %2963 = vmatpush1.msra.mxu0 0.0
  %2964 = vmatprep.subr.mxu0 0.0
  %2965 = vmatpush1.msra.mxu0 0.0
  %2966 = vmatprep.subr.mxu0 0.0
  %2967 = vmatpush1.msra.mxu0 0.0
  %2968 = vmatprep.subr.mxu0 0.0
  %2969 = vmatpush1.msra.mxu0 0.0
  %2970 = vmatprep.mubr.f32.mxu0 0.0
  %2971 = vmatmul.mubr.f32.gmra.mrb[0].mxu0 %v2883
  %v2972 = vpop.f32.mrb[0].mxu0
  %v2973 = vadd.f32 0.0, %v2972
  %v2974 = vpop.f32.mrb[0].mxu0
  %2975 = vmatprep.mubr.f32.mxu0 0.0
  %2976 = vmatmul.mubr.f32.gmra.mrb[0].mxu0 %v2886
  %v2977 = vpop.f32.mrb[0].mxu0
  %v2978 = vadd.f32 0.0, %v2977
  %v2979 = vpop.f32.mrb[0].mxu0
  %2980 = vmatprep.mubr.f32.mxu0 0.0
  %2981 = vmatmul.mubr.f32.gmra.mrb[0].mxu0 %v2889
  %v2982 = vpop.f32.mrb[0].mxu0
  %v2983 = vadd.f32 0.0, %v2982
  %v2984 = vpop.f32.mrb[0].mxu0
  %2985 = vmatprep.mubr.f32.mxu0 0.0
  %2986 = vmatmul.mubr.f32.gmra.mrb[0].mxu0 %v2892
  %v2987 = vpop.f32.mrb[0].mxu0
  %v2988 = vadd.f32 0.0, %v2987
  %v2989 = vpop.f32.mrb[0].mxu0
  %2990 = vmatprep.mubr.f32.mxu0 0.0
  %2991 = vmatmul.mubr.f32.gmra.mrb[0].mxu0 %v2895
  %v2992 = vpop.f32.mrb[0].mxu0
  %v2993 = vadd.f32 0.0, %v2992
  %v2994 = vpop.f32.mrb[0].mxu0
  %2995 = vmatprep.mubr.f32.mxu0 0.0
  %2996 = vmatmul.mubr.f32.gmra.mrb[0].mxu0 %v2898
  %v2997 = vpop.f32.mrb[0].mxu0
  %v2998 = vadd.f32 0.0, %v2997
  %v2999 = vpop.f32.mrb[0].mxu0
  %3000 = vmatprep.mubr.f32.mxu0 0.0
  %3001 = vmatmul.mubr.f32.gmra.mrb[0].mxu0 %v2901
  %v3002 = vpop.f32.mrb[0].mxu0
  %v3003 = vadd.f32 0.0, %v3002
  %v3004 = vpop.f32.mrb[0].mxu0
  %3005 = vmatprep.mubr.f32.mxu0 0.0
  %3006 = vmatmul.mubr.f32.gmra.mrb[0].mxu0 %v2904
  %v3007 = vpop.f32.mrb[0].mxu0
  %v3008 = vadd.f32 0.0, %v3007
  %v3009 = vpop.f32.mrb[0].mxu0
  %3010 = vdwg.mxu0
  %v3011 = vadd.f32 %v2861, %v2973
  %v3012 = vadd.f32 %v2862, %v2978
  %v3013 = vadd.f32 %v2863, %v2983
  %v3014 = vadd.f32 %v2864, %v2988
  %v3015 = vadd.f32 %v2865, %v2993
  %v3016 = vadd.f32 %v2866, %v2998
  %v3017 = vadd.f32 %v2867, %v3003
  %v3018 = vadd.f32 %v2868, %v3008
  %v3019 = vld [vmem:[%s2869 + $0x1] sm:$0xff]
  %v3020 = vld [vmem:[%s2869 + $0x11] sm:$0xff]
  %v3021 = vld [vmem:[%s2869 + $0x21] sm:$0xff]
  %v3022 = vld [vmem:[%s2869 + $0x31] sm:$0xff]
  %v3023 = vld [vmem:[%s2869 + $0x41] sm:$0xff]
  %v3024 = vld [vmem:[%s2869 + $0x51] sm:$0xff]
  %v3025 = vld [vmem:[%s2869 + $0x61] sm:$0xff]
  %v3026 = vld [vmem:[%s2869 + $0x71] sm:$0xff]
  %v3027 = vld [vmem:[%s3 + $0x200] sm:$0xff]
  %v3028 = vld [vmem:[%s3 + $0x208] sm:$0xff]
  %v3029 = vld [vmem:[%s3 + $0x210] sm:$0xff]
  %v3030 = vld [vmem:[%s3 + $0x218] sm:$0xff]
  %v3032 = vsel %vm79, %v3019, 0
  %v3035 = vsel %vm79, %v3020, 0
  %v3038 = vsel %vm79, %v3021, 0
  %v3041 = vsel %vm79, %v3022, 0
  %v3044 = vsel %vm79, %v3023, 0
  %v3047 = vsel %vm79, %v3024, 0
  %v3050 = vsel %vm79, %v3025, 0
  %v3053 = vsel %vm79, %v3026, 0
  %3055 = vmatprep.subr.mxu0 0.0
  %3056 = vmatpush1.msra.mxu0 %v3027
  %3057 = vmatprep.subr.mxu0 0.0
  %3058 = vmatpush1.msra.mxu0 %v3028
  %3059 = vmatprep.subr.mxu0 0.0
  %3060 = vmatpush1.msra.mxu0 %v3029
  %3061 = vmatprep.subr.mxu0 0.0
  %3062 = vmatpush1.msra.mxu0 %v3030
  %3063 = vmatprep.subr.mxu0 0.0
  %3064 = vmatpush1.msra.mxu0 0.0
  %3065 = vmatprep.subr.mxu0 0.0
  %3066 = vmatpush1.msra.mxu0 0.0
  %3067 = vmatprep.subr.mxu0 0.0
  %3068 = vmatpush1.msra.mxu0 0.0
  %3069 = vmatprep.subr.mxu0 0.0
  %3070 = vmatpush1.msra.mxu0 0.0
  %3071 = vmatprep.subr.mxu0 0.0
  %3072 = vmatpush1.msra.mxu0 0.0
  %3073 = vmatprep.subr.mxu0 0.0
  %3074 = vmatpush1.msra.mxu0 0.0
  %3075 = vmatprep.subr.mxu0 0.0
  %3076 = vmatpush1.msra.mxu0 0.0
  %3077 = vmatprep.subr.mxu0 0.0
  %3078 = vmatpush1.msra.mxu0 0.0
  %3079 = vmatprep.subr.mxu0 0.0
  %3080 = vmatpush1.msra.mxu0 0.0
  %3081 = vmatprep.subr.mxu0 0.0
  %3082 = vmatpush1.msra.mxu0 0.0
  %3083 = vmatprep.subr.mxu0 0.0
  %3084 = vmatpush1.msra.mxu0 0.0
  %3085 = vmatprep.subr.mxu0 0.0
  %3086 = vmatpush1.msra.mxu0 0.0
  %3087 = vmatprep.subr.mxu0 0.0
  %3088 = vmatpush1.msra.mxu0 0.0
  %3089 = vmatprep.subr.mxu0 0.0
  %3090 = vmatpush1.msra.mxu0 0.0
  %3091 = vmatprep.subr.mxu0 0.0
  %3092 = vmatpush1.msra.mxu0 0.0
  %3093 = vmatprep.subr.mxu0 0.0
  %3094 = vmatpush1.msra.mxu0 0.0
  %3095 = vmatprep.subr.mxu0 0.0
  %3096 = vmatpush1.msra.mxu0 0.0
  %3097 = vmatprep.subr.mxu0 0.0
  %3098 = vmatpush1.msra.mxu0 0.0
  %3099 = vmatprep.subr.mxu0 0.0
  %3100 = vmatpush1.msra.mxu0 0.0
  %3101 = vmatprep.subr.mxu0 0.0
  %3102 = vmatpush1.msra.mxu0 0.0
  %3103 = vmatprep.subr.mxu0 0.0
  %3104 = vmatpush1.msra.mxu0 0.0
  %3105 = vmatprep.subr.mxu0 0.0
  %3106 = vmatpush1.msra.mxu0 0.0
  %3107 = vmatprep.subr.mxu0 0.0
  %3108 = vmatpush1.msra.mxu0 0.0
  %3109 = vmatprep.subr.mxu0 0.0
  %3110 = vmatpush1.msra.mxu0 0.0
  %3111 = vmatprep.subr.mxu0 0.0
  %3112 = vmatpush1.msra.mxu0 0.0
  %3113 = vmatprep.subr.mxu0 0.0
  %3114 = vmatpush1.msra.mxu0 0.0
  %3115 = vmatprep.subr.mxu0 0.0
  %3116 = vmatpush1.msra.mxu0 0.0
  %3117 = vmatprep.subr.mxu0 0.0
  %3118 = vmatpush1.msra.mxu0 0.0
  %3119 = vmatprep.mubr.f32.mxu0 0.0
  %3120 = vmatmul.mubr.f32.gmra.mrb[0].mxu0 %v3032
  %v3121 = vpop.f32.mrb[0].mxu0
  %v3122 = vadd.f32 0.0, %v3121
  %v3123 = vpop.f32.mrb[0].mxu0
  %3124 = vmatprep.mubr.f32.mxu0 0.0
  %3125 = vmatmul.mubr.f32.gmra.mrb[0].mxu0 %v3035
  %v3126 = vpop.f32.mrb[0].mxu0
  %v3127 = vadd.f32 0.0, %v3126
  %v3128 = vpop.f32.mrb[0].mxu0
  %3129 = vmatprep.mubr.f32.mxu0 0.0
  %3130 = vmatmul.mubr.f32.gmra.mrb[0].mxu0 %v3038
  %v3131 = vpop.f32.mrb[0].mxu0
  %v3132 = vadd.f32 0.0, %v3131
  %v3133 = vpop.f32.mrb[0].mxu0
  %3134 = vmatprep.mubr.f32.mxu0 0.0
  %3135 = vmatmul.mubr.f32.gmra.mrb[0].mxu0 %v3041
  %v3136 = vpop.f32.mrb[0].mxu0
  %v3137 = vadd.f32 0.0, %v3136
  %v3138 = vpop.f32.mrb[0].mxu0
  %3139 = vmatprep.mubr.f32.mxu0 0.0
  %3140 = vmatmul.mubr.f32.gmra.mrb[0].mxu0 %v3044
  %v3141 = vpop.f32.mrb[0].mxu0
  %v3142 = vadd.f32 0.0, %v3141
  %v3143 = vpop.f32.mrb[0].mxu0
  %3144 = vmatprep.mubr.f32.mxu0 0.0
  %3145 = vmatmul.mubr.f32.gmra.mrb[0].mxu0 %v3047
  %v3146 = vpop.f32.mrb[0].mxu0
  %v3147 = vadd.f32 0.0, %v3146
  %v3148 = vpop.f32.mrb[0].mxu0
  %3149 = vmatprep.mubr.f32.mxu0 0.0
  %3150 = vmatmul.mubr.f32.gmra.mrb[0].mxu0 %v3050
  %v3151 = vpop.f32.mrb[0].mxu0
  %v3152 = vadd.f32 0.0, %v3151
  %v3153 = vpop.f32.mrb[0].mxu0
  %3154 = vmatprep.mubr.f32.mxu0 0.0
  %3155 = vmatmul.mubr.f32.gmra.mrb[0].mxu0 %v3053
  %v3156 = vpop.f32.mrb[0].mxu0
  %v3157 = vadd.f32 0.0, %v3156
  %v3158 = vpop.f32.mrb[0].mxu0
  %3159 = vdwg.mxu0
  %v3160 = vadd.f32 %v3011, %v3122
  %v3161 = vadd.f32 %v3012, %v3127
  %v3162 = vadd.f32 %v3013, %v3132
  %v3163 = vadd.f32 %v3014, %v3137
  %v3164 = vadd.f32 %v3015, %v3142
  %v3165 = vadd.f32 %v3016, %v3147
  %v3166 = vadd.f32 %v3017, %v3152
  %v3167 = vadd.f32 %v3018, %v3157
  %v3168 = vld [vmem:[%s2869 + $0x2] sm:$0xff]
  %v3169 = vld [vmem:[%s2869 + $0x12] sm:$0xff]
  %v3170 = vld [vmem:[%s2869 + $0x22] sm:$0xff]
  %v3171 = vld [vmem:[%s2869 + $0x32] sm:$0xff]
  %v3172 = vld [vmem:[%s2869 + $0x42] sm:$0xff]
  %v3173 = vld [vmem:[%s2869 + $0x52] sm:$0xff]
  %v3174 = vld [vmem:[%s2869 + $0x62] sm:$0xff]
  %v3175 = vld [vmem:[%s2869 + $0x72] sm:$0xff]
  %v3176 = vld [vmem:[%s3 + $0x220] sm:$0xff]
  %v3177 = vld [vmem:[%s3 + $0x228] sm:$0xff]
  %v3178 = vld [vmem:[%s3 + $0x230] sm:$0xff]
  %v3179 = vld [vmem:[%s3 + $0x238] sm:$0xff]
  %v3181 = vsel %vm79, %v3168, 0
  %v3184 = vsel %vm79, %v3169, 0
  %v3187 = vsel %vm79, %v3170, 0
  %v3190 = vsel %vm79, %v3171, 0
  %v3193 = vsel %vm79, %v3172, 0
  %v3196 = vsel %vm79, %v3173, 0
  %v3199 = vsel %vm79, %v3174, 0
  %v3202 = vsel %vm79, %v3175, 0
  %3204 = vmatprep.subr.mxu0 0.0
  %3205 = vmatpush1.msra.mxu0 %v3176
  %3206 = vmatprep.subr.mxu0 0.0
  %3207 = vmatpush1.msra.mxu0 %v3177
  %3208 = vmatprep.subr.mxu0 0.0
  %3209 = vmatpush1.msra.mxu0 %v3178
  %3210 = vmatprep.subr.mxu0 0.0
  %3211 = vmatpush1.msra.mxu0 %v3179
  %3212 = vmatprep.subr.mxu0 0.0
  %3213 = vmatpush1.msra.mxu0 0.0
  %3214 = vmatprep.subr.mxu0 0.0
  %3215 = vmatpush1.msra.mxu0 0.0
  %3216 = vmatprep.subr.mxu0 0.0
  %3217 = vmatpush1.msra.mxu0 0.0
  %3218 = vmatprep.subr.mxu0 0.0
  %3219 = vmatpush1.msra.mxu0 0.0
  %3220 = vmatprep.subr.mxu0 0.0
  %3221 = vmatpush1.msra.mxu0 0.0
  %3222 = vmatprep.subr.mxu0 0.0
  %3223 = vmatpush1.msra.mxu0 0.0
  %3224 = vmatprep.subr.mxu0 0.0
  %3225 = vmatpush1.msra.mxu0 0.0
  %3226 = vmatprep.subr.mxu0 0.0
  %3227 = vmatpush1.msra.mxu0 0.0
  %3228 = vmatprep.subr.mxu0 0.0
  %3229 = vmatpush1.msra.mxu0 0.0
  %3230 = vmatprep.subr.mxu0 0.0
  %3231 = vmatpush1.msra.mxu0 0.0
  %3232 = vmatprep.subr.mxu0 0.0
  %3233 = vmatpush1.msra.mxu0 0.0
  %3234 = vmatprep.subr.mxu0 0.0
  %3235 = vmatpush1.msra.mxu0 0.0
  %3236 = vmatprep.subr.mxu0 0.0
  %3237 = vmatpush1.msra.mxu0 0.0
  %3238 = vmatprep.subr.mxu0 0.0
  %3239 = vmatpush1.msra.mxu0 0.0
  %3240 = vmatprep.subr.mxu0 0.0
  %3241 = vmatpush1.msra.mxu0 0.0
  %3242 = vmatprep.subr.mxu0 0.0
  %3243 = vmatpush1.msra.mxu0 0.0
  %3244 = vmatprep.subr.mxu0 0.0
  %3245 = vmatpush1.msra.mxu0 0.0
  %3246 = vmatprep.subr.mxu0 0.0
  %3247 = vmatpush1.msra.mxu0 0.0
  %3248 = vmatprep.subr.mxu0 0.0
  %3249 = vmatpush1.msra.mxu0 0.0
  %3250 = vmatprep.subr.mxu0 0.0
  %3251 = vmatpush1.msra.mxu0 0.0
  %3252 = vmatprep.subr.mxu0 0.0
  %3253 = vmatpush1.msra.mxu0 0.0
  %3254 = vmatprep.subr.mxu0 0.0
  %3255 = vmatpush1.msra.mxu0 0.0
  %3256 = vmatprep.subr.mxu0 0.0
  %3257 = vmatpush1.msra.mxu0 0.0
  %3258 = vmatprep.subr.mxu0 0.0
  %3259 = vmatpush1.msra.mxu0 0.0
  %3260 = vmatprep.subr.mxu0 0.0
  %3261 = vmatpush1.msra.mxu0 0.0
  %3262 = vmatprep.subr.mxu0 0.0
  %3263 = vmatpush1.msra.mxu0 0.0
  %3264 = vmatprep.subr.mxu0 0.0
  %3265 = vmatpush1.msra.mxu0 0.0
  %3266 = vmatprep.subr.mxu0 0.0
  %3267 = vmatpush1.msra.mxu0 0.0
  %3268 = vmatprep.mubr.f32.mxu0 0.0
  %3269 = vmatmul.mubr.f32.gmra.mrb[0].mxu0 %v3181
  %v3270 = vpop.f32.mrb[0].mxu0
  %v3271 = vadd.f32 0.0, %v3270
  %v3272 = vpop.f32.mrb[0].mxu0
  %3273 = vmatprep.mubr.f32.mxu0 0.0
  %3274 = vmatmul.mubr.f32.gmra.mrb[0].mxu0 %v3184
  %v3275 = vpop.f32.mrb[0].mxu0
  %v3276 = vadd.f32 0.0, %v3275
  %v3277 = vpop.f32.mrb[0].mxu0
  %3278 = vmatprep.mubr.f32.mxu0 0.0
  %3279 = vmatmul.mubr.f32.gmra.mrb[0].mxu0 %v3187
  %v3280 = vpop.f32.mrb[0].mxu0
  %v3281 = vadd.f32 0.0, %v3280
  %v3282 = vpop.f32.mrb[0].mxu0
  %3283 = vmatprep.mubr.f32.mxu0 0.0
  %3284 = vmatmul.mubr.f32.gmra.mrb[0].mxu0 %v3190
  %v3285 = vpop.f32.mrb[0].mxu0
  %v3286 = vadd.f32 0.0, %v3285
  %v3287 = vpop.f32.mrb[0].mxu0
  %3288 = vmatprep.mubr.f32.mxu0 0.0
  %3289 = vmatmul.mubr.f32.gmra.mrb[0].mxu0 %v3193
  %v3290 = vpop.f32.mrb[0].mxu0
  %v3291 = vadd.f32 0.0, %v3290
  %v3292 = vpop.f32.mrb[0].mxu0
  %3293 = vmatprep.mubr.f32.mxu0 0.0
  %3294 = vmatmul.mubr.f32.gmra.mrb[0].mxu0 %v3196
  %v3295 = vpop.f32.mrb[0].mxu0
  %v3296 = vadd.f32 0.0, %v3295
  %v3297 = vpop.f32.mrb[0].mxu0
  %3298 = vmatprep.mubr.f32.mxu0 0.0
  %3299 = vmatmul.mubr.f32.gmra.mrb[0].mxu0 %v3199
  %v3300 = vpop.f32.mrb[0].mxu0
  %v3301 = vadd.f32 0.0, %v3300
  %v3302 = vpop.f32.mrb[0].mxu0
  %3303 = vmatprep.mubr.f32.mxu0 0.0
  %3304 = vmatmul.mubr.f32.gmra.mrb[0].mxu0 %v3202
  %v3305 = vpop.f32.mrb[0].mxu0
  %v3306 = vadd.f32 0.0, %v3305
  %v3307 = vpop.f32.mrb[0].mxu0
  %3308 = vdwg.mxu0
  %v3309 = vadd.f32 %v3160, %v3271
  %v3310 = vadd.f32 %v3161, %v3276
  %v3311 = vadd.f32 %v3162, %v3281
  %v3312 = vadd.f32 %v3163, %v3286
  %v3313 = vadd.f32 %v3164, %v3291
  %v3314 = vadd.f32 %v3165, %v3296
  %v3315 = vadd.f32 %v3166, %v3301
  %v3316 = vadd.f32 %v3167, %v3306
  %v3317 = vld [vmem:[%s2869 + $0x3] sm:$0xff]
  %v3318 = vld [vmem:[%s2869 + $0x13] sm:$0xff]
  %v3319 = vld [vmem:[%s2869 + $0x23] sm:$0xff]
  %v3320 = vld [vmem:[%s2869 + $0x33] sm:$0xff]
  %v3321 = vld [vmem:[%s2869 + $0x43] sm:$0xff]
  %v3322 = vld [vmem:[%s2869 + $0x53] sm:$0xff]
  %v3323 = vld [vmem:[%s2869 + $0x63] sm:$0xff]
  %v3324 = vld [vmem:[%s2869 + $0x73] sm:$0xff]
  %v3325 = vld [vmem:[%s3 + $0x240] sm:$0xff]
  %v3326 = vld [vmem:[%s3 + $0x248] sm:$0xff]
  %v3327 = vld [vmem:[%s3 + $0x250] sm:$0xff]
  %v3328 = vld [vmem:[%s3 + $0x258] sm:$0xff]
  %v3330 = vsel %vm79, %v3317, 0
  %v3333 = vsel %vm79, %v3318, 0
  %v3336 = vsel %vm79, %v3319, 0
  %v3339 = vsel %vm79, %v3320, 0
  %v3342 = vsel %vm79, %v3321, 0
  %v3345 = vsel %vm79, %v3322, 0
  %v3348 = vsel %vm79, %v3323, 0
  %v3351 = vsel %vm79, %v3324, 0
  %3353 = vmatprep.subr.mxu0 0.0
  %3354 = vmatpush1.msra.mxu0 %v3325
  %3355 = vmatprep.subr.mxu0 0.0
  %3356 = vmatpush1.msra.mxu0 %v3326
  %3357 = vmatprep.subr.mxu0 0.0
  %3358 = vmatpush1.msra.mxu0 %v3327
  %3359 = vmatprep.subr.mxu0 0.0
  %3360 = vmatpush1.msra.mxu0 %v3328
  %3361 = vmatprep.subr.mxu0 0.0
  %3362 = vmatpush1.msra.mxu0 0.0
  %3363 = vmatprep.subr.mxu0 0.0
  %3364 = vmatpush1.msra.mxu0 0.0
  %3365 = vmatprep.subr.mxu0 0.0
  %3366 = vmatpush1.msra.mxu0 0.0
  %3367 = vmatprep.subr.mxu0 0.0
  %3368 = vmatpush1.msra.mxu0 0.0
  %3369 = vmatprep.subr.mxu0 0.0
  %3370 = vmatpush1.msra.mxu0 0.0
  %3371 = vmatprep.subr.mxu0 0.0
  %3372 = vmatpush1.msra.mxu0 0.0
  %3373 = vmatprep.subr.mxu0 0.0
  %3374 = vmatpush1.msra.mxu0 0.0
  %3375 = vmatprep.subr.mxu0 0.0
  %3376 = vmatpush1.msra.mxu0 0.0
  %3377 = vmatprep.subr.mxu0 0.0
  %3378 = vmatpush1.msra.mxu0 0.0
  %3379 = vmatprep.subr.mxu0 0.0
  %3380 = vmatpush1.msra.mxu0 0.0
  %3381 = vmatprep.subr.mxu0 0.0
  %3382 = vmatpush1.msra.mxu0 0.0
  %3383 = vmatprep.subr.mxu0 0.0
  %3384 = vmatpush1.msra.mxu0 0.0
  %3385 = vmatprep.subr.mxu0 0.0
  %3386 = vmatpush1.msra.mxu0 0.0
  %3387 = vmatprep.subr.mxu0 0.0
  %3388 = vmatpush1.msra.mxu0 0.0
  %3389 = vmatprep.subr.mxu0 0.0
  %3390 = vmatpush1.msra.mxu0 0.0
  %3391 = vmatprep.subr.mxu0 0.0
  %3392 = vmatpush1.msra.mxu0 0.0
  %3393 = vmatprep.subr.mxu0 0.0
  %3394 = vmatpush1.msra.mxu0 0.0
  %3395 = vmatprep.subr.mxu0 0.0
  %3396 = vmatpush1.msra.mxu0 0.0
  %3397 = vmatprep.subr.mxu0 0.0
  %3398 = vmatpush1.msra.mxu0 0.0
  %3399 = vmatprep.subr.mxu0 0.0
  %3400 = vmatpush1.msra.mxu0 0.0
  %3401 = vmatprep.subr.mxu0 0.0
  %3402 = vmatpush1.msra.mxu0 0.0
  %3403 = vmatprep.subr.mxu0 0.0
  %3404 = vmatpush1.msra.mxu0 0.0
  %3405 = vmatprep.subr.mxu0 0.0
  %3406 = vmatpush1.msra.mxu0 0.0
  %3407 = vmatprep.subr.mxu0 0.0
  %3408 = vmatpush1.msra.mxu0 0.0
  %3409 = vmatprep.subr.mxu0 0.0
  %3410 = vmatpush1.msra.mxu0 0.0
  %3411 = vmatprep.subr.mxu0 0.0
  %3412 = vmatpush1.msra.mxu0 0.0
  %3413 = vmatprep.subr.mxu0 0.0
  %3414 = vmatpush1.msra.mxu0 0.0
  %3415 = vmatprep.subr.mxu0 0.0
  %3416 = vmatpush1.msra.mxu0 0.0
  %3417 = vmatprep.mubr.f32.mxu0 0.0
  %3418 = vmatmul.mubr.f32.gmra.mrb[0].mxu0 %v3330
  %v3419 = vpop.f32.mrb[0].mxu0
  %v3420 = vadd.f32 0.0, %v3419
  %v3421 = vpop.f32.mrb[0].mxu0
  %3422 = vmatprep.mubr.f32.mxu0 0.0
  %3423 = vmatmul.mubr.f32.gmra.mrb[0].mxu0 %v3333
  %v3424 = vpop.f32.mrb[0].mxu0
  %v3425 = vadd.f32 0.0, %v3424
  %v3426 = vpop.f32.mrb[0].mxu0
  %3427 = vmatprep.mubr.f32.mxu0 0.0
  %3428 = vmatmul.mubr.f32.gmra.mrb[0].mxu0 %v3336
  %v3429 = vpop.f32.mrb[0].mxu0
  %v3430 = vadd.f32 0.0, %v3429
  %v3431 = vpop.f32.mrb[0].mxu0
  %3432 = vmatprep.mubr.f32.mxu0 0.0
  %3433 = vmatmul.mubr.f32.gmra.mrb[0].mxu0 %v3339
  %v3434 = vpop.f32.mrb[0].mxu0
  %v3435 = vadd.f32 0.0, %v3434
  %v3436 = vpop.f32.mrb[0].mxu0
  %3437 = vmatprep.mubr.f32.mxu0 0.0
  %3438 = vmatmul.mubr.f32.gmra.mrb[0].mxu0 %v3342
  %v3439 = vpop.f32.mrb[0].mxu0
  %v3440 = vadd.f32 0.0, %v3439
  %v3441 = vpop.f32.mrb[0].mxu0
  %3442 = vmatprep.mubr.f32.mxu0 0.0
  %3443 = vmatmul.mubr.f32.gmra.mrb[0].mxu0 %v3345
  %v3444 = vpop.f32.mrb[0].mxu0
  %v3445 = vadd.f32 0.0, %v3444
  %v3446 = vpop.f32.mrb[0].mxu0
  %3447 = vmatprep.mubr.f32.mxu0 0.0
  %3448 = vmatmul.mubr.f32.gmra.mrb[0].mxu0 %v3348
  %v3449 = vpop.f32.mrb[0].mxu0
  %v3450 = vadd.f32 0.0, %v3449
  %v3451 = vpop.f32.mrb[0].mxu0
  %3452 = vmatprep.mubr.f32.mxu0 0.0
  %3453 = vmatmul.mubr.f32.gmra.mrb[0].mxu0 %v3351
  %v3454 = vpop.f32.mrb[0].mxu0
  %v3455 = vadd.f32 0.0, %v3454
  %v3456 = vpop.f32.mrb[0].mxu0
  %3457 = vdwg.mxu0
  %v3458 = vadd.f32 %v3309, %v3420
  %v3459 = vadd.f32 %v3310, %v3425
  %v3460 = vadd.f32 %v3311, %v3430
  %v3461 = vadd.f32 %v3312, %v3435
  %v3462 = vadd.f32 %v3313, %v3440
  %v3463 = vadd.f32 %v3314, %v3445
  %v3464 = vadd.f32 %v3315, %v3450
  %v3465 = vadd.f32 %v3316, %v3455
  %v3466 = vld [vmem:[%s2869 + $0x4] sm:$0xff]
  %v3467 = vld [vmem:[%s2869 + $0x14] sm:$0xff]
  %v3468 = vld [vmem:[%s2869 + $0x24] sm:$0xff]
  %v3469 = vld [vmem:[%s2869 + $0x34] sm:$0xff]
  %v3470 = vld [vmem:[%s2869 + $0x44] sm:$0xff]
  %v3471 = vld [vmem:[%s2869 + $0x54] sm:$0xff]
  %v3472 = vld [vmem:[%s2869 + $0x64] sm:$0xff]
  %v3473 = vld [vmem:[%s2869 + $0x74] sm:$0xff]
  %v3474 = vld [vmem:[%s3 + $0x260] sm:$0xff]
  %v3475 = vld [vmem:[%s3 + $0x268] sm:$0xff]
  %v3476 = vld [vmem:[%s3 + $0x270] sm:$0xff]
  %v3477 = vld [vmem:[%s3 + $0x278] sm:$0xff]
  %v3479 = vsel %vm79, %v3466, 0
  %v3482 = vsel %vm79, %v3467, 0
  %v3485 = vsel %vm79, %v3468, 0
  %v3488 = vsel %vm79, %v3469, 0
  %v3491 = vsel %vm79, %v3470, 0
  %v3494 = vsel %vm79, %v3471, 0
  %v3497 = vsel %vm79, %v3472, 0
  %v3500 = vsel %vm79, %v3473, 0
  %3502 = vmatprep.subr.mxu0 0.0
  %3503 = vmatpush1.msra.mxu0 %v3474
  %3504 = vmatprep.subr.mxu0 0.0
  %3505 = vmatpush1.msra.mxu0 %v3475
  %3506 = vmatprep.subr.mxu0 0.0
  %3507 = vmatpush1.msra.mxu0 %v3476
  %3508 = vmatprep.subr.mxu0 0.0
  %3509 = vmatpush1.msra.mxu0 %v3477
  %3510 = vmatprep.subr.mxu0 0.0
  %3511 = vmatpush1.msra.mxu0 0.0
  %3512 = vmatprep.subr.mxu0 0.0
  %3513 = vmatpush1.msra.mxu0 0.0
  %3514 = vmatprep.subr.mxu0 0.0
  %3515 = vmatpush1.msra.mxu0 0.0
  %3516 = vmatprep.subr.mxu0 0.0
  %3517 = vmatpush1.msra.mxu0 0.0
  %3518 = vmatprep.subr.mxu0 0.0
  %3519 = vmatpush1.msra.mxu0 0.0
  %3520 = vmatprep.subr.mxu0 0.0
  %3521 = vmatpush1.msra.mxu0 0.0
  %3522 = vmatprep.subr.mxu0 0.0
  %3523 = vmatpush1.msra.mxu0 0.0
  %3524 = vmatprep.subr.mxu0 0.0
  %3525 = vmatpush1.msra.mxu0 0.0
  %3526 = vmatprep.subr.mxu0 0.0
  %3527 = vmatpush1.msra.mxu0 0.0
  %3528 = vmatprep.subr.mxu0 0.0
  %3529 = vmatpush1.msra.mxu0 0.0
  %3530 = vmatprep.subr.mxu0 0.0
  %3531 = vmatpush1.msra.mxu0 0.0
  %3532 = vmatprep.subr.mxu0 0.0
  %3533 = vmatpush1.msra.mxu0 0.0
  %3534 = vmatprep.subr.mxu0 0.0
  %3535 = vmatpush1.msra.mxu0 0.0
  %3536 = vmatprep.subr.mxu0 0.0
  %3537 = vmatpush1.msra.mxu0 0.0
  %3538 = vmatprep.subr.mxu0 0.0
  %3539 = vmatpush1.msra.mxu0 0.0
  %3540 = vmatprep.subr.mxu0 0.0
  %3541 = vmatpush1.msra.mxu0 0.0
  %3542 = vmatprep.subr.mxu0 0.0
  %3543 = vmatpush1.msra.mxu0 0.0
  %3544 = vmatprep.subr.mxu0 0.0
  %3545 = vmatpush1.msra.mxu0 0.0
  %3546 = vmatprep.subr.mxu0 0.0
  %3547 = vmatpush1.msra.mxu0 0.0
  %3548 = vmatprep.subr.mxu0 0.0
  %3549 = vmatpush1.msra.mxu0 0.0
  %3550 = vmatprep.subr.mxu0 0.0
  %3551 = vmatpush1.msra.mxu0 0.0
  %3552 = vmatprep.subr.mxu0 0.0
  %3553 = vmatpush1.msra.mxu0 0.0
  %3554 = vmatprep.subr.mxu0 0.0
  %3555 = vmatpush1.msra.mxu0 0.0
  %3556 = vmatprep.subr.mxu0 0.0
  %3557 = vmatpush1.msra.mxu0 0.0
  %3558 = vmatprep.subr.mxu0 0.0
  %3559 = vmatpush1.msra.mxu0 0.0
  %3560 = vmatprep.subr.mxu0 0.0
  %3561 = vmatpush1.msra.mxu0 0.0
  %3562 = vmatprep.subr.mxu0 0.0
  %3563 = vmatpush1.msra.mxu0 0.0
  %3564 = vmatprep.subr.mxu0 0.0
  %3565 = vmatpush1.msra.mxu0 0.0
  %3566 = vmatprep.mubr.f32.mxu0 0.0
  %3567 = vmatmul.mubr.f32.gmra.mrb[0].mxu0 %v3479
  %v3568 = vpop.f32.mrb[0].mxu0
  %v3569 = vadd.f32 0.0, %v3568
  %v3570 = vpop.f32.mrb[0].mxu0
  %3571 = vmatprep.mubr.f32.mxu0 0.0
  %3572 = vmatmul.mubr.f32.gmra.mrb[0].mxu0 %v3482
  %v3573 = vpop.f32.mrb[0].mxu0
  %v3574 = vadd.f32 0.0, %v3573
  %v3575 = vpop.f32.mrb[0].mxu0
  %3576 = vmatprep.mubr.f32.mxu0 0.0
  %3577 = vmatmul.mubr.f32.gmra.mrb[0].mxu0 %v3485
  %v3578 = vpop.f32.mrb[0].mxu0
  %v3579 = vadd.f32 0.0, %v3578
  %v3580 = vpop.f32.mrb[0].mxu0
  %3581 = vmatprep.mubr.f32.mxu0 0.0
  %3582 = vmatmul.mubr.f32.gmra.mrb[0].mxu0 %v3488
  %v3583 = vpop.f32.mrb[0].mxu0
  %v3584 = vadd.f32 0.0, %v3583
  %v3585 = vpop.f32.mrb[0].mxu0
  %3586 = vmatprep.mubr.f32.mxu0 0.0
  %3587 = vmatmul.mubr.f32.gmra.mrb[0].mxu0 %v3491
  %v3588 = vpop.f32.mrb[0].mxu0
  %v3589 = vadd.f32 0.0, %v3588
  %v3590 = vpop.f32.mrb[0].mxu0
  %3591 = vmatprep.mubr.f32.mxu0 0.0
  %3592 = vmatmul.mubr.f32.gmra.mrb[0].mxu0 %v3494
  %v3593 = vpop.f32.mrb[0].mxu0
  %v3594 = vadd.f32 0.0, %v3593
  %v3595 = vpop.f32.mrb[0].mxu0
  %3596 = vmatprep.mubr.f32.mxu0 0.0
  %3597 = vmatmul.mubr.f32.gmra.mrb[0].mxu0 %v3497
  %v3598 = vpop.f32.mrb[0].mxu0
  %v3599 = vadd.f32 0.0, %v3598
  %v3600 = vpop.f32.mrb[0].mxu0
  %3601 = vmatprep.mubr.f32.mxu0 0.0
  %3602 = vmatmul.mubr.f32.gmra.mrb[0].mxu0 %v3500
  %v3603 = vpop.f32.mrb[0].mxu0
  %v3604 = vadd.f32 0.0, %v3603
  %v3605 = vpop.f32.mrb[0].mxu0
  %3606 = vdwg.mxu0
  %v3607 = vadd.f32 %v3458, %v3569
  %v3608 = vadd.f32 %v3459, %v3574
  %v3609 = vadd.f32 %v3460, %v3579
  %v3610 = vadd.f32 %v3461, %v3584
  %v3611 = vadd.f32 %v3462, %v3589
  %v3612 = vadd.f32 %v3463, %v3594
  %v3613 = vadd.f32 %v3464, %v3599
  %v3614 = vadd.f32 %v3465, %v3604
  %s3615 = scalar_lea.vmem [#allocation2], 64
  %v3616 = vld [vmem:[%s3615] sm:$0xff]
  %v3617 = vld [vmem:[%s3615 + $0x10] sm:$0xff]
  %v3618 = vld [vmem:[%s3615 + $0x20] sm:$0xff]
  %v3619 = vld [vmem:[%s3615 + $0x30] sm:$0xff]
  %v3620 = vld [vmem:[%s3615 + $0x40] sm:$0xff]
  %v3621 = vld [vmem:[%s3615 + $0x50] sm:$0xff]
  %v3622 = vld [vmem:[%s3615 + $0x60] sm:$0xff]
  %v3623 = vld [vmem:[%s3615 + $0x70] sm:$0xff]
  %v3624 = vld [vmem:[%s3 + $0x280] sm:$0xff]
  %v3625 = vld [vmem:[%s3 + $0x288] sm:$0xff]
  %v3626 = vld [vmem:[%s3 + $0x290] sm:$0xff]
  %v3627 = vld [vmem:[%s3 + $0x298] sm:$0xff]
  %v3629 = vsel %vm79, %v3616, 0
  %v3632 = vsel %vm79, %v3617, 0
  %v3635 = vsel %vm79, %v3618, 0
  %v3638 = vsel %vm79, %v3619, 0
  %v3641 = vsel %vm79, %v3620, 0
  %v3644 = vsel %vm79, %v3621, 0
  %v3647 = vsel %vm79, %v3622, 0
  %v3650 = vsel %vm79, %v3623, 0
  %3652 = vmatprep.subr.mxu0 0.0
  %3653 = vmatpush1.msra.mxu0 %v3624
  %3654 = vmatprep.subr.mxu0 0.0
  %3655 = vmatpush1.msra.mxu0 %v3625
  %3656 = vmatprep.subr.mxu0 0.0
  %3657 = vmatpush1.msra.mxu0 %v3626
  %3658 = vmatprep.subr.mxu0 0.0
  %3659 = vmatpush1.msra.mxu0 %v3627
  %3660 = vmatprep.subr.mxu0 0.0
  %3661 = vmatpush1.msra.mxu0 0.0
  %3662 = vmatprep.subr.mxu0 0.0
  %3663 = vmatpush1.msra.mxu0 0.0
  %3664 = vmatprep.subr.mxu0 0.0
  %3665 = vmatpush1.msra.mxu0 0.0
  %3666 = vmatprep.subr.mxu0 0.0
  %3667 = vmatpush1.msra.mxu0 0.0
  %3668 = vmatprep.subr.mxu0 0.0
  %3669 = vmatpush1.msra.mxu0 0.0
  %3670 = vmatprep.subr.mxu0 0.0
  %3671 = vmatpush1.msra.mxu0 0.0
  %3672 = vmatprep.subr.mxu0 0.0
  %3673 = vmatpush1.msra.mxu0 0.0
  %3674 = vmatprep.subr.mxu0 0.0
  %3675 = vmatpush1.msra.mxu0 0.0
  %3676 = vmatprep.subr.mxu0 0.0
  %3677 = vmatpush1.msra.mxu0 0.0
  %3678 = vmatprep.subr.mxu0 0.0
  %3679 = vmatpush1.msra.mxu0 0.0
  %3680 = vmatprep.subr.mxu0 0.0
  %3681 = vmatpush1.msra.mxu0 0.0
  %3682 = vmatprep.subr.mxu0 0.0
  %3683 = vmatpush1.msra.mxu0 0.0
  %3684 = vmatprep.subr.mxu0 0.0
  %3685 = vmatpush1.msra.mxu0 0.0
  %3686 = vmatprep.subr.mxu0 0.0
  %3687 = vmatpush1.msra.mxu0 0.0
  %3688 = vmatprep.subr.mxu0 0.0
  %3689 = vmatpush1.msra.mxu0 0.0
  %3690 = vmatprep.subr.mxu0 0.0
  %3691 = vmatpush1.msra.mxu0 0.0
  %3692 = vmatprep.subr.mxu0 0.0
  %3693 = vmatpush1.msra.mxu0 0.0
  %3694 = vmatprep.subr.mxu0 0.0
  %3695 = vmatpush1.msra.mxu0 0.0
  %3696 = vmatprep.subr.mxu0 0.0
  %3697 = vmatpush1.msra.mxu0 0.0
  %3698 = vmatprep.subr.mxu0 0.0
  %3699 = vmatpush1.msra.mxu0 0.0
  %3700 = vmatprep.subr.mxu0 0.0
  %3701 = vmatpush1.msra.mxu0 0.0
  %3702 = vmatprep.subr.mxu0 0.0
  %3703 = vmatpush1.msra.mxu0 0.0
  %3704 = vmatprep.subr.mxu0 0.0
  %3705 = vmatpush1.msra.mxu0 0.0
  %3706 = vmatprep.subr.mxu0 0.0
  %3707 = vmatpush1.msra.mxu0 0.0
  %3708 = vmatprep.subr.mxu0 0.0
  %3709 = vmatpush1.msra.mxu0 0.0
  %3710 = vmatprep.subr.mxu0 0.0
  %3711 = vmatpush1.msra.mxu0 0.0
  %3712 = vmatprep.subr.mxu0 0.0
  %3713 = vmatpush1.msra.mxu0 0.0
  %3714 = vmatprep.subr.mxu0 0.0
  %3715 = vmatpush1.msra.mxu0 0.0
  %3716 = vmatprep.mubr.f32.mxu0 0.0
  %3717 = vmatmul.mubr.f32.gmra.mrb[0].mxu0 %v3629
  %v3718 = vpop.f32.mrb[0].mxu0
  %v3719 = vadd.f32 0.0, %v3718
  %v3720 = vpop.f32.mrb[0].mxu0
  %3721 = vmatprep.mubr.f32.mxu0 0.0
  %3722 = vmatmul.mubr.f32.gmra.mrb[0].mxu0 %v3632
  %v3723 = vpop.f32.mrb[0].mxu0
  %v3724 = vadd.f32 0.0, %v3723
  %v3725 = vpop.f32.mrb[0].mxu0
  %3726 = vmatprep.mubr.f32.mxu0 0.0
  %3727 = vmatmul.mubr.f32.gmra.mrb[0].mxu0 %v3635
  %v3728 = vpop.f32.mrb[0].mxu0
  %v3729 = vadd.f32 0.0, %v3728
  %v3730 = vpop.f32.mrb[0].mxu0
  %3731 = vmatprep.mubr.f32.mxu0 0.0
  %3732 = vmatmul.mubr.f32.gmra.mrb[0].mxu0 %v3638
  %v3733 = vpop.f32.mrb[0].mxu0
  %v3734 = vadd.f32 0.0, %v3733
  %v3735 = vpop.f32.mrb[0].mxu0
  %3736 = vmatprep.mubr.f32.mxu0 0.0
  %3737 = vmatmul.mubr.f32.gmra.mrb[0].mxu0 %v3641
  %v3738 = vpop.f32.mrb[0].mxu0
  %v3739 = vadd.f32 0.0, %v3738
  %v3740 = vpop.f32.mrb[0].mxu0
  %3741 = vmatprep.mubr.f32.mxu0 0.0
  %3742 = vmatmul.mubr.f32.gmra.mrb[0].mxu0 %v3644
  %v3743 = vpop.f32.mrb[0].mxu0
  %v3744 = vadd.f32 0.0, %v3743
  %v3745 = vpop.f32.mrb[0].mxu0
  %3746 = vmatprep.mubr.f32.mxu0 0.0
  %3747 = vmatmul.mubr.f32.gmra.mrb[0].mxu0 %v3647
  %v3748 = vpop.f32.mrb[0].mxu0
  %v3749 = vadd.f32 0.0, %v3748
  %v3750 = vpop.f32.mrb[0].mxu0
  %3751 = vmatprep.mubr.f32.mxu0 0.0
  %3752 = vmatmul.mubr.f32.gmra.mrb[0].mxu0 %v3650
  %v3753 = vpop.f32.mrb[0].mxu0
  %v3754 = vadd.f32 0.0, %v3753
  %v3755 = vpop.f32.mrb[0].mxu0
  %3756 = vdwg.mxu0
  %v3757 = vadd.f32 %v3607, %v3719
  %v3758 = vadd.f32 %v3608, %v3724
  %v3759 = vadd.f32 %v3609, %v3729
  %v3760 = vadd.f32 %v3610, %v3734
  %v3761 = vadd.f32 %v3611, %v3739
  %v3762 = vadd.f32 %v3612, %v3744
  %v3763 = vadd.f32 %v3613, %v3749
  %v3764 = vadd.f32 %v3614, %v3754
  %v3765 = vld [vmem:[%s3615 + $0x1] sm:$0xff]
  %v3766 = vld [vmem:[%s3615 + $0x11] sm:$0xff]
  %v3767 = vld [vmem:[%s3615 + $0x21] sm:$0xff]
  %v3768 = vld [vmem:[%s3615 + $0x31] sm:$0xff]
  %v3769 = vld [vmem:[%s3615 + $0x41] sm:$0xff]
  %v3770 = vld [vmem:[%s3615 + $0x51] sm:$0xff]
  %v3771 = vld [vmem:[%s3615 + $0x61] sm:$0xff]
  %v3772 = vld [vmem:[%s3615 + $0x71] sm:$0xff]
  %v3773 = vld [vmem:[%s3 + $0x2a0] sm:$0xff]
  %v3774 = vld [vmem:[%s3 + $0x2a8] sm:$0xff]
  %v3775 = vld [vmem:[%s3 + $0x2b0] sm:$0xff]
  %v3776 = vld [vmem:[%s3 + $0x2b8] sm:$0xff]
  %v3778 = vsel %vm79, %v3765, 0
  %v3781 = vsel %vm79, %v3766, 0
  %v3784 = vsel %vm79, %v3767, 0
  %v3787 = vsel %vm79, %v3768, 0
  %v3790 = vsel %vm79, %v3769, 0
  %v3793 = vsel %vm79, %v3770, 0
  %v3796 = vsel %vm79, %v3771, 0
  %v3799 = vsel %vm79, %v3772, 0
  %3801 = vmatprep.subr.mxu0 0.0
  %3802 = vmatpush1.msra.mxu0 %v3773
  %3803 = vmatprep.subr.mxu0 0.0
  %3804 = vmatpush1.msra.mxu0 %v3774
  %3805 = vmatprep.subr.mxu0 0.0
  %3806 = vmatpush1.msra.mxu0 %v3775
  %3807 = vmatprep.subr.mxu0 0.0
  %3808 = vmatpush1.msra.mxu0 %v3776
  %3809 = vmatprep.subr.mxu0 0.0
  %3810 = vmatpush1.msra.mxu0 0.0
  %3811 = vmatprep.subr.mxu0 0.0
  %3812 = vmatpush1.msra.mxu0 0.0
  %3813 = vmatprep.subr.mxu0 0.0
  %3814 = vmatpush1.msra.mxu0 0.0
  %3815 = vmatprep.subr.mxu0 0.0
  %3816 = vmatpush1.msra.mxu0 0.0
  %3817 = vmatprep.subr.mxu0 0.0
  %3818 = vmatpush1.msra.mxu0 0.0
  %3819 = vmatprep.subr.mxu0 0.0
  %3820 = vmatpush1.msra.mxu0 0.0
  %3821 = vmatprep.subr.mxu0 0.0
  %3822 = vmatpush1.msra.mxu0 0.0
  %3823 = vmatprep.subr.mxu0 0.0
  %3824 = vmatpush1.msra.mxu0 0.0
  %3825 = vmatprep.subr.mxu0 0.0
  %3826 = vmatpush1.msra.mxu0 0.0
  %3827 = vmatprep.subr.mxu0 0.0
  %3828 = vmatpush1.msra.mxu0 0.0
  %3829 = vmatprep.subr.mxu0 0.0
  %3830 = vmatpush1.msra.mxu0 0.0
  %3831 = vmatprep.subr.mxu0 0.0
  %3832 = vmatpush1.msra.mxu0 0.0
  %3833 = vmatprep.subr.mxu0 0.0
  %3834 = vmatpush1.msra.mxu0 0.0
  %3835 = vmatprep.subr.mxu0 0.0
  %3836 = vmatpush1.msra.mxu0 0.0
  %3837 = vmatprep.subr.mxu0 0.0
  %3838 = vmatpush1.msra.mxu0 0.0
  %3839 = vmatprep.subr.mxu0 0.0
  %3840 = vmatpush1.msra.mxu0 0.0
  %3841 = vmatprep.subr.mxu0 0.0
  %3842 = vmatpush1.msra.mxu0 0.0
  %3843 = vmatprep.subr.mxu0 0.0
  %3844 = vmatpush1.msra.mxu0 0.0
  %3845 = vmatprep.subr.mxu0 0.0
  %3846 = vmatpush1.msra.mxu0 0.0
  %3847 = vmatprep.subr.mxu0 0.0
  %3848 = vmatpush1.msra.mxu0 0.0
  %3849 = vmatprep.subr.mxu0 0.0
  %3850 = vmatpush1.msra.mxu0 0.0
  %3851 = vmatprep.subr.mxu0 0.0
  %3852 = vmatpush1.msra.mxu0 0.0
  %3853 = vmatprep.subr.mxu0 0.0
  %3854 = vmatpush1.msra.mxu0 0.0
  %3855 = vmatprep.subr.mxu0 0.0
  %3856 = vmatpush1.msra.mxu0 0.0
  %3857 = vmatprep.subr.mxu0 0.0
  %3858 = vmatpush1.msra.mxu0 0.0
  %3859 = vmatprep.subr.mxu0 0.0
  %3860 = vmatpush1.msra.mxu0 0.0
  %3861 = vmatprep.subr.mxu0 0.0
  %3862 = vmatpush1.msra.mxu0 0.0
  %3863 = vmatprep.subr.mxu0 0.0
  %3864 = vmatpush1.msra.mxu0 0.0
  %3865 = vmatprep.mubr.f32.mxu0 0.0
  %3866 = vmatmul.mubr.f32.gmra.mrb[0].mxu0 %v3778
  %v3867 = vpop.f32.mrb[0].mxu0
  %v3868 = vadd.f32 0.0, %v3867
  %v3869 = vpop.f32.mrb[0].mxu0
  %3870 = vmatprep.mubr.f32.mxu0 0.0
  %3871 = vmatmul.mubr.f32.gmra.mrb[0].mxu0 %v3781
  %v3872 = vpop.f32.mrb[0].mxu0
  %v3873 = vadd.f32 0.0, %v3872
  %v3874 = vpop.f32.mrb[0].mxu0
  %3875 = vmatprep.mubr.f32.mxu0 0.0
  %3876 = vmatmul.mubr.f32.gmra.mrb[0].mxu0 %v3784
  %v3877 = vpop.f32.mrb[0].mxu0
  %v3878 = vadd.f32 0.0, %v3877
  %v3879 = vpop.f32.mrb[0].mxu0
  %3880 = vmatprep.mubr.f32.mxu0 0.0
  %3881 = vmatmul.mubr.f32.gmra.mrb[0].mxu0 %v3787
  %v3882 = vpop.f32.mrb[0].mxu0
  %v3883 = vadd.f32 0.0, %v3882
  %v3884 = vpop.f32.mrb[0].mxu0
  %3885 = vmatprep.mubr.f32.mxu0 0.0
  %3886 = vmatmul.mubr.f32.gmra.mrb[0].mxu0 %v3790
  %v3887 = vpop.f32.mrb[0].mxu0
  %v3888 = vadd.f32 0.0, %v3887
  %v3889 = vpop.f32.mrb[0].mxu0
  %3890 = vmatprep.mubr.f32.mxu0 0.0
  %3891 = vmatmul.mubr.f32.gmra.mrb[0].mxu0 %v3793
  %v3892 = vpop.f32.mrb[0].mxu0
  %v3893 = vadd.f32 0.0, %v3892
  %v3894 = vpop.f32.mrb[0].mxu0
  %3895 = vmatprep.mubr.f32.mxu0 0.0
  %3896 = vmatmul.mubr.f32.gmra.mrb[0].mxu0 %v3796
  %v3897 = vpop.f32.mrb[0].mxu0
  %v3898 = vadd.f32 0.0, %v3897
  %v3899 = vpop.f32.mrb[0].mxu0
  %3900 = vmatprep.mubr.f32.mxu0 0.0
  %3901 = vmatmul.mubr.f32.gmra.mrb[0].mxu0 %v3799
  %v3902 = vpop.f32.mrb[0].mxu0
  %v3903 = vadd.f32 0.0, %v3902
  %v3904 = vpop.f32.mrb[0].mxu0
  %3905 = vdwg.mxu0
  %v3906 = vadd.f32 %v3757, %v3868
  %v3907 = vadd.f32 %v3758, %v3873
  %v3908 = vadd.f32 %v3759, %v3878
  %v3909 = vadd.f32 %v3760, %v3883
  %v3910 = vadd.f32 %v3761, %v3888
  %v3911 = vadd.f32 %v3762, %v3893
  %v3912 = vadd.f32 %v3763, %v3898
  %v3913 = vadd.f32 %v3764, %v3903
  %v3914 = vld [vmem:[%s3615 + $0x2] sm:$0xff]
  %v3915 = vld [vmem:[%s3615 + $0x12] sm:$0xff]
  %v3916 = vld [vmem:[%s3615 + $0x22] sm:$0xff]
  %v3917 = vld [vmem:[%s3615 + $0x32] sm:$0xff]
  %v3918 = vld [vmem:[%s3615 + $0x42] sm:$0xff]
  %v3919 = vld [vmem:[%s3615 + $0x52] sm:$0xff]
  %v3920 = vld [vmem:[%s3615 + $0x62] sm:$0xff]
  %v3921 = vld [vmem:[%s3615 + $0x72] sm:$0xff]
  %v3922 = vld [vmem:[%s3 + $0x2c0] sm:$0xff]
  %v3923 = vld [vmem:[%s3 + $0x2c8] sm:$0xff]
  %v3924 = vld [vmem:[%s3 + $0x2d0] sm:$0xff]
  %v3925 = vld [vmem:[%s3 + $0x2d8] sm:$0xff]
  %v3927 = vsel %vm79, %v3914, 0
  %v3930 = vsel %vm79, %v3915, 0
  %v3933 = vsel %vm79, %v3916, 0
  %v3936 = vsel %vm79, %v3917, 0
  %v3939 = vsel %vm79, %v3918, 0
  %v3942 = vsel %vm79, %v3919, 0
  %v3945 = vsel %vm79, %v3920, 0
  %v3948 = vsel %vm79, %v3921, 0
  %3950 = vmatprep.subr.mxu0 0.0
  %3951 = vmatpush1.msra.mxu0 %v3922
  %3952 = vmatprep.subr.mxu0 0.0
  %3953 = vmatpush1.msra.mxu0 %v3923
  %3954 = vmatprep.subr.mxu0 0.0
  %3955 = vmatpush1.msra.mxu0 %v3924
  %3956 = vmatprep.subr.mxu0 0.0
  %3957 = vmatpush1.msra.mxu0 %v3925
  %3958 = vmatprep.subr.mxu0 0.0
  %3959 = vmatpush1.msra.mxu0 0.0
  %3960 = vmatprep.subr.mxu0 0.0
  %3961 = vmatpush1.msra.mxu0 0.0
  %3962 = vmatprep.subr.mxu0 0.0
  %3963 = vmatpush1.msra.mxu0 0.0
  %3964 = vmatprep.subr.mxu0 0.0
  %3965 = vmatpush1.msra.mxu0 0.0
  %3966 = vmatprep.subr.mxu0 0.0
  %3967 = vmatpush1.msra.mxu0 0.0
  %3968 = vmatprep.subr.mxu0 0.0
  %3969 = vmatpush1.msra.mxu0 0.0
  %3970 = vmatprep.subr.mxu0 0.0
  %3971 = vmatpush1.msra.mxu0 0.0
  %3972 = vmatprep.subr.mxu0 0.0
  %3973 = vmatpush1.msra.mxu0 0.0
  %3974 = vmatprep.subr.mxu0 0.0
  %3975 = vmatpush1.msra.mxu0 0.0
  %3976 = vmatprep.subr.mxu0 0.0
  %3977 = vmatpush1.msra.mxu0 0.0
  %3978 = vmatprep.subr.mxu0 0.0
  %3979 = vmatpush1.msra.mxu0 0.0
  %3980 = vmatprep.subr.mxu0 0.0
  %3981 = vmatpush1.msra.mxu0 0.0
  %3982 = vmatprep.subr.mxu0 0.0
  %3983 = vmatpush1.msra.mxu0 0.0
  %3984 = vmatprep.subr.mxu0 0.0
  %3985 = vmatpush1.msra.mxu0 0.0
  %3986 = vmatprep.subr.mxu0 0.0
  %3987 = vmatpush1.msra.mxu0 0.0
  %3988 = vmatprep.subr.mxu0 0.0
  %3989 = vmatpush1.msra.mxu0 0.0
  %3990 = vmatprep.subr.mxu0 0.0
  %3991 = vmatpush1.msra.mxu0 0.0
  %3992 = vmatprep.subr.mxu0 0.0
  %3993 = vmatpush1.msra.mxu0 0.0
  %3994 = vmatprep.subr.mxu0 0.0
  %3995 = vmatpush1.msra.mxu0 0.0
  %3996 = vmatprep.subr.mxu0 0.0
  %3997 = vmatpush1.msra.mxu0 0.0
  %3998 = vmatprep.subr.mxu0 0.0
  %3999 = vmatpush1.msra.mxu0 0.0
  %4000 = vmatprep.subr.mxu0 0.0
  %4001 = vmatpush1.msra.mxu0 0.0
  %4002 = vmatprep.subr.mxu0 0.0
  %4003 = vmatpush1.msra.mxu0 0.0
  %4004 = vmatprep.subr.mxu0 0.0
  %4005 = vmatpush1.msra.mxu0 0.0
  %4006 = vmatprep.subr.mxu0 0.0
  %4007 = vmatpush1.msra.mxu0 0.0
  %4008 = vmatprep.subr.mxu0 0.0
  %4009 = vmatpush1.msra.mxu0 0.0
  %4010 = vmatprep.subr.mxu0 0.0
  %4011 = vmatpush1.msra.mxu0 0.0
  %4012 = vmatprep.subr.mxu0 0.0
  %4013 = vmatpush1.msra.mxu0 0.0
  %4014 = vmatprep.mubr.f32.mxu0 0.0
  %4015 = vmatmul.mubr.f32.gmra.mrb[0].mxu0 %v3927
  %v4016 = vpop.f32.mrb[0].mxu0
  %v4017 = vadd.f32 0.0, %v4016
  %v4018 = vpop.f32.mrb[0].mxu0
  %4019 = vmatprep.mubr.f32.mxu0 0.0
  %4020 = vmatmul.mubr.f32.gmra.mrb[0].mxu0 %v3930
  %v4021 = vpop.f32.mrb[0].mxu0
  %v4022 = vadd.f32 0.0, %v4021
  %v4023 = vpop.f32.mrb[0].mxu0
  %4024 = vmatprep.mubr.f32.mxu0 0.0
  %4025 = vmatmul.mubr.f32.gmra.mrb[0].mxu0 %v3933
  %v4026 = vpop.f32.mrb[0].mxu0
  %v4027 = vadd.f32 0.0, %v4026
  %v4028 = vpop.f32.mrb[0].mxu0
  %4029 = vmatprep.mubr.f32.mxu0 0.0
  %4030 = vmatmul.mubr.f32.gmra.mrb[0].mxu0 %v3936
  %v4031 = vpop.f32.mrb[0].mxu0
  %v4032 = vadd.f32 0.0, %v4031
  %v4033 = vpop.f32.mrb[0].mxu0
  %4034 = vmatprep.mubr.f32.mxu0 0.0
  %4035 = vmatmul.mubr.f32.gmra.mrb[0].mxu0 %v3939
  %v4036 = vpop.f32.mrb[0].mxu0
  %v4037 = vadd.f32 0.0, %v4036
  %v4038 = vpop.f32.mrb[0].mxu0
  %4039 = vmatprep.mubr.f32.mxu0 0.0
  %4040 = vmatmul.mubr.f32.gmra.mrb[0].mxu0 %v3942
  %v4041 = vpop.f32.mrb[0].mxu0
  %v4042 = vadd.f32 0.0, %v4041
  %v4043 = vpop.f32.mrb[0].mxu0
  %4044 = vmatprep.mubr.f32.mxu0 0.0
  %4045 = vmatmul.mubr.f32.gmra.mrb[0].mxu0 %v3945
  %v4046 = vpop.f32.mrb[0].mxu0
  %v4047 = vadd.f32 0.0, %v4046
  %v4048 = vpop.f32.mrb[0].mxu0
  %4049 = vmatprep.mubr.f32.mxu0 0.0
  %4050 = vmatmul.mubr.f32.gmra.mrb[0].mxu0 %v3948
  %v4051 = vpop.f32.mrb[0].mxu0
  %v4052 = vadd.f32 0.0, %v4051
  %v4053 = vpop.f32.mrb[0].mxu0
  %4054 = vdwg.mxu0
  %v4055 = vadd.f32 %v3906, %v4017
  %v4056 = vadd.f32 %v3907, %v4022
  %v4057 = vadd.f32 %v3908, %v4027
  %v4058 = vadd.f32 %v3909, %v4032
  %v4059 = vadd.f32 %v3910, %v4037
  %v4060 = vadd.f32 %v3911, %v4042
  %v4061 = vadd.f32 %v3912, %v4047
  %v4062 = vadd.f32 %v3913, %v4052
  %v4063 = vld [vmem:[%s3615 + $0x3] sm:$0xff]
  %v4064 = vld [vmem:[%s3615 + $0x13] sm:$0xff]
  %v4065 = vld [vmem:[%s3615 + $0x23] sm:$0xff]
  %v4066 = vld [vmem:[%s3615 + $0x33] sm:$0xff]
  %v4067 = vld [vmem:[%s3615 + $0x43] sm:$0xff]
  %v4068 = vld [vmem:[%s3615 + $0x53] sm:$0xff]
  %v4069 = vld [vmem:[%s3615 + $0x63] sm:$0xff]
  %v4070 = vld [vmem:[%s3615 + $0x73] sm:$0xff]
  %v4071 = vld [vmem:[%s3 + $0x2e0] sm:$0xff]
  %v4072 = vld [vmem:[%s3 + $0x2e8] sm:$0xff]
  %v4073 = vld [vmem:[%s3 + $0x2f0] sm:$0xff]
  %v4074 = vld [vmem:[%s3 + $0x2f8] sm:$0xff]
  %v4076 = vsel %vm79, %v4063, 0
  %v4079 = vsel %vm79, %v4064, 0
  %v4082 = vsel %vm79, %v4065, 0
  %v4085 = vsel %vm79, %v4066, 0
  %v4088 = vsel %vm79, %v4067, 0
  %v4091 = vsel %vm79, %v4068, 0
  %v4094 = vsel %vm79, %v4069, 0
  %v4097 = vsel %vm79, %v4070, 0
  %4099 = vmatprep.subr.mxu0 0.0
  %4100 = vmatpush1.msra.mxu0 %v4071
  %4101 = vmatprep.subr.mxu0 0.0
  %4102 = vmatpush1.msra.mxu0 %v4072
  %4103 = vmatprep.subr.mxu0 0.0
  %4104 = vmatpush1.msra.mxu0 %v4073
  %4105 = vmatprep.subr.mxu0 0.0
  %4106 = vmatpush1.msra.mxu0 %v4074
  %4107 = vmatprep.subr.mxu0 0.0
  %4108 = vmatpush1.msra.mxu0 0.0
  %4109 = vmatprep.subr.mxu0 0.0
  %4110 = vmatpush1.msra.mxu0 0.0
  %4111 = vmatprep.subr.mxu0 0.0
  %4112 = vmatpush1.msra.mxu0 0.0
  %4113 = vmatprep.subr.mxu0 0.0
  %4114 = vmatpush1.msra.mxu0 0.0
  %4115 = vmatprep.subr.mxu0 0.0
  %4116 = vmatpush1.msra.mxu0 0.0
  %4117 = vmatprep.subr.mxu0 0.0
  %4118 = vmatpush1.msra.mxu0 0.0
  %4119 = vmatprep.subr.mxu0 0.0
  %4120 = vmatpush1.msra.mxu0 0.0
  %4121 = vmatprep.subr.mxu0 0.0
  %4122 = vmatpush1.msra.mxu0 0.0
  %4123 = vmatprep.subr.mxu0 0.0
  %4124 = vmatpush1.msra.mxu0 0.0
  %4125 = vmatprep.subr.mxu0 0.0
  %4126 = vmatpush1.msra.mxu0 0.0
  %4127 = vmatprep.subr.mxu0 0.0
  %4128 = vmatpush1.msra.mxu0 0.0
  %4129 = vmatprep.subr.mxu0 0.0
  %4130 = vmatpush1.msra.mxu0 0.0
  %4131 = vmatprep.subr.mxu0 0.0
  %4132 = vmatpush1.msra.mxu0 0.0
  %4133 = vmatprep.subr.mxu0 0.0
  %4134 = vmatpush1.msra.mxu0 0.0
  %4135 = vmatprep.subr.mxu0 0.0
  %4136 = vmatpush1.msra.mxu0 0.0
  %4137 = vmatprep.subr.mxu0 0.0
  %4138 = vmatpush1.msra.mxu0 0.0
  %4139 = vmatprep.subr.mxu0 0.0
  %4140 = vmatpush1.msra.mxu0 0.0
  %4141 = vmatprep.subr.mxu0 0.0
  %4142 = vmatpush1.msra.mxu0 0.0
  %4143 = vmatprep.subr.mxu0 0.0
  %4144 = vmatpush1.msra.mxu0 0.0
  %4145 = vmatprep.subr.mxu0 0.0
  %4146 = vmatpush1.msra.mxu0 0.0
  %4147 = vmatprep.subr.mxu0 0.0
  %4148 = vmatpush1.msra.mxu0 0.0
  %4149 = vmatprep.subr.mxu0 0.0
  %4150 = vmatpush1.msra.mxu0 0.0
  %4151 = vmatprep.subr.mxu0 0.0
  %4152 = vmatpush1.msra.mxu0 0.0
  %4153 = vmatprep.subr.mxu0 0.0
  %4154 = vmatpush1.msra.mxu0 0.0
  %4155 = vmatprep.subr.mxu0 0.0
  %4156 = vmatpush1.msra.mxu0 0.0
  %4157 = vmatprep.subr.mxu0 0.0
  %4158 = vmatpush1.msra.mxu0 0.0
  %4159 = vmatprep.subr.mxu0 0.0
  %4160 = vmatpush1.msra.mxu0 0.0
  %4161 = vmatprep.subr.mxu0 0.0
  %4162 = vmatpush1.msra.mxu0 0.0
  %4163 = vmatprep.mubr.f32.mxu0 0.0
  %4164 = vmatmul.mubr.f32.gmra.mrb[0].mxu0 %v4076
  %v4165 = vpop.f32.mrb[0].mxu0
  %v4166 = vadd.f32 0.0, %v4165
  %v4167 = vpop.f32.mrb[0].mxu0
  %4168 = vmatprep.mubr.f32.mxu0 0.0
  %4169 = vmatmul.mubr.f32.gmra.mrb[0].mxu0 %v4079
  %v4170 = vpop.f32.mrb[0].mxu0
  %v4171 = vadd.f32 0.0, %v4170
  %v4172 = vpop.f32.mrb[0].mxu0
  %4173 = vmatprep.mubr.f32.mxu0 0.0
  %4174 = vmatmul.mubr.f32.gmra.mrb[0].mxu0 %v4082
  %v4175 = vpop.f32.mrb[0].mxu0
  %v4176 = vadd.f32 0.0, %v4175
  %v4177 = vpop.f32.mrb[0].mxu0
  %4178 = vmatprep.mubr.f32.mxu0 0.0
  %4179 = vmatmul.mubr.f32.gmra.mrb[0].mxu0 %v4085
  %v4180 = vpop.f32.mrb[0].mxu0
  %v4181 = vadd.f32 0.0, %v4180
  %v4182 = vpop.f32.mrb[0].mxu0
  %4183 = vmatprep.mubr.f32.mxu0 0.0
  %4184 = vmatmul.mubr.f32.gmra.mrb[0].mxu0 %v4088
  %v4185 = vpop.f32.mrb[0].mxu0
  %v4186 = vadd.f32 0.0, %v4185
  %v4187 = vpop.f32.mrb[0].mxu0
  %4188 = vmatprep.mubr.f32.mxu0 0.0
  %4189 = vmatmul.mubr.f32.gmra.mrb[0].mxu0 %v4091
  %v4190 = vpop.f32.mrb[0].mxu0
  %v4191 = vadd.f32 0.0, %v4190
  %v4192 = vpop.f32.mrb[0].mxu0
  %4193 = vmatprep.mubr.f32.mxu0 0.0
  %4194 = vmatmul.mubr.f32.gmra.mrb[0].mxu0 %v4094
  %v4195 = vpop.f32.mrb[0].mxu0
  %v4196 = vadd.f32 0.0, %v4195
  %v4197 = vpop.f32.mrb[0].mxu0
  %4198 = vmatprep.mubr.f32.mxu0 0.0
  %4199 = vmatmul.mubr.f32.gmra.mrb[0].mxu0 %v4097
  %v4200 = vpop.f32.mrb[0].mxu0
  %v4201 = vadd.f32 0.0, %v4200
  %v4202 = vpop.f32.mrb[0].mxu0
  %4203 = vdwg.mxu0
  %v4204 = vadd.f32 %v4055, %v4166
  %v4205 = vadd.f32 %v4056, %v4171
  %v4206 = vadd.f32 %v4057, %v4176
  %v4207 = vadd.f32 %v4058, %v4181
  %v4208 = vadd.f32 %v4059, %v4186
  %v4209 = vadd.f32 %v4060, %v4191
  %v4210 = vadd.f32 %v4061, %v4196
  %v4211 = vadd.f32 %v4062, %v4201
  %v4212 = vld [vmem:[%s3615 + $0x4] sm:$0xff]
  %v4213 = vld [vmem:[%s3615 + $0x14] sm:$0xff]
  %v4214 = vld [vmem:[%s3615 + $0x24] sm:$0xff]
  %v4215 = vld [vmem:[%s3615 + $0x34] sm:$0xff]
  %v4216 = vld [vmem:[%s3615 + $0x44] sm:$0xff]
  %v4217 = vld [vmem:[%s3615 + $0x54] sm:$0xff]
  %v4218 = vld [vmem:[%s3615 + $0x64] sm:$0xff]
  %v4219 = vld [vmem:[%s3615 + $0x74] sm:$0xff]
  %v4220 = vld [vmem:[%s3 + $0x300] sm:$0xff]
  %v4221 = vld [vmem:[%s3 + $0x308] sm:$0xff]
  %v4222 = vld [vmem:[%s3 + $0x310] sm:$0xff]
  %v4223 = vld [vmem:[%s3 + $0x318] sm:$0xff]
  %v4225 = vsel %vm79, %v4212, 0
  %v4228 = vsel %vm79, %v4213, 0
  %v4231 = vsel %vm79, %v4214, 0
  %v4234 = vsel %vm79, %v4215, 0
  %v4237 = vsel %vm79, %v4216, 0
  %v4240 = vsel %vm79, %v4217, 0
  %v4243 = vsel %vm79, %v4218, 0
  %v4246 = vsel %vm79, %v4219, 0
  %4248 = vmatprep.subr.mxu0 0.0
  %4249 = vmatpush1.msra.mxu0 %v4220
  %4250 = vmatprep.subr.mxu0 0.0
  %4251 = vmatpush1.msra.mxu0 %v4221
  %4252 = vmatprep.subr.mxu0 0.0
  %4253 = vmatpush1.msra.mxu0 %v4222
  %4254 = vmatprep.subr.mxu0 0.0
  %4255 = vmatpush1.msra.mxu0 %v4223
  %4256 = vmatprep.subr.mxu0 0.0
  %4257 = vmatpush1.msra.mxu0 0.0
  %4258 = vmatprep.subr.mxu0 0.0
  %4259 = vmatpush1.msra.mxu0 0.0
  %4260 = vmatprep.subr.mxu0 0.0
  %4261 = vmatpush1.msra.mxu0 0.0
  %4262 = vmatprep.subr.mxu0 0.0
  %4263 = vmatpush1.msra.mxu0 0.0
  %4264 = vmatprep.subr.mxu0 0.0
  %4265 = vmatpush1.msra.mxu0 0.0
  %4266 = vmatprep.subr.mxu0 0.0
  %4267 = vmatpush1.msra.mxu0 0.0
  %4268 = vmatprep.subr.mxu0 0.0
  %4269 = vmatpush1.msra.mxu0 0.0
  %4270 = vmatprep.subr.mxu0 0.0
  %4271 = vmatpush1.msra.mxu0 0.0
  %4272 = vmatprep.subr.mxu0 0.0
  %4273 = vmatpush1.msra.mxu0 0.0
  %4274 = vmatprep.subr.mxu0 0.0
  %4275 = vmatpush1.msra.mxu0 0.0
  %4276 = vmatprep.subr.mxu0 0.0
  %4277 = vmatpush1.msra.mxu0 0.0
  %4278 = vmatprep.subr.mxu0 0.0
  %4279 = vmatpush1.msra.mxu0 0.0
  %4280 = vmatprep.subr.mxu0 0.0
  %4281 = vmatpush1.msra.mxu0 0.0
  %4282 = vmatprep.subr.mxu0 0.0
  %4283 = vmatpush1.msra.mxu0 0.0
  %4284 = vmatprep.subr.mxu0 0.0
  %4285 = vmatpush1.msra.mxu0 0.0
  %4286 = vmatprep.subr.mxu0 0.0
  %4287 = vmatpush1.msra.mxu0 0.0
  %4288 = vmatprep.subr.mxu0 0.0
  %4289 = vmatpush1.msra.mxu0 0.0
  %4290 = vmatprep.subr.mxu0 0.0
  %4291 = vmatpush1.msra.mxu0 0.0
  %4292 = vmatprep.subr.mxu0 0.0
  %4293 = vmatpush1.msra.mxu0 0.0
  %4294 = vmatprep.subr.mxu0 0.0
  %4295 = vmatpush1.msra.mxu0 0.0
  %4296 = vmatprep.subr.mxu0 0.0
  %4297 = vmatpush1.msra.mxu0 0.0
  %4298 = vmatprep.subr.mxu0 0.0
  %4299 = vmatpush1.msra.mxu0 0.0
  %4300 = vmatprep.subr.mxu0 0.0
  %4301 = vmatpush1.msra.mxu0 0.0
  %4302 = vmatprep.subr.mxu0 0.0
  %4303 = vmatpush1.msra.mxu0 0.0
  %4304 = vmatprep.subr.mxu0 0.0
  %4305 = vmatpush1.msra.mxu0 0.0
  %4306 = vmatprep.subr.mxu0 0.0
  %4307 = vmatpush1.msra.mxu0 0.0
  %4308 = vmatprep.subr.mxu0 0.0
  %4309 = vmatpush1.msra.mxu0 0.0
  %4310 = vmatprep.subr.mxu0 0.0
  %4311 = vmatpush1.msra.mxu0 0.0
  %4312 = vmatprep.mubr.f32.mxu0 0.0
  %4313 = vmatmul.mubr.f32.gmra.mrb[0].mxu0 %v4225
  %v4314 = vpop.f32.mrb[0].mxu0
  %v4315 = vadd.f32 0.0, %v4314
  %v4316 = vpop.f32.mrb[0].mxu0
  %4317 = vmatprep.mubr.f32.mxu0 0.0
  %4318 = vmatmul.mubr.f32.gmra.mrb[0].mxu0 %v4228
  %v4319 = vpop.f32.mrb[0].mxu0
  %v4320 = vadd.f32 0.0, %v4319
  %v4321 = vpop.f32.mrb[0].mxu0
  %4322 = vmatprep.mubr.f32.mxu0 0.0
  %4323 = vmatmul.mubr.f32.gmra.mrb[0].mxu0 %v4231
  %v4324 = vpop.f32.mrb[0].mxu0
  %v4325 = vadd.f32 0.0, %v4324
  %v4326 = vpop.f32.mrb[0].mxu0
  %4327 = vmatprep.mubr.f32.mxu0 0.0
  %4328 = vmatmul.mubr.f32.gmra.mrb[0].mxu0 %v4234
  %v4329 = vpop.f32.mrb[0].mxu0
  %v4330 = vadd.f32 0.0, %v4329
  %v4331 = vpop.f32.mrb[0].mxu0
  %4332 = vmatprep.mubr.f32.mxu0 0.0
  %4333 = vmatmul.mubr.f32.gmra.mrb[0].mxu0 %v4237
  %v4334 = vpop.f32.mrb[0].mxu0
  %v4335 = vadd.f32 0.0, %v4334
  %v4336 = vpop.f32.mrb[0].mxu0
  %4337 = vmatprep.mubr.f32.mxu0 0.0
  %4338 = vmatmul.mubr.f32.gmra.mrb[0].mxu0 %v4240
  %v4339 = vpop.f32.mrb[0].mxu0
  %v4340 = vadd.f32 0.0, %v4339
  %v4341 = vpop.f32.mrb[0].mxu0
  %4342 = vmatprep.mubr.f32.mxu0 0.0
  %4343 = vmatmul.mubr.f32.gmra.mrb[0].mxu0 %v4243
  %v4344 = vpop.f32.mrb[0].mxu0
  %v4345 = vadd.f32 0.0, %v4344
  %v4346 = vpop.f32.mrb[0].mxu0
  %4347 = vmatprep.mubr.f32.mxu0 0.0
  %4348 = vmatmul.mubr.f32.gmra.mrb[0].mxu0 %v4246
  %v4349 = vpop.f32.mrb[0].mxu0
  %v4350 = vadd.f32 0.0, %v4349
  %v4351 = vpop.f32.mrb[0].mxu0
  %4352 = vdwg.mxu0
  %v4353 = vadd.f32 %v4204, %v4315
  %v4354 = vadd.f32 %v4205, %v4320
  %v4355 = vadd.f32 %v4206, %v4325
  %v4356 = vadd.f32 %v4207, %v4330
  %v4357 = vadd.f32 %v4208, %v4335
  %v4358 = vadd.f32 %v4209, %v4340
  %v4359 = vadd.f32 %v4210, %v4345
  %v4360 = vadd.f32 %v4211, %v4350
  %v4361 = vmax.f32 %v4353, 0.0
  %v4362 = vmax.f32 %v4354, 0.0
  %v4363 = vmax.f32 %v4355, 0.0
  %v4364 = vmax.f32 %v4356, 0.0
  %v4365 = vmax.f32 %v4357, 0.0
  %v4366 = vmax.f32 %v4358, 0.0
  %v4367 = vmax.f32 %v4359, 0.0
  %v4368 = vmax.f32 %v4360, 0.0
  %4369 = vst [vmem:[%s5] sm:$0xff] %v4361
  %4370 = vst [vmem:[%s5 + $0x8] sm:$0xff] %v4362
  %4371 = vst [vmem:[%s5 + $0x10] sm:$0xff] %v4363
  %4372 = vst [vmem:[%s5 + $0x18] sm:$0xff] %v4364
  %4373 = vst [vmem:[%s5 + $0x20] sm:$0xff] %v4365
  %4374 = vst [vmem:[%s5 + $0x28] sm:$0xff] %v4366
  %4375 = vst [vmem:[%s5 + $0x30] sm:$0xff] %v4367
  %4376 = vst [vmem:[%s5 + $0x38] sm:$0xff] %v4368
  %s4377 = scalar_lea.vmem [#allocation2], 192
  %v4378 = vld [vmem:[%s4377] sm:$0xff]
  %v4379 = vld [vmem:[%s4377 + $0x10] sm:$0xff]
  %v4380 = vld [vmem:[%s4377 + $0x20] sm:$0xff]
  %v4381 = vld [vmem:[%s4377 + $0x30] sm:$0xff]
  %v4382 = vld [vmem:[%s4377 + $0x40] sm:$0xff]
  %v4383 = vld [vmem:[%s4377 + $0x50] sm:$0xff]
  %v4384 = vld [vmem:[%s4377 + $0x60] sm:$0xff]
  %v4385 = vld [vmem:[%s4377 + $0x70] sm:$0xff]
  %v4386 = vld [vmem:[%s3] sm:$0xff]
  %v4387 = vld [vmem:[%s3 + $0x8] sm:$0xff]
  %v4388 = vld [vmem:[%s3 + $0x10] sm:$0xff]
  %v4389 = vld [vmem:[%s3 + $0x18] sm:$0xff]
  %v4391 = vsel %vm79, %v4378, 0
  %v4394 = vsel %vm79, %v4379, 0
  %v4397 = vsel %vm79, %v4380, 0
  %v4400 = vsel %vm79, %v4381, 0
  %v4403 = vsel %vm79, %v4382, 0
  %v4406 = vsel %vm79, %v4383, 0
  %v4409 = vsel %vm79, %v4384, 0
  %v4412 = vsel %vm79, %v4385, 0
  %4414 = vmatprep.subr.mxu0 0.0
  %4415 = vmatpush1.msra.mxu0 %v4386
  %4416 = vmatprep.subr.mxu0 0.0
  %4417 = vmatpush1.msra.mxu0 %v4387
  %4418 = vmatprep.subr.mxu0 0.0
  %4419 = vmatpush1.msra.mxu0 %v4388
  %4420 = vmatprep.subr.mxu0 0.0
  %4421 = vmatpush1.msra.mxu0 %v4389
  %4422 = vmatprep.subr.mxu0 0.0
  %4423 = vmatpush1.msra.mxu0 0.0
  %4424 = vmatprep.subr.mxu0 0.0
  %4425 = vmatpush1.msra.mxu0 0.0
  %4426 = vmatprep.subr.mxu0 0.0
  %4427 = vmatpush1.msra.mxu0 0.0
  %4428 = vmatprep.subr.mxu0 0.0
  %4429 = vmatpush1.msra.mxu0 0.0
  %4430 = vmatprep.subr.mxu0 0.0
  %4431 = vmatpush1.msra.mxu0 0.0
  %4432 = vmatprep.subr.mxu0 0.0
  %4433 = vmatpush1.msra.mxu0 0.0
  %4434 = vmatprep.subr.mxu0 0.0
  %4435 = vmatpush1.msra.mxu0 0.0
  %4436 = vmatprep.subr.mxu0 0.0
  %4437 = vmatpush1.msra.mxu0 0.0
  %4438 = vmatprep.subr.mxu0 0.0
  %4439 = vmatpush1.msra.mxu0 0.0
  %4440 = vmatprep.subr.mxu0 0.0
  %4441 = vmatpush1.msra.mxu0 0.0
  %4442 = vmatprep.subr.mxu0 0.0
  %4443 = vmatpush1.msra.mxu0 0.0
  %4444 = vmatprep.subr.mxu0 0.0
  %4445 = vmatpush1.msra.mxu0 0.0
  %4446 = vmatprep.subr.mxu0 0.0
  %4447 = vmatpush1.msra.mxu0 0.0
  %4448 = vmatprep.subr.mxu0 0.0
  %4449 = vmatpush1.msra.mxu0 0.0
  %4450 = vmatprep.subr.mxu0 0.0
  %4451 = vmatpush1.msra.mxu0 0.0
  %4452 = vmatprep.subr.mxu0 0.0
  %4453 = vmatpush1.msra.mxu0 0.0
  %4454 = vmatprep.subr.mxu0 0.0
  %4455 = vmatpush1.msra.mxu0 0.0
  %4456 = vmatprep.subr.mxu0 0.0
  %4457 = vmatpush1.msra.mxu0 0.0
  %4458 = vmatprep.subr.mxu0 0.0
  %4459 = vmatpush1.msra.mxu0 0.0
  %4460 = vmatprep.subr.mxu0 0.0
  %4461 = vmatpush1.msra.mxu0 0.0
  %4462 = vmatprep.subr.mxu0 0.0
  %4463 = vmatpush1.msra.mxu0 0.0
  %4464 = vmatprep.subr.mxu0 0.0
  %4465 = vmatpush1.msra.mxu0 0.0
  %4466 = vmatprep.subr.mxu0 0.0
  %4467 = vmatpush1.msra.mxu0 0.0
  %4468 = vmatprep.subr.mxu0 0.0
  %4469 = vmatpush1.msra.mxu0 0.0
  %4470 = vmatprep.subr.mxu0 0.0
  %4471 = vmatpush1.msra.mxu0 0.0
  %4472 = vmatprep.subr.mxu0 0.0
  %4473 = vmatpush1.msra.mxu0 0.0
  %4474 = vmatprep.subr.mxu0 0.0
  %4475 = vmatpush1.msra.mxu0 0.0
  %4476 = vmatprep.subr.mxu0 0.0
  %4477 = vmatpush1.msra.mxu0 0.0
  %4478 = vmatprep.mubr.f32.mxu0 0.0
  %4479 = vmatmul.mubr.f32.gmra.mrb[0].mxu0 %v4391
  %v4480 = vpop.f32.mrb[0].mxu0
  %v4481 = vadd.f32 0.0, %v4480
  %v4482 = vpop.f32.mrb[0].mxu0
  %4483 = vmatprep.mubr.f32.mxu0 0.0
  %4484 = vmatmul.mubr.f32.gmra.mrb[0].mxu0 %v4394
  %v4485 = vpop.f32.mrb[0].mxu0
  %v4486 = vadd.f32 0.0, %v4485
  %v4487 = vpop.f32.mrb[0].mxu0
  %4488 = vmatprep.mubr.f32.mxu0 0.0
  %4489 = vmatmul.mubr.f32.gmra.mrb[0].mxu0 %v4397
  %v4490 = vpop.f32.mrb[0].mxu0
  %v4491 = vadd.f32 0.0, %v4490
  %v4492 = vpop.f32.mrb[0].mxu0
  %4493 = vmatprep.mubr.f32.mxu0 0.0
  %4494 = vmatmul.mubr.f32.gmra.mrb[0].mxu0 %v4400
  %v4495 = vpop.f32.mrb[0].mxu0
  %v4496 = vadd.f32 0.0, %v4495
  %v4497 = vpop.f32.mrb[0].mxu0
  %4498 = vmatprep.mubr.f32.mxu0 0.0
  %4499 = vmatmul.mubr.f32.gmra.mrb[0].mxu0 %v4403
  %v4500 = vpop.f32.mrb[0].mxu0
  %v4501 = vadd.f32 0.0, %v4500
  %v4502 = vpop.f32.mrb[0].mxu0
  %4503 = vmatprep.mubr.f32.mxu0 0.0
  %4504 = vmatmul.mubr.f32.gmra.mrb[0].mxu0 %v4406
  %v4505 = vpop.f32.mrb[0].mxu0
  %v4506 = vadd.f32 0.0, %v4505
  %v4507 = vpop.f32.mrb[0].mxu0
  %4508 = vmatprep.mubr.f32.mxu0 0.0
  %4509 = vmatmul.mubr.f32.gmra.mrb[0].mxu0 %v4409
  %v4510 = vpop.f32.mrb[0].mxu0
  %v4511 = vadd.f32 0.0, %v4510
  %v4512 = vpop.f32.mrb[0].mxu0
  %4513 = vmatprep.mubr.f32.mxu0 0.0
  %4514 = vmatmul.mubr.f32.gmra.mrb[0].mxu0 %v4412
  %v4515 = vpop.f32.mrb[0].mxu0
  %v4516 = vadd.f32 0.0, %v4515
  %v4517 = vpop.f32.mrb[0].mxu0
  %4518 = vdwg.mxu0
  %v4519 = vadd.f32 %v630, %v4481
  %v4520 = vadd.f32 %v630, %v4486
  %v4521 = vadd.f32 %v630, %v4491
  %v4522 = vadd.f32 %v630, %v4496
  %v4523 = vadd.f32 %v630, %v4501
  %v4524 = vadd.f32 %v630, %v4506
  %v4525 = vadd.f32 %v630, %v4511
  %v4526 = vadd.f32 %v630, %v4516
  %v4527 = vld [vmem:[%s4377 + $0x1] sm:$0xff]
  %v4528 = vld [vmem:[%s4377 + $0x11] sm:$0xff]
  %v4529 = vld [vmem:[%s4377 + $0x21] sm:$0xff]
  %v4530 = vld [vmem:[%s4377 + $0x31] sm:$0xff]
  %v4531 = vld [vmem:[%s4377 + $0x41] sm:$0xff]
  %v4532 = vld [vmem:[%s4377 + $0x51] sm:$0xff]
  %v4533 = vld [vmem:[%s4377 + $0x61] sm:$0xff]
  %v4534 = vld [vmem:[%s4377 + $0x71] sm:$0xff]
  %v4535 = vld [vmem:[%s3 + $0x20] sm:$0xff]
  %v4536 = vld [vmem:[%s3 + $0x28] sm:$0xff]
  %v4537 = vld [vmem:[%s3 + $0x30] sm:$0xff]
  %v4538 = vld [vmem:[%s3 + $0x38] sm:$0xff]
  %v4540 = vsel %vm79, %v4527, 0
  %v4543 = vsel %vm79, %v4528, 0
  %v4546 = vsel %vm79, %v4529, 0
  %v4549 = vsel %vm79, %v4530, 0
  %v4552 = vsel %vm79, %v4531, 0
  %v4555 = vsel %vm79, %v4532, 0
  %v4558 = vsel %vm79, %v4533, 0
  %v4561 = vsel %vm79, %v4534, 0
  %4563 = vmatprep.subr.mxu0 0.0
  %4564 = vmatpush1.msra.mxu0 %v4535
  %4565 = vmatprep.subr.mxu0 0.0
  %4566 = vmatpush1.msra.mxu0 %v4536
  %4567 = vmatprep.subr.mxu0 0.0
  %4568 = vmatpush1.msra.mxu0 %v4537
  %4569 = vmatprep.subr.mxu0 0.0
  %4570 = vmatpush1.msra.mxu0 %v4538
  %4571 = vmatprep.subr.mxu0 0.0
  %4572 = vmatpush1.msra.mxu0 0.0
  %4573 = vmatprep.subr.mxu0 0.0
  %4574 = vmatpush1.msra.mxu0 0.0
  %4575 = vmatprep.subr.mxu0 0.0
  %4576 = vmatpush1.msra.mxu0 0.0
  %4577 = vmatprep.subr.mxu0 0.0
  %4578 = vmatpush1.msra.mxu0 0.0
  %4579 = vmatprep.subr.mxu0 0.0
  %4580 = vmatpush1.msra.mxu0 0.0
  %4581 = vmatprep.subr.mxu0 0.0
  %4582 = vmatpush1.msra.mxu0 0.0
  %4583 = vmatprep.subr.mxu0 0.0
  %4584 = vmatpush1.msra.mxu0 0.0
  %4585 = vmatprep.subr.mxu0 0.0
  %4586 = vmatpush1.msra.mxu0 0.0
  %4587 = vmatprep.subr.mxu0 0.0
  %4588 = vmatpush1.msra.mxu0 0.0
  %4589 = vmatprep.subr.mxu0 0.0
  %4590 = vmatpush1.msra.mxu0 0.0
  %4591 = vmatprep.subr.mxu0 0.0
  %4592 = vmatpush1.msra.mxu0 0.0
  %4593 = vmatprep.subr.mxu0 0.0
  %4594 = vmatpush1.msra.mxu0 0.0
  %4595 = vmatprep.subr.mxu0 0.0
  %4596 = vmatpush1.msra.mxu0 0.0
  %4597 = vmatprep.subr.mxu0 0.0
  %4598 = vmatpush1.msra.mxu0 0.0
  %4599 = vmatprep.subr.mxu0 0.0
  %4600 = vmatpush1.msra.mxu0 0.0
  %4601 = vmatprep.subr.mxu0 0.0
  %4602 = vmatpush1.msra.mxu0 0.0
  %4603 = vmatprep.subr.mxu0 0.0
  %4604 = vmatpush1.msra.mxu0 0.0
  %4605 = vmatprep.subr.mxu0 0.0
  %4606 = vmatpush1.msra.mxu0 0.0
  %4607 = vmatprep.subr.mxu0 0.0
  %4608 = vmatpush1.msra.mxu0 0.0
  %4609 = vmatprep.subr.mxu0 0.0
  %4610 = vmatpush1.msra.mxu0 0.0
  %4611 = vmatprep.subr.mxu0 0.0
  %4612 = vmatpush1.msra.mxu0 0.0
  %4613 = vmatprep.subr.mxu0 0.0
  %4614 = vmatpush1.msra.mxu0 0.0
  %4615 = vmatprep.subr.mxu0 0.0
  %4616 = vmatpush1.msra.mxu0 0.0
  %4617 = vmatprep.subr.mxu0 0.0
  %4618 = vmatpush1.msra.mxu0 0.0
  %4619 = vmatprep.subr.mxu0 0.0
  %4620 = vmatpush1.msra.mxu0 0.0
  %4621 = vmatprep.subr.mxu0 0.0
  %4622 = vmatpush1.msra.mxu0 0.0
  %4623 = vmatprep.subr.mxu0 0.0
  %4624 = vmatpush1.msra.mxu0 0.0
  %4625 = vmatprep.subr.mxu0 0.0
  %4626 = vmatpush1.msra.mxu0 0.0
  %4627 = vmatprep.mubr.f32.mxu0 0.0
  %4628 = vmatmul.mubr.f32.gmra.mrb[0].mxu0 %v4540
  %v4629 = vpop.f32.mrb[0].mxu0
  %v4630 = vadd.f32 0.0, %v4629
  %v4631 = vpop.f32.mrb[0].mxu0
  %4632 = vmatprep.mubr.f32.mxu0 0.0
  %4633 = vmatmul.mubr.f32.gmra.mrb[0].mxu0 %v4543
  %v4634 = vpop.f32.mrb[0].mxu0
  %v4635 = vadd.f32 0.0, %v4634
  %v4636 = vpop.f32.mrb[0].mxu0
  %4637 = vmatprep.mubr.f32.mxu0 0.0
  %4638 = vmatmul.mubr.f32.gmra.mrb[0].mxu0 %v4546
  %v4639 = vpop.f32.mrb[0].mxu0
  %v4640 = vadd.f32 0.0, %v4639
  %v4641 = vpop.f32.mrb[0].mxu0
  %4642 = vmatprep.mubr.f32.mxu0 0.0
  %4643 = vmatmul.mubr.f32.gmra.mrb[0].mxu0 %v4549
  %v4644 = vpop.f32.mrb[0].mxu0
  %v4645 = vadd.f32 0.0, %v4644
  %v4646 = vpop.f32.mrb[0].mxu0
  %4647 = vmatprep.mubr.f32.mxu0 0.0
  %4648 = vmatmul.mubr.f32.gmra.mrb[0].mxu0 %v4552
  %v4649 = vpop.f32.mrb[0].mxu0
  %v4650 = vadd.f32 0.0, %v4649
  %v4651 = vpop.f32.mrb[0].mxu0
  %4652 = vmatprep.mubr.f32.mxu0 0.0
  %4653 = vmatmul.mubr.f32.gmra.mrb[0].mxu0 %v4555
  %v4654 = vpop.f32.mrb[0].mxu0
  %v4655 = vadd.f32 0.0, %v4654
  %v4656 = vpop.f32.mrb[0].mxu0
  %4657 = vmatprep.mubr.f32.mxu0 0.0
  %4658 = vmatmul.mubr.f32.gmra.mrb[0].mxu0 %v4558
  %v4659 = vpop.f32.mrb[0].mxu0
  %v4660 = vadd.f32 0.0, %v4659
  %v4661 = vpop.f32.mrb[0].mxu0
  %4662 = vmatprep.mubr.f32.mxu0 0.0
  %4663 = vmatmul.mubr.f32.gmra.mrb[0].mxu0 %v4561
  %v4664 = vpop.f32.mrb[0].mxu0
  %v4665 = vadd.f32 0.0, %v4664
  %v4666 = vpop.f32.mrb[0].mxu0
  %4667 = vdwg.mxu0
  %v4668 = vadd.f32 %v4519, %v4630
  %v4669 = vadd.f32 %v4520, %v4635
  %v4670 = vadd.f32 %v4521, %v4640
  %v4671 = vadd.f32 %v4522, %v4645
  %v4672 = vadd.f32 %v4523, %v4650
  %v4673 = vadd.f32 %v4524, %v4655
  %v4674 = vadd.f32 %v4525, %v4660
  %v4675 = vadd.f32 %v4526, %v4665
  %v4676 = vld [vmem:[%s4377 + $0x2] sm:$0xff]
  %v4677 = vld [vmem:[%s4377 + $0x12] sm:$0xff]
  %v4678 = vld [vmem:[%s4377 + $0x22] sm:$0xff]
  %v4679 = vld [vmem:[%s4377 + $0x32] sm:$0xff]
  %v4680 = vld [vmem:[%s4377 + $0x42] sm:$0xff]
  %v4681 = vld [vmem:[%s4377 + $0x52] sm:$0xff]
  %v4682 = vld [vmem:[%s4377 + $0x62] sm:$0xff]
  %v4683 = vld [vmem:[%s4377 + $0x72] sm:$0xff]
  %v4684 = vld [vmem:[%s3 + $0x40] sm:$0xff]
  %v4685 = vld [vmem:[%s3 + $0x48] sm:$0xff]
  %v4686 = vld [vmem:[%s3 + $0x50] sm:$0xff]
  %v4687 = vld [vmem:[%s3 + $0x58] sm:$0xff]
  %v4689 = vsel %vm79, %v4676, 0
  %v4692 = vsel %vm79, %v4677, 0
  %v4695 = vsel %vm79, %v4678, 0
  %v4698 = vsel %vm79, %v4679, 0
  %v4701 = vsel %vm79, %v4680, 0
  %v4704 = vsel %vm79, %v4681, 0
  %v4707 = vsel %vm79, %v4682, 0
  %v4710 = vsel %vm79, %v4683, 0
  %4712 = vmatprep.subr.mxu0 0.0
  %4713 = vmatpush1.msra.mxu0 %v4684
  %4714 = vmatprep.subr.mxu0 0.0
  %4715 = vmatpush1.msra.mxu0 %v4685
  %4716 = vmatprep.subr.mxu0 0.0
  %4717 = vmatpush1.msra.mxu0 %v4686
  %4718 = vmatprep.subr.mxu0 0.0
  %4719 = vmatpush1.msra.mxu0 %v4687
  %4720 = vmatprep.subr.mxu0 0.0
  %4721 = vmatpush1.msra.mxu0 0.0
  %4722 = vmatprep.subr.mxu0 0.0
  %4723 = vmatpush1.msra.mxu0 0.0
  %4724 = vmatprep.subr.mxu0 0.0
  %4725 = vmatpush1.msra.mxu0 0.0
  %4726 = vmatprep.subr.mxu0 0.0
  %4727 = vmatpush1.msra.mxu0 0.0
  %4728 = vmatprep.subr.mxu0 0.0
  %4729 = vmatpush1.msra.mxu0 0.0
  %4730 = vmatprep.subr.mxu0 0.0
  %4731 = vmatpush1.msra.mxu0 0.0
  %4732 = vmatprep.subr.mxu0 0.0
  %4733 = vmatpush1.msra.mxu0 0.0
  %4734 = vmatprep.subr.mxu0 0.0
  %4735 = vmatpush1.msra.mxu0 0.0
  %4736 = vmatprep.subr.mxu0 0.0
  %4737 = vmatpush1.msra.mxu0 0.0
  %4738 = vmatprep.subr.mxu0 0.0
  %4739 = vmatpush1.msra.mxu0 0.0
  %4740 = vmatprep.subr.mxu0 0.0
  %4741 = vmatpush1.msra.mxu0 0.0
  %4742 = vmatprep.subr.mxu0 0.0
  %4743 = vmatpush1.msra.mxu0 0.0
  %4744 = vmatprep.subr.mxu0 0.0
  %4745 = vmatpush1.msra.mxu0 0.0
  %4746 = vmatprep.subr.mxu0 0.0
  %4747 = vmatpush1.msra.mxu0 0.0
  %4748 = vmatprep.subr.mxu0 0.0
  %4749 = vmatpush1.msra.mxu0 0.0
  %4750 = vmatprep.subr.mxu0 0.0
  %4751 = vmatpush1.msra.mxu0 0.0
  %4752 = vmatprep.subr.mxu0 0.0
  %4753 = vmatpush1.msra.mxu0 0.0
  %4754 = vmatprep.subr.mxu0 0.0
  %4755 = vmatpush1.msra.mxu0 0.0
  %4756 = vmatprep.subr.mxu0 0.0
  %4757 = vmatpush1.msra.mxu0 0.0
  %4758 = vmatprep.subr.mxu0 0.0
  %4759 = vmatpush1.msra.mxu0 0.0
  %4760 = vmatprep.subr.mxu0 0.0
  %4761 = vmatpush1.msra.mxu0 0.0
  %4762 = vmatprep.subr.mxu0 0.0
  %4763 = vmatpush1.msra.mxu0 0.0
  %4764 = vmatprep.subr.mxu0 0.0
  %4765 = vmatpush1.msra.mxu0 0.0
  %4766 = vmatprep.subr.mxu0 0.0
  %4767 = vmatpush1.msra.mxu0 0.0
  %4768 = vmatprep.subr.mxu0 0.0
  %4769 = vmatpush1.msra.mxu0 0.0
  %4770 = vmatprep.subr.mxu0 0.0
  %4771 = vmatpush1.msra.mxu0 0.0
  %4772 = vmatprep.subr.mxu0 0.0
  %4773 = vmatpush1.msra.mxu0 0.0
  %4774 = vmatprep.subr.mxu0 0.0
  %4775 = vmatpush1.msra.mxu0 0.0
  %4776 = vmatprep.mubr.f32.mxu0 0.0
  %4777 = vmatmul.mubr.f32.gmra.mrb[0].mxu0 %v4689
  %v4778 = vpop.f32.mrb[0].mxu0
  %v4779 = vadd.f32 0.0, %v4778
  %v4780 = vpop.f32.mrb[0].mxu0
  %4781 = vmatprep.mubr.f32.mxu0 0.0
  %4782 = vmatmul.mubr.f32.gmra.mrb[0].mxu0 %v4692
  %v4783 = vpop.f32.mrb[0].mxu0
  %v4784 = vadd.f32 0.0, %v4783
  %v4785 = vpop.f32.mrb[0].mxu0
  %4786 = vmatprep.mubr.f32.mxu0 0.0
  %4787 = vmatmul.mubr.f32.gmra.mrb[0].mxu0 %v4695
  %v4788 = vpop.f32.mrb[0].mxu0
  %v4789 = vadd.f32 0.0, %v4788
  %v4790 = vpop.f32.mrb[0].mxu0
  %4791 = vmatprep.mubr.f32.mxu0 0.0
  %4792 = vmatmul.mubr.f32.gmra.mrb[0].mxu0 %v4698
  %v4793 = vpop.f32.mrb[0].mxu0
  %v4794 = vadd.f32 0.0, %v4793
  %v4795 = vpop.f32.mrb[0].mxu0
  %4796 = vmatprep.mubr.f32.mxu0 0.0
  %4797 = vmatmul.mubr.f32.gmra.mrb[0].mxu0 %v4701
  %v4798 = vpop.f32.mrb[0].mxu0
  %v4799 = vadd.f32 0.0, %v4798
  %v4800 = vpop.f32.mrb[0].mxu0
  %4801 = vmatprep.mubr.f32.mxu0 0.0
  %4802 = vmatmul.mubr.f32.gmra.mrb[0].mxu0 %v4704
  %v4803 = vpop.f32.mrb[0].mxu0
  %v4804 = vadd.f32 0.0, %v4803
  %v4805 = vpop.f32.mrb[0].mxu0
  %4806 = vmatprep.mubr.f32.mxu0 0.0
  %4807 = vmatmul.mubr.f32.gmra.mrb[0].mxu0 %v4707
  %v4808 = vpop.f32.mrb[0].mxu0
  %v4809 = vadd.f32 0.0, %v4808
  %v4810 = vpop.f32.mrb[0].mxu0
  %4811 = vmatprep.mubr.f32.mxu0 0.0
  %4812 = vmatmul.mubr.f32.gmra.mrb[0].mxu0 %v4710
  %v4813 = vpop.f32.mrb[0].mxu0
  %v4814 = vadd.f32 0.0, %v4813
  %v4815 = vpop.f32.mrb[0].mxu0
  %4816 = vdwg.mxu0
  %v4817 = vadd.f32 %v4668, %v4779
  %v4818 = vadd.f32 %v4669, %v4784
  %v4819 = vadd.f32 %v4670, %v4789
  %v4820 = vadd.f32 %v4671, %v4794
  %v4821 = vadd.f32 %v4672, %v4799
  %v4822 = vadd.f32 %v4673, %v4804
  %v4823 = vadd.f32 %v4674, %v4809
  %v4824 = vadd.f32 %v4675, %v4814
  %v4825 = vld [vmem:[%s4377 + $0x3] sm:$0xff]
  %v4826 = vld [vmem:[%s4377 + $0x13] sm:$0xff]
  %v4827 = vld [vmem:[%s4377 + $0x23] sm:$0xff]
  %v4828 = vld [vmem:[%s4377 + $0x33] sm:$0xff]
  %v4829 = vld [vmem:[%s4377 + $0x43] sm:$0xff]
  %v4830 = vld [vmem:[%s4377 + $0x53] sm:$0xff]
  %v4831 = vld [vmem:[%s4377 + $0x63] sm:$0xff]
  %v4832 = vld [vmem:[%s4377 + $0x73] sm:$0xff]
  %v4833 = vld [vmem:[%s3 + $0x60] sm:$0xff]
  %v4834 = vld [vmem:[%s3 + $0x68] sm:$0xff]
  %v4835 = vld [vmem:[%s3 + $0x70] sm:$0xff]
  %v4836 = vld [vmem:[%s3 + $0x78] sm:$0xff]
  %v4838 = vsel %vm79, %v4825, 0
  %v4841 = vsel %vm79, %v4826, 0
  %v4844 = vsel %vm79, %v4827, 0
  %v4847 = vsel %vm79, %v4828, 0
  %v4850 = vsel %vm79, %v4829, 0
  %v4853 = vsel %vm79, %v4830, 0
  %v4856 = vsel %vm79, %v4831, 0
  %v4859 = vsel %vm79, %v4832, 0
  %4861 = vmatprep.subr.mxu0 0.0
  %4862 = vmatpush1.msra.mxu0 %v4833
  %4863 = vmatprep.subr.mxu0 0.0
  %4864 = vmatpush1.msra.mxu0 %v4834
  %4865 = vmatprep.subr.mxu0 0.0
  %4866 = vmatpush1.msra.mxu0 %v4835
  %4867 = vmatprep.subr.mxu0 0.0
  %4868 = vmatpush1.msra.mxu0 %v4836
  %4869 = vmatprep.subr.mxu0 0.0
  %4870 = vmatpush1.msra.mxu0 0.0
  %4871 = vmatprep.subr.mxu0 0.0
  %4872 = vmatpush1.msra.mxu0 0.0
  %4873 = vmatprep.subr.mxu0 0.0
  %4874 = vmatpush1.msra.mxu0 0.0
  %4875 = vmatprep.subr.mxu0 0.0
  %4876 = vmatpush1.msra.mxu0 0.0
  %4877 = vmatprep.subr.mxu0 0.0
  %4878 = vmatpush1.msra.mxu0 0.0
  %4879 = vmatprep.subr.mxu0 0.0
  %4880 = vmatpush1.msra.mxu0 0.0
  %4881 = vmatprep.subr.mxu0 0.0
  %4882 = vmatpush1.msra.mxu0 0.0
  %4883 = vmatprep.subr.mxu0 0.0
  %4884 = vmatpush1.msra.mxu0 0.0
  %4885 = vmatprep.subr.mxu0 0.0
  %4886 = vmatpush1.msra.mxu0 0.0
  %4887 = vmatprep.subr.mxu0 0.0
  %4888 = vmatpush1.msra.mxu0 0.0
  %4889 = vmatprep.subr.mxu0 0.0
  %4890 = vmatpush1.msra.mxu0 0.0
  %4891 = vmatprep.subr.mxu0 0.0
  %4892 = vmatpush1.msra.mxu0 0.0
  %4893 = vmatprep.subr.mxu0 0.0
  %4894 = vmatpush1.msra.mxu0 0.0
  %4895 = vmatprep.subr.mxu0 0.0
  %4896 = vmatpush1.msra.mxu0 0.0
  %4897 = vmatprep.subr.mxu0 0.0
  %4898 = vmatpush1.msra.mxu0 0.0
  %4899 = vmatprep.subr.mxu0 0.0
  %4900 = vmatpush1.msra.mxu0 0.0
  %4901 = vmatprep.subr.mxu0 0.0
  %4902 = vmatpush1.msra.mxu0 0.0
  %4903 = vmatprep.subr.mxu0 0.0
  %4904 = vmatpush1.msra.mxu0 0.0
  %4905 = vmatprep.subr.mxu0 0.0
  %4906 = vmatpush1.msra.mxu0 0.0
  %4907 = vmatprep.subr.mxu0 0.0
  %4908 = vmatpush1.msra.mxu0 0.0
  %4909 = vmatprep.subr.mxu0 0.0
  %4910 = vmatpush1.msra.mxu0 0.0
  %4911 = vmatprep.subr.mxu0 0.0
  %4912 = vmatpush1.msra.mxu0 0.0
  %4913 = vmatprep.subr.mxu0 0.0
  %4914 = vmatpush1.msra.mxu0 0.0
  %4915 = vmatprep.subr.mxu0 0.0
  %4916 = vmatpush1.msra.mxu0 0.0
  %4917 = vmatprep.subr.mxu0 0.0
  %4918 = vmatpush1.msra.mxu0 0.0
  %4919 = vmatprep.subr.mxu0 0.0
  %4920 = vmatpush1.msra.mxu0 0.0
  %4921 = vmatprep.subr.mxu0 0.0
  %4922 = vmatpush1.msra.mxu0 0.0
  %4923 = vmatprep.subr.mxu0 0.0
  %4924 = vmatpush1.msra.mxu0 0.0
  %4925 = vmatprep.mubr.f32.mxu0 0.0
  %4926 = vmatmul.mubr.f32.gmra.mrb[0].mxu0 %v4838
  %v4927 = vpop.f32.mrb[0].mxu0
  %v4928 = vadd.f32 0.0, %v4927
  %v4929 = vpop.f32.mrb[0].mxu0
  %4930 = vmatprep.mubr.f32.mxu0 0.0
  %4931 = vmatmul.mubr.f32.gmra.mrb[0].mxu0 %v4841
  %v4932 = vpop.f32.mrb[0].mxu0
  %v4933 = vadd.f32 0.0, %v4932
  %v4934 = vpop.f32.mrb[0].mxu0
  %4935 = vmatprep.mubr.f32.mxu0 0.0
  %4936 = vmatmul.mubr.f32.gmra.mrb[0].mxu0 %v4844
  %v4937 = vpop.f32.mrb[0].mxu0
  %v4938 = vadd.f32 0.0, %v4937
  %v4939 = vpop.f32.mrb[0].mxu0
  %4940 = vmatprep.mubr.f32.mxu0 0.0
  %4941 = vmatmul.mubr.f32.gmra.mrb[0].mxu0 %v4847
  %v4942 = vpop.f32.mrb[0].mxu0
  %v4943 = vadd.f32 0.0, %v4942
  %v4944 = vpop.f32.mrb[0].mxu0
  %4945 = vmatprep.mubr.f32.mxu0 0.0
  %4946 = vmatmul.mubr.f32.gmra.mrb[0].mxu0 %v4850
  %v4947 = vpop.f32.mrb[0].mxu0
  %v4948 = vadd.f32 0.0, %v4947
  %v4949 = vpop.f32.mrb[0].mxu0
  %4950 = vmatprep.mubr.f32.mxu0 0.0
  %4951 = vmatmul.mubr.f32.gmra.mrb[0].mxu0 %v4853
  %v4952 = vpop.f32.mrb[0].mxu0
  %v4953 = vadd.f32 0.0, %v4952
  %v4954 = vpop.f32.mrb[0].mxu0
  %4955 = vmatprep.mubr.f32.mxu0 0.0
  %4956 = vmatmul.mubr.f32.gmra.mrb[0].mxu0 %v4856
  %v4957 = vpop.f32.mrb[0].mxu0
  %v4958 = vadd.f32 0.0, %v4957
  %v4959 = vpop.f32.mrb[0].mxu0
  %4960 = vmatprep.mubr.f32.mxu0 0.0
  %4961 = vmatmul.mubr.f32.gmra.mrb[0].mxu0 %v4859
  %v4962 = vpop.f32.mrb[0].mxu0
  %v4963 = vadd.f32 0.0, %v4962
  %v4964 = vpop.f32.mrb[0].mxu0
  %4965 = vdwg.mxu0
  %v4966 = vadd.f32 %v4817, %v4928
  %v4967 = vadd.f32 %v4818, %v4933
  %v4968 = vadd.f32 %v4819, %v4938
  %v4969 = vadd.f32 %v4820, %v4943
  %v4970 = vadd.f32 %v4821, %v4948
  %v4971 = vadd.f32 %v4822, %v4953
  %v4972 = vadd.f32 %v4823, %v4958
  %v4973 = vadd.f32 %v4824, %v4963
  %v4974 = vld [vmem:[%s4377 + $0x4] sm:$0xff]
  %v4975 = vld [vmem:[%s4377 + $0x14] sm:$0xff]
  %v4976 = vld [vmem:[%s4377 + $0x24] sm:$0xff]
  %v4977 = vld [vmem:[%s4377 + $0x34] sm:$0xff]
  %v4978 = vld [vmem:[%s4377 + $0x44] sm:$0xff]
  %v4979 = vld [vmem:[%s4377 + $0x54] sm:$0xff]
  %v4980 = vld [vmem:[%s4377 + $0x64] sm:$0xff]
  %v4981 = vld [vmem:[%s4377 + $0x74] sm:$0xff]
  %v4982 = vld [vmem:[%s3 + $0x80] sm:$0xff]
  %v4983 = vld [vmem:[%s3 + $0x88] sm:$0xff]
  %v4984 = vld [vmem:[%s3 + $0x90] sm:$0xff]
  %v4985 = vld [vmem:[%s3 + $0x98] sm:$0xff]
  %v4987 = vsel %vm79, %v4974, 0
  %v4990 = vsel %vm79, %v4975, 0
  %v4993 = vsel %vm79, %v4976, 0
  %v4996 = vsel %vm79, %v4977, 0
  %v4999 = vsel %vm79, %v4978, 0
  %v5002 = vsel %vm79, %v4979, 0
  %v5005 = vsel %vm79, %v4980, 0
  %v5008 = vsel %vm79, %v4981, 0
  %5010 = vmatprep.subr.mxu0 0.0
  %5011 = vmatpush1.msra.mxu0 %v4982
  %5012 = vmatprep.subr.mxu0 0.0
  %5013 = vmatpush1.msra.mxu0 %v4983
  %5014 = vmatprep.subr.mxu0 0.0
  %5015 = vmatpush1.msra.mxu0 %v4984
  %5016 = vmatprep.subr.mxu0 0.0
  %5017 = vmatpush1.msra.mxu0 %v4985
  %5018 = vmatprep.subr.mxu0 0.0
  %5019 = vmatpush1.msra.mxu0 0.0
  %5020 = vmatprep.subr.mxu0 0.0
  %5021 = vmatpush1.msra.mxu0 0.0
  %5022 = vmatprep.subr.mxu0 0.0
  %5023 = vmatpush1.msra.mxu0 0.0
  %5024 = vmatprep.subr.mxu0 0.0
  %5025 = vmatpush1.msra.mxu0 0.0
  %5026 = vmatprep.subr.mxu0 0.0
  %5027 = vmatpush1.msra.mxu0 0.0
  %5028 = vmatprep.subr.mxu0 0.0
  %5029 = vmatpush1.msra.mxu0 0.0
  %5030 = vmatprep.subr.mxu0 0.0
  %5031 = vmatpush1.msra.mxu0 0.0
  %5032 = vmatprep.subr.mxu0 0.0
  %5033 = vmatpush1.msra.mxu0 0.0
  %5034 = vmatprep.subr.mxu0 0.0
  %5035 = vmatpush1.msra.mxu0 0.0
  %5036 = vmatprep.subr.mxu0 0.0
  %5037 = vmatpush1.msra.mxu0 0.0
  %5038 = vmatprep.subr.mxu0 0.0
  %5039 = vmatpush1.msra.mxu0 0.0
  %5040 = vmatprep.subr.mxu0 0.0
  %5041 = vmatpush1.msra.mxu0 0.0
  %5042 = vmatprep.subr.mxu0 0.0
  %5043 = vmatpush1.msra.mxu0 0.0
  %5044 = vmatprep.subr.mxu0 0.0
  %5045 = vmatpush1.msra.mxu0 0.0
  %5046 = vmatprep.subr.mxu0 0.0
  %5047 = vmatpush1.msra.mxu0 0.0
  %5048 = vmatprep.subr.mxu0 0.0
  %5049 = vmatpush1.msra.mxu0 0.0
  %5050 = vmatprep.subr.mxu0 0.0
  %5051 = vmatpush1.msra.mxu0 0.0
  %5052 = vmatprep.subr.mxu0 0.0
  %5053 = vmatpush1.msra.mxu0 0.0
  %5054 = vmatprep.subr.mxu0 0.0
  %5055 = vmatpush1.msra.mxu0 0.0
  %5056 = vmatprep.subr.mxu0 0.0
  %5057 = vmatpush1.msra.mxu0 0.0
  %5058 = vmatprep.subr.mxu0 0.0
  %5059 = vmatpush1.msra.mxu0 0.0
  %5060 = vmatprep.subr.mxu0 0.0
  %5061 = vmatpush1.msra.mxu0 0.0
  %5062 = vmatprep.subr.mxu0 0.0
  %5063 = vmatpush1.msra.mxu0 0.0
  %5064 = vmatprep.subr.mxu0 0.0
  %5065 = vmatpush1.msra.mxu0 0.0
  %5066 = vmatprep.subr.mxu0 0.0
  %5067 = vmatpush1.msra.mxu0 0.0
  %5068 = vmatprep.subr.mxu0 0.0
  %5069 = vmatpush1.msra.mxu0 0.0
  %5070 = vmatprep.subr.mxu0 0.0
  %5071 = vmatpush1.msra.mxu0 0.0
  %5072 = vmatprep.subr.mxu0 0.0
  %5073 = vmatpush1.msra.mxu0 0.0
  %5074 = vmatprep.mubr.f32.mxu0 0.0
  %5075 = vmatmul.mubr.f32.gmra.mrb[0].mxu0 %v4987
  %v5076 = vpop.f32.mrb[0].mxu0
  %v5077 = vadd.f32 0.0, %v5076
  %v5078 = vpop.f32.mrb[0].mxu0
  %5079 = vmatprep.mubr.f32.mxu0 0.0
  %5080 = vmatmul.mubr.f32.gmra.mrb[0].mxu0 %v4990
  %v5081 = vpop.f32.mrb[0].mxu0
  %v5082 = vadd.f32 0.0, %v5081
  %v5083 = vpop.f32.mrb[0].mxu0
  %5084 = vmatprep.mubr.f32.mxu0 0.0
  %5085 = vmatmul.mubr.f32.gmra.mrb[0].mxu0 %v4993
  %v5086 = vpop.f32.mrb[0].mxu0
  %v5087 = vadd.f32 0.0, %v5086
  %v5088 = vpop.f32.mrb[0].mxu0
  %5089 = vmatprep.mubr.f32.mxu0 0.0
  %5090 = vmatmul.mubr.f32.gmra.mrb[0].mxu0 %v4996
  %v5091 = vpop.f32.mrb[0].mxu0
  %v5092 = vadd.f32 0.0, %v5091
  %v5093 = vpop.f32.mrb[0].mxu0
  %5094 = vmatprep.mubr.f32.mxu0 0.0
  %5095 = vmatmul.mubr.f32.gmra.mrb[0].mxu0 %v4999
  %v5096 = vpop.f32.mrb[0].mxu0
  %v5097 = vadd.f32 0.0, %v5096
  %v5098 = vpop.f32.mrb[0].mxu0
  %5099 = vmatprep.mubr.f32.mxu0 0.0
  %5100 = vmatmul.mubr.f32.gmra.mrb[0].mxu0 %v5002
  %v5101 = vpop.f32.mrb[0].mxu0
  %v5102 = vadd.f32 0.0, %v5101
  %v5103 = vpop.f32.mrb[0].mxu0
  %5104 = vmatprep.mubr.f32.mxu0 0.0
  %5105 = vmatmul.mubr.f32.gmra.mrb[0].mxu0 %v5005
  %v5106 = vpop.f32.mrb[0].mxu0
  %v5107 = vadd.f32 0.0, %v5106
  %v5108 = vpop.f32.mrb[0].mxu0
  %5109 = vmatprep.mubr.f32.mxu0 0.0
  %5110 = vmatmul.mubr.f32.gmra.mrb[0].mxu0 %v5008
  %v5111 = vpop.f32.mrb[0].mxu0
  %v5112 = vadd.f32 0.0, %v5111
  %v5113 = vpop.f32.mrb[0].mxu0
  %5114 = vdwg.mxu0
  %v5115 = vadd.f32 %v4966, %v5077
  %v5116 = vadd.f32 %v4967, %v5082
  %v5117 = vadd.f32 %v4968, %v5087
  %v5118 = vadd.f32 %v4969, %v5092
  %v5119 = vadd.f32 %v4970, %v5097
  %v5120 = vadd.f32 %v4971, %v5102
  %v5121 = vadd.f32 %v4972, %v5107
  %v5122 = vadd.f32 %v4973, %v5112
  %s5123 = scalar_lea.vmem [#allocation2], 208
  %v5124 = vld [vmem:[%s5123] sm:$0xff]
  %v5125 = vld [vmem:[%s5123 + $0x10] sm:$0xff]
  %v5126 = vld [vmem:[%s5123 + $0x20] sm:$0xff]
  %v5127 = vld [vmem:[%s5123 + $0x30] sm:$0xff]
  %v5128 = vld [vmem:[%s5123 + $0x40] sm:$0xff]
  %v5129 = vld [vmem:[%s5123 + $0x50] sm:$0xff]
  %v5130 = vld [vmem:[%s5123 + $0x60] sm:$0xff]
  %v5131 = vld [vmem:[%s5123 + $0x70] sm:$0xff]
  %v5132 = vld [vmem:[%s3 + $0xa0] sm:$0xff]
  %v5133 = vld [vmem:[%s3 + $0xa8] sm:$0xff]
  %v5134 = vld [vmem:[%s3 + $0xb0] sm:$0xff]
  %v5135 = vld [vmem:[%s3 + $0xb8] sm:$0xff]
  %v5137 = vsel %vm79, %v5124, 0
  %v5140 = vsel %vm79, %v5125, 0
  %v5143 = vsel %vm79, %v5126, 0
  %v5146 = vsel %vm79, %v5127, 0
  %v5149 = vsel %vm79, %v5128, 0
  %v5152 = vsel %vm79, %v5129, 0
  %v5155 = vsel %vm79, %v5130, 0
  %v5158 = vsel %vm79, %v5131, 0
  %5160 = vmatprep.subr.mxu0 0.0
  %5161 = vmatpush1.msra.mxu0 %v5132
  %5162 = vmatprep.subr.mxu0 0.0
  %5163 = vmatpush1.msra.mxu0 %v5133
  %5164 = vmatprep.subr.mxu0 0.0
  %5165 = vmatpush1.msra.mxu0 %v5134
  %5166 = vmatprep.subr.mxu0 0.0
  %5167 = vmatpush1.msra.mxu0 %v5135
  %5168 = vmatprep.subr.mxu0 0.0
  %5169 = vmatpush1.msra.mxu0 0.0
  %5170 = vmatprep.subr.mxu0 0.0
  %5171 = vmatpush1.msra.mxu0 0.0
  %5172 = vmatprep.subr.mxu0 0.0
  %5173 = vmatpush1.msra.mxu0 0.0
  %5174 = vmatprep.subr.mxu0 0.0
  %5175 = vmatpush1.msra.mxu0 0.0
  %5176 = vmatprep.subr.mxu0 0.0
  %5177 = vmatpush1.msra.mxu0 0.0
  %5178 = vmatprep.subr.mxu0 0.0
  %5179 = vmatpush1.msra.mxu0 0.0
  %5180 = vmatprep.subr.mxu0 0.0
  %5181 = vmatpush1.msra.mxu0 0.0
  %5182 = vmatprep.subr.mxu0 0.0
  %5183 = vmatpush1.msra.mxu0 0.0
  %5184 = vmatprep.subr.mxu0 0.0
  %5185 = vmatpush1.msra.mxu0 0.0
  %5186 = vmatprep.subr.mxu0 0.0
  %5187 = vmatpush1.msra.mxu0 0.0
  %5188 = vmatprep.subr.mxu0 0.0
  %5189 = vmatpush1.msra.mxu0 0.0
  %5190 = vmatprep.subr.mxu0 0.0
  %5191 = vmatpush1.msra.mxu0 0.0
  %5192 = vmatprep.subr.mxu0 0.0
  %5193 = vmatpush1.msra.mxu0 0.0
  %5194 = vmatprep.subr.mxu0 0.0
  %5195 = vmatpush1.msra.mxu0 0.0
  %5196 = vmatprep.subr.mxu0 0.0
  %5197 = vmatpush1.msra.mxu0 0.0
  %5198 = vmatprep.subr.mxu0 0.0
  %5199 = vmatpush1.msra.mxu0 0.0
  %5200 = vmatprep.subr.mxu0 0.0
  %5201 = vmatpush1.msra.mxu0 0.0
  %5202 = vmatprep.subr.mxu0 0.0
  %5203 = vmatpush1.msra.mxu0 0.0
  %5204 = vmatprep.subr.mxu0 0.0
  %5205 = vmatpush1.msra.mxu0 0.0
  %5206 = vmatprep.subr.mxu0 0.0
  %5207 = vmatpush1.msra.mxu0 0.0
  %5208 = vmatprep.subr.mxu0 0.0
  %5209 = vmatpush1.msra.mxu0 0.0
  %5210 = vmatprep.subr.mxu0 0.0
  %5211 = vmatpush1.msra.mxu0 0.0
  %5212 = vmatprep.subr.mxu0 0.0
  %5213 = vmatpush1.msra.mxu0 0.0
  %5214 = vmatprep.subr.mxu0 0.0
  %5215 = vmatpush1.msra.mxu0 0.0
  %5216 = vmatprep.subr.mxu0 0.0
  %5217 = vmatpush1.msra.mxu0 0.0
  %5218 = vmatprep.subr.mxu0 0.0
  %5219 = vmatpush1.msra.mxu0 0.0
  %5220 = vmatprep.subr.mxu0 0.0
  %5221 = vmatpush1.msra.mxu0 0.0
  %5222 = vmatprep.subr.mxu0 0.0
  %5223 = vmatpush1.msra.mxu0 0.0
  %5224 = vmatprep.mubr.f32.mxu0 0.0
  %5225 = vmatmul.mubr.f32.gmra.mrb[0].mxu0 %v5137
  %v5226 = vpop.f32.mrb[0].mxu0
  %v5227 = vadd.f32 0.0, %v5226
  %v5228 = vpop.f32.mrb[0].mxu0
  %5229 = vmatprep.mubr.f32.mxu0 0.0
  %5230 = vmatmul.mubr.f32.gmra.mrb[0].mxu0 %v5140
  %v5231 = vpop.f32.mrb[0].mxu0
  %v5232 = vadd.f32 0.0, %v5231
  %v5233 = vpop.f32.mrb[0].mxu0
  %5234 = vmatprep.mubr.f32.mxu0 0.0
  %5235 = vmatmul.mubr.f32.gmra.mrb[0].mxu0 %v5143
  %v5236 = vpop.f32.mrb[0].mxu0
  %v5237 = vadd.f32 0.0, %v5236
  %v5238 = vpop.f32.mrb[0].mxu0
  %5239 = vmatprep.mubr.f32.mxu0 0.0
  %5240 = vmatmul.mubr.f32.gmra.mrb[0].mxu0 %v5146
  %v5241 = vpop.f32.mrb[0].mxu0
  %v5242 = vadd.f32 0.0, %v5241
  %v5243 = vpop.f32.mrb[0].mxu0
  %5244 = vmatprep.mubr.f32.mxu0 0.0
  %5245 = vmatmul.mubr.f32.gmra.mrb[0].mxu0 %v5149
  %v5246 = vpop.f32.mrb[0].mxu0
  %v5247 = vadd.f32 0.0, %v5246
  %v5248 = vpop.f32.mrb[0].mxu0
  %5249 = vmatprep.mubr.f32.mxu0 0.0
  %5250 = vmatmul.mubr.f32.gmra.mrb[0].mxu0 %v5152
  %v5251 = vpop.f32.mrb[0].mxu0
  %v5252 = vadd.f32 0.0, %v5251
  %v5253 = vpop.f32.mrb[0].mxu0
  %5254 = vmatprep.mubr.f32.mxu0 0.0
  %5255 = vmatmul.mubr.f32.gmra.mrb[0].mxu0 %v5155
  %v5256 = vpop.f32.mrb[0].mxu0
  %v5257 = vadd.f32 0.0, %v5256
  %v5258 = vpop.f32.mrb[0].mxu0
  %5259 = vmatprep.mubr.f32.mxu0 0.0
  %5260 = vmatmul.mubr.f32.gmra.mrb[0].mxu0 %v5158
  %v5261 = vpop.f32.mrb[0].mxu0
  %v5262 = vadd.f32 0.0, %v5261
  %v5263 = vpop.f32.mrb[0].mxu0
  %5264 = vdwg.mxu0
  %v5265 = vadd.f32 %v5115, %v5227
  %v5266 = vadd.f32 %v5116, %v5232
  %v5267 = vadd.f32 %v5117, %v5237
  %v5268 = vadd.f32 %v5118, %v5242
  %v5269 = vadd.f32 %v5119, %v5247
  %v5270 = vadd.f32 %v5120, %v5252
  %v5271 = vadd.f32 %v5121, %v5257
  %v5272 = vadd.f32 %v5122, %v5262
  %v5273 = vld [vmem:[%s5123 + $0x1] sm:$0xff]
  %v5274 = vld [vmem:[%s5123 + $0x11] sm:$0xff]
  %v5275 = vld [vmem:[%s5123 + $0x21] sm:$0xff]
  %v5276 = vld [vmem:[%s5123 + $0x31] sm:$0xff]
  %v5277 = vld [vmem:[%s5123 + $0x41] sm:$0xff]
  %v5278 = vld [vmem:[%s5123 + $0x51] sm:$0xff]
  %v5279 = vld [vmem:[%s5123 + $0x61] sm:$0xff]
  %v5280 = vld [vmem:[%s5123 + $0x71] sm:$0xff]
  %v5281 = vld [vmem:[%s3 + $0xc0] sm:$0xff]
  %v5282 = vld [vmem:[%s3 + $0xc8] sm:$0xff]
  %v5283 = vld [vmem:[%s3 + $0xd0] sm:$0xff]
  %v5284 = vld [vmem:[%s3 + $0xd8] sm:$0xff]
  %v5286 = vsel %vm79, %v5273, 0
  %v5289 = vsel %vm79, %v5274, 0
  %v5292 = vsel %vm79, %v5275, 0
  %v5295 = vsel %vm79, %v5276, 0
  %v5298 = vsel %vm79, %v5277, 0
  %v5301 = vsel %vm79, %v5278, 0
  %v5304 = vsel %vm79, %v5279, 0
  %v5307 = vsel %vm79, %v5280, 0
  %5309 = vmatprep.subr.mxu0 0.0
  %5310 = vmatpush1.msra.mxu0 %v5281
  %5311 = vmatprep.subr.mxu0 0.0
  %5312 = vmatpush1.msra.mxu0 %v5282
  %5313 = vmatprep.subr.mxu0 0.0
  %5314 = vmatpush1.msra.mxu0 %v5283
  %5315 = vmatprep.subr.mxu0 0.0
  %5316 = vmatpush1.msra.mxu0 %v5284
  %5317 = vmatprep.subr.mxu0 0.0
  %5318 = vmatpush1.msra.mxu0 0.0
  %5319 = vmatprep.subr.mxu0 0.0
  %5320 = vmatpush1.msra.mxu0 0.0
  %5321 = vmatprep.subr.mxu0 0.0
  %5322 = vmatpush1.msra.mxu0 0.0
  %5323 = vmatprep.subr.mxu0 0.0
  %5324 = vmatpush1.msra.mxu0 0.0
  %5325 = vmatprep.subr.mxu0 0.0
  %5326 = vmatpush1.msra.mxu0 0.0
  %5327 = vmatprep.subr.mxu0 0.0
  %5328 = vmatpush1.msra.mxu0 0.0
  %5329 = vmatprep.subr.mxu0 0.0
  %5330 = vmatpush1.msra.mxu0 0.0
  %5331 = vmatprep.subr.mxu0 0.0
  %5332 = vmatpush1.msra.mxu0 0.0
  %5333 = vmatprep.subr.mxu0 0.0
  %5334 = vmatpush1.msra.mxu0 0.0
  %5335 = vmatprep.subr.mxu0 0.0
  %5336 = vmatpush1.msra.mxu0 0.0
  %5337 = vmatprep.subr.mxu0 0.0
  %5338 = vmatpush1.msra.mxu0 0.0
  %5339 = vmatprep.subr.mxu0 0.0
  %5340 = vmatpush1.msra.mxu0 0.0
  %5341 = vmatprep.subr.mxu0 0.0
  %5342 = vmatpush1.msra.mxu0 0.0
  %5343 = vmatprep.subr.mxu0 0.0
  %5344 = vmatpush1.msra.mxu0 0.0
  %5345 = vmatprep.subr.mxu0 0.0
  %5346 = vmatpush1.msra.mxu0 0.0
  %5347 = vmatprep.subr.mxu0 0.0
  %5348 = vmatpush1.msra.mxu0 0.0
  %5349 = vmatprep.subr.mxu0 0.0
  %5350 = vmatpush1.msra.mxu0 0.0
  %5351 = vmatprep.subr.mxu0 0.0
  %5352 = vmatpush1.msra.mxu0 0.0
  %5353 = vmatprep.subr.mxu0 0.0
  %5354 = vmatpush1.msra.mxu0 0.0
  %5355 = vmatprep.subr.mxu0 0.0
  %5356 = vmatpush1.msra.mxu0 0.0
  %5357 = vmatprep.subr.mxu0 0.0
  %5358 = vmatpush1.msra.mxu0 0.0
  %5359 = vmatprep.subr.mxu0 0.0
  %5360 = vmatpush1.msra.mxu0 0.0
  %5361 = vmatprep.subr.mxu0 0.0
  %5362 = vmatpush1.msra.mxu0 0.0
  %5363 = vmatprep.subr.mxu0 0.0
  %5364 = vmatpush1.msra.mxu0 0.0
  %5365 = vmatprep.subr.mxu0 0.0
  %5366 = vmatpush1.msra.mxu0 0.0
  %5367 = vmatprep.subr.mxu0 0.0
  %5368 = vmatpush1.msra.mxu0 0.0
  %5369 = vmatprep.subr.mxu0 0.0
  %5370 = vmatpush1.msra.mxu0 0.0
  %5371 = vmatprep.subr.mxu0 0.0
  %5372 = vmatpush1.msra.mxu0 0.0
  %5373 = vmatprep.mubr.f32.mxu0 0.0
  %5374 = vmatmul.mubr.f32.gmra.mrb[0].mxu0 %v5286
  %v5375 = vpop.f32.mrb[0].mxu0
  %v5376 = vadd.f32 0.0, %v5375
  %v5377 = vpop.f32.mrb[0].mxu0
  %5378 = vmatprep.mubr.f32.mxu0 0.0
  %5379 = vmatmul.mubr.f32.gmra.mrb[0].mxu0 %v5289
  %v5380 = vpop.f32.mrb[0].mxu0
  %v5381 = vadd.f32 0.0, %v5380
  %v5382 = vpop.f32.mrb[0].mxu0
  %5383 = vmatprep.mubr.f32.mxu0 0.0
  %5384 = vmatmul.mubr.f32.gmra.mrb[0].mxu0 %v5292
  %v5385 = vpop.f32.mrb[0].mxu0
  %v5386 = vadd.f32 0.0, %v5385
  %v5387 = vpop.f32.mrb[0].mxu0
  %5388 = vmatprep.mubr.f32.mxu0 0.0
  %5389 = vmatmul.mubr.f32.gmra.mrb[0].mxu0 %v5295
  %v5390 = vpop.f32.mrb[0].mxu0
  %v5391 = vadd.f32 0.0, %v5390
  %v5392 = vpop.f32.mrb[0].mxu0
  %5393 = vmatprep.mubr.f32.mxu0 0.0
  %5394 = vmatmul.mubr.f32.gmra.mrb[0].mxu0 %v5298
  %v5395 = vpop.f32.mrb[0].mxu0
  %v5396 = vadd.f32 0.0, %v5395
  %v5397 = vpop.f32.mrb[0].mxu0
  %5398 = vmatprep.mubr.f32.mxu0 0.0
  %5399 = vmatmul.mubr.f32.gmra.mrb[0].mxu0 %v5301
  %v5400 = vpop.f32.mrb[0].mxu0
  %v5401 = vadd.f32 0.0, %v5400
  %v5402 = vpop.f32.mrb[0].mxu0
  %5403 = vmatprep.mubr.f32.mxu0 0.0
  %5404 = vmatmul.mubr.f32.gmra.mrb[0].mxu0 %v5304
  %v5405 = vpop.f32.mrb[0].mxu0
  %v5406 = vadd.f32 0.0, %v5405
  %v5407 = vpop.f32.mrb[0].mxu0
  %5408 = vmatprep.mubr.f32.mxu0 0.0
  %5409 = vmatmul.mubr.f32.gmra.mrb[0].mxu0 %v5307
  %v5410 = vpop.f32.mrb[0].mxu0
  %v5411 = vadd.f32 0.0, %v5410
  %v5412 = vpop.f32.mrb[0].mxu0
  %5413 = vdwg.mxu0
  %v5414 = vadd.f32 %v5265, %v5376
  %v5415 = vadd.f32 %v5266, %v5381
  %v5416 = vadd.f32 %v5267, %v5386
  %v5417 = vadd.f32 %v5268, %v5391
  %v5418 = vadd.f32 %v5269, %v5396
  %v5419 = vadd.f32 %v5270, %v5401
  %v5420 = vadd.f32 %v5271, %v5406
  %v5421 = vadd.f32 %v5272, %v5411
  %v5422 = vld [vmem:[%s5123 + $0x2] sm:$0xff]
  %v5423 = vld [vmem:[%s5123 + $0x12] sm:$0xff]
  %v5424 = vld [vmem:[%s5123 + $0x22] sm:$0xff]
  %v5425 = vld [vmem:[%s5123 + $0x32] sm:$0xff]
  %v5426 = vld [vmem:[%s5123 + $0x42] sm:$0xff]
  %v5427 = vld [vmem:[%s5123 + $0x52] sm:$0xff]
  %v5428 = vld [vmem:[%s5123 + $0x62] sm:$0xff]
  %v5429 = vld [vmem:[%s5123 + $0x72] sm:$0xff]
  %v5430 = vld [vmem:[%s3 + $0xe0] sm:$0xff]
  %v5431 = vld [vmem:[%s3 + $0xe8] sm:$0xff]
  %v5432 = vld [vmem:[%s3 + $0xf0] sm:$0xff]
  %v5433 = vld [vmem:[%s3 + $0xf8] sm:$0xff]
  %v5435 = vsel %vm79, %v5422, 0
  %v5438 = vsel %vm79, %v5423, 0
  %v5441 = vsel %vm79, %v5424, 0
  %v5444 = vsel %vm79, %v5425, 0
  %v5447 = vsel %vm79, %v5426, 0
  %v5450 = vsel %vm79, %v5427, 0
  %v5453 = vsel %vm79, %v5428, 0
  %v5456 = vsel %vm79, %v5429, 0
  %5458 = vmatprep.subr.mxu0 0.0
  %5459 = vmatpush1.msra.mxu0 %v5430
  %5460 = vmatprep.subr.mxu0 0.0
  %5461 = vmatpush1.msra.mxu0 %v5431
  %5462 = vmatprep.subr.mxu0 0.0
  %5463 = vmatpush1.msra.mxu0 %v5432
  %5464 = vmatprep.subr.mxu0 0.0
  %5465 = vmatpush1.msra.mxu0 %v5433
  %5466 = vmatprep.subr.mxu0 0.0
  %5467 = vmatpush1.msra.mxu0 0.0
  %5468 = vmatprep.subr.mxu0 0.0
  %5469 = vmatpush1.msra.mxu0 0.0
  %5470 = vmatprep.subr.mxu0 0.0
  %5471 = vmatpush1.msra.mxu0 0.0
  %5472 = vmatprep.subr.mxu0 0.0
  %5473 = vmatpush1.msra.mxu0 0.0
  %5474 = vmatprep.subr.mxu0 0.0
  %5475 = vmatpush1.msra.mxu0 0.0
  %5476 = vmatprep.subr.mxu0 0.0
  %5477 = vmatpush1.msra.mxu0 0.0
  %5478 = vmatprep.subr.mxu0 0.0
  %5479 = vmatpush1.msra.mxu0 0.0
  %5480 = vmatprep.subr.mxu0 0.0
  %5481 = vmatpush1.msra.mxu0 0.0
  %5482 = vmatprep.subr.mxu0 0.0
  %5483 = vmatpush1.msra.mxu0 0.0
  %5484 = vmatprep.subr.mxu0 0.0
  %5485 = vmatpush1.msra.mxu0 0.0
  %5486 = vmatprep.subr.mxu0 0.0
  %5487 = vmatpush1.msra.mxu0 0.0
  %5488 = vmatprep.subr.mxu0 0.0
  %5489 = vmatpush1.msra.mxu0 0.0
  %5490 = vmatprep.subr.mxu0 0.0
  %5491 = vmatpush1.msra.mxu0 0.0
  %5492 = vmatprep.subr.mxu0 0.0
  %5493 = vmatpush1.msra.mxu0 0.0
  %5494 = vmatprep.subr.mxu0 0.0
  %5495 = vmatpush1.msra.mxu0 0.0
  %5496 = vmatprep.subr.mxu0 0.0
  %5497 = vmatpush1.msra.mxu0 0.0
  %5498 = vmatprep.subr.mxu0 0.0
  %5499 = vmatpush1.msra.mxu0 0.0
  %5500 = vmatprep.subr.mxu0 0.0
  %5501 = vmatpush1.msra.mxu0 0.0
  %5502 = vmatprep.subr.mxu0 0.0
  %5503 = vmatpush1.msra.mxu0 0.0
  %5504 = vmatprep.subr.mxu0 0.0
  %5505 = vmatpush1.msra.mxu0 0.0
  %5506 = vmatprep.subr.mxu0 0.0
  %5507 = vmatpush1.msra.mxu0 0.0
  %5508 = vmatprep.subr.mxu0 0.0
  %5509 = vmatpush1.msra.mxu0 0.0
  %5510 = vmatprep.subr.mxu0 0.0
  %5511 = vmatpush1.msra.mxu0 0.0
  %5512 = vmatprep.subr.mxu0 0.0
  %5513 = vmatpush1.msra.mxu0 0.0
  %5514 = vmatprep.subr.mxu0 0.0
  %5515 = vmatpush1.msra.mxu0 0.0
  %5516 = vmatprep.subr.mxu0 0.0
  %5517 = vmatpush1.msra.mxu0 0.0
  %5518 = vmatprep.subr.mxu0 0.0
  %5519 = vmatpush1.msra.mxu0 0.0
  %5520 = vmatprep.subr.mxu0 0.0
  %5521 = vmatpush1.msra.mxu0 0.0
  %5522 = vmatprep.mubr.f32.mxu0 0.0
  %5523 = vmatmul.mubr.f32.gmra.mrb[0].mxu0 %v5435
  %v5524 = vpop.f32.mrb[0].mxu0
  %v5525 = vadd.f32 0.0, %v5524
  %v5526 = vpop.f32.mrb[0].mxu0
  %5527 = vmatprep.mubr.f32.mxu0 0.0
  %5528 = vmatmul.mubr.f32.gmra.mrb[0].mxu0 %v5438
  %v5529 = vpop.f32.mrb[0].mxu0
  %v5530 = vadd.f32 0.0, %v5529
  %v5531 = vpop.f32.mrb[0].mxu0
  %5532 = vmatprep.mubr.f32.mxu0 0.0
  %5533 = vmatmul.mubr.f32.gmra.mrb[0].mxu0 %v5441
  %v5534 = vpop.f32.mrb[0].mxu0
  %v5535 = vadd.f32 0.0, %v5534
  %v5536 = vpop.f32.mrb[0].mxu0
  %5537 = vmatprep.mubr.f32.mxu0 0.0
  %5538 = vmatmul.mubr.f32.gmra.mrb[0].mxu0 %v5444
  %v5539 = vpop.f32.mrb[0].mxu0
  %v5540 = vadd.f32 0.0, %v5539
  %v5541 = vpop.f32.mrb[0].mxu0
  %5542 = vmatprep.mubr.f32.mxu0 0.0
  %5543 = vmatmul.mubr.f32.gmra.mrb[0].mxu0 %v5447
  %v5544 = vpop.f32.mrb[0].mxu0
  %v5545 = vadd.f32 0.0, %v5544
  %v5546 = vpop.f32.mrb[0].mxu0
  %5547 = vmatprep.mubr.f32.mxu0 0.0
  %5548 = vmatmul.mubr.f32.gmra.mrb[0].mxu0 %v5450
  %v5549 = vpop.f32.mrb[0].mxu0
  %v5550 = vadd.f32 0.0, %v5549
  %v5551 = vpop.f32.mrb[0].mxu0
  %5552 = vmatprep.mubr.f32.mxu0 0.0
  %5553 = vmatmul.mubr.f32.gmra.mrb[0].mxu0 %v5453
  %v5554 = vpop.f32.mrb[0].mxu0
  %v5555 = vadd.f32 0.0, %v5554
  %v5556 = vpop.f32.mrb[0].mxu0
  %5557 = vmatprep.mubr.f32.mxu0 0.0
  %5558 = vmatmul.mubr.f32.gmra.mrb[0].mxu0 %v5456
  %v5559 = vpop.f32.mrb[0].mxu0
  %v5560 = vadd.f32 0.0, %v5559
  %v5561 = vpop.f32.mrb[0].mxu0
  %5562 = vdwg.mxu0
  %v5563 = vadd.f32 %v5414, %v5525
  %v5564 = vadd.f32 %v5415, %v5530
  %v5565 = vadd.f32 %v5416, %v5535
  %v5566 = vadd.f32 %v5417, %v5540
  %v5567 = vadd.f32 %v5418, %v5545
  %v5568 = vadd.f32 %v5419, %v5550
  %v5569 = vadd.f32 %v5420, %v5555
  %v5570 = vadd.f32 %v5421, %v5560
  %v5571 = vld [vmem:[%s5123 + $0x3] sm:$0xff]
  %v5572 = vld [vmem:[%s5123 + $0x13] sm:$0xff]
  %v5573 = vld [vmem:[%s5123 + $0x23] sm:$0xff]
  %v5574 = vld [vmem:[%s5123 + $0x33] sm:$0xff]
  %v5575 = vld [vmem:[%s5123 + $0x43] sm:$0xff]
  %v5576 = vld [vmem:[%s5123 + $0x53] sm:$0xff]
  %v5577 = vld [vmem:[%s5123 + $0x63] sm:$0xff]
  %v5578 = vld [vmem:[%s5123 + $0x73] sm:$0xff]
  %v5579 = vld [vmem:[%s3 + $0x100] sm:$0xff]
  %v5580 = vld [vmem:[%s3 + $0x108] sm:$0xff]
  %v5581 = vld [vmem:[%s3 + $0x110] sm:$0xff]
  %v5582 = vld [vmem:[%s3 + $0x118] sm:$0xff]
  %v5584 = vsel %vm79, %v5571, 0
  %v5587 = vsel %vm79, %v5572, 0
  %v5590 = vsel %vm79, %v5573, 0
  %v5593 = vsel %vm79, %v5574, 0
  %v5596 = vsel %vm79, %v5575, 0
  %v5599 = vsel %vm79, %v5576, 0
  %v5602 = vsel %vm79, %v5577, 0
  %v5605 = vsel %vm79, %v5578, 0
  %5607 = vmatprep.subr.mxu0 0.0
  %5608 = vmatpush1.msra.mxu0 %v5579
  %5609 = vmatprep.subr.mxu0 0.0
  %5610 = vmatpush1.msra.mxu0 %v5580
  %5611 = vmatprep.subr.mxu0 0.0
  %5612 = vmatpush1.msra.mxu0 %v5581
  %5613 = vmatprep.subr.mxu0 0.0
  %5614 = vmatpush1.msra.mxu0 %v5582
  %5615 = vmatprep.subr.mxu0 0.0
  %5616 = vmatpush1.msra.mxu0 0.0
  %5617 = vmatprep.subr.mxu0 0.0
  %5618 = vmatpush1.msra.mxu0 0.0
  %5619 = vmatprep.subr.mxu0 0.0
  %5620 = vmatpush1.msra.mxu0 0.0
  %5621 = vmatprep.subr.mxu0 0.0
  %5622 = vmatpush1.msra.mxu0 0.0
  %5623 = vmatprep.subr.mxu0 0.0
  %5624 = vmatpush1.msra.mxu0 0.0
  %5625 = vmatprep.subr.mxu0 0.0
  %5626 = vmatpush1.msra.mxu0 0.0
  %5627 = vmatprep.subr.mxu0 0.0
  %5628 = vmatpush1.msra.mxu0 0.0
  %5629 = vmatprep.subr.mxu0 0.0
  %5630 = vmatpush1.msra.mxu0 0.0
  %5631 = vmatprep.subr.mxu0 0.0
  %5632 = vmatpush1.msra.mxu0 0.0
  %5633 = vmatprep.subr.mxu0 0.0
  %5634 = vmatpush1.msra.mxu0 0.0
  %5635 = vmatprep.subr.mxu0 0.0
  %5636 = vmatpush1.msra.mxu0 0.0
  %5637 = vmatprep.subr.mxu0 0.0
  %5638 = vmatpush1.msra.mxu0 0.0
  %5639 = vmatprep.subr.mxu0 0.0
  %5640 = vmatpush1.msra.mxu0 0.0
  %5641 = vmatprep.subr.mxu0 0.0
  %5642 = vmatpush1.msra.mxu0 0.0
  %5643 = vmatprep.subr.mxu0 0.0
  %5644 = vmatpush1.msra.mxu0 0.0
  %5645 = vmatprep.subr.mxu0 0.0
  %5646 = vmatpush1.msra.mxu0 0.0
  %5647 = vmatprep.subr.mxu0 0.0
  %5648 = vmatpush1.msra.mxu0 0.0
  %5649 = vmatprep.subr.mxu0 0.0
  %5650 = vmatpush1.msra.mxu0 0.0
  %5651 = vmatprep.subr.mxu0 0.0
  %5652 = vmatpush1.msra.mxu0 0.0
  %5653 = vmatprep.subr.mxu0 0.0
  %5654 = vmatpush1.msra.mxu0 0.0
  %5655 = vmatprep.subr.mxu0 0.0
  %5656 = vmatpush1.msra.mxu0 0.0
  %5657 = vmatprep.subr.mxu0 0.0
  %5658 = vmatpush1.msra.mxu0 0.0
  %5659 = vmatprep.subr.mxu0 0.0
  %5660 = vmatpush1.msra.mxu0 0.0
  %5661 = vmatprep.subr.mxu0 0.0
  %5662 = vmatpush1.msra.mxu0 0.0
  %5663 = vmatprep.subr.mxu0 0.0
  %5664 = vmatpush1.msra.mxu0 0.0
  %5665 = vmatprep.subr.mxu0 0.0
  %5666 = vmatpush1.msra.mxu0 0.0
  %5667 = vmatprep.subr.mxu0 0.0
  %5668 = vmatpush1.msra.mxu0 0.0
  %5669 = vmatprep.subr.mxu0 0.0
  %5670 = vmatpush1.msra.mxu0 0.0
  %5671 = vmatprep.mubr.f32.mxu0 0.0
  %5672 = vmatmul.mubr.f32.gmra.mrb[0].mxu0 %v5584
  %v5673 = vpop.f32.mrb[0].mxu0
  %v5674 = vadd.f32 0.0, %v5673
  %v5675 = vpop.f32.mrb[0].mxu0
  %5676 = vmatprep.mubr.f32.mxu0 0.0
  %5677 = vmatmul.mubr.f32.gmra.mrb[0].mxu0 %v5587
  %v5678 = vpop.f32.mrb[0].mxu0
  %v5679 = vadd.f32 0.0, %v5678
  %v5680 = vpop.f32.mrb[0].mxu0
  %5681 = vmatprep.mubr.f32.mxu0 0.0
  %5682 = vmatmul.mubr.f32.gmra.mrb[0].mxu0 %v5590
  %v5683 = vpop.f32.mrb[0].mxu0
  %v5684 = vadd.f32 0.0, %v5683
  %v5685 = vpop.f32.mrb[0].mxu0
  %5686 = vmatprep.mubr.f32.mxu0 0.0
  %5687 = vmatmul.mubr.f32.gmra.mrb[0].mxu0 %v5593
  %v5688 = vpop.f32.mrb[0].mxu0
  %v5689 = vadd.f32 0.0, %v5688
  %v5690 = vpop.f32.mrb[0].mxu0
  %5691 = vmatprep.mubr.f32.mxu0 0.0
  %5692 = vmatmul.mubr.f32.gmra.mrb[0].mxu0 %v5596
  %v5693 = vpop.f32.mrb[0].mxu0
  %v5694 = vadd.f32 0.0, %v5693
  %v5695 = vpop.f32.mrb[0].mxu0
  %5696 = vmatprep.mubr.f32.mxu0 0.0
  %5697 = vmatmul.mubr.f32.gmra.mrb[0].mxu0 %v5599
  %v5698 = vpop.f32.mrb[0].mxu0
  %v5699 = vadd.f32 0.0, %v5698
  %v5700 = vpop.f32.mrb[0].mxu0
  %5701 = vmatprep.mubr.f32.mxu0 0.0
  %5702 = vmatmul.mubr.f32.gmra.mrb[0].mxu0 %v5602
  %v5703 = vpop.f32.mrb[0].mxu0
  %v5704 = vadd.f32 0.0, %v5703
  %v5705 = vpop.f32.mrb[0].mxu0
  %5706 = vmatprep.mubr.f32.mxu0 0.0
  %5707 = vmatmul.mubr.f32.gmra.mrb[0].mxu0 %v5605
  %v5708 = vpop.f32.mrb[0].mxu0
  %v5709 = vadd.f32 0.0, %v5708
  %v5710 = vpop.f32.mrb[0].mxu0
  %5711 = vdwg.mxu0
  %v5712 = vadd.f32 %v5563, %v5674
  %v5713 = vadd.f32 %v5564, %v5679
  %v5714 = vadd.f32 %v5565, %v5684
  %v5715 = vadd.f32 %v5566, %v5689
  %v5716 = vadd.f32 %v5567, %v5694
  %v5717 = vadd.f32 %v5568, %v5699
  %v5718 = vadd.f32 %v5569, %v5704
  %v5719 = vadd.f32 %v5570, %v5709
  %v5720 = vld [vmem:[%s5123 + $0x4] sm:$0xff]
  %v5721 = vld [vmem:[%s5123 + $0x14] sm:$0xff]
  %v5722 = vld [vmem:[%s5123 + $0x24] sm:$0xff]
  %v5723 = vld [vmem:[%s5123 + $0x34] sm:$0xff]
  %v5724 = vld [vmem:[%s5123 + $0x44] sm:$0xff]
  %v5725 = vld [vmem:[%s5123 + $0x54] sm:$0xff]
  %v5726 = vld [vmem:[%s5123 + $0x64] sm:$0xff]
  %v5727 = vld [vmem:[%s5123 + $0x74] sm:$0xff]
  %v5728 = vld [vmem:[%s3 + $0x120] sm:$0xff]
  %v5729 = vld [vmem:[%s3 + $0x128] sm:$0xff]
  %v5730 = vld [vmem:[%s3 + $0x130] sm:$0xff]
  %v5731 = vld [vmem:[%s3 + $0x138] sm:$0xff]
  %v5733 = vsel %vm79, %v5720, 0
  %v5736 = vsel %vm79, %v5721, 0
  %v5739 = vsel %vm79, %v5722, 0
  %v5742 = vsel %vm79, %v5723, 0
  %v5745 = vsel %vm79, %v5724, 0
  %v5748 = vsel %vm79, %v5725, 0
  %v5751 = vsel %vm79, %v5726, 0
  %v5754 = vsel %vm79, %v5727, 0
  %5756 = vmatprep.subr.mxu0 0.0
  %5757 = vmatpush1.msra.mxu0 %v5728
  %5758 = vmatprep.subr.mxu0 0.0
  %5759 = vmatpush1.msra.mxu0 %v5729
  %5760 = vmatprep.subr.mxu0 0.0
  %5761 = vmatpush1.msra.mxu0 %v5730
  %5762 = vmatprep.subr.mxu0 0.0
  %5763 = vmatpush1.msra.mxu0 %v5731
  %5764 = vmatprep.subr.mxu0 0.0
  %5765 = vmatpush1.msra.mxu0 0.0
  %5766 = vmatprep.subr.mxu0 0.0
  %5767 = vmatpush1.msra.mxu0 0.0
  %5768 = vmatprep.subr.mxu0 0.0
  %5769 = vmatpush1.msra.mxu0 0.0
  %5770 = vmatprep.subr.mxu0 0.0
  %5771 = vmatpush1.msra.mxu0 0.0
  %5772 = vmatprep.subr.mxu0 0.0
  %5773 = vmatpush1.msra.mxu0 0.0
  %5774 = vmatprep.subr.mxu0 0.0
  %5775 = vmatpush1.msra.mxu0 0.0
  %5776 = vmatprep.subr.mxu0 0.0
  %5777 = vmatpush1.msra.mxu0 0.0
  %5778 = vmatprep.subr.mxu0 0.0
  %5779 = vmatpush1.msra.mxu0 0.0
  %5780 = vmatprep.subr.mxu0 0.0
  %5781 = vmatpush1.msra.mxu0 0.0
  %5782 = vmatprep.subr.mxu0 0.0
  %5783 = vmatpush1.msra.mxu0 0.0
  %5784 = vmatprep.subr.mxu0 0.0
  %5785 = vmatpush1.msra.mxu0 0.0
  %5786 = vmatprep.subr.mxu0 0.0
  %5787 = vmatpush1.msra.mxu0 0.0
  %5788 = vmatprep.subr.mxu0 0.0
  %5789 = vmatpush1.msra.mxu0 0.0
  %5790 = vmatprep.subr.mxu0 0.0
  %5791 = vmatpush1.msra.mxu0 0.0
  %5792 = vmatprep.subr.mxu0 0.0
  %5793 = vmatpush1.msra.mxu0 0.0
  %5794 = vmatprep.subr.mxu0 0.0
  %5795 = vmatpush1.msra.mxu0 0.0
  %5796 = vmatprep.subr.mxu0 0.0
  %5797 = vmatpush1.msra.mxu0 0.0
  %5798 = vmatprep.subr.mxu0 0.0
  %5799 = vmatpush1.msra.mxu0 0.0
  %5800 = vmatprep.subr.mxu0 0.0
  %5801 = vmatpush1.msra.mxu0 0.0
  %5802 = vmatprep.subr.mxu0 0.0
  %5803 = vmatpush1.msra.mxu0 0.0
  %5804 = vmatprep.subr.mxu0 0.0
  %5805 = vmatpush1.msra.mxu0 0.0
  %5806 = vmatprep.subr.mxu0 0.0
  %5807 = vmatpush1.msra.mxu0 0.0
  %5808 = vmatprep.subr.mxu0 0.0
  %5809 = vmatpush1.msra.mxu0 0.0
  %5810 = vmatprep.subr.mxu0 0.0
  %5811 = vmatpush1.msra.mxu0 0.0
  %5812 = vmatprep.subr.mxu0 0.0
  %5813 = vmatpush1.msra.mxu0 0.0
  %5814 = vmatprep.subr.mxu0 0.0
  %5815 = vmatpush1.msra.mxu0 0.0
  %5816 = vmatprep.subr.mxu0 0.0
  %5817 = vmatpush1.msra.mxu0 0.0
  %5818 = vmatprep.subr.mxu0 0.0
  %5819 = vmatpush1.msra.mxu0 0.0
  %5820 = vmatprep.mubr.f32.mxu0 0.0
  %5821 = vmatmul.mubr.f32.gmra.mrb[0].mxu0 %v5733
  %v5822 = vpop.f32.mrb[0].mxu0
  %v5823 = vadd.f32 0.0, %v5822
  %v5824 = vpop.f32.mrb[0].mxu0
  %5825 = vmatprep.mubr.f32.mxu0 0.0
  %5826 = vmatmul.mubr.f32.gmra.mrb[0].mxu0 %v5736
  %v5827 = vpop.f32.mrb[0].mxu0
  %v5828 = vadd.f32 0.0, %v5827
  %v5829 = vpop.f32.mrb[0].mxu0
  %5830 = vmatprep.mubr.f32.mxu0 0.0
  %5831 = vmatmul.mubr.f32.gmra.mrb[0].mxu0 %v5739
  %v5832 = vpop.f32.mrb[0].mxu0
  %v5833 = vadd.f32 0.0, %v5832
  %v5834 = vpop.f32.mrb[0].mxu0
  %5835 = vmatprep.mubr.f32.mxu0 0.0
  %5836 = vmatmul.mubr.f32.gmra.mrb[0].mxu0 %v5742
  %v5837 = vpop.f32.mrb[0].mxu0
  %v5838 = vadd.f32 0.0, %v5837
  %v5839 = vpop.f32.mrb[0].mxu0
  %5840 = vmatprep.mubr.f32.mxu0 0.0
  %5841 = vmatmul.mubr.f32.gmra.mrb[0].mxu0 %v5745
  %v5842 = vpop.f32.mrb[0].mxu0
  %v5843 = vadd.f32 0.0, %v5842
  %v5844 = vpop.f32.mrb[0].mxu0
  %5845 = vmatprep.mubr.f32.mxu0 0.0
  %5846 = vmatmul.mubr.f32.gmra.mrb[0].mxu0 %v5748
  %v5847 = vpop.f32.mrb[0].mxu0
  %v5848 = vadd.f32 0.0, %v5847
  %v5849 = vpop.f32.mrb[0].mxu0
  %5850 = vmatprep.mubr.f32.mxu0 0.0
  %5851 = vmatmul.mubr.f32.gmra.mrb[0].mxu0 %v5751
  %v5852 = vpop.f32.mrb[0].mxu0
  %v5853 = vadd.f32 0.0, %v5852
  %v5854 = vpop.f32.mrb[0].mxu0
  %5855 = vmatprep.mubr.f32.mxu0 0.0
  %5856 = vmatmul.mubr.f32.gmra.mrb[0].mxu0 %v5754
  %v5857 = vpop.f32.mrb[0].mxu0
  %v5858 = vadd.f32 0.0, %v5857
  %v5859 = vpop.f32.mrb[0].mxu0
  %5860 = vdwg.mxu0
  %v5861 = vadd.f32 %v5712, %v5823
  %v5862 = vadd.f32 %v5713, %v5828
  %v5863 = vadd.f32 %v5714, %v5833
  %v5864 = vadd.f32 %v5715, %v5838
  %v5865 = vadd.f32 %v5716, %v5843
  %v5866 = vadd.f32 %v5717, %v5848
  %v5867 = vadd.f32 %v5718, %v5853
  %v5868 = vadd.f32 %v5719, %v5858
  %s5869 = scalar_lea.vmem [#allocation2], 224
  %v5870 = vld [vmem:[%s5869] sm:$0xff]
  %v5871 = vld [vmem:[%s5869 + $0x10] sm:$0xff]
  %v5872 = vld [vmem:[%s5869 + $0x20] sm:$0xff]
  %v5873 = vld [vmem:[%s5869 + $0x30] sm:$0xff]
  %v5874 = vld [vmem:[%s5869 + $0x40] sm:$0xff]
  %v5875 = vld [vmem:[%s5869 + $0x50] sm:$0xff]
  %v5876 = vld [vmem:[%s5869 + $0x60] sm:$0xff]
  %v5877 = vld [vmem:[%s5869 + $0x70] sm:$0xff]
  %v5878 = vld [vmem:[%s3 + $0x140] sm:$0xff]
  %v5879 = vld [vmem:[%s3 + $0x148] sm:$0xff]
  %v5880 = vld [vmem:[%s3 + $0x150] sm:$0xff]
  %v5881 = vld [vmem:[%s3 + $0x158] sm:$0xff]
  %v5883 = vsel %vm79, %v5870, 0
  %v5886 = vsel %vm79, %v5871, 0
  %v5889 = vsel %vm79, %v5872, 0
  %v5892 = vsel %vm79, %v5873, 0
  %v5895 = vsel %vm79, %v5874, 0
  %v5898 = vsel %vm79, %v5875, 0
  %v5901 = vsel %vm79, %v5876, 0
  %v5904 = vsel %vm79, %v5877, 0
  %5906 = vmatprep.subr.mxu0 0.0
  %5907 = vmatpush1.msra.mxu0 %v5878
  %5908 = vmatprep.subr.mxu0 0.0
  %5909 = vmatpush1.msra.mxu0 %v5879
  %5910 = vmatprep.subr.mxu0 0.0
  %5911 = vmatpush1.msra.mxu0 %v5880
  %5912 = vmatprep.subr.mxu0 0.0
  %5913 = vmatpush1.msra.mxu0 %v5881
  %5914 = vmatprep.subr.mxu0 0.0
  %5915 = vmatpush1.msra.mxu0 0.0
  %5916 = vmatprep.subr.mxu0 0.0
  %5917 = vmatpush1.msra.mxu0 0.0
  %5918 = vmatprep.subr.mxu0 0.0
  %5919 = vmatpush1.msra.mxu0 0.0
  %5920 = vmatprep.subr.mxu0 0.0
  %5921 = vmatpush1.msra.mxu0 0.0
  %5922 = vmatprep.subr.mxu0 0.0
  %5923 = vmatpush1.msra.mxu0 0.0
  %5924 = vmatprep.subr.mxu0 0.0
  %5925 = vmatpush1.msra.mxu0 0.0
  %5926 = vmatprep.subr.mxu0 0.0
  %5927 = vmatpush1.msra.mxu0 0.0
  %5928 = vmatprep.subr.mxu0 0.0
  %5929 = vmatpush1.msra.mxu0 0.0
  %5930 = vmatprep.subr.mxu0 0.0
  %5931 = vmatpush1.msra.mxu0 0.0
  %5932 = vmatprep.subr.mxu0 0.0
  %5933 = vmatpush1.msra.mxu0 0.0
  %5934 = vmatprep.subr.mxu0 0.0
  %5935 = vmatpush1.msra.mxu0 0.0
  %5936 = vmatprep.subr.mxu0 0.0
  %5937 = vmatpush1.msra.mxu0 0.0
  %5938 = vmatprep.subr.mxu0 0.0
  %5939 = vmatpush1.msra.mxu0 0.0
  %5940 = vmatprep.subr.mxu0 0.0
  %5941 = vmatpush1.msra.mxu0 0.0
  %5942 = vmatprep.subr.mxu0 0.0
  %5943 = vmatpush1.msra.mxu0 0.0
  %5944 = vmatprep.subr.mxu0 0.0
  %5945 = vmatpush1.msra.mxu0 0.0
  %5946 = vmatprep.subr.mxu0 0.0
  %5947 = vmatpush1.msra.mxu0 0.0
  %5948 = vmatprep.subr.mxu0 0.0
  %5949 = vmatpush1.msra.mxu0 0.0
  %5950 = vmatprep.subr.mxu0 0.0
  %5951 = vmatpush1.msra.mxu0 0.0
  %5952 = vmatprep.subr.mxu0 0.0
  %5953 = vmatpush1.msra.mxu0 0.0
  %5954 = vmatprep.subr.mxu0 0.0
  %5955 = vmatpush1.msra.mxu0 0.0
  %5956 = vmatprep.subr.mxu0 0.0
  %5957 = vmatpush1.msra.mxu0 0.0
  %5958 = vmatprep.subr.mxu0 0.0
  %5959 = vmatpush1.msra.mxu0 0.0
  %5960 = vmatprep.subr.mxu0 0.0
  %5961 = vmatpush1.msra.mxu0 0.0
  %5962 = vmatprep.subr.mxu0 0.0
  %5963 = vmatpush1.msra.mxu0 0.0
  %5964 = vmatprep.subr.mxu0 0.0
  %5965 = vmatpush1.msra.mxu0 0.0
  %5966 = vmatprep.subr.mxu0 0.0
  %5967 = vmatpush1.msra.mxu0 0.0
  %5968 = vmatprep.subr.mxu0 0.0
  %5969 = vmatpush1.msra.mxu0 0.0
  %5970 = vmatprep.mubr.f32.mxu0 0.0
  %5971 = vmatmul.mubr.f32.gmra.mrb[0].mxu0 %v5883
  %v5972 = vpop.f32.mrb[0].mxu0
  %v5973 = vadd.f32 0.0, %v5972
  %v5974 = vpop.f32.mrb[0].mxu0
  %5975 = vmatprep.mubr.f32.mxu0 0.0
  %5976 = vmatmul.mubr.f32.gmra.mrb[0].mxu0 %v5886
  %v5977 = vpop.f32.mrb[0].mxu0
  %v5978 = vadd.f32 0.0, %v5977
  %v5979 = vpop.f32.mrb[0].mxu0
  %5980 = vmatprep.mubr.f32.mxu0 0.0
  %5981 = vmatmul.mubr.f32.gmra.mrb[0].mxu0 %v5889
  %v5982 = vpop.f32.mrb[0].mxu0
  %v5983 = vadd.f32 0.0, %v5982
  %v5984 = vpop.f32.mrb[0].mxu0
  %5985 = vmatprep.mubr.f32.mxu0 0.0
  %5986 = vmatmul.mubr.f32.gmra.mrb[0].mxu0 %v5892
  %v5987 = vpop.f32.mrb[0].mxu0
  %v5988 = vadd.f32 0.0, %v5987
  %v5989 = vpop.f32.mrb[0].mxu0
  %5990 = vmatprep.mubr.f32.mxu0 0.0
  %5991 = vmatmul.mubr.f32.gmra.mrb[0].mxu0 %v5895
  %v5992 = vpop.f32.mrb[0].mxu0
  %v5993 = vadd.f32 0.0, %v5992
  %v5994 = vpop.f32.mrb[0].mxu0
  %5995 = vmatprep.mubr.f32.mxu0 0.0
  %5996 = vmatmul.mubr.f32.gmra.mrb[0].mxu0 %v5898
  %v5997 = vpop.f32.mrb[0].mxu0
  %v5998 = vadd.f32 0.0, %v5997
  %v5999 = vpop.f32.mrb[0].mxu0
  %6000 = vmatprep.mubr.f32.mxu0 0.0
  %6001 = vmatmul.mubr.f32.gmra.mrb[0].mxu0 %v5901
  %v6002 = vpop.f32.mrb[0].mxu0
  %v6003 = vadd.f32 0.0, %v6002
  %v6004 = vpop.f32.mrb[0].mxu0
  %6005 = vmatprep.mubr.f32.mxu0 0.0
  %6006 = vmatmul.mubr.f32.gmra.mrb[0].mxu0 %v5904
  %v6007 = vpop.f32.mrb[0].mxu0
  %v6008 = vadd.f32 0.0, %v6007
  %v6009 = vpop.f32.mrb[0].mxu0
  %6010 = vdwg.mxu0
  %v6011 = vadd.f32 %v5861, %v5973
  %v6012 = vadd.f32 %v5862, %v5978
  %v6013 = vadd.f32 %v5863, %v5983
  %v6014 = vadd.f32 %v5864, %v5988
  %v6015 = vadd.f32 %v5865, %v5993
  %v6016 = vadd.f32 %v5866, %v5998
  %v6017 = vadd.f32 %v5867, %v6003
  %v6018 = vadd.f32 %v5868, %v6008
  %v6019 = vld [vmem:[%s5869 + $0x1] sm:$0xff]
  %v6020 = vld [vmem:[%s5869 + $0x11] sm:$0xff]
  %v6021 = vld [vmem:[%s5869 + $0x21] sm:$0xff]
  %v6022 = vld [vmem:[%s5869 + $0x31] sm:$0xff]
  %v6023 = vld [vmem:[%s5869 + $0x41] sm:$0xff]
  %v6024 = vld [vmem:[%s5869 + $0x51] sm:$0xff]
  %v6025 = vld [vmem:[%s5869 + $0x61] sm:$0xff]
  %v6026 = vld [vmem:[%s5869 + $0x71] sm:$0xff]
  %v6027 = vld [vmem:[%s3 + $0x160] sm:$0xff]
  %v6028 = vld [vmem:[%s3 + $0x168] sm:$0xff]
  %v6029 = vld [vmem:[%s3 + $0x170] sm:$0xff]
  %v6030 = vld [vmem:[%s3 + $0x178] sm:$0xff]
  %v6032 = vsel %vm79, %v6019, 0
  %v6035 = vsel %vm79, %v6020, 0
  %v6038 = vsel %vm79, %v6021, 0
  %v6041 = vsel %vm79, %v6022, 0
  %v6044 = vsel %vm79, %v6023, 0
  %v6047 = vsel %vm79, %v6024, 0
  %v6050 = vsel %vm79, %v6025, 0
  %v6053 = vsel %vm79, %v6026, 0
  %6055 = vmatprep.subr.mxu0 0.0
  %6056 = vmatpush1.msra.mxu0 %v6027
  %6057 = vmatprep.subr.mxu0 0.0
  %6058 = vmatpush1.msra.mxu0 %v6028
  %6059 = vmatprep.subr.mxu0 0.0
  %6060 = vmatpush1.msra.mxu0 %v6029
  %6061 = vmatprep.subr.mxu0 0.0
  %6062 = vmatpush1.msra.mxu0 %v6030
  %6063 = vmatprep.subr.mxu0 0.0
  %6064 = vmatpush1.msra.mxu0 0.0
  %6065 = vmatprep.subr.mxu0 0.0
  %6066 = vmatpush1.msra.mxu0 0.0
  %6067 = vmatprep.subr.mxu0 0.0
  %6068 = vmatpush1.msra.mxu0 0.0
  %6069 = vmatprep.subr.mxu0 0.0
  %6070 = vmatpush1.msra.mxu0 0.0
  %6071 = vmatprep.subr.mxu0 0.0
  %6072 = vmatpush1.msra.mxu0 0.0
  %6073 = vmatprep.subr.mxu0 0.0
  %6074 = vmatpush1.msra.mxu0 0.0
  %6075 = vmatprep.subr.mxu0 0.0
  %6076 = vmatpush1.msra.mxu0 0.0
  %6077 = vmatprep.subr.mxu0 0.0
  %6078 = vmatpush1.msra.mxu0 0.0
  %6079 = vmatprep.subr.mxu0 0.0
  %6080 = vmatpush1.msra.mxu0 0.0
  %6081 = vmatprep.subr.mxu0 0.0
  %6082 = vmatpush1.msra.mxu0 0.0
  %6083 = vmatprep.subr.mxu0 0.0
  %6084 = vmatpush1.msra.mxu0 0.0
  %6085 = vmatprep.subr.mxu0 0.0
  %6086 = vmatpush1.msra.mxu0 0.0
  %6087 = vmatprep.subr.mxu0 0.0
  %6088 = vmatpush1.msra.mxu0 0.0
  %6089 = vmatprep.subr.mxu0 0.0
  %6090 = vmatpush1.msra.mxu0 0.0
  %6091 = vmatprep.subr.mxu0 0.0
  %6092 = vmatpush1.msra.mxu0 0.0
  %6093 = vmatprep.subr.mxu0 0.0
  %6094 = vmatpush1.msra.mxu0 0.0
  %6095 = vmatprep.subr.mxu0 0.0
  %6096 = vmatpush1.msra.mxu0 0.0
  %6097 = vmatprep.subr.mxu0 0.0
  %6098 = vmatpush1.msra.mxu0 0.0
  %6099 = vmatprep.subr.mxu0 0.0
  %6100 = vmatpush1.msra.mxu0 0.0
  %6101 = vmatprep.subr.mxu0 0.0
  %6102 = vmatpush1.msra.mxu0 0.0
  %6103 = vmatprep.subr.mxu0 0.0
  %6104 = vmatpush1.msra.mxu0 0.0
  %6105 = vmatprep.subr.mxu0 0.0
  %6106 = vmatpush1.msra.mxu0 0.0
  %6107 = vmatprep.subr.mxu0 0.0
  %6108 = vmatpush1.msra.mxu0 0.0
  %6109 = vmatprep.subr.mxu0 0.0
  %6110 = vmatpush1.msra.mxu0 0.0
  %6111 = vmatprep.subr.mxu0 0.0
  %6112 = vmatpush1.msra.mxu0 0.0
  %6113 = vmatprep.subr.mxu0 0.0
  %6114 = vmatpush1.msra.mxu0 0.0
  %6115 = vmatprep.subr.mxu0 0.0
  %6116 = vmatpush1.msra.mxu0 0.0
  %6117 = vmatprep.subr.mxu0 0.0
  %6118 = vmatpush1.msra.mxu0 0.0
  %6119 = vmatprep.mubr.f32.mxu0 0.0
  %6120 = vmatmul.mubr.f32.gmra.mrb[0].mxu0 %v6032
  %v6121 = vpop.f32.mrb[0].mxu0
  %v6122 = vadd.f32 0.0, %v6121
  %v6123 = vpop.f32.mrb[0].mxu0
  %6124 = vmatprep.mubr.f32.mxu0 0.0
  %6125 = vmatmul.mubr.f32.gmra.mrb[0].mxu0 %v6035
  %v6126 = vpop.f32.mrb[0].mxu0
  %v6127 = vadd.f32 0.0, %v6126
  %v6128 = vpop.f32.mrb[0].mxu0
  %6129 = vmatprep.mubr.f32.mxu0 0.0
  %6130 = vmatmul.mubr.f32.gmra.mrb[0].mxu0 %v6038
  %v6131 = vpop.f32.mrb[0].mxu0
  %v6132 = vadd.f32 0.0, %v6131
  %v6133 = vpop.f32.mrb[0].mxu0
  %6134 = vmatprep.mubr.f32.mxu0 0.0
  %6135 = vmatmul.mubr.f32.gmra.mrb[0].mxu0 %v6041
  %v6136 = vpop.f32.mrb[0].mxu0
  %v6137 = vadd.f32 0.0, %v6136
  %v6138 = vpop.f32.mrb[0].mxu0
  %6139 = vmatprep.mubr.f32.mxu0 0.0
  %6140 = vmatmul.mubr.f32.gmra.mrb[0].mxu0 %v6044
  %v6141 = vpop.f32.mrb[0].mxu0
  %v6142 = vadd.f32 0.0, %v6141
  %v6143 = vpop.f32.mrb[0].mxu0
  %6144 = vmatprep.mubr.f32.mxu0 0.0
  %6145 = vmatmul.mubr.f32.gmra.mrb[0].mxu0 %v6047
  %v6146 = vpop.f32.mrb[0].mxu0
  %v6147 = vadd.f32 0.0, %v6146
  %v6148 = vpop.f32.mrb[0].mxu0
  %6149 = vmatprep.mubr.f32.mxu0 0.0
  %6150 = vmatmul.mubr.f32.gmra.mrb[0].mxu0 %v6050
  %v6151 = vpop.f32.mrb[0].mxu0
  %v6152 = vadd.f32 0.0, %v6151
  %v6153 = vpop.f32.mrb[0].mxu0
  %6154 = vmatprep.mubr.f32.mxu0 0.0
  %6155 = vmatmul.mubr.f32.gmra.mrb[0].mxu0 %v6053
  %v6156 = vpop.f32.mrb[0].mxu0
  %v6157 = vadd.f32 0.0, %v6156
  %v6158 = vpop.f32.mrb[0].mxu0
  %6159 = vdwg.mxu0
  %v6160 = vadd.f32 %v6011, %v6122
  %v6161 = vadd.f32 %v6012, %v6127
  %v6162 = vadd.f32 %v6013, %v6132
  %v6163 = vadd.f32 %v6014, %v6137
  %v6164 = vadd.f32 %v6015, %v6142
  %v6165 = vadd.f32 %v6016, %v6147
  %v6166 = vadd.f32 %v6017, %v6152
  %v6167 = vadd.f32 %v6018, %v6157
  %v6168 = vld [vmem:[%s5869 + $0x2] sm:$0xff]
  %v6169 = vld [vmem:[%s5869 + $0x12] sm:$0xff]
  %v6170 = vld [vmem:[%s5869 + $0x22] sm:$0xff]
  %v6171 = vld [vmem:[%s5869 + $0x32] sm:$0xff]
  %v6172 = vld [vmem:[%s5869 + $0x42] sm:$0xff]
  %v6173 = vld [vmem:[%s5869 + $0x52] sm:$0xff]
  %v6174 = vld [vmem:[%s5869 + $0x62] sm:$0xff]
  %v6175 = vld [vmem:[%s5869 + $0x72] sm:$0xff]
  %v6176 = vld [vmem:[%s3 + $0x180] sm:$0xff]
  %v6177 = vld [vmem:[%s3 + $0x188] sm:$0xff]
  %v6178 = vld [vmem:[%s3 + $0x190] sm:$0xff]
  %v6179 = vld [vmem:[%s3 + $0x198] sm:$0xff]
  %v6181 = vsel %vm79, %v6168, 0
  %v6184 = vsel %vm79, %v6169, 0
  %v6187 = vsel %vm79, %v6170, 0
  %v6190 = vsel %vm79, %v6171, 0
  %v6193 = vsel %vm79, %v6172, 0
  %v6196 = vsel %vm79, %v6173, 0
  %v6199 = vsel %vm79, %v6174, 0
  %v6202 = vsel %vm79, %v6175, 0
  %6204 = vmatprep.subr.mxu0 0.0
  %6205 = vmatpush1.msra.mxu0 %v6176
  %6206 = vmatprep.subr.mxu0 0.0
  %6207 = vmatpush1.msra.mxu0 %v6177
  %6208 = vmatprep.subr.mxu0 0.0
  %6209 = vmatpush1.msra.mxu0 %v6178
  %6210 = vmatprep.subr.mxu0 0.0
  %6211 = vmatpush1.msra.mxu0 %v6179
  %6212 = vmatprep.subr.mxu0 0.0
  %6213 = vmatpush1.msra.mxu0 0.0
  %6214 = vmatprep.subr.mxu0 0.0
  %6215 = vmatpush1.msra.mxu0 0.0
  %6216 = vmatprep.subr.mxu0 0.0
  %6217 = vmatpush1.msra.mxu0 0.0
  %6218 = vmatprep.subr.mxu0 0.0
  %6219 = vmatpush1.msra.mxu0 0.0
  %6220 = vmatprep.subr.mxu0 0.0
  %6221 = vmatpush1.msra.mxu0 0.0
  %6222 = vmatprep.subr.mxu0 0.0
  %6223 = vmatpush1.msra.mxu0 0.0
  %6224 = vmatprep.subr.mxu0 0.0
  %6225 = vmatpush1.msra.mxu0 0.0
  %6226 = vmatprep.subr.mxu0 0.0
  %6227 = vmatpush1.msra.mxu0 0.0
  %6228 = vmatprep.subr.mxu0 0.0
  %6229 = vmatpush1.msra.mxu0 0.0
  %6230 = vmatprep.subr.mxu0 0.0
  %6231 = vmatpush1.msra.mxu0 0.0
  %6232 = vmatprep.subr.mxu0 0.0
  %6233 = vmatpush1.msra.mxu0 0.0
  %6234 = vmatprep.subr.mxu0 0.0
  %6235 = vmatpush1.msra.mxu0 0.0
  %6236 = vmatprep.subr.mxu0 0.0
  %6237 = vmatpush1.msra.mxu0 0.0
  %6238 = vmatprep.subr.mxu0 0.0
  %6239 = vmatpush1.msra.mxu0 0.0
  %6240 = vmatprep.subr.mxu0 0.0
  %6241 = vmatpush1.msra.mxu0 0.0
  %6242 = vmatprep.subr.mxu0 0.0
  %6243 = vmatpush1.msra.mxu0 0.0
  %6244 = vmatprep.subr.mxu0 0.0
  %6245 = vmatpush1.msra.mxu0 0.0
  %6246 = vmatprep.subr.mxu0 0.0
  %6247 = vmatpush1.msra.mxu0 0.0
  %6248 = vmatprep.subr.mxu0 0.0
  %6249 = vmatpush1.msra.mxu0 0.0
  %6250 = vmatprep.subr.mxu0 0.0
  %6251 = vmatpush1.msra.mxu0 0.0
  %6252 = vmatprep.subr.mxu0 0.0
  %6253 = vmatpush1.msra.mxu0 0.0
  %6254 = vmatprep.subr.mxu0 0.0
  %6255 = vmatpush1.msra.mxu0 0.0
  %6256 = vmatprep.subr.mxu0 0.0
  %6257 = vmatpush1.msra.mxu0 0.0
  %6258 = vmatprep.subr.mxu0 0.0
  %6259 = vmatpush1.msra.mxu0 0.0
  %6260 = vmatprep.subr.mxu0 0.0
  %6261 = vmatpush1.msra.mxu0 0.0
  %6262 = vmatprep.subr.mxu0 0.0
  %6263 = vmatpush1.msra.mxu0 0.0
  %6264 = vmatprep.subr.mxu0 0.0
  %6265 = vmatpush1.msra.mxu0 0.0
  %6266 = vmatprep.subr.mxu0 0.0
  %6267 = vmatpush1.msra.mxu0 0.0
  %6268 = vmatprep.mubr.f32.mxu0 0.0
  %6269 = vmatmul.mubr.f32.gmra.mrb[0].mxu0 %v6181
  %v6270 = vpop.f32.mrb[0].mxu0
  %v6271 = vadd.f32 0.0, %v6270
  %v6272 = vpop.f32.mrb[0].mxu0
  %6273 = vmatprep.mubr.f32.mxu0 0.0
  %6274 = vmatmul.mubr.f32.gmra.mrb[0].mxu0 %v6184
  %v6275 = vpop.f32.mrb[0].mxu0
  %v6276 = vadd.f32 0.0, %v6275
  %v6277 = vpop.f32.mrb[0].mxu0
  %6278 = vmatprep.mubr.f32.mxu0 0.0
  %6279 = vmatmul.mubr.f32.gmra.mrb[0].mxu0 %v6187
  %v6280 = vpop.f32.mrb[0].mxu0
  %v6281 = vadd.f32 0.0, %v6280
  %v6282 = vpop.f32.mrb[0].mxu0
  %6283 = vmatprep.mubr.f32.mxu0 0.0
  %6284 = vmatmul.mubr.f32.gmra.mrb[0].mxu0 %v6190
  %v6285 = vpop.f32.mrb[0].mxu0
  %v6286 = vadd.f32 0.0, %v6285
  %v6287 = vpop.f32.mrb[0].mxu0
  %6288 = vmatprep.mubr.f32.mxu0 0.0
  %6289 = vmatmul.mubr.f32.gmra.mrb[0].mxu0 %v6193
  %v6290 = vpop.f32.mrb[0].mxu0
  %v6291 = vadd.f32 0.0, %v6290
  %v6292 = vpop.f32.mrb[0].mxu0
  %6293 = vmatprep.mubr.f32.mxu0 0.0
  %6294 = vmatmul.mubr.f32.gmra.mrb[0].mxu0 %v6196
  %v6295 = vpop.f32.mrb[0].mxu0
  %v6296 = vadd.f32 0.0, %v6295
  %v6297 = vpop.f32.mrb[0].mxu0
  %6298 = vmatprep.mubr.f32.mxu0 0.0
  %6299 = vmatmul.mubr.f32.gmra.mrb[0].mxu0 %v6199
  %v6300 = vpop.f32.mrb[0].mxu0
  %v6301 = vadd.f32 0.0, %v6300
  %v6302 = vpop.f32.mrb[0].mxu0
  %6303 = vmatprep.mubr.f32.mxu0 0.0
  %6304 = vmatmul.mubr.f32.gmra.mrb[0].mxu0 %v6202
  %v6305 = vpop.f32.mrb[0].mxu0
  %v6306 = vadd.f32 0.0, %v6305
  %v6307 = vpop.f32.mrb[0].mxu0
  %6308 = vdwg.mxu0
  %v6309 = vadd.f32 %v6160, %v6271
  %v6310 = vadd.f32 %v6161, %v6276
  %v6311 = vadd.f32 %v6162, %v6281
  %v6312 = vadd.f32 %v6163, %v6286
  %v6313 = vadd.f32 %v6164, %v6291
  %v6314 = vadd.f32 %v6165, %v6296
  %v6315 = vadd.f32 %v6166, %v6301
  %v6316 = vadd.f32 %v6167, %v6306
  %v6317 = vld [vmem:[%s5869 + $0x3] sm:$0xff]
  %v6318 = vld [vmem:[%s5869 + $0x13] sm:$0xff]
  %v6319 = vld [vmem:[%s5869 + $0x23] sm:$0xff]
  %v6320 = vld [vmem:[%s5869 + $0x33] sm:$0xff]
  %v6321 = vld [vmem:[%s5869 + $0x43] sm:$0xff]
  %v6322 = vld [vmem:[%s5869 + $0x53] sm:$0xff]
  %v6323 = vld [vmem:[%s5869 + $0x63] sm:$0xff]
  %v6324 = vld [vmem:[%s5869 + $0x73] sm:$0xff]
  %v6325 = vld [vmem:[%s3 + $0x1a0] sm:$0xff]
  %v6326 = vld [vmem:[%s3 + $0x1a8] sm:$0xff]
  %v6327 = vld [vmem:[%s3 + $0x1b0] sm:$0xff]
  %v6328 = vld [vmem:[%s3 + $0x1b8] sm:$0xff]
  %v6330 = vsel %vm79, %v6317, 0
  %v6333 = vsel %vm79, %v6318, 0
  %v6336 = vsel %vm79, %v6319, 0
  %v6339 = vsel %vm79, %v6320, 0
  %v6342 = vsel %vm79, %v6321, 0
  %v6345 = vsel %vm79, %v6322, 0
  %v6348 = vsel %vm79, %v6323, 0
  %v6351 = vsel %vm79, %v6324, 0
  %6353 = vmatprep.subr.mxu0 0.0
  %6354 = vmatpush1.msra.mxu0 %v6325
  %6355 = vmatprep.subr.mxu0 0.0
  %6356 = vmatpush1.msra.mxu0 %v6326
  %6357 = vmatprep.subr.mxu0 0.0
  %6358 = vmatpush1.msra.mxu0 %v6327
  %6359 = vmatprep.subr.mxu0 0.0
  %6360 = vmatpush1.msra.mxu0 %v6328
  %6361 = vmatprep.subr.mxu0 0.0
  %6362 = vmatpush1.msra.mxu0 0.0
  %6363 = vmatprep.subr.mxu0 0.0
  %6364 = vmatpush1.msra.mxu0 0.0
  %6365 = vmatprep.subr.mxu0 0.0
  %6366 = vmatpush1.msra.mxu0 0.0
  %6367 = vmatprep.subr.mxu0 0.0
  %6368 = vmatpush1.msra.mxu0 0.0
  %6369 = vmatprep.subr.mxu0 0.0
  %6370 = vmatpush1.msra.mxu0 0.0
  %6371 = vmatprep.subr.mxu0 0.0
  %6372 = vmatpush1.msra.mxu0 0.0
  %6373 = vmatprep.subr.mxu0 0.0
  %6374 = vmatpush1.msra.mxu0 0.0
  %6375 = vmatprep.subr.mxu0 0.0
  %6376 = vmatpush1.msra.mxu0 0.0
  %6377 = vmatprep.subr.mxu0 0.0
  %6378 = vmatpush1.msra.mxu0 0.0
  %6379 = vmatprep.subr.mxu0 0.0
  %6380 = vmatpush1.msra.mxu0 0.0
  %6381 = vmatprep.subr.mxu0 0.0
  %6382 = vmatpush1.msra.mxu0 0.0
  %6383 = vmatprep.subr.mxu0 0.0
  %6384 = vmatpush1.msra.mxu0 0.0
  %6385 = vmatprep.subr.mxu0 0.0
  %6386 = vmatpush1.msra.mxu0 0.0
  %6387 = vmatprep.subr.mxu0 0.0
  %6388 = vmatpush1.msra.mxu0 0.0
  %6389 = vmatprep.subr.mxu0 0.0
  %6390 = vmatpush1.msra.mxu0 0.0
  %6391 = vmatprep.subr.mxu0 0.0
  %6392 = vmatpush1.msra.mxu0 0.0
  %6393 = vmatprep.subr.mxu0 0.0
  %6394 = vmatpush1.msra.mxu0 0.0
  %6395 = vmatprep.subr.mxu0 0.0
  %6396 = vmatpush1.msra.mxu0 0.0
  %6397 = vmatprep.subr.mxu0 0.0
  %6398 = vmatpush1.msra.mxu0 0.0
  %6399 = vmatprep.subr.mxu0 0.0
  %6400 = vmatpush1.msra.mxu0 0.0
  %6401 = vmatprep.subr.mxu0 0.0
  %6402 = vmatpush1.msra.mxu0 0.0
  %6403 = vmatprep.subr.mxu0 0.0
  %6404 = vmatpush1.msra.mxu0 0.0
  %6405 = vmatprep.subr.mxu0 0.0
  %6406 = vmatpush1.msra.mxu0 0.0
  %6407 = vmatprep.subr.mxu0 0.0
  %6408 = vmatpush1.msra.mxu0 0.0
  %6409 = vmatprep.subr.mxu0 0.0
  %6410 = vmatpush1.msra.mxu0 0.0
  %6411 = vmatprep.subr.mxu0 0.0
  %6412 = vmatpush1.msra.mxu0 0.0
  %6413 = vmatprep.subr.mxu0 0.0
  %6414 = vmatpush1.msra.mxu0 0.0
  %6415 = vmatprep.subr.mxu0 0.0
  %6416 = vmatpush1.msra.mxu0 0.0
  %6417 = vmatprep.mubr.f32.mxu0 0.0
  %6418 = vmatmul.mubr.f32.gmra.mrb[0].mxu0 %v6330
  %v6419 = vpop.f32.mrb[0].mxu0
  %v6420 = vadd.f32 0.0, %v6419
  %v6421 = vpop.f32.mrb[0].mxu0
  %6422 = vmatprep.mubr.f32.mxu0 0.0
  %6423 = vmatmul.mubr.f32.gmra.mrb[0].mxu0 %v6333
  %v6424 = vpop.f32.mrb[0].mxu0
  %v6425 = vadd.f32 0.0, %v6424
  %v6426 = vpop.f32.mrb[0].mxu0
  %6427 = vmatprep.mubr.f32.mxu0 0.0
  %6428 = vmatmul.mubr.f32.gmra.mrb[0].mxu0 %v6336
  %v6429 = vpop.f32.mrb[0].mxu0
  %v6430 = vadd.f32 0.0, %v6429
  %v6431 = vpop.f32.mrb[0].mxu0
  %6432 = vmatprep.mubr.f32.mxu0 0.0
  %6433 = vmatmul.mubr.f32.gmra.mrb[0].mxu0 %v6339
  %v6434 = vpop.f32.mrb[0].mxu0
  %v6435 = vadd.f32 0.0, %v6434
  %v6436 = vpop.f32.mrb[0].mxu0
  %6437 = vmatprep.mubr.f32.mxu0 0.0
  %6438 = vmatmul.mubr.f32.gmra.mrb[0].mxu0 %v6342
  %v6439 = vpop.f32.mrb[0].mxu0
  %v6440 = vadd.f32 0.0, %v6439
  %v6441 = vpop.f32.mrb[0].mxu0
  %6442 = vmatprep.mubr.f32.mxu0 0.0
  %6443 = vmatmul.mubr.f32.gmra.mrb[0].mxu0 %v6345
  %v6444 = vpop.f32.mrb[0].mxu0
  %v6445 = vadd.f32 0.0, %v6444
  %v6446 = vpop.f32.mrb[0].mxu0
  %6447 = vmatprep.mubr.f32.mxu0 0.0
  %6448 = vmatmul.mubr.f32.gmra.mrb[0].mxu0 %v6348
  %v6449 = vpop.f32.mrb[0].mxu0
  %v6450 = vadd.f32 0.0, %v6449
  %v6451 = vpop.f32.mrb[0].mxu0
  %6452 = vmatprep.mubr.f32.mxu0 0.0
  %6453 = vmatmul.mubr.f32.gmra.mrb[0].mxu0 %v6351
  %v6454 = vpop.f32.mrb[0].mxu0
  %v6455 = vadd.f32 0.0, %v6454
  %v6456 = vpop.f32.mrb[0].mxu0
  %6457 = vdwg.mxu0
  %v6458 = vadd.f32 %v6309, %v6420
  %v6459 = vadd.f32 %v6310, %v6425
  %v6460 = vadd.f32 %v6311, %v6430
  %v6461 = vadd.f32 %v6312, %v6435
  %v6462 = vadd.f32 %v6313, %v6440
  %v6463 = vadd.f32 %v6314, %v6445
  %v6464 = vadd.f32 %v6315, %v6450
  %v6465 = vadd.f32 %v6316, %v6455
  %v6466 = vld [vmem:[%s5869 + $0x4] sm:$0xff]
  %v6467 = vld [vmem:[%s5869 + $0x14] sm:$0xff]
  %v6468 = vld [vmem:[%s5869 + $0x24] sm:$0xff]
  %v6469 = vld [vmem:[%s5869 + $0x34] sm:$0xff]
  %v6470 = vld [vmem:[%s5869 + $0x44] sm:$0xff]
  %v6471 = vld [vmem:[%s5869 + $0x54] sm:$0xff]
  %v6472 = vld [vmem:[%s5869 + $0x64] sm:$0xff]
  %v6473 = vld [vmem:[%s5869 + $0x74] sm:$0xff]
  %v6474 = vld [vmem:[%s3 + $0x1c0] sm:$0xff]
  %v6475 = vld [vmem:[%s3 + $0x1c8] sm:$0xff]
  %v6476 = vld [vmem:[%s3 + $0x1d0] sm:$0xff]
  %v6477 = vld [vmem:[%s3 + $0x1d8] sm:$0xff]
  %v6479 = vsel %vm79, %v6466, 0
  %v6482 = vsel %vm79, %v6467, 0
  %v6485 = vsel %vm79, %v6468, 0
  %v6488 = vsel %vm79, %v6469, 0
  %v6491 = vsel %vm79, %v6470, 0
  %v6494 = vsel %vm79, %v6471, 0
  %v6497 = vsel %vm79, %v6472, 0
  %v6500 = vsel %vm79, %v6473, 0
  %6502 = vmatprep.subr.mxu0 0.0
  %6503 = vmatpush1.msra.mxu0 %v6474
  %6504 = vmatprep.subr.mxu0 0.0
  %6505 = vmatpush1.msra.mxu0 %v6475
  %6506 = vmatprep.subr.mxu0 0.0
  %6507 = vmatpush1.msra.mxu0 %v6476
  %6508 = vmatprep.subr.mxu0 0.0
  %6509 = vmatpush1.msra.mxu0 %v6477
  %6510 = vmatprep.subr.mxu0 0.0
  %6511 = vmatpush1.msra.mxu0 0.0
  %6512 = vmatprep.subr.mxu0 0.0
  %6513 = vmatpush1.msra.mxu0 0.0
  %6514 = vmatprep.subr.mxu0 0.0
  %6515 = vmatpush1.msra.mxu0 0.0
  %6516 = vmatprep.subr.mxu0 0.0
  %6517 = vmatpush1.msra.mxu0 0.0
  %6518 = vmatprep.subr.mxu0 0.0
  %6519 = vmatpush1.msra.mxu0 0.0
  %6520 = vmatprep.subr.mxu0 0.0
  %6521 = vmatpush1.msra.mxu0 0.0
  %6522 = vmatprep.subr.mxu0 0.0
  %6523 = vmatpush1.msra.mxu0 0.0
  %6524 = vmatprep.subr.mxu0 0.0
  %6525 = vmatpush1.msra.mxu0 0.0
  %6526 = vmatprep.subr.mxu0 0.0
  %6527 = vmatpush1.msra.mxu0 0.0
  %6528 = vmatprep.subr.mxu0 0.0
  %6529 = vmatpush1.msra.mxu0 0.0
  %6530 = vmatprep.subr.mxu0 0.0
  %6531 = vmatpush1.msra.mxu0 0.0
  %6532 = vmatprep.subr.mxu0 0.0
  %6533 = vmatpush1.msra.mxu0 0.0
  %6534 = vmatprep.subr.mxu0 0.0
  %6535 = vmatpush1.msra.mxu0 0.0
  %6536 = vmatprep.subr.mxu0 0.0
  %6537 = vmatpush1.msra.mxu0 0.0
  %6538 = vmatprep.subr.mxu0 0.0
  %6539 = vmatpush1.msra.mxu0 0.0
  %6540 = vmatprep.subr.mxu0 0.0
  %6541 = vmatpush1.msra.mxu0 0.0
  %6542 = vmatprep.subr.mxu0 0.0
  %6543 = vmatpush1.msra.mxu0 0.0
  %6544 = vmatprep.subr.mxu0 0.0
  %6545 = vmatpush1.msra.mxu0 0.0
  %6546 = vmatprep.subr.mxu0 0.0
  %6547 = vmatpush1.msra.mxu0 0.0
  %6548 = vmatprep.subr.mxu0 0.0
  %6549 = vmatpush1.msra.mxu0 0.0
  %6550 = vmatprep.subr.mxu0 0.0
  %6551 = vmatpush1.msra.mxu0 0.0
  %6552 = vmatprep.subr.mxu0 0.0
  %6553 = vmatpush1.msra.mxu0 0.0
  %6554 = vmatprep.subr.mxu0 0.0
  %6555 = vmatpush1.msra.mxu0 0.0
  %6556 = vmatprep.subr.mxu0 0.0
  %6557 = vmatpush1.msra.mxu0 0.0
  %6558 = vmatprep.subr.mxu0 0.0
  %6559 = vmatpush1.msra.mxu0 0.0
  %6560 = vmatprep.subr.mxu0 0.0
  %6561 = vmatpush1.msra.mxu0 0.0
  %6562 = vmatprep.subr.mxu0 0.0
  %6563 = vmatpush1.msra.mxu0 0.0
  %6564 = vmatprep.subr.mxu0 0.0
  %6565 = vmatpush1.msra.mxu0 0.0
  %6566 = vmatprep.mubr.f32.mxu0 0.0
  %6567 = vmatmul.mubr.f32.gmra.mrb[0].mxu0 %v6479
  %v6568 = vpop.f32.mrb[0].mxu0
  %v6569 = vadd.f32 0.0, %v6568
  %v6570 = vpop.f32.mrb[0].mxu0
  %6571 = vmatprep.mubr.f32.mxu0 0.0
  %6572 = vmatmul.mubr.f32.gmra.mrb[0].mxu0 %v6482
  %v6573 = vpop.f32.mrb[0].mxu0
  %v6574 = vadd.f32 0.0, %v6573
  %v6575 = vpop.f32.mrb[0].mxu0
  %6576 = vmatprep.mubr.f32.mxu0 0.0
  %6577 = vmatmul.mubr.f32.gmra.mrb[0].mxu0 %v6485
  %v6578 = vpop.f32.mrb[0].mxu0
  %v6579 = vadd.f32 0.0, %v6578
  %v6580 = vpop.f32.mrb[0].mxu0
  %6581 = vmatprep.mubr.f32.mxu0 0.0
  %6582 = vmatmul.mubr.f32.gmra.mrb[0].mxu0 %v6488
  %v6583 = vpop.f32.mrb[0].mxu0
  %v6584 = vadd.f32 0.0, %v6583
  %v6585 = vpop.f32.mrb[0].mxu0
  %6586 = vmatprep.mubr.f32.mxu0 0.0
  %6587 = vmatmul.mubr.f32.gmra.mrb[0].mxu0 %v6491
  %v6588 = vpop.f32.mrb[0].mxu0
  %v6589 = vadd.f32 0.0, %v6588
  %v6590 = vpop.f32.mrb[0].mxu0
  %6591 = vmatprep.mubr.f32.mxu0 0.0
  %6592 = vmatmul.mubr.f32.gmra.mrb[0].mxu0 %v6494
  %v6593 = vpop.f32.mrb[0].mxu0
  %v6594 = vadd.f32 0.0, %v6593
  %v6595 = vpop.f32.mrb[0].mxu0
  %6596 = vmatprep.mubr.f32.mxu0 0.0
  %6597 = vmatmul.mubr.f32.gmra.mrb[0].mxu0 %v6497
  %v6598 = vpop.f32.mrb[0].mxu0
  %v6599 = vadd.f32 0.0, %v6598
  %v6600 = vpop.f32.mrb[0].mxu0
  %6601 = vmatprep.mubr.f32.mxu0 0.0
  %6602 = vmatmul.mubr.f32.gmra.mrb[0].mxu0 %v6500
  %v6603 = vpop.f32.mrb[0].mxu0
  %v6604 = vadd.f32 0.0, %v6603
  %v6605 = vpop.f32.mrb[0].mxu0
  %6606 = vdwg.mxu0
  %v6607 = vadd.f32 %v6458, %v6569
  %v6608 = vadd.f32 %v6459, %v6574
  %v6609 = vadd.f32 %v6460, %v6579
  %v6610 = vadd.f32 %v6461, %v6584
  %v6611 = vadd.f32 %v6462, %v6589
  %v6612 = vadd.f32 %v6463, %v6594
  %v6613 = vadd.f32 %v6464, %v6599
  %v6614 = vadd.f32 %v6465, %v6604
  %s6615 = scalar_lea.vmem [#allocation2], 240
  %v6616 = vld [vmem:[%s6615] sm:$0xff]
  %v6617 = vld [vmem:[%s6615 + $0x10] sm:$0xff]
  %v6618 = vld [vmem:[%s6615 + $0x20] sm:$0xff]
  %v6619 = vld [vmem:[%s6615 + $0x30] sm:$0xff]
  %v6620 = vld [vmem:[%s6615 + $0x40] sm:$0xff]
  %v6621 = vld [vmem:[%s6615 + $0x50] sm:$0xff]
  %v6622 = vld [vmem:[%s6615 + $0x60] sm:$0xff]
  %v6623 = vld [vmem:[%s6615 + $0x70] sm:$0xff]
  %v6624 = vld [vmem:[%s3 + $0x1e0] sm:$0xff]
  %v6625 = vld [vmem:[%s3 + $0x1e8] sm:$0xff]
  %v6626 = vld [vmem:[%s3 + $0x1f0] sm:$0xff]
  %v6627 = vld [vmem:[%s3 + $0x1f8] sm:$0xff]
  %v6629 = vsel %vm79, %v6616, 0
  %v6632 = vsel %vm79, %v6617, 0
  %v6635 = vsel %vm79, %v6618, 0
  %v6638 = vsel %vm79, %v6619, 0
  %v6641 = vsel %vm79, %v6620, 0
  %v6644 = vsel %vm79, %v6621, 0
  %v6647 = vsel %vm79, %v6622, 0
  %v6650 = vsel %vm79, %v6623, 0
  %6652 = vmatprep.subr.mxu0 0.0
  %6653 = vmatpush1.msra.mxu0 %v6624
  %6654 = vmatprep.subr.mxu0 0.0
  %6655 = vmatpush1.msra.mxu0 %v6625
  %6656 = vmatprep.subr.mxu0 0.0
  %6657 = vmatpush1.msra.mxu0 %v6626
  %6658 = vmatprep.subr.mxu0 0.0
  %6659 = vmatpush1.msra.mxu0 %v6627
  %6660 = vmatprep.subr.mxu0 0.0
  %6661 = vmatpush1.msra.mxu0 0.0
  %6662 = vmatprep.subr.mxu0 0.0
  %6663 = vmatpush1.msra.mxu0 0.0
  %6664 = vmatprep.subr.mxu0 0.0
  %6665 = vmatpush1.msra.mxu0 0.0
  %6666 = vmatprep.subr.mxu0 0.0
  %6667 = vmatpush1.msra.mxu0 0.0
  %6668 = vmatprep.subr.mxu0 0.0
  %6669 = vmatpush1.msra.mxu0 0.0
  %6670 = vmatprep.subr.mxu0 0.0
  %6671 = vmatpush1.msra.mxu0 0.0
  %6672 = vmatprep.subr.mxu0 0.0
  %6673 = vmatpush1.msra.mxu0 0.0
  %6674 = vmatprep.subr.mxu0 0.0
  %6675 = vmatpush1.msra.mxu0 0.0
  %6676 = vmatprep.subr.mxu0 0.0
  %6677 = vmatpush1.msra.mxu0 0.0
  %6678 = vmatprep.subr.mxu0 0.0
  %6679 = vmatpush1.msra.mxu0 0.0
  %6680 = vmatprep.subr.mxu0 0.0
  %6681 = vmatpush1.msra.mxu0 0.0
  %6682 = vmatprep.subr.mxu0 0.0
  %6683 = vmatpush1.msra.mxu0 0.0
  %6684 = vmatprep.subr.mxu0 0.0
  %6685 = vmatpush1.msra.mxu0 0.0
  %6686 = vmatprep.subr.mxu0 0.0
  %6687 = vmatpush1.msra.mxu0 0.0
  %6688 = vmatprep.subr.mxu0 0.0
  %6689 = vmatpush1.msra.mxu0 0.0
  %6690 = vmatprep.subr.mxu0 0.0
  %6691 = vmatpush1.msra.mxu0 0.0
  %6692 = vmatprep.subr.mxu0 0.0
  %6693 = vmatpush1.msra.mxu0 0.0
  %6694 = vmatprep.subr.mxu0 0.0
  %6695 = vmatpush1.msra.mxu0 0.0
  %6696 = vmatprep.subr.mxu0 0.0
  %6697 = vmatpush1.msra.mxu0 0.0
  %6698 = vmatprep.subr.mxu0 0.0
  %6699 = vmatpush1.msra.mxu0 0.0
  %6700 = vmatprep.subr.mxu0 0.0
  %6701 = vmatpush1.msra.mxu0 0.0
  %6702 = vmatprep.subr.mxu0 0.0
  %6703 = vmatpush1.msra.mxu0 0.0
  %6704 = vmatprep.subr.mxu0 0.0
  %6705 = vmatpush1.msra.mxu0 0.0
  %6706 = vmatprep.subr.mxu0 0.0
  %6707 = vmatpush1.msra.mxu0 0.0
  %6708 = vmatprep.subr.mxu0 0.0
  %6709 = vmatpush1.msra.mxu0 0.0
  %6710 = vmatprep.subr.mxu0 0.0
  %6711 = vmatpush1.msra.mxu0 0.0
  %6712 = vmatprep.subr.mxu0 0.0
  %6713 = vmatpush1.msra.mxu0 0.0
  %6714 = vmatprep.subr.mxu0 0.0
  %6715 = vmatpush1.msra.mxu0 0.0
  %6716 = vmatprep.mubr.f32.mxu0 0.0
  %6717 = vmatmul.mubr.f32.gmra.mrb[0].mxu0 %v6629
  %v6718 = vpop.f32.mrb[0].mxu0
  %v6719 = vadd.f32 0.0, %v6718
  %v6720 = vpop.f32.mrb[0].mxu0
  %6721 = vmatprep.mubr.f32.mxu0 0.0
  %6722 = vmatmul.mubr.f32.gmra.mrb[0].mxu0 %v6632
  %v6723 = vpop.f32.mrb[0].mxu0
  %v6724 = vadd.f32 0.0, %v6723
  %v6725 = vpop.f32.mrb[0].mxu0
  %6726 = vmatprep.mubr.f32.mxu0 0.0
  %6727 = vmatmul.mubr.f32.gmra.mrb[0].mxu0 %v6635
  %v6728 = vpop.f32.mrb[0].mxu0
  %v6729 = vadd.f32 0.0, %v6728
  %v6730 = vpop.f32.mrb[0].mxu0
  %6731 = vmatprep.mubr.f32.mxu0 0.0
  %6732 = vmatmul.mubr.f32.gmra.mrb[0].mxu0 %v6638
  %v6733 = vpop.f32.mrb[0].mxu0
  %v6734 = vadd.f32 0.0, %v6733
  %v6735 = vpop.f32.mrb[0].mxu0
  %6736 = vmatprep.mubr.f32.mxu0 0.0
  %6737 = vmatmul.mubr.f32.gmra.mrb[0].mxu0 %v6641
  %v6738 = vpop.f32.mrb[0].mxu0
  %v6739 = vadd.f32 0.0, %v6738
  %v6740 = vpop.f32.mrb[0].mxu0
  %6741 = vmatprep.mubr.f32.mxu0 0.0
  %6742 = vmatmul.mubr.f32.gmra.mrb[0].mxu0 %v6644
  %v6743 = vpop.f32.mrb[0].mxu0
  %v6744 = vadd.f32 0.0, %v6743
  %v6745 = vpop.f32.mrb[0].mxu0
  %6746 = vmatprep.mubr.f32.mxu0 0.0
  %6747 = vmatmul.mubr.f32.gmra.mrb[0].mxu0 %v6647
  %v6748 = vpop.f32.mrb[0].mxu0
  %v6749 = vadd.f32 0.0, %v6748
  %v6750 = vpop.f32.mrb[0].mxu0
  %6751 = vmatprep.mubr.f32.mxu0 0.0
  %6752 = vmatmul.mubr.f32.gmra.mrb[0].mxu0 %v6650
  %v6753 = vpop.f32.mrb[0].mxu0
  %v6754 = vadd.f32 0.0, %v6753
  %v6755 = vpop.f32.mrb[0].mxu0
  %6756 = vdwg.mxu0
  %v6757 = vadd.f32 %v6607, %v6719
  %v6758 = vadd.f32 %v6608, %v6724
  %v6759 = vadd.f32 %v6609, %v6729
  %v6760 = vadd.f32 %v6610, %v6734
  %v6761 = vadd.f32 %v6611, %v6739
  %v6762 = vadd.f32 %v6612, %v6744
  %v6763 = vadd.f32 %v6613, %v6749
  %v6764 = vadd.f32 %v6614, %v6754
  %v6765 = vld [vmem:[%s6615 + $0x1] sm:$0xff]
  %v6766 = vld [vmem:[%s6615 + $0x11] sm:$0xff]
  %v6767 = vld [vmem:[%s6615 + $0x21] sm:$0xff]
  %v6768 = vld [vmem:[%s6615 + $0x31] sm:$0xff]
  %v6769 = vld [vmem:[%s6615 + $0x41] sm:$0xff]
  %v6770 = vld [vmem:[%s6615 + $0x51] sm:$0xff]
  %v6771 = vld [vmem:[%s6615 + $0x61] sm:$0xff]
  %v6772 = vld [vmem:[%s6615 + $0x71] sm:$0xff]
  %v6773 = vld [vmem:[%s3 + $0x200] sm:$0xff]
  %v6774 = vld [vmem:[%s3 + $0x208] sm:$0xff]
  %v6775 = vld [vmem:[%s3 + $0x210] sm:$0xff]
  %v6776 = vld [vmem:[%s3 + $0x218] sm:$0xff]
  %v6778 = vsel %vm79, %v6765, 0
  %v6781 = vsel %vm79, %v6766, 0
  %v6784 = vsel %vm79, %v6767, 0
  %v6787 = vsel %vm79, %v6768, 0
  %v6790 = vsel %vm79, %v6769, 0
  %v6793 = vsel %vm79, %v6770, 0
  %v6796 = vsel %vm79, %v6771, 0
  %v6799 = vsel %vm79, %v6772, 0
  %6801 = vmatprep.subr.mxu0 0.0
  %6802 = vmatpush1.msra.mxu0 %v6773
  %6803 = vmatprep.subr.mxu0 0.0
  %6804 = vmatpush1.msra.mxu0 %v6774
  %6805 = vmatprep.subr.mxu0 0.0
  %6806 = vmatpush1.msra.mxu0 %v6775
  %6807 = vmatprep.subr.mxu0 0.0
  %6808 = vmatpush1.msra.mxu0 %v6776
  %6809 = vmatprep.subr.mxu0 0.0
  %6810 = vmatpush1.msra.mxu0 0.0
  %6811 = vmatprep.subr.mxu0 0.0
  %6812 = vmatpush1.msra.mxu0 0.0
  %6813 = vmatprep.subr.mxu0 0.0
  %6814 = vmatpush1.msra.mxu0 0.0
  %6815 = vmatprep.subr.mxu0 0.0
  %6816 = vmatpush1.msra.mxu0 0.0
  %6817 = vmatprep.subr.mxu0 0.0
  %6818 = vmatpush1.msra.mxu0 0.0
  %6819 = vmatprep.subr.mxu0 0.0
  %6820 = vmatpush1.msra.mxu0 0.0
  %6821 = vmatprep.subr.mxu0 0.0
  %6822 = vmatpush1.msra.mxu0 0.0
  %6823 = vmatprep.subr.mxu0 0.0
  %6824 = vmatpush1.msra.mxu0 0.0
  %6825 = vmatprep.subr.mxu0 0.0
  %6826 = vmatpush1.msra.mxu0 0.0
  %6827 = vmatprep.subr.mxu0 0.0
  %6828 = vmatpush1.msra.mxu0 0.0
  %6829 = vmatprep.subr.mxu0 0.0
  %6830 = vmatpush1.msra.mxu0 0.0
  %6831 = vmatprep.subr.mxu0 0.0
  %6832 = vmatpush1.msra.mxu0 0.0
  %6833 = vmatprep.subr.mxu0 0.0
  %6834 = vmatpush1.msra.mxu0 0.0
  %6835 = vmatprep.subr.mxu0 0.0
  %6836 = vmatpush1.msra.mxu0 0.0
  %6837 = vmatprep.subr.mxu0 0.0
  %6838 = vmatpush1.msra.mxu0 0.0
  %6839 = vmatprep.subr.mxu0 0.0
  %6840 = vmatpush1.msra.mxu0 0.0
  %6841 = vmatprep.subr.mxu0 0.0
  %6842 = vmatpush1.msra.mxu0 0.0
  %6843 = vmatprep.subr.mxu0 0.0
  %6844 = vmatpush1.msra.mxu0 0.0
  %6845 = vmatprep.subr.mxu0 0.0
  %6846 = vmatpush1.msra.mxu0 0.0
  %6847 = vmatprep.subr.mxu0 0.0
  %6848 = vmatpush1.msra.mxu0 0.0
  %6849 = vmatprep.subr.mxu0 0.0
  %6850 = vmatpush1.msra.mxu0 0.0
  %6851 = vmatprep.subr.mxu0 0.0
  %6852 = vmatpush1.msra.mxu0 0.0
  %6853 = vmatprep.subr.mxu0 0.0
  %6854 = vmatpush1.msra.mxu0 0.0
  %6855 = vmatprep.subr.mxu0 0.0
  %6856 = vmatpush1.msra.mxu0 0.0
  %6857 = vmatprep.subr.mxu0 0.0
  %6858 = vmatpush1.msra.mxu0 0.0
  %6859 = vmatprep.subr.mxu0 0.0
  %6860 = vmatpush1.msra.mxu0 0.0
  %6861 = vmatprep.subr.mxu0 0.0
  %6862 = vmatpush1.msra.mxu0 0.0
  %6863 = vmatprep.subr.mxu0 0.0
  %6864 = vmatpush1.msra.mxu0 0.0
  %6865 = vmatprep.mubr.f32.mxu0 0.0
  %6866 = vmatmul.mubr.f32.gmra.mrb[0].mxu0 %v6778
  %v6867 = vpop.f32.mrb[0].mxu0
  %v6868 = vadd.f32 0.0, %v6867
  %v6869 = vpop.f32.mrb[0].mxu0
  %6870 = vmatprep.mubr.f32.mxu0 0.0
  %6871 = vmatmul.mubr.f32.gmra.mrb[0].mxu0 %v6781
  %v6872 = vpop.f32.mrb[0].mxu0
  %v6873 = vadd.f32 0.0, %v6872
  %v6874 = vpop.f32.mrb[0].mxu0
  %6875 = vmatprep.mubr.f32.mxu0 0.0
  %6876 = vmatmul.mubr.f32.gmra.mrb[0].mxu0 %v6784
  %v6877 = vpop.f32.mrb[0].mxu0
  %v6878 = vadd.f32 0.0, %v6877
  %v6879 = vpop.f32.mrb[0].mxu0
  %6880 = vmatprep.mubr.f32.mxu0 0.0
  %6881 = vmatmul.mubr.f32.gmra.mrb[0].mxu0 %v6787
  %v6882 = vpop.f32.mrb[0].mxu0
  %v6883 = vadd.f32 0.0, %v6882
  %v6884 = vpop.f32.mrb[0].mxu0
  %6885 = vmatprep.mubr.f32.mxu0 0.0
  %6886 = vmatmul.mubr.f32.gmra.mrb[0].mxu0 %v6790
  %v6887 = vpop.f32.mrb[0].mxu0
  %v6888 = vadd.f32 0.0, %v6887
  %v6889 = vpop.f32.mrb[0].mxu0
  %6890 = vmatprep.mubr.f32.mxu0 0.0
  %6891 = vmatmul.mubr.f32.gmra.mrb[0].mxu0 %v6793
  %v6892 = vpop.f32.mrb[0].mxu0
  %v6893 = vadd.f32 0.0, %v6892
  %v6894 = vpop.f32.mrb[0].mxu0
  %6895 = vmatprep.mubr.f32.mxu0 0.0
  %6896 = vmatmul.mubr.f32.gmra.mrb[0].mxu0 %v6796
  %v6897 = vpop.f32.mrb[0].mxu0
  %v6898 = vadd.f32 0.0, %v6897
  %v6899 = vpop.f32.mrb[0].mxu0
  %6900 = vmatprep.mubr.f32.mxu0 0.0
  %6901 = vmatmul.mubr.f32.gmra.mrb[0].mxu0 %v6799
  %v6902 = vpop.f32.mrb[0].mxu0
  %v6903 = vadd.f32 0.0, %v6902
  %v6904 = vpop.f32.mrb[0].mxu0
  %6905 = vdwg.mxu0
  %v6906 = vadd.f32 %v6757, %v6868
  %v6907 = vadd.f32 %v6758, %v6873
  %v6908 = vadd.f32 %v6759, %v6878
  %v6909 = vadd.f32 %v6760, %v6883
  %v6910 = vadd.f32 %v6761, %v6888
  %v6911 = vadd.f32 %v6762, %v6893
  %v6912 = vadd.f32 %v6763, %v6898
  %v6913 = vadd.f32 %v6764, %v6903
  %v6914 = vld [vmem:[%s6615 + $0x2] sm:$0xff]
  %v6915 = vld [vmem:[%s6615 + $0x12] sm:$0xff]
  %v6916 = vld [vmem:[%s6615 + $0x22] sm:$0xff]
  %v6917 = vld [vmem:[%s6615 + $0x32] sm:$0xff]
  %v6918 = vld [vmem:[%s6615 + $0x42] sm:$0xff]
  %v6919 = vld [vmem:[%s6615 + $0x52] sm:$0xff]
  %v6920 = vld [vmem:[%s6615 + $0x62] sm:$0xff]
  %v6921 = vld [vmem:[%s6615 + $0x72] sm:$0xff]
  %v6922 = vld [vmem:[%s3 + $0x220] sm:$0xff]
  %v6923 = vld [vmem:[%s3 + $0x228] sm:$0xff]
  %v6924 = vld [vmem:[%s3 + $0x230] sm:$0xff]
  %v6925 = vld [vmem:[%s3 + $0x238] sm:$0xff]
  %v6927 = vsel %vm79, %v6914, 0
  %v6930 = vsel %vm79, %v6915, 0
  %v6933 = vsel %vm79, %v6916, 0
  %v6936 = vsel %vm79, %v6917, 0
  %v6939 = vsel %vm79, %v6918, 0
  %v6942 = vsel %vm79, %v6919, 0
  %v6945 = vsel %vm79, %v6920, 0
  %v6948 = vsel %vm79, %v6921, 0
  %6950 = vmatprep.subr.mxu0 0.0
  %6951 = vmatpush1.msra.mxu0 %v6922
  %6952 = vmatprep.subr.mxu0 0.0
  %6953 = vmatpush1.msra.mxu0 %v6923
  %6954 = vmatprep.subr.mxu0 0.0
  %6955 = vmatpush1.msra.mxu0 %v6924
  %6956 = vmatprep.subr.mxu0 0.0
  %6957 = vmatpush1.msra.mxu0 %v6925
  %6958 = vmatprep.subr.mxu0 0.0
  %6959 = vmatpush1.msra.mxu0 0.0
  %6960 = vmatprep.subr.mxu0 0.0
  %6961 = vmatpush1.msra.mxu0 0.0
  %6962 = vmatprep.subr.mxu0 0.0
  %6963 = vmatpush1.msra.mxu0 0.0
  %6964 = vmatprep.subr.mxu0 0.0
  %6965 = vmatpush1.msra.mxu0 0.0
  %6966 = vmatprep.subr.mxu0 0.0
  %6967 = vmatpush1.msra.mxu0 0.0
  %6968 = vmatprep.subr.mxu0 0.0
  %6969 = vmatpush1.msra.mxu0 0.0
  %6970 = vmatprep.subr.mxu0 0.0
  %6971 = vmatpush1.msra.mxu0 0.0
  %6972 = vmatprep.subr.mxu0 0.0
  %6973 = vmatpush1.msra.mxu0 0.0
  %6974 = vmatprep.subr.mxu0 0.0
  %6975 = vmatpush1.msra.mxu0 0.0
  %6976 = vmatprep.subr.mxu0 0.0
  %6977 = vmatpush1.msra.mxu0 0.0
  %6978 = vmatprep.subr.mxu0 0.0
  %6979 = vmatpush1.msra.mxu0 0.0
  %6980 = vmatprep.subr.mxu0 0.0
  %6981 = vmatpush1.msra.mxu0 0.0
  %6982 = vmatprep.subr.mxu0 0.0
  %6983 = vmatpush1.msra.mxu0 0.0
  %6984 = vmatprep.subr.mxu0 0.0
  %6985 = vmatpush1.msra.mxu0 0.0
  %6986 = vmatprep.subr.mxu0 0.0
  %6987 = vmatpush1.msra.mxu0 0.0
  %6988 = vmatprep.subr.mxu0 0.0
  %6989 = vmatpush1.msra.mxu0 0.0
  %6990 = vmatprep.subr.mxu0 0.0
  %6991 = vmatpush1.msra.mxu0 0.0
  %6992 = vmatprep.subr.mxu0 0.0
  %6993 = vmatpush1.msra.mxu0 0.0
  %6994 = vmatprep.subr.mxu0 0.0
  %6995 = vmatpush1.msra.mxu0 0.0
  %6996 = vmatprep.subr.mxu0 0.0
  %6997 = vmatpush1.msra.mxu0 0.0
  %6998 = vmatprep.subr.mxu0 0.0
  %6999 = vmatpush1.msra.mxu0 0.0
  %7000 = vmatprep.subr.mxu0 0.0
  %7001 = vmatpush1.msra.mxu0 0.0
  %7002 = vmatprep.subr.mxu0 0.0
  %7003 = vmatpush1.msra.mxu0 0.0
  %7004 = vmatprep.subr.mxu0 0.0
  %7005 = vmatpush1.msra.mxu0 0.0
  %7006 = vmatprep.subr.mxu0 0.0
  %7007 = vmatpush1.msra.mxu0 0.0
  %7008 = vmatprep.subr.mxu0 0.0
  %7009 = vmatpush1.msra.mxu0 0.0
  %7010 = vmatprep.subr.mxu0 0.0
  %7011 = vmatpush1.msra.mxu0 0.0
  %7012 = vmatprep.subr.mxu0 0.0
  %7013 = vmatpush1.msra.mxu0 0.0
  %7014 = vmatprep.mubr.f32.mxu0 0.0
  %7015 = vmatmul.mubr.f32.gmra.mrb[0].mxu0 %v6927
  %v7016 = vpop.f32.mrb[0].mxu0
  %v7017 = vadd.f32 0.0, %v7016
  %v7018 = vpop.f32.mrb[0].mxu0
  %7019 = vmatprep.mubr.f32.mxu0 0.0
  %7020 = vmatmul.mubr.f32.gmra.mrb[0].mxu0 %v6930
  %v7021 = vpop.f32.mrb[0].mxu0
  %v7022 = vadd.f32 0.0, %v7021
  %v7023 = vpop.f32.mrb[0].mxu0
  %7024 = vmatprep.mubr.f32.mxu0 0.0
  %7025 = vmatmul.mubr.f32.gmra.mrb[0].mxu0 %v6933
  %v7026 = vpop.f32.mrb[0].mxu0
  %v7027 = vadd.f32 0.0, %v7026
  %v7028 = vpop.f32.mrb[0].mxu0
  %7029 = vmatprep.mubr.f32.mxu0 0.0
  %7030 = vmatmul.mubr.f32.gmra.mrb[0].mxu0 %v6936
  %v7031 = vpop.f32.mrb[0].mxu0
  %v7032 = vadd.f32 0.0, %v7031
  %v7033 = vpop.f32.mrb[0].mxu0
  %7034 = vmatprep.mubr.f32.mxu0 0.0
  %7035 = vmatmul.mubr.f32.gmra.mrb[0].mxu0 %v6939
  %v7036 = vpop.f32.mrb[0].mxu0
  %v7037 = vadd.f32 0.0, %v7036
  %v7038 = vpop.f32.mrb[0].mxu0
  %7039 = vmatprep.mubr.f32.mxu0 0.0
  %7040 = vmatmul.mubr.f32.gmra.mrb[0].mxu0 %v6942
  %v7041 = vpop.f32.mrb[0].mxu0
  %v7042 = vadd.f32 0.0, %v7041
  %v7043 = vpop.f32.mrb[0].mxu0
  %7044 = vmatprep.mubr.f32.mxu0 0.0
  %7045 = vmatmul.mubr.f32.gmra.mrb[0].mxu0 %v6945
  %v7046 = vpop.f32.mrb[0].mxu0
  %v7047 = vadd.f32 0.0, %v7046
  %v7048 = vpop.f32.mrb[0].mxu0
  %7049 = vmatprep.mubr.f32.mxu0 0.0
  %7050 = vmatmul.mubr.f32.gmra.mrb[0].mxu0 %v6948
  %v7051 = vpop.f32.mrb[0].mxu0
  %v7052 = vadd.f32 0.0, %v7051
  %v7053 = vpop.f32.mrb[0].mxu0
  %7054 = vdwg.mxu0
  %v7055 = vadd.f32 %v6906, %v7017
  %v7056 = vadd.f32 %v6907, %v7022
  %v7057 = vadd.f32 %v6908, %v7027
  %v7058 = vadd.f32 %v6909, %v7032
  %v7059 = vadd.f32 %v6910, %v7037
  %v7060 = vadd.f32 %v6911, %v7042
  %v7061 = vadd.f32 %v6912, %v7047
  %v7062 = vadd.f32 %v6913, %v7052
  %v7063 = vld [vmem:[%s6615 + $0x3] sm:$0xff]
  %v7064 = vld [vmem:[%s6615 + $0x13] sm:$0xff]
  %v7065 = vld [vmem:[%s6615 + $0x23] sm:$0xff]
  %v7066 = vld [vmem:[%s6615 + $0x33] sm:$0xff]
  %v7067 = vld [vmem:[%s6615 + $0x43] sm:$0xff]
  %v7068 = vld [vmem:[%s6615 + $0x53] sm:$0xff]
  %v7069 = vld [vmem:[%s6615 + $0x63] sm:$0xff]
  %v7070 = vld [vmem:[%s6615 + $0x73] sm:$0xff]
  %v7071 = vld [vmem:[%s3 + $0x240] sm:$0xff]
  %v7072 = vld [vmem:[%s3 + $0x248] sm:$0xff]
  %v7073 = vld [vmem:[%s3 + $0x250] sm:$0xff]
  %v7074 = vld [vmem:[%s3 + $0x258] sm:$0xff]
  %v7076 = vsel %vm79, %v7063, 0
  %v7079 = vsel %vm79, %v7064, 0
  %v7082 = vsel %vm79, %v7065, 0
  %v7085 = vsel %vm79, %v7066, 0
  %v7088 = vsel %vm79, %v7067, 0
  %v7091 = vsel %vm79, %v7068, 0
  %v7094 = vsel %vm79, %v7069, 0
  %v7097 = vsel %vm79, %v7070, 0
  %7099 = vmatprep.subr.mxu0 0.0
  %7100 = vmatpush1.msra.mxu0 %v7071
  %7101 = vmatprep.subr.mxu0 0.0
  %7102 = vmatpush1.msra.mxu0 %v7072
  %7103 = vmatprep.subr.mxu0 0.0
  %7104 = vmatpush1.msra.mxu0 %v7073
  %7105 = vmatprep.subr.mxu0 0.0
  %7106 = vmatpush1.msra.mxu0 %v7074
  %7107 = vmatprep.subr.mxu0 0.0
  %7108 = vmatpush1.msra.mxu0 0.0
  %7109 = vmatprep.subr.mxu0 0.0
  %7110 = vmatpush1.msra.mxu0 0.0
  %7111 = vmatprep.subr.mxu0 0.0
  %7112 = vmatpush1.msra.mxu0 0.0
  %7113 = vmatprep.subr.mxu0 0.0
  %7114 = vmatpush1.msra.mxu0 0.0
  %7115 = vmatprep.subr.mxu0 0.0
  %7116 = vmatpush1.msra.mxu0 0.0
  %7117 = vmatprep.subr.mxu0 0.0
  %7118 = vmatpush1.msra.mxu0 0.0
  %7119 = vmatprep.subr.mxu0 0.0
  %7120 = vmatpush1.msra.mxu0 0.0
  %7121 = vmatprep.subr.mxu0 0.0
  %7122 = vmatpush1.msra.mxu0 0.0
  %7123 = vmatprep.subr.mxu0 0.0
  %7124 = vmatpush1.msra.mxu0 0.0
  %7125 = vmatprep.subr.mxu0 0.0
  %7126 = vmatpush1.msra.mxu0 0.0
  %7127 = vmatprep.subr.mxu0 0.0
  %7128 = vmatpush1.msra.mxu0 0.0
  %7129 = vmatprep.subr.mxu0 0.0
  %7130 = vmatpush1.msra.mxu0 0.0
  %7131 = vmatprep.subr.mxu0 0.0
  %7132 = vmatpush1.msra.mxu0 0.0
  %7133 = vmatprep.subr.mxu0 0.0
  %7134 = vmatpush1.msra.mxu0 0.0
  %7135 = vmatprep.subr.mxu0 0.0
  %7136 = vmatpush1.msra.mxu0 0.0
  %7137 = vmatprep.subr.mxu0 0.0
  %7138 = vmatpush1.msra.mxu0 0.0
  %7139 = vmatprep.subr.mxu0 0.0
  %7140 = vmatpush1.msra.mxu0 0.0
  %7141 = vmatprep.subr.mxu0 0.0
  %7142 = vmatpush1.msra.mxu0 0.0
  %7143 = vmatprep.subr.mxu0 0.0
  %7144 = vmatpush1.msra.mxu0 0.0
  %7145 = vmatprep.subr.mxu0 0.0
  %7146 = vmatpush1.msra.mxu0 0.0
  %7147 = vmatprep.subr.mxu0 0.0
  %7148 = vmatpush1.msra.mxu0 0.0
  %7149 = vmatprep.subr.mxu0 0.0
  %7150 = vmatpush1.msra.mxu0 0.0
  %7151 = vmatprep.subr.mxu0 0.0
  %7152 = vmatpush1.msra.mxu0 0.0
  %7153 = vmatprep.subr.mxu0 0.0
  %7154 = vmatpush1.msra.mxu0 0.0
  %7155 = vmatprep.subr.mxu0 0.0
  %7156 = vmatpush1.msra.mxu0 0.0
  %7157 = vmatprep.subr.mxu0 0.0
  %7158 = vmatpush1.msra.mxu0 0.0
  %7159 = vmatprep.subr.mxu0 0.0
  %7160 = vmatpush1.msra.mxu0 0.0
  %7161 = vmatprep.subr.mxu0 0.0
  %7162 = vmatpush1.msra.mxu0 0.0
  %7163 = vmatprep.mubr.f32.mxu0 0.0
  %7164 = vmatmul.mubr.f32.gmra.mrb[0].mxu0 %v7076
  %v7165 = vpop.f32.mrb[0].mxu0
  %v7166 = vadd.f32 0.0, %v7165
  %v7167 = vpop.f32.mrb[0].mxu0
  %7168 = vmatprep.mubr.f32.mxu0 0.0
  %7169 = vmatmul.mubr.f32.gmra.mrb[0].mxu0 %v7079
  %v7170 = vpop.f32.mrb[0].mxu0
  %v7171 = vadd.f32 0.0, %v7170
  %v7172 = vpop.f32.mrb[0].mxu0
  %7173 = vmatprep.mubr.f32.mxu0 0.0
  %7174 = vmatmul.mubr.f32.gmra.mrb[0].mxu0 %v7082
  %v7175 = vpop.f32.mrb[0].mxu0
  %v7176 = vadd.f32 0.0, %v7175
  %v7177 = vpop.f32.mrb[0].mxu0
  %7178 = vmatprep.mubr.f32.mxu0 0.0
  %7179 = vmatmul.mubr.f32.gmra.mrb[0].mxu0 %v7085
  %v7180 = vpop.f32.mrb[0].mxu0
  %v7181 = vadd.f32 0.0, %v7180
  %v7182 = vpop.f32.mrb[0].mxu0
  %7183 = vmatprep.mubr.f32.mxu0 0.0
  %7184 = vmatmul.mubr.f32.gmra.mrb[0].mxu0 %v7088
  %v7185 = vpop.f32.mrb[0].mxu0
  %v7186 = vadd.f32 0.0, %v7185
  %v7187 = vpop.f32.mrb[0].mxu0
  %7188 = vmatprep.mubr.f32.mxu0 0.0
  %7189 = vmatmul.mubr.f32.gmra.mrb[0].mxu0 %v7091
  %v7190 = vpop.f32.mrb[0].mxu0
  %v7191 = vadd.f32 0.0, %v7190
  %v7192 = vpop.f32.mrb[0].mxu0
  %7193 = vmatprep.mubr.f32.mxu0 0.0
  %7194 = vmatmul.mubr.f32.gmra.mrb[0].mxu0 %v7094
  %v7195 = vpop.f32.mrb[0].mxu0
  %v7196 = vadd.f32 0.0, %v7195
  %v7197 = vpop.f32.mrb[0].mxu0
  %7198 = vmatprep.mubr.f32.mxu0 0.0
  %7199 = vmatmul.mubr.f32.gmra.mrb[0].mxu0 %v7097
  %v7200 = vpop.f32.mrb[0].mxu0
  %v7201 = vadd.f32 0.0, %v7200
  %v7202 = vpop.f32.mrb[0].mxu0
  %7203 = vdwg.mxu0
  %v7204 = vadd.f32 %v7055, %v7166
  %v7205 = vadd.f32 %v7056, %v7171
  %v7206 = vadd.f32 %v7057, %v7176
  %v7207 = vadd.f32 %v7058, %v7181
  %v7208 = vadd.f32 %v7059, %v7186
  %v7209 = vadd.f32 %v7060, %v7191
  %v7210 = vadd.f32 %v7061, %v7196
  %v7211 = vadd.f32 %v7062, %v7201
  %v7212 = vld [vmem:[%s6615 + $0x4] sm:$0xff]
  %v7213 = vld [vmem:[%s6615 + $0x14] sm:$0xff]
  %v7214 = vld [vmem:[%s6615 + $0x24] sm:$0xff]
  %v7215 = vld [vmem:[%s6615 + $0x34] sm:$0xff]
  %v7216 = vld [vmem:[%s6615 + $0x44] sm:$0xff]
  %v7217 = vld [vmem:[%s6615 + $0x54] sm:$0xff]
  %v7218 = vld [vmem:[%s6615 + $0x64] sm:$0xff]
  %v7219 = vld [vmem:[%s6615 + $0x74] sm:$0xff]
  %v7220 = vld [vmem:[%s3 + $0x260] sm:$0xff]
  %v7221 = vld [vmem:[%s3 + $0x268] sm:$0xff]
  %v7222 = vld [vmem:[%s3 + $0x270] sm:$0xff]
  %v7223 = vld [vmem:[%s3 + $0x278] sm:$0xff]
  %v7225 = vsel %vm79, %v7212, 0
  %v7228 = vsel %vm79, %v7213, 0
  %v7231 = vsel %vm79, %v7214, 0
  %v7234 = vsel %vm79, %v7215, 0
  %v7237 = vsel %vm79, %v7216, 0
  %v7240 = vsel %vm79, %v7217, 0
  %v7243 = vsel %vm79, %v7218, 0
  %v7246 = vsel %vm79, %v7219, 0
  %7248 = vmatprep.subr.mxu0 0.0
  %7249 = vmatpush1.msra.mxu0 %v7220
  %7250 = vmatprep.subr.mxu0 0.0
  %7251 = vmatpush1.msra.mxu0 %v7221
  %7252 = vmatprep.subr.mxu0 0.0
  %7253 = vmatpush1.msra.mxu0 %v7222
  %7254 = vmatprep.subr.mxu0 0.0
  %7255 = vmatpush1.msra.mxu0 %v7223
  %7256 = vmatprep.subr.mxu0 0.0
  %7257 = vmatpush1.msra.mxu0 0.0
  %7258 = vmatprep.subr.mxu0 0.0
  %7259 = vmatpush1.msra.mxu0 0.0
  %7260 = vmatprep.subr.mxu0 0.0
  %7261 = vmatpush1.msra.mxu0 0.0
  %7262 = vmatprep.subr.mxu0 0.0
  %7263 = vmatpush1.msra.mxu0 0.0
  %7264 = vmatprep.subr.mxu0 0.0
  %7265 = vmatpush1.msra.mxu0 0.0
  %7266 = vmatprep.subr.mxu0 0.0
  %7267 = vmatpush1.msra.mxu0 0.0
  %7268 = vmatprep.subr.mxu0 0.0
  %7269 = vmatpush1.msra.mxu0 0.0
  %7270 = vmatprep.subr.mxu0 0.0
  %7271 = vmatpush1.msra.mxu0 0.0
  %7272 = vmatprep.subr.mxu0 0.0
  %7273 = vmatpush1.msra.mxu0 0.0
  %7274 = vmatprep.subr.mxu0 0.0
  %7275 = vmatpush1.msra.mxu0 0.0
  %7276 = vmatprep.subr.mxu0 0.0
  %7277 = vmatpush1.msra.mxu0 0.0
  %7278 = vmatprep.subr.mxu0 0.0
  %7279 = vmatpush1.msra.mxu0 0.0
  %7280 = vmatprep.subr.mxu0 0.0
  %7281 = vmatpush1.msra.mxu0 0.0
  %7282 = vmatprep.subr.mxu0 0.0
  %7283 = vmatpush1.msra.mxu0 0.0
  %7284 = vmatprep.subr.mxu0 0.0
  %7285 = vmatpush1.msra.mxu0 0.0
  %7286 = vmatprep.subr.mxu0 0.0
  %7287 = vmatpush1.msra.mxu0 0.0
  %7288 = vmatprep.subr.mxu0 0.0
  %7289 = vmatpush1.msra.mxu0 0.0
  %7290 = vmatprep.subr.mxu0 0.0
  %7291 = vmatpush1.msra.mxu0 0.0
  %7292 = vmatprep.subr.mxu0 0.0
  %7293 = vmatpush1.msra.mxu0 0.0
  %7294 = vmatprep.subr.mxu0 0.0
  %7295 = vmatpush1.msra.mxu0 0.0
  %7296 = vmatprep.subr.mxu0 0.0
  %7297 = vmatpush1.msra.mxu0 0.0
  %7298 = vmatprep.subr.mxu0 0.0
  %7299 = vmatpush1.msra.mxu0 0.0
  %7300 = vmatprep.subr.mxu0 0.0
  %7301 = vmatpush1.msra.mxu0 0.0
  %7302 = vmatprep.subr.mxu0 0.0
  %7303 = vmatpush1.msra.mxu0 0.0
  %7304 = vmatprep.subr.mxu0 0.0
  %7305 = vmatpush1.msra.mxu0 0.0
  %7306 = vmatprep.subr.mxu0 0.0
  %7307 = vmatpush1.msra.mxu0 0.0
  %7308 = vmatprep.subr.mxu0 0.0
  %7309 = vmatpush1.msra.mxu0 0.0
  %7310 = vmatprep.subr.mxu0 0.0
  %7311 = vmatpush1.msra.mxu0 0.0
  %7312 = vmatprep.mubr.f32.mxu0 0.0
  %7313 = vmatmul.mubr.f32.gmra.mrb[0].mxu0 %v7225
  %v7314 = vpop.f32.mrb[0].mxu0
  %v7315 = vadd.f32 0.0, %v7314
  %v7316 = vpop.f32.mrb[0].mxu0
  %7317 = vmatprep.mubr.f32.mxu0 0.0
  %7318 = vmatmul.mubr.f32.gmra.mrb[0].mxu0 %v7228
  %v7319 = vpop.f32.mrb[0].mxu0
  %v7320 = vadd.f32 0.0, %v7319
  %v7321 = vpop.f32.mrb[0].mxu0
  %7322 = vmatprep.mubr.f32.mxu0 0.0
  %7323 = vmatmul.mubr.f32.gmra.mrb[0].mxu0 %v7231
  %v7324 = vpop.f32.mrb[0].mxu0
  %v7325 = vadd.f32 0.0, %v7324
  %v7326 = vpop.f32.mrb[0].mxu0
  %7327 = vmatprep.mubr.f32.mxu0 0.0
  %7328 = vmatmul.mubr.f32.gmra.mrb[0].mxu0 %v7234
  %v7329 = vpop.f32.mrb[0].mxu0
  %v7330 = vadd.f32 0.0, %v7329
  %v7331 = vpop.f32.mrb[0].mxu0
  %7332 = vmatprep.mubr.f32.mxu0 0.0
  %7333 = vmatmul.mubr.f32.gmra.mrb[0].mxu0 %v7237
  %v7334 = vpop.f32.mrb[0].mxu0
  %v7335 = vadd.f32 0.0, %v7334
  %v7336 = vpop.f32.mrb[0].mxu0
  %7337 = vmatprep.mubr.f32.mxu0 0.0
  %7338 = vmatmul.mubr.f32.gmra.mrb[0].mxu0 %v7240
  %v7339 = vpop.f32.mrb[0].mxu0
  %v7340 = vadd.f32 0.0, %v7339
  %v7341 = vpop.f32.mrb[0].mxu0
  %7342 = vmatprep.mubr.f32.mxu0 0.0
  %7343 = vmatmul.mubr.f32.gmra.mrb[0].mxu0 %v7243
  %v7344 = vpop.f32.mrb[0].mxu0
  %v7345 = vadd.f32 0.0, %v7344
  %v7346 = vpop.f32.mrb[0].mxu0
  %7347 = vmatprep.mubr.f32.mxu0 0.0
  %7348 = vmatmul.mubr.f32.gmra.mrb[0].mxu0 %v7246
  %v7349 = vpop.f32.mrb[0].mxu0
  %v7350 = vadd.f32 0.0, %v7349
  %v7351 = vpop.f32.mrb[0].mxu0
  %7352 = vdwg.mxu0
  %v7353 = vadd.f32 %v7204, %v7315
  %v7354 = vadd.f32 %v7205, %v7320
  %v7355 = vadd.f32 %v7206, %v7325
  %v7356 = vadd.f32 %v7207, %v7330
  %v7357 = vadd.f32 %v7208, %v7335
  %v7358 = vadd.f32 %v7209, %v7340
  %v7359 = vadd.f32 %v7210, %v7345
  %v7360 = vadd.f32 %v7211, %v7350
  %s7361 = scalar_lea.vmem [#allocation2], 256
  %v7362 = vld [vmem:[%s7361] sm:$0xff]
  %v7363 = vld [vmem:[%s7361 + $0x10] sm:$0xff]
  %v7364 = vld [vmem:[%s7361 + $0x20] sm:$0xff]
  %v7365 = vld [vmem:[%s7361 + $0x30] sm:$0xff]
  %v7366 = vld [vmem:[%s7361 + $0x40] sm:$0xff]
  %v7367 = vld [vmem:[%s7361 + $0x50] sm:$0xff]
  %v7368 = vld [vmem:[%s7361 + $0x60] sm:$0xff]
  %v7369 = vld [vmem:[%s7361 + $0x70] sm:$0xff]
  %v7370 = vld [vmem:[%s3 + $0x280] sm:$0xff]
  %v7371 = vld [vmem:[%s3 + $0x288] sm:$0xff]
  %v7372 = vld [vmem:[%s3 + $0x290] sm:$0xff]
  %v7373 = vld [vmem:[%s3 + $0x298] sm:$0xff]
  %v7375 = vsel %vm79, %v7362, 0
  %v7378 = vsel %vm79, %v7363, 0
  %v7381 = vsel %vm79, %v7364, 0
  %v7384 = vsel %vm79, %v7365, 0
  %v7387 = vsel %vm79, %v7366, 0
  %v7390 = vsel %vm79, %v7367, 0
  %v7393 = vsel %vm79, %v7368, 0
  %v7396 = vsel %vm79, %v7369, 0
  %7398 = vmatprep.subr.mxu0 0.0
  %7399 = vmatpush1.msra.mxu0 %v7370
  %7400 = vmatprep.subr.mxu0 0.0
  %7401 = vmatpush1.msra.mxu0 %v7371
  %7402 = vmatprep.subr.mxu0 0.0
  %7403 = vmatpush1.msra.mxu0 %v7372
  %7404 = vmatprep.subr.mxu0 0.0
  %7405 = vmatpush1.msra.mxu0 %v7373
  %7406 = vmatprep.subr.mxu0 0.0
  %7407 = vmatpush1.msra.mxu0 0.0
  %7408 = vmatprep.subr.mxu0 0.0
  %7409 = vmatpush1.msra.mxu0 0.0
  %7410 = vmatprep.subr.mxu0 0.0
  %7411 = vmatpush1.msra.mxu0 0.0
  %7412 = vmatprep.subr.mxu0 0.0
  %7413 = vmatpush1.msra.mxu0 0.0
  %7414 = vmatprep.subr.mxu0 0.0
  %7415 = vmatpush1.msra.mxu0 0.0
  %7416 = vmatprep.subr.mxu0 0.0
  %7417 = vmatpush1.msra.mxu0 0.0
  %7418 = vmatprep.subr.mxu0 0.0
  %7419 = vmatpush1.msra.mxu0 0.0
  %7420 = vmatprep.subr.mxu0 0.0
  %7421 = vmatpush1.msra.mxu0 0.0
  %7422 = vmatprep.subr.mxu0 0.0
  %7423 = vmatpush1.msra.mxu0 0.0
  %7424 = vmatprep.subr.mxu0 0.0
  %7425 = vmatpush1.msra.mxu0 0.0
  %7426 = vmatprep.subr.mxu0 0.0
  %7427 = vmatpush1.msra.mxu0 0.0
  %7428 = vmatprep.subr.mxu0 0.0
  %7429 = vmatpush1.msra.mxu0 0.0
  %7430 = vmatprep.subr.mxu0 0.0
  %7431 = vmatpush1.msra.mxu0 0.0
  %7432 = vmatprep.subr.mxu0 0.0
  %7433 = vmatpush1.msra.mxu0 0.0
  %7434 = vmatprep.subr.mxu0 0.0
  %7435 = vmatpush1.msra.mxu0 0.0
  %7436 = vmatprep.subr.mxu0 0.0
  %7437 = vmatpush1.msra.mxu0 0.0
  %7438 = vmatprep.subr.mxu0 0.0
  %7439 = vmatpush1.msra.mxu0 0.0
  %7440 = vmatprep.subr.mxu0 0.0
  %7441 = vmatpush1.msra.mxu0 0.0
  %7442 = vmatprep.subr.mxu0 0.0
  %7443 = vmatpush1.msra.mxu0 0.0
  %7444 = vmatprep.subr.mxu0 0.0
  %7445 = vmatpush1.msra.mxu0 0.0
  %7446 = vmatprep.subr.mxu0 0.0
  %7447 = vmatpush1.msra.mxu0 0.0
  %7448 = vmatprep.subr.mxu0 0.0
  %7449 = vmatpush1.msra.mxu0 0.0
  %7450 = vmatprep.subr.mxu0 0.0
  %7451 = vmatpush1.msra.mxu0 0.0
  %7452 = vmatprep.subr.mxu0 0.0
  %7453 = vmatpush1.msra.mxu0 0.0
  %7454 = vmatprep.subr.mxu0 0.0
  %7455 = vmatpush1.msra.mxu0 0.0
  %7456 = vmatprep.subr.mxu0 0.0
  %7457 = vmatpush1.msra.mxu0 0.0
  %7458 = vmatprep.subr.mxu0 0.0
  %7459 = vmatpush1.msra.mxu0 0.0
  %7460 = vmatprep.subr.mxu0 0.0
  %7461 = vmatpush1.msra.mxu0 0.0
  %7462 = vmatprep.mubr.f32.mxu0 0.0
  %7463 = vmatmul.mubr.f32.gmra.mrb[0].mxu0 %v7375
  %v7464 = vpop.f32.mrb[0].mxu0
  %v7465 = vadd.f32 0.0, %v7464
  %v7466 = vpop.f32.mrb[0].mxu0
  %7467 = vmatprep.mubr.f32.mxu0 0.0
  %7468 = vmatmul.mubr.f32.gmra.mrb[0].mxu0 %v7378
  %v7469 = vpop.f32.mrb[0].mxu0
  %v7470 = vadd.f32 0.0, %v7469
  %v7471 = vpop.f32.mrb[0].mxu0
  %7472 = vmatprep.mubr.f32.mxu0 0.0
  %7473 = vmatmul.mubr.f32.gmra.mrb[0].mxu0 %v7381
  %v7474 = vpop.f32.mrb[0].mxu0
  %v7475 = vadd.f32 0.0, %v7474
  %v7476 = vpop.f32.mrb[0].mxu0
  %7477 = vmatprep.mubr.f32.mxu0 0.0
  %7478 = vmatmul.mubr.f32.gmra.mrb[0].mxu0 %v7384
  %v7479 = vpop.f32.mrb[0].mxu0
  %v7480 = vadd.f32 0.0, %v7479
  %v7481 = vpop.f32.mrb[0].mxu0
  %7482 = vmatprep.mubr.f32.mxu0 0.0
  %7483 = vmatmul.mubr.f32.gmra.mrb[0].mxu0 %v7387
  %v7484 = vpop.f32.mrb[0].mxu0
  %v7485 = vadd.f32 0.0, %v7484
  %v7486 = vpop.f32.mrb[0].mxu0
  %7487 = vmatprep.mubr.f32.mxu0 0.0
  %7488 = vmatmul.mubr.f32.gmra.mrb[0].mxu0 %v7390
  %v7489 = vpop.f32.mrb[0].mxu0
  %v7490 = vadd.f32 0.0, %v7489
  %v7491 = vpop.f32.mrb[0].mxu0
  %7492 = vmatprep.mubr.f32.mxu0 0.0
  %7493 = vmatmul.mubr.f32.gmra.mrb[0].mxu0 %v7393
  %v7494 = vpop.f32.mrb[0].mxu0
  %v7495 = vadd.f32 0.0, %v7494
  %v7496 = vpop.f32.mrb[0].mxu0
  %7497 = vmatprep.mubr.f32.mxu0 0.0
  %7498 = vmatmul.mubr.f32.gmra.mrb[0].mxu0 %v7396
  %v7499 = vpop.f32.mrb[0].mxu0
  %v7500 = vadd.f32 0.0, %v7499
  %v7501 = vpop.f32.mrb[0].mxu0
  %7502 = vdwg.mxu0
  %v7503 = vadd.f32 %v7353, %v7465
  %v7504 = vadd.f32 %v7354, %v7470
  %v7505 = vadd.f32 %v7355, %v7475
  %v7506 = vadd.f32 %v7356, %v7480
  %v7507 = vadd.f32 %v7357, %v7485
  %v7508 = vadd.f32 %v7358, %v7490
  %v7509 = vadd.f32 %v7359, %v7495
  %v7510 = vadd.f32 %v7360, %v7500
  %v7511 = vld [vmem:[%s7361 + $0x1] sm:$0xff]
  %v7512 = vld [vmem:[%s7361 + $0x11] sm:$0xff]
  %v7513 = vld [vmem:[%s7361 + $0x21] sm:$0xff]
  %v7514 = vld [vmem:[%s7361 + $0x31] sm:$0xff]
  %v7515 = vld [vmem:[%s7361 + $0x41] sm:$0xff]
  %v7516 = vld [vmem:[%s7361 + $0x51] sm:$0xff]
  %v7517 = vld [vmem:[%s7361 + $0x61] sm:$0xff]
  %v7518 = vld [vmem:[%s7361 + $0x71] sm:$0xff]
  %v7519 = vld [vmem:[%s3 + $0x2a0] sm:$0xff]
  %v7520 = vld [vmem:[%s3 + $0x2a8] sm:$0xff]
  %v7521 = vld [vmem:[%s3 + $0x2b0] sm:$0xff]
  %v7522 = vld [vmem:[%s3 + $0x2b8] sm:$0xff]
  %v7524 = vsel %vm79, %v7511, 0
  %v7527 = vsel %vm79, %v7512, 0
  %v7530 = vsel %vm79, %v7513, 0
  %v7533 = vsel %vm79, %v7514, 0
  %v7536 = vsel %vm79, %v7515, 0
  %v7539 = vsel %vm79, %v7516, 0
  %v7542 = vsel %vm79, %v7517, 0
  %v7545 = vsel %vm79, %v7518, 0
  %7547 = vmatprep.subr.mxu0 0.0
  %7548 = vmatpush1.msra.mxu0 %v7519
  %7549 = vmatprep.subr.mxu0 0.0
  %7550 = vmatpush1.msra.mxu0 %v7520
  %7551 = vmatprep.subr.mxu0 0.0
  %7552 = vmatpush1.msra.mxu0 %v7521
  %7553 = vmatprep.subr.mxu0 0.0
  %7554 = vmatpush1.msra.mxu0 %v7522
  %7555 = vmatprep.subr.mxu0 0.0
  %7556 = vmatpush1.msra.mxu0 0.0
  %7557 = vmatprep.subr.mxu0 0.0
  %7558 = vmatpush1.msra.mxu0 0.0
  %7559 = vmatprep.subr.mxu0 0.0
  %7560 = vmatpush1.msra.mxu0 0.0
  %7561 = vmatprep.subr.mxu0 0.0
  %7562 = vmatpush1.msra.mxu0 0.0
  %7563 = vmatprep.subr.mxu0 0.0
  %7564 = vmatpush1.msra.mxu0 0.0
  %7565 = vmatprep.subr.mxu0 0.0
  %7566 = vmatpush1.msra.mxu0 0.0
  %7567 = vmatprep.subr.mxu0 0.0
  %7568 = vmatpush1.msra.mxu0 0.0
  %7569 = vmatprep.subr.mxu0 0.0
  %7570 = vmatpush1.msra.mxu0 0.0
  %7571 = vmatprep.subr.mxu0 0.0
  %7572 = vmatpush1.msra.mxu0 0.0
  %7573 = vmatprep.subr.mxu0 0.0
  %7574 = vmatpush1.msra.mxu0 0.0
  %7575 = vmatprep.subr.mxu0 0.0
  %7576 = vmatpush1.msra.mxu0 0.0
  %7577 = vmatprep.subr.mxu0 0.0
  %7578 = vmatpush1.msra.mxu0 0.0
  %7579 = vmatprep.subr.mxu0 0.0
  %7580 = vmatpush1.msra.mxu0 0.0
  %7581 = vmatprep.subr.mxu0 0.0
  %7582 = vmatpush1.msra.mxu0 0.0
  %7583 = vmatprep.subr.mxu0 0.0
  %7584 = vmatpush1.msra.mxu0 0.0
  %7585 = vmatprep.subr.mxu0 0.0
  %7586 = vmatpush1.msra.mxu0 0.0
  %7587 = vmatprep.subr.mxu0 0.0
  %7588 = vmatpush1.msra.mxu0 0.0
  %7589 = vmatprep.subr.mxu0 0.0
  %7590 = vmatpush1.msra.mxu0 0.0
  %7591 = vmatprep.subr.mxu0 0.0
  %7592 = vmatpush1.msra.mxu0 0.0
  %7593 = vmatprep.subr.mxu0 0.0
  %7594 = vmatpush1.msra.mxu0 0.0
  %7595 = vmatprep.subr.mxu0 0.0
  %7596 = vmatpush1.msra.mxu0 0.0
  %7597 = vmatprep.subr.mxu0 0.0
  %7598 = vmatpush1.msra.mxu0 0.0
  %7599 = vmatprep.subr.mxu0 0.0
  %7600 = vmatpush1.msra.mxu0 0.0
  %7601 = vmatprep.subr.mxu0 0.0
  %7602 = vmatpush1.msra.mxu0 0.0
  %7603 = vmatprep.subr.mxu0 0.0
  %7604 = vmatpush1.msra.mxu0 0.0
  %7605 = vmatprep.subr.mxu0 0.0
  %7606 = vmatpush1.msra.mxu0 0.0
  %7607 = vmatprep.subr.mxu0 0.0
  %7608 = vmatpush1.msra.mxu0 0.0
  %7609 = vmatprep.subr.mxu0 0.0
  %7610 = vmatpush1.msra.mxu0 0.0
  %7611 = vmatprep.mubr.f32.mxu0 0.0
  %7612 = vmatmul.mubr.f32.gmra.mrb[0].mxu0 %v7524
  %v7613 = vpop.f32.mrb[0].mxu0
  %v7614 = vadd.f32 0.0, %v7613
  %v7615 = vpop.f32.mrb[0].mxu0
  %7616 = vmatprep.mubr.f32.mxu0 0.0
  %7617 = vmatmul.mubr.f32.gmra.mrb[0].mxu0 %v7527
  %v7618 = vpop.f32.mrb[0].mxu0
  %v7619 = vadd.f32 0.0, %v7618
  %v7620 = vpop.f32.mrb[0].mxu0
  %7621 = vmatprep.mubr.f32.mxu0 0.0
  %7622 = vmatmul.mubr.f32.gmra.mrb[0].mxu0 %v7530
  %v7623 = vpop.f32.mrb[0].mxu0
  %v7624 = vadd.f32 0.0, %v7623
  %v7625 = vpop.f32.mrb[0].mxu0
  %7626 = vmatprep.mubr.f32.mxu0 0.0
  %7627 = vmatmul.mubr.f32.gmra.mrb[0].mxu0 %v7533
  %v7628 = vpop.f32.mrb[0].mxu0
  %v7629 = vadd.f32 0.0, %v7628
  %v7630 = vpop.f32.mrb[0].mxu0
  %7631 = vmatprep.mubr.f32.mxu0 0.0
  %7632 = vmatmul.mubr.f32.gmra.mrb[0].mxu0 %v7536
  %v7633 = vpop.f32.mrb[0].mxu0
  %v7634 = vadd.f32 0.0, %v7633
  %v7635 = vpop.f32.mrb[0].mxu0
  %7636 = vmatprep.mubr.f32.mxu0 0.0
  %7637 = vmatmul.mubr.f32.gmra.mrb[0].mxu0 %v7539
  %v7638 = vpop.f32.mrb[0].mxu0
  %v7639 = vadd.f32 0.0, %v7638
  %v7640 = vpop.f32.mrb[0].mxu0
  %7641 = vmatprep.mubr.f32.mxu0 0.0
  %7642 = vmatmul.mubr.f32.gmra.mrb[0].mxu0 %v7542
  %v7643 = vpop.f32.mrb[0].mxu0
  %v7644 = vadd.f32 0.0, %v7643
  %v7645 = vpop.f32.mrb[0].mxu0
  %7646 = vmatprep.mubr.f32.mxu0 0.0
  %7647 = vmatmul.mubr.f32.gmra.mrb[0].mxu0 %v7545
  %v7648 = vpop.f32.mrb[0].mxu0
  %v7649 = vadd.f32 0.0, %v7648
  %v7650 = vpop.f32.mrb[0].mxu0
  %7651 = vdwg.mxu0
  %v7652 = vadd.f32 %v7503, %v7614
  %v7653 = vadd.f32 %v7504, %v7619
  %v7654 = vadd.f32 %v7505, %v7624
  %v7655 = vadd.f32 %v7506, %v7629
  %v7656 = vadd.f32 %v7507, %v7634
  %v7657 = vadd.f32 %v7508, %v7639
  %v7658 = vadd.f32 %v7509, %v7644
  %v7659 = vadd.f32 %v7510, %v7649
  %v7660 = vld [vmem:[%s7361 + $0x2] sm:$0xff]
  %v7661 = vld [vmem:[%s7361 + $0x12] sm:$0xff]
  %v7662 = vld [vmem:[%s7361 + $0x22] sm:$0xff]
  %v7663 = vld [vmem:[%s7361 + $0x32] sm:$0xff]
  %v7664 = vld [vmem:[%s7361 + $0x42] sm:$0xff]
  %v7665 = vld [vmem:[%s7361 + $0x52] sm:$0xff]
  %v7666 = vld [vmem:[%s7361 + $0x62] sm:$0xff]
  %v7667 = vld [vmem:[%s7361 + $0x72] sm:$0xff]
  %v7668 = vld [vmem:[%s3 + $0x2c0] sm:$0xff]
  %v7669 = vld [vmem:[%s3 + $0x2c8] sm:$0xff]
  %v7670 = vld [vmem:[%s3 + $0x2d0] sm:$0xff]
  %v7671 = vld [vmem:[%s3 + $0x2d8] sm:$0xff]
  %v7673 = vsel %vm79, %v7660, 0
  %v7676 = vsel %vm79, %v7661, 0
  %v7679 = vsel %vm79, %v7662, 0
  %v7682 = vsel %vm79, %v7663, 0
  %v7685 = vsel %vm79, %v7664, 0
  %v7688 = vsel %vm79, %v7665, 0
  %v7691 = vsel %vm79, %v7666, 0
  %v7694 = vsel %vm79, %v7667, 0
  %7696 = vmatprep.subr.mxu0 0.0
  %7697 = vmatpush1.msra.mxu0 %v7668
  %7698 = vmatprep.subr.mxu0 0.0
  %7699 = vmatpush1.msra.mxu0 %v7669
  %7700 = vmatprep.subr.mxu0 0.0
  %7701 = vmatpush1.msra.mxu0 %v7670
  %7702 = vmatprep.subr.mxu0 0.0
  %7703 = vmatpush1.msra.mxu0 %v7671
  %7704 = vmatprep.subr.mxu0 0.0
  %7705 = vmatpush1.msra.mxu0 0.0
  %7706 = vmatprep.subr.mxu0 0.0
  %7707 = vmatpush1.msra.mxu0 0.0
  %7708 = vmatprep.subr.mxu0 0.0
  %7709 = vmatpush1.msra.mxu0 0.0
  %7710 = vmatprep.subr.mxu0 0.0
  %7711 = vmatpush1.msra.mxu0 0.0
  %7712 = vmatprep.subr.mxu0 0.0
  %7713 = vmatpush1.msra.mxu0 0.0
  %7714 = vmatprep.subr.mxu0 0.0
  %7715 = vmatpush1.msra.mxu0 0.0
  %7716 = vmatprep.subr.mxu0 0.0
  %7717 = vmatpush1.msra.mxu0 0.0
  %7718 = vmatprep.subr.mxu0 0.0
  %7719 = vmatpush1.msra.mxu0 0.0
  %7720 = vmatprep.subr.mxu0 0.0
  %7721 = vmatpush1.msra.mxu0 0.0
  %7722 = vmatprep.subr.mxu0 0.0
  %7723 = vmatpush1.msra.mxu0 0.0
  %7724 = vmatprep.subr.mxu0 0.0
  %7725 = vmatpush1.msra.mxu0 0.0
  %7726 = vmatprep.subr.mxu0 0.0
  %7727 = vmatpush1.msra.mxu0 0.0
  %7728 = vmatprep.subr.mxu0 0.0
  %7729 = vmatpush1.msra.mxu0 0.0
  %7730 = vmatprep.subr.mxu0 0.0
  %7731 = vmatpush1.msra.mxu0 0.0
  %7732 = vmatprep.subr.mxu0 0.0
  %7733 = vmatpush1.msra.mxu0 0.0
  %7734 = vmatprep.subr.mxu0 0.0
  %7735 = vmatpush1.msra.mxu0 0.0
  %7736 = vmatprep.subr.mxu0 0.0
  %7737 = vmatpush1.msra.mxu0 0.0
  %7738 = vmatprep.subr.mxu0 0.0
  %7739 = vmatpush1.msra.mxu0 0.0
  %7740 = vmatprep.subr.mxu0 0.0
  %7741 = vmatpush1.msra.mxu0 0.0
  %7742 = vmatprep.subr.mxu0 0.0
  %7743 = vmatpush1.msra.mxu0 0.0
  %7744 = vmatprep.subr.mxu0 0.0
  %7745 = vmatpush1.msra.mxu0 0.0
  %7746 = vmatprep.subr.mxu0 0.0
  %7747 = vmatpush1.msra.mxu0 0.0
  %7748 = vmatprep.subr.mxu0 0.0
  %7749 = vmatpush1.msra.mxu0 0.0
  %7750 = vmatprep.subr.mxu0 0.0
  %7751 = vmatpush1.msra.mxu0 0.0
  %7752 = vmatprep.subr.mxu0 0.0
  %7753 = vmatpush1.msra.mxu0 0.0
  %7754 = vmatprep.subr.mxu0 0.0
  %7755 = vmatpush1.msra.mxu0 0.0
  %7756 = vmatprep.subr.mxu0 0.0
  %7757 = vmatpush1.msra.mxu0 0.0
  %7758 = vmatprep.subr.mxu0 0.0
  %7759 = vmatpush1.msra.mxu0 0.0
  %7760 = vmatprep.mubr.f32.mxu0 0.0
  %7761 = vmatmul.mubr.f32.gmra.mrb[0].mxu0 %v7673
  %v7762 = vpop.f32.mrb[0].mxu0
  %v7763 = vadd.f32 0.0, %v7762
  %v7764 = vpop.f32.mrb[0].mxu0
  %7765 = vmatprep.mubr.f32.mxu0 0.0
  %7766 = vmatmul.mubr.f32.gmra.mrb[0].mxu0 %v7676
  %v7767 = vpop.f32.mrb[0].mxu0
  %v7768 = vadd.f32 0.0, %v7767
  %v7769 = vpop.f32.mrb[0].mxu0
  %7770 = vmatprep.mubr.f32.mxu0 0.0
  %7771 = vmatmul.mubr.f32.gmra.mrb[0].mxu0 %v7679
  %v7772 = vpop.f32.mrb[0].mxu0
  %v7773 = vadd.f32 0.0, %v7772
  %v7774 = vpop.f32.mrb[0].mxu0
  %7775 = vmatprep.mubr.f32.mxu0 0.0
  %7776 = vmatmul.mubr.f32.gmra.mrb[0].mxu0 %v7682
  %v7777 = vpop.f32.mrb[0].mxu0
  %v7778 = vadd.f32 0.0, %v7777
  %v7779 = vpop.f32.mrb[0].mxu0
  %7780 = vmatprep.mubr.f32.mxu0 0.0
  %7781 = vmatmul.mubr.f32.gmra.mrb[0].mxu0 %v7685
  %v7782 = vpop.f32.mrb[0].mxu0
  %v7783 = vadd.f32 0.0, %v7782
  %v7784 = vpop.f32.mrb[0].mxu0
  %7785 = vmatprep.mubr.f32.mxu0 0.0
  %7786 = vmatmul.mubr.f32.gmra.mrb[0].mxu0 %v7688
  %v7787 = vpop.f32.mrb[0].mxu0
  %v7788 = vadd.f32 0.0, %v7787
  %v7789 = vpop.f32.mrb[0].mxu0
  %7790 = vmatprep.mubr.f32.mxu0 0.0
  %7791 = vmatmul.mubr.f32.gmra.mrb[0].mxu0 %v7691
  %v7792 = vpop.f32.mrb[0].mxu0
  %v7793 = vadd.f32 0.0, %v7792
  %v7794 = vpop.f32.mrb[0].mxu0
  %7795 = vmatprep.mubr.f32.mxu0 0.0
  %7796 = vmatmul.mubr.f32.gmra.mrb[0].mxu0 %v7694
  %v7797 = vpop.f32.mrb[0].mxu0
  %v7798 = vadd.f32 0.0, %v7797
  %v7799 = vpop.f32.mrb[0].mxu0
  %7800 = vdwg.mxu0
  %v7801 = vadd.f32 %v7652, %v7763
  %v7802 = vadd.f32 %v7653, %v7768
  %v7803 = vadd.f32 %v7654, %v7773
  %v7804 = vadd.f32 %v7655, %v7778
  %v7805 = vadd.f32 %v7656, %v7783
  %v7806 = vadd.f32 %v7657, %v7788
  %v7807 = vadd.f32 %v7658, %v7793
  %v7808 = vadd.f32 %v7659, %v7798
  %v7809 = vld [vmem:[%s7361 + $0x3] sm:$0xff]
  %v7810 = vld [vmem:[%s7361 + $0x13] sm:$0xff]
  %v7811 = vld [vmem:[%s7361 + $0x23] sm:$0xff]
  %v7812 = vld [vmem:[%s7361 + $0x33] sm:$0xff]
  %v7813 = vld [vmem:[%s7361 + $0x43] sm:$0xff]
  %v7814 = vld [vmem:[%s7361 + $0x53] sm:$0xff]
  %v7815 = vld [vmem:[%s7361 + $0x63] sm:$0xff]
  %v7816 = vld [vmem:[%s7361 + $0x73] sm:$0xff]
  %v7817 = vld [vmem:[%s3 + $0x2e0] sm:$0xff]
  %v7818 = vld [vmem:[%s3 + $0x2e8] sm:$0xff]
  %v7819 = vld [vmem:[%s3 + $0x2f0] sm:$0xff]
  %v7820 = vld [vmem:[%s3 + $0x2f8] sm:$0xff]
  %v7822 = vsel %vm79, %v7809, 0
  %v7825 = vsel %vm79, %v7810, 0
  %v7828 = vsel %vm79, %v7811, 0
  %v7831 = vsel %vm79, %v7812, 0
  %v7834 = vsel %vm79, %v7813, 0
  %v7837 = vsel %vm79, %v7814, 0
  %v7840 = vsel %vm79, %v7815, 0
  %v7843 = vsel %vm79, %v7816, 0
  %7845 = vmatprep.subr.mxu0 0.0
  %7846 = vmatpush1.msra.mxu0 %v7817
  %7847 = vmatprep.subr.mxu0 0.0
  %7848 = vmatpush1.msra.mxu0 %v7818
  %7849 = vmatprep.subr.mxu0 0.0
  %7850 = vmatpush1.msra.mxu0 %v7819
  %7851 = vmatprep.subr.mxu0 0.0
  %7852 = vmatpush1.msra.mxu0 %v7820
  %7853 = vmatprep.subr.mxu0 0.0
  %7854 = vmatpush1.msra.mxu0 0.0
  %7855 = vmatprep.subr.mxu0 0.0
  %7856 = vmatpush1.msra.mxu0 0.0
  %7857 = vmatprep.subr.mxu0 0.0
  %7858 = vmatpush1.msra.mxu0 0.0
  %7859 = vmatprep.subr.mxu0 0.0
  %7860 = vmatpush1.msra.mxu0 0.0
  %7861 = vmatprep.subr.mxu0 0.0
  %7862 = vmatpush1.msra.mxu0 0.0
  %7863 = vmatprep.subr.mxu0 0.0
  %7864 = vmatpush1.msra.mxu0 0.0
  %7865 = vmatprep.subr.mxu0 0.0
  %7866 = vmatpush1.msra.mxu0 0.0
  %7867 = vmatprep.subr.mxu0 0.0
  %7868 = vmatpush1.msra.mxu0 0.0
  %7869 = vmatprep.subr.mxu0 0.0
  %7870 = vmatpush1.msra.mxu0 0.0
  %7871 = vmatprep.subr.mxu0 0.0
  %7872 = vmatpush1.msra.mxu0 0.0
  %7873 = vmatprep.subr.mxu0 0.0
  %7874 = vmatpush1.msra.mxu0 0.0
  %7875 = vmatprep.subr.mxu0 0.0
  %7876 = vmatpush1.msra.mxu0 0.0
  %7877 = vmatprep.subr.mxu0 0.0
  %7878 = vmatpush1.msra.mxu0 0.0
  %7879 = vmatprep.subr.mxu0 0.0
  %7880 = vmatpush1.msra.mxu0 0.0
  %7881 = vmatprep.subr.mxu0 0.0
  %7882 = vmatpush1.msra.mxu0 0.0
  %7883 = vmatprep.subr.mxu0 0.0
  %7884 = vmatpush1.msra.mxu0 0.0
  %7885 = vmatprep.subr.mxu0 0.0
  %7886 = vmatpush1.msra.mxu0 0.0
  %7887 = vmatprep.subr.mxu0 0.0
  %7888 = vmatpush1.msra.mxu0 0.0
  %7889 = vmatprep.subr.mxu0 0.0
  %7890 = vmatpush1.msra.mxu0 0.0
  %7891 = vmatprep.subr.mxu0 0.0
  %7892 = vmatpush1.msra.mxu0 0.0
  %7893 = vmatprep.subr.mxu0 0.0
  %7894 = vmatpush1.msra.mxu0 0.0
  %7895 = vmatprep.subr.mxu0 0.0
  %7896 = vmatpush1.msra.mxu0 0.0
  %7897 = vmatprep.subr.mxu0 0.0
  %7898 = vmatpush1.msra.mxu0 0.0
  %7899 = vmatprep.subr.mxu0 0.0
  %7900 = vmatpush1.msra.mxu0 0.0
  %7901 = vmatprep.subr.mxu0 0.0
  %7902 = vmatpush1.msra.mxu0 0.0
  %7903 = vmatprep.subr.mxu0 0.0
  %7904 = vmatpush1.msra.mxu0 0.0
  %7905 = vmatprep.subr.mxu0 0.0
  %7906 = vmatpush1.msra.mxu0 0.0
  %7907 = vmatprep.subr.mxu0 0.0
  %7908 = vmatpush1.msra.mxu0 0.0
  %7909 = vmatprep.mubr.f32.mxu0 0.0
  %7910 = vmatmul.mubr.f32.gmra.mrb[0].mxu0 %v7822
  %v7911 = vpop.f32.mrb[0].mxu0
  %v7912 = vadd.f32 0.0, %v7911
  %v7913 = vpop.f32.mrb[0].mxu0
  %7914 = vmatprep.mubr.f32.mxu0 0.0
  %7915 = vmatmul.mubr.f32.gmra.mrb[0].mxu0 %v7825
  %v7916 = vpop.f32.mrb[0].mxu0
  %v7917 = vadd.f32 0.0, %v7916
  %v7918 = vpop.f32.mrb[0].mxu0
  %7919 = vmatprep.mubr.f32.mxu0 0.0
  %7920 = vmatmul.mubr.f32.gmra.mrb[0].mxu0 %v7828
  %v7921 = vpop.f32.mrb[0].mxu0
  %v7922 = vadd.f32 0.0, %v7921
  %v7923 = vpop.f32.mrb[0].mxu0
  %7924 = vmatprep.mubr.f32.mxu0 0.0
  %7925 = vmatmul.mubr.f32.gmra.mrb[0].mxu0 %v7831
  %v7926 = vpop.f32.mrb[0].mxu0
  %v7927 = vadd.f32 0.0, %v7926
  %v7928 = vpop.f32.mrb[0].mxu0
  %7929 = vmatprep.mubr.f32.mxu0 0.0
  %7930 = vmatmul.mubr.f32.gmra.mrb[0].mxu0 %v7834
  %v7931 = vpop.f32.mrb[0].mxu0
  %v7932 = vadd.f32 0.0, %v7931
  %v7933 = vpop.f32.mrb[0].mxu0
  %7934 = vmatprep.mubr.f32.mxu0 0.0
  %7935 = vmatmul.mubr.f32.gmra.mrb[0].mxu0 %v7837
  %v7936 = vpop.f32.mrb[0].mxu0
  %v7937 = vadd.f32 0.0, %v7936
  %v7938 = vpop.f32.mrb[0].mxu0
  %7939 = vmatprep.mubr.f32.mxu0 0.0
  %7940 = vmatmul.mubr.f32.gmra.mrb[0].mxu0 %v7840
  %v7941 = vpop.f32.mrb[0].mxu0
  %v7942 = vadd.f32 0.0, %v7941
  %v7943 = vpop.f32.mrb[0].mxu0
  %7944 = vmatprep.mubr.f32.mxu0 0.0
  %7945 = vmatmul.mubr.f32.gmra.mrb[0].mxu0 %v7843
  %v7946 = vpop.f32.mrb[0].mxu0
  %v7947 = vadd.f32 0.0, %v7946
  %v7948 = vpop.f32.mrb[0].mxu0
  %7949 = vdwg.mxu0
  %v7950 = vadd.f32 %v7801, %v7912
  %v7951 = vadd.f32 %v7802, %v7917
  %v7952 = vadd.f32 %v7803, %v7922
  %v7953 = vadd.f32 %v7804, %v7927
  %v7954 = vadd.f32 %v7805, %v7932
  %v7955 = vadd.f32 %v7806, %v7937
  %v7956 = vadd.f32 %v7807, %v7942
  %v7957 = vadd.f32 %v7808, %v7947
  %v7958 = vld [vmem:[%s7361 + $0x4] sm:$0xff]
  %v7959 = vld [vmem:[%s7361 + $0x14] sm:$0xff]
  %v7960 = vld [vmem:[%s7361 + $0x24] sm:$0xff]
  %v7961 = vld [vmem:[%s7361 + $0x34] sm:$0xff]
  %v7962 = vld [vmem:[%s7361 + $0x44] sm:$0xff]
  %v7963 = vld [vmem:[%s7361 + $0x54] sm:$0xff]
  %v7964 = vld [vmem:[%s7361 + $0x64] sm:$0xff]
  %v7965 = vld [vmem:[%s7361 + $0x74] sm:$0xff]
  %v7966 = vld [vmem:[%s3 + $0x300] sm:$0xff]
  %v7967 = vld [vmem:[%s3 + $0x308] sm:$0xff]
  %v7968 = vld [vmem:[%s3 + $0x310] sm:$0xff]
  %v7969 = vld [vmem:[%s3 + $0x318] sm:$0xff]
  %v7971 = vsel %vm79, %v7958, 0
  %v7974 = vsel %vm79, %v7959, 0
  %v7977 = vsel %vm79, %v7960, 0
  %v7980 = vsel %vm79, %v7961, 0
  %v7983 = vsel %vm79, %v7962, 0
  %v7986 = vsel %vm79, %v7963, 0
  %v7989 = vsel %vm79, %v7964, 0
  %v7992 = vsel %vm79, %v7965, 0
  %7994 = vmatprep.subr.mxu0 0.0
  %7995 = vmatpush1.msra.mxu0 %v7966
  %7996 = vmatprep.subr.mxu0 0.0
  %7997 = vmatpush1.msra.mxu0 %v7967
  %7998 = vmatprep.subr.mxu0 0.0
  %7999 = vmatpush1.msra.mxu0 %v7968
  %8000 = vmatprep.subr.mxu0 0.0
  %8001 = vmatpush1.msra.mxu0 %v7969
  %8002 = vmatprep.subr.mxu0 0.0
  %8003 = vmatpush1.msra.mxu0 0.0
  %8004 = vmatprep.subr.mxu0 0.0
  %8005 = vmatpush1.msra.mxu0 0.0
  %8006 = vmatprep.subr.mxu0 0.0
  %8007 = vmatpush1.msra.mxu0 0.0
  %8008 = vmatprep.subr.mxu0 0.0
  %8009 = vmatpush1.msra.mxu0 0.0
  %8010 = vmatprep.subr.mxu0 0.0
  %8011 = vmatpush1.msra.mxu0 0.0
  %8012 = vmatprep.subr.mxu0 0.0
  %8013 = vmatpush1.msra.mxu0 0.0
  %8014 = vmatprep.subr.mxu0 0.0
  %8015 = vmatpush1.msra.mxu0 0.0
  %8016 = vmatprep.subr.mxu0 0.0
  %8017 = vmatpush1.msra.mxu0 0.0
  %8018 = vmatprep.subr.mxu0 0.0
  %8019 = vmatpush1.msra.mxu0 0.0
  %8020 = vmatprep.subr.mxu0 0.0
  %8021 = vmatpush1.msra.mxu0 0.0
  %8022 = vmatprep.subr.mxu0 0.0
  %8023 = vmatpush1.msra.mxu0 0.0
  %8024 = vmatprep.subr.mxu0 0.0
  %8025 = vmatpush1.msra.mxu0 0.0
  %8026 = vmatprep.subr.mxu0 0.0
  %8027 = vmatpush1.msra.mxu0 0.0
  %8028 = vmatprep.subr.mxu0 0.0
  %8029 = vmatpush1.msra.mxu0 0.0
  %8030 = vmatprep.subr.mxu0 0.0
  %8031 = vmatpush1.msra.mxu0 0.0
  %8032 = vmatprep.subr.mxu0 0.0
  %8033 = vmatpush1.msra.mxu0 0.0
  %8034 = vmatprep.subr.mxu0 0.0
  %8035 = vmatpush1.msra.mxu0 0.0
  %8036 = vmatprep.subr.mxu0 0.0
  %8037 = vmatpush1.msra.mxu0 0.0
  %8038 = vmatprep.subr.mxu0 0.0
  %8039 = vmatpush1.msra.mxu0 0.0
  %8040 = vmatprep.subr.mxu0 0.0
  %8041 = vmatpush1.msra.mxu0 0.0
  %8042 = vmatprep.subr.mxu0 0.0
  %8043 = vmatpush1.msra.mxu0 0.0
  %8044 = vmatprep.subr.mxu0 0.0
  %8045 = vmatpush1.msra.mxu0 0.0
  %8046 = vmatprep.subr.mxu0 0.0
  %8047 = vmatpush1.msra.mxu0 0.0
  %8048 = vmatprep.subr.mxu0 0.0
  %8049 = vmatpush1.msra.mxu0 0.0
  %8050 = vmatprep.subr.mxu0 0.0
  %8051 = vmatpush1.msra.mxu0 0.0
  %8052 = vmatprep.subr.mxu0 0.0
  %8053 = vmatpush1.msra.mxu0 0.0
  %8054 = vmatprep.subr.mxu0 0.0
  %8055 = vmatpush1.msra.mxu0 0.0
  %8056 = vmatprep.subr.mxu0 0.0
  %8057 = vmatpush1.msra.mxu0 0.0
  %8058 = vmatprep.mubr.f32.mxu0 0.0
  %8059 = vmatmul.mubr.f32.gmra.mrb[0].mxu0 %v7971
  %v8060 = vpop.f32.mrb[0].mxu0
  %v8061 = vadd.f32 0.0, %v8060
  %v8062 = vpop.f32.mrb[0].mxu0
  %8063 = vmatprep.mubr.f32.mxu0 0.0
  %8064 = vmatmul.mubr.f32.gmra.mrb[0].mxu0 %v7974
  %v8065 = vpop.f32.mrb[0].mxu0
  %v8066 = vadd.f32 0.0, %v8065
  %v8067 = vpop.f32.mrb[0].mxu0
  %8068 = vmatprep.mubr.f32.mxu0 0.0
  %8069 = vmatmul.mubr.f32.gmra.mrb[0].mxu0 %v7977
  %v8070 = vpop.f32.mrb[0].mxu0
  %v8071 = vadd.f32 0.0, %v8070
  %v8072 = vpop.f32.mrb[0].mxu0
  %8073 = vmatprep.mubr.f32.mxu0 0.0
  %8074 = vmatmul.mubr.f32.gmra.mrb[0].mxu0 %v7980
  %v8075 = vpop.f32.mrb[0].mxu0
  %v8076 = vadd.f32 0.0, %v8075
  %v8077 = vpop.f32.mrb[0].mxu0
  %8078 = vmatprep.mubr.f32.mxu0 0.0
  %8079 = vmatmul.mubr.f32.gmra.mrb[0].mxu0 %v7983
  %v8080 = vpop.f32.mrb[0].mxu0
  %v8081 = vadd.f32 0.0, %v8080
  %v8082 = vpop.f32.mrb[0].mxu0
  %8083 = vmatprep.mubr.f32.mxu0 0.0
  %8084 = vmatmul.mubr.f32.gmra.mrb[0].mxu0 %v7986
  %v8085 = vpop.f32.mrb[0].mxu0
  %v8086 = vadd.f32 0.0, %v8085
  %v8087 = vpop.f32.mrb[0].mxu0
  %8088 = vmatprep.mubr.f32.mxu0 0.0
  %8089 = vmatmul.mubr.f32.gmra.mrb[0].mxu0 %v7989
  %v8090 = vpop.f32.mrb[0].mxu0
  %v8091 = vadd.f32 0.0, %v8090
  %v8092 = vpop.f32.mrb[0].mxu0
  %8093 = vmatprep.mubr.f32.mxu0 0.0
  %8094 = vmatmul.mubr.f32.gmra.mrb[0].mxu0 %v7992
  %v8095 = vpop.f32.mrb[0].mxu0
  %v8096 = vadd.f32 0.0, %v8095
  %v8097 = vpop.f32.mrb[0].mxu0
  %8098 = vdwg.mxu0
  %v8099 = vadd.f32 %v7950, %v8061
  %v8100 = vadd.f32 %v7951, %v8066
  %v8101 = vadd.f32 %v7952, %v8071
  %v8102 = vadd.f32 %v7953, %v8076
  %v8103 = vadd.f32 %v7954, %v8081
  %v8104 = vadd.f32 %v7955, %v8086
  %v8105 = vadd.f32 %v7956, %v8091
  %v8106 = vadd.f32 %v7957, %v8096
  %v8107 = vmax.f32 %v8099, 0.0
  %v8108 = vmax.f32 %v8100, 0.0
  %v8109 = vmax.f32 %v8101, 0.0
  %v8110 = vmax.f32 %v8102, 0.0
  %v8111 = vmax.f32 %v8103, 0.0
  %v8112 = vmax.f32 %v8104, 0.0
  %v8113 = vmax.f32 %v8105, 0.0
  %v8114 = vmax.f32 %v8106, 0.0
  %s8115 = scalar_lea.vmem %s5, 64
  %8116 = vst [vmem:[%s8115] sm:$0xff] %v8107
  %8117 = vst [vmem:[%s8115 + $0x8] sm:$0xff] %v8108
  %8118 = vst [vmem:[%s8115 + $0x10] sm:$0xff] %v8109
  %8119 = vst [vmem:[%s8115 + $0x18] sm:$0xff] %v8110
  %8120 = vst [vmem:[%s8115 + $0x20] sm:$0xff] %v8111
  %8121 = vst [vmem:[%s8115 + $0x28] sm:$0xff] %v8112
  %8122 = vst [vmem:[%s8115 + $0x30] sm:$0xff] %v8113
  %8123 = vst [vmem:[%s8115 + $0x38] sm:$0xff] %v8114
  // Predicated region
  $region22: #{sequential_forward.1} parent=0 // pred_check
    _
  $region23: #{sequential_forward.1} parent=0 // pred_check_branch
    %8125 = sbr.rel (0) target = $region25
  $region24: #{sequential_forward.1} parent=0 // pred_region
    _
  $region25: #{sequential_forward.1} parent=0 // pred_fallthru
    _
  // Predicated region
  $region26: #{sequential_forward.1} parent=0 // pred_check
    _
  $region27: #{sequential_forward.1} parent=0 // pred_check_branch
    %8127 = sbr.rel (0) target = $region29
  $region28: #{sequential_forward.1} parent=0 // pred_region
    _
  $region29: #{sequential_forward.1} parent=0 // pred_fallthru
    _

</llo_original>
